<compile_context>
chip_gen: v7x
topology: tpu7x:2x2x1
jax: 0.10.0
libtpu: 0.0.40
codegen_flags: <defaults>
</compile_context>

<pallas_src>
import functools
import numpy as np
import jax
import jax.numpy as jnp
from jax.experimental import pallas as pl
from jax.experimental.pallas import tpu as pltpu

# ----------------------------- sizes (small demo) ----------------------------
B = 16              # batch (kept small; must be a multiple of BT)
BT = 8              # batch elements per grid step -> grid = (2,)
V = 8               # number of nodes
E = V * (V - 1)     # directed edges (fully connected, no self loops) = 56
IN_DIM = 4          # in_dim
N_HID = 32          # n_hid
OUT_DIM = 8         # out_dim
N_LAYERS = 2        # number of NRIConv layers
EDGE_TYPES = 2
WH = EDGE_TYPES * N_HID      # widened (edge-type fused) hidden = 64
LN_EPS = 1e-5


def _bdot(a, b):
    """bf16 MXU matmul with f32 accumulation."""
    return jnp.dot(a.astype(jnp.bfloat16), b.astype(jnp.bfloat16),
                   preferred_element_type=jnp.float32)


# ================================ Pallas kernel ===============================
def _nri_kernel(x_ref, mask_ref, rel_ref, rel_t_ref,
                wa_ref, lnb_ref,
                mw1_ref, mb_ref, mw2_ref,
                ow1_ref, ob_ref, ow2_ref,
                wout_ref, bout_ref,
                o_ref):
    """Full NRI forward for a block of BT batch elements (grid axis 0 = batch tile)."""
    # ---- embed: adapt_ws + ReLU + dropout(identity) + LayerNorm (all f32 VPU) ----
    h0 = jnp.maximum(_bdot(x_ref[...], wa_ref[...]) + lnb_ref[0], 0.0)   # (BT*V, H)
    mean = jnp.mean(h0, axis=-1, keepdims=True)
    var = jnp.mean((h0 - mean) ** 2, axis=-1, keepdims=True)
    h = (h0 - mean) * jax.lax.rsqrt(var + LN_EPS) * lnb_ref[1] + lnb_ref[2]

    rel_rec = rel_ref[0]            # (BT*E, BT*V) bf16 block-diagonal
    rel_send = rel_ref[1]           # (BT*E, BT*V) bf16 block-diagonal
    rel_rec_t = rel_t_ref[...]      # (BT*V, BT*E) bf16 block-diagonal
    mask = mask_ref[...]            # (BT*E, ET*H) f32 lane-dense rel_type weights

    for l in range(N_LAYERS):                                       # unrolled
        hb = h.astype(jnp.bfloat16)
        recv = jnp.dot(rel_rec, hb, preferred_element_type=jnp.float32)   # (BT*E, H)
        send = jnp.dot(rel_send, hb, preferred_element_type=jnp.float32)  # (BT*E, H)
        # msg_fc1 on cat([send, recv]) fused across edge types (N = ET*H)
        m = jnp.maximum(_bdot(send, mw1_ref[l, 0]) + _bdot(recv, mw1_ref[l, 1])
                        + mb_ref[l, 0], 0.0)                        # (BT*E, ET*H)
        # msg_fc2 fused across edge types via block-diagonal weights
        m = jnp.maximum(_bdot(m, mw2_ref[l]) + mb_ref[l, 1], 0.0)   # (BT*E, ET*H)
        m = m * mask                                                # rel_type weighting
        # aggregate: agg_wide[:, i*H:(i+1)*H] = rel_rec^T @ (msg_i * rel_type_i)
        aggw = jnp.dot(rel_rec_t, m.astype(jnp.bfloat16),
                       preferred_element_type=jnp.float32)          # (BT*V, ET*H)
        # out_fc1 on cat([h, agg]); sum over edge types absorbed via stacked-K weights
        wo1 = ow1_ref[l]                                            # ((1+ET)*H, H)
        p = jnp.maximum(_bdot(h, wo1[:N_HID]) + _bdot(aggw, wo1[N_HID:])
                        + ob_ref[l, 0], 0.0)
        p = jnp.maximum(_bdot(p, ow2_ref[l]) + ob_ref[l, 1], 0.0)
        h = h + p                                                   # residual

    o_ref[...] = _bdot(h, wout_ref[...]) + bout_ref[...]            # out_w_ode


# ================================ host wrapper ================================
def nri_forward(params, x, rel_type, rel_rec, rel_send):
    Bc, Vc, _ = x.shape
    assert Bc % BT == 0, "demo wrapper assumes batch divisible by BT"
    bf16 = jnp.bfloat16

    # ---- host-side data prep (layout plumbing, no compute hoisting) ----
    x_flat = x.reshape(Bc * Vc, IN_DIM)

    # lane-dense per-edge-type mask: mask[b*E+e, i*H:(i+1)*H] = rel_type[b, e, i]
    mask = jnp.repeat(rel_type, N_HID, axis=-1).reshape(Bc * E, WH).astype(jnp.float32)

    # block-diagonal relation matrices over the BT batch tile (0/1 -> exact in bf16)
    eye_bt = jnp.eye(BT, dtype=jnp.float32)
    rel_rec_bd = jnp.kron(eye_bt, rel_rec)                 # (BT*E, BT*V)
    rel_send_bd = jnp.kron(eye_bt, rel_send)               # (BT*E, BT*V)
    rel = jnp.stack([rel_rec_bd, rel_send_bd]).astype(bf16)
    rel_rec_t_bd = rel_rec_bd.T.astype(bf16)               # (BT*V, BT*E)

    # msg_fc1: concat over edge types along N; index 0 = send part, 1 = recv part
    mw1 = jnp.stack([
        jnp.concatenate([params["w1s"][:, i] for i in range(EDGE_TYPES)], axis=-1),
        jnp.concatenate([params["w1r"][:, i] for i in range(EDGE_TYPES)], axis=-1),
    ], axis=1).astype(bf16)                                # (L, 2, H, ET*H)
    mb = jnp.stack([
        jnp.concatenate([params["b1"][:, i] for i in range(EDGE_TYPES)], axis=-1),
        jnp.concatenate([params["b2"][:, i] for i in range(EDGE_TYPES)], axis=-1),
    ], axis=1).astype(jnp.float32)                         # (L, 2, 1, ET*H)

    # msg_fc2: block-diagonal over edge types
    mw2 = jnp.zeros((N_LAYERS, WH, WH), jnp.float32)
    for i in range(EDGE_TYPES):
        mw2 = mw2.at[:, i * N_HID:(i + 1) * N_HID, i * N_HID:(i + 1) * N_HID].set(
            params["w2"][:, i])
    mw2 = mw2.astype(bf16)                                 # (L, ET*H, ET*H)

    # out_fc1: [Wo1_x ; Wo1_agg ; Wo1_agg] stacked along K (sum over edge types)
    ow1 = jnp.concatenate([params["wo1x"]] + [params["wo1m"]] * EDGE_TYPES,
                          axis=1).astype(bf16)             # (L, (1+ET)*H, H)
    ob = jnp.stack([params["bo1"], params["bo2"]], axis=1).astype(jnp.float32)
    ow2 = params["wo2"].astype(bf16)

    wa = params["adapt_w"].astype(bf16)
    lnb = jnp.stack([params["adapt_b"], params["ln_gamma"], params["ln_beta"]],
                    axis=0).astype(jnp.float32)            # (3, 1, H)
    wout = params["out_w"].astype(bf16)
    bout = params["out_b"].astype(jnp.float32)

    def const(shape):
        nd = len(shape)
        return pl.BlockSpec(shape, lambda b, nd=nd: (0,) * nd)

    in_specs = [
        pl.BlockSpec((BT * V, IN_DIM), lambda b: (b, 0)),    # x_flat
        pl.BlockSpec((BT * E, WH), lambda b: (b, 0)),        # rel_type lane-dense mask
        const((2, BT * E, BT * V)),                          # rel_rec / rel_send (bd)
        const((BT * V, BT * E)),                             # rel_rec^T (bd)
        const((IN_DIM, N_HID)),                              # adapt_ws weight
        const((3, 1, N_HID)),                                # [adapt_b; ln_gamma; ln_beta]
        const((N_LAYERS, 2, N_HID, WH)),                     # msg_fc1 (send/recv, fused N)
        const((N_LAYERS, 2, 1, WH)),                         # msg biases (b1, b2)
        const((N_LAYERS, WH, WH)),                           # msg_fc2 block-diag
        const((N_LAYERS, (1 + EDGE_TYPES) * N_HID, N_HID)),  # out_fc1 packed K
        const((N_LAYERS, 2, 1, N_HID)),                      # out biases (bo1, bo2)
        const((N_LAYERS, N_HID, N_HID)),                     # out_fc2
        const((N_HID, OUT_DIM)),                             # out_w_ode weight
        const((1, OUT_DIM)),                                 # out_w_ode bias
    ]

    out_flat = pl.pallas_call(
        _nri_kernel,
        grid=(Bc // BT,),
        in_specs=in_specs,
        out_specs=pl.BlockSpec((BT * V, OUT_DIM), lambda b: (b, 0)),
        out_shape=jax.ShapeDtypeStruct((Bc * V, OUT_DIM), jnp.float32),
        compiler_params=pltpu.CompilerParams(dimension_semantics=("parallel",)),
    )(x_flat, mask, rel, rel_rec_t_bd,
      wa, lnb, mw1, mb, mw2, ow1, ob, ow2, wout, bout)

    return out_flat.reshape(Bc, Vc, OUT_DIM)


# =============================== pure-JAX reference ===========================
def reference_forward(params, x, rel_type, rel_rec, rel_send):
    h0 = jax.nn.relu(jnp.einsum("bvi,io->bvo", x, params["adapt_w"]) + params["adapt_b"])
    m = jnp.mean(h0, -1, keepdims=True)
    v = jnp.mean((h0 - m) ** 2, -1, keepdims=True)
    h = (h0 - m) * jax.lax.rsqrt(v + LN_EPS) * params["ln_gamma"] + params["ln_beta"]

    for l in range(N_LAYERS):
        recv = jnp.einsum("ev,bvd->bed", rel_rec, h)
        send = jnp.einsum("ev,bvd->bed", rel_send, h)
        pre_msg = jnp.concatenate([send, recv], axis=-1)
        all_msgs = jnp.zeros((x.shape[0], E, N_HID), jnp.float32)
        for i in range(EDGE_TYPES):
            w1 = jnp.concatenate([params["w1s"][l, i], params["w1r"][l, i]], axis=0)
            msg = jax.nn.relu(pre_msg @ w1 + params["b1"][l, i])
            msg = jax.nn.relu(msg @ params["w2"][l, i] + params["b2"][l, i])
            all_msgs = all_msgs + msg * rel_type[:, :, i:i + 1]
        agg = jnp.einsum("ev,bed->bvd", rel_rec, all_msgs)
        aug = jnp.concatenate([h, agg], axis=-1)
        wo1 = jnp.concatenate([params["wo1x"][l], params["wo1m"][l]], axis=0)
        pred = jax.nn.relu(aug @ wo1 + params["bo1"][l])
        pred = jax.nn.relu(pred @ params["wo2"][l] + params["bo2"][l])
        h = h + pred

    return h @ params["out_w"] + params["out_b"]


# ==================================== params ==================================
def init_params(key):
    ks = jax.random.split(key, 14)
    nrm = lambda k, shape, s=0.1: s * jax.random.normal(k, shape, dtype=jnp.float32)
    return {
        "adapt_w": nrm(ks[0], (IN_DIM, N_HID)),
        "adapt_b": nrm(ks[1], (1, N_HID), 0.05),
        "ln_gamma": jnp.ones((1, N_HID), jnp.float32),
        "ln_beta": jnp.zeros((1, N_HID), jnp.float32),
        "w1s": nrm(ks[2], (N_LAYERS, EDGE_TYPES, N_HID, N_HID)),
        "w1r": nrm(ks[3], (N_LAYERS, EDGE_TYPES, N_HID, N_HID)),
        "b1": nrm(ks[4], (N_LAYERS, EDGE_TYPES, 1, N_HID), 0.05),
        "w2": nrm(ks[5], (N_LAYERS, EDGE_TYPES, N_HID, N_HID)),
        "b2": nrm(ks[6], (N_LAYERS, EDGE_TYPES, 1, N_HID), 0.05),
        "wo1x": nrm(ks[7], (N_LAYERS, N_HID, N_HID)),
        "wo1m": nrm(ks[8], (N_LAYERS, N_HID, N_HID)),
        "bo1": nrm(ks[9], (N_LAYERS, 1, N_HID), 0.05),
        "wo2": nrm(ks[10], (N_LAYERS, N_HID, N_HID)),
        "bo2": nrm(ks[11], (N_LAYERS, 1, N_HID), 0.05),
        "out_w": nrm(ks[12], (N_HID, OUT_DIM)),
        "out_b": nrm(ks[13], (1, OUT_DIM), 0.05),
    }


# ===================================== main ===================================
if __name__ == "__main__":
    key = jax.random.PRNGKey(0)
    kp, kx, kt = jax.random.split(key, 3)
    params = init_params(kp)

    # fully-connected directed relation graph without self loops (standard NRI setup)
    off_diag = np.ones((V, V), dtype=np.float32) - np.eye(V, dtype=np.float32)
    recv_idx, send_idx = np.where(off_diag)
    eye_v = np.eye(V, dtype=np.float32)
    rel_rec = jnp.asarray(eye_v[recv_idx])     # (E, V)
    rel_send = jnp.asarray(eye_v[send_idx])    # (E, V)

    x = jax.random.normal(kx, (B, V, IN_DIM), dtype=jnp.float32)
    rel_type = jax.nn.softmax(
        jax.random.normal(kt, (B, E, EDGE_TYPES), dtype=jnp.float32), axis=-1)

    out = nri_forward(params, x, rel_type, rel_rec, rel_send)
    jax.block_until_ready(out)

    ref = reference_forward(params, x, rel_type, rel_rec, rel_send)
    assert out.shape == (B, V, OUT_DIM)
    # Kernel uses bf16 MXU operands with f32 accumulation; reference is f32.
    np.testing.assert_allclose(np.asarray(out), np.asarray(ref), atol=5e-2, rtol=5e-2)
    print("KERNEL_OK")
</pallas_src>

<mosaic_0001>
module attributes {stable_mosaic.version = 11 : i64} {
  func.func @_nri_kernel(%arg0: i32, %arg1: memref<64x4xf32, #tpu.memory_space<vmem>>, %arg2: memref<448x64xf32, #tpu.memory_space<vmem>>, %arg3: memref<2x448x64xbf16, #tpu.memory_space<vmem>>, %arg4: memref<64x448xbf16, #tpu.memory_space<vmem>>, %arg5: memref<4x32xbf16, #tpu.memory_space<vmem>>, %arg6: memref<3x1x32xf32, #tpu.memory_space<vmem>>, %arg7: memref<2x2x32x64xbf16, #tpu.memory_space<vmem>>, %arg8: memref<2x2x1x64xf32, #tpu.memory_space<vmem>>, %arg9: memref<2x64x64xbf16, #tpu.memory_space<vmem>>, %arg10: memref<2x96x32xbf16, #tpu.memory_space<vmem>>, %arg11: memref<2x2x1x32xf32, #tpu.memory_space<vmem>>, %arg12: memref<2x32x32xbf16, #tpu.memory_space<vmem>>, %arg13: memref<32x8xbf16, #tpu.memory_space<vmem>>, %arg14: memref<1x8xf32, #tpu.memory_space<vmem>>, %arg15: memref<64x8xf32, #tpu.memory_space<vmem>>) attributes {dimension_semantics = [#tpu.dimension_semantics<parallel>], iteration_bounds = array<i64: 2>, scalar_prefetch = 0 : i64, scratch_operands = 0 : i64, tpu.core_type = #tpu.core_type<tc>, window_params = [{transform_indices = @transform_0, window_bounds = array<i64: 64, 4>}, {transform_indices = @transform_1, window_bounds = array<i64: 448, 64>}, {pipeline_mode = #tpu.pipeline_mode<synchronous>, transform_indices = @transform_2, window_bounds = array<i64: 2, 448, 64>}, {pipeline_mode = #tpu.pipeline_mode<synchronous>, transform_indices = @transform_3, window_bounds = array<i64: 64, 448>}, {pipeline_mode = #tpu.pipeline_mode<synchronous>, transform_indices = @transform_4, window_bounds = array<i64: 4, 32>}, {pipeline_mode = #tpu.pipeline_mode<synchronous>, transform_indices = @transform_5, window_bounds = array<i64: 3, 1, 32>}, {pipeline_mode = #tpu.pipeline_mode<synchronous>, transform_indices = @transform_6, window_bounds = array<i64: 2, 2, 32, 64>}, {pipeline_mode = #tpu.pipeline_mode<synchronous>, transform_indices = @transform_7, window_bounds = array<i64: 2, 2, 1, 64>}, {pipeline_mode = #tpu.pipeline_mode<synchronous>, transform_indices = @transform_8, window_bounds = array<i64: 2, 64, 64>}, {pipeline_mode = #tpu.pipeline_mode<synchronous>, transform_indices = @transform_9, window_bounds = array<i64: 2, 96, 32>}, {pipeline_mode = #tpu.pipeline_mode<synchronous>, transform_indices = @transform_10, window_bounds = array<i64: 2, 2, 1, 32>}, {pipeline_mode = #tpu.pipeline_mode<synchronous>, transform_indices = @transform_11, window_bounds = array<i64: 2, 32, 32>}, {pipeline_mode = #tpu.pipeline_mode<synchronous>, transform_indices = @transform_12, window_bounds = array<i64: 32, 8>}, {pipeline_mode = #tpu.pipeline_mode<synchronous>, transform_indices = @transform_13, window_bounds = array<i64: 1, 8>}, {transform_indices = @transform_14, window_bounds = array<i64: 64, 8>}]} {
    %c0 = arith.constant 0 : index
    %c0_0 = arith.constant 0 : index
    %0 = vector.load %arg1[%c0, %c0_0] : memref<64x4xf32, #tpu.memory_space<vmem>>, vector<64x4xf32>
    %c0_1 = arith.constant 0 : index
    %c0_2 = arith.constant 0 : index
    %1 = vector.load %arg5[%c0_1, %c0_2] : memref<4x32xbf16, #tpu.memory_space<vmem>>, vector<4x32xbf16>
    %2 = arith.truncf %0 : vector<64x4xf32> to vector<64x4xbf16>
    %cst = arith.constant dense<0.000000e+00> : vector<64x32xf32>
    %3 = tpu.matmul %2, %1, %cst {dimension_numbers = #tpu.dot_dimension_numbers<[1], [0], [0], [1], [0, 0, 1, 1], [], []>} : vector<64x4xbf16>, vector<4x32xbf16>, vector<64x32xf32> -> vector<64x32xf32>
    %c0_3 = arith.constant 0 : index
    %c0_4 = arith.constant 0 : index
    %c0_5 = arith.constant 0 : index
    %4 = vector.load %arg6[%c0_3, %c0_4, %c0_5] : memref<3x1x32xf32, #tpu.memory_space<vmem>>, vector<1x1x32xf32>
    %5 = vector.shape_cast %4 : vector<1x1x32xf32> to vector<1x32xf32>
    %6 = vector.broadcast %5 : vector<1x32xf32> to vector<64x32xf32>
    %7 = arith.addf %3, %6 : vector<64x32xf32>
    %cst_6 = arith.constant 0.000000e+00 : f32
    %8 = vector.broadcast %cst_6 : f32 to vector<64x32xf32>
    %9 = arith.maximumf %7, %8 : vector<64x32xf32>
    %cst_7 = arith.constant dense<0.000000e+00> : vector<64xf32>
    %10 = vector.multi_reduction <add>, %9, %cst_7 [1] : vector<64x32xf32> to vector<64xf32>
    %11 = vector.shape_cast %10 : vector<64xf32> to vector<64x1xf32>
    %cst_8 = arith.constant 3.200000e+01 : f32
    %12 = vector.broadcast %cst_8 : f32 to vector<64x1xf32>
    %13 = arith.divf %11, %12 : vector<64x1xf32>
    %14 = vector.broadcast %13 : vector<64x1xf32> to vector<64x32xf32>
    %15 = arith.subf %9, %14 : vector<64x32xf32>
    %16 = arith.mulf %15, %15 : vector<64x32xf32>
    %cst_9 = arith.constant dense<0.000000e+00> : vector<64xf32>
    %17 = vector.multi_reduction <add>, %16, %cst_9 [1] : vector<64x32xf32> to vector<64xf32>
    %18 = vector.shape_cast %17 : vector<64xf32> to vector<64x1xf32>
    %cst_10 = arith.constant 3.200000e+01 : f32
    %19 = vector.broadcast %cst_10 : f32 to vector<64x1xf32>
    %20 = arith.divf %18, %19 : vector<64x1xf32>
    %21 = vector.broadcast %13 : vector<64x1xf32> to vector<64x32xf32>
    %22 = arith.subf %9, %21 : vector<64x32xf32>
    %cst_11 = arith.constant 9.99999974E-6 : f32
    %23 = vector.broadcast %cst_11 : f32 to vector<64x1xf32>
    %24 = arith.addf %20, %23 : vector<64x1xf32>
    %25 = math.rsqrt %24 : vector<64x1xf32>
    %26 = vector.broadcast %25 : vector<64x1xf32> to vector<64x32xf32>
    %27 = arith.mulf %22, %26 : vector<64x32xf32>
    %c1 = arith.constant 1 : index
    %c0_12 = arith.constant 0 : index
    %c0_13 = arith.constant 0 : index
    %28 = vector.load %arg6[%c1, %c0_12, %c0_13] : memref<3x1x32xf32, #tpu.memory_space<vmem>>, vector<1x1x32xf32>
    %29 = vector.shape_cast %28 : vector<1x1x32xf32> to vector<1x32xf32>
    %30 = vector.broadcast %29 : vector<1x32xf32> to vector<64x32xf32>
    %31 = arith.mulf %27, %30 : vector<64x32xf32>
    %c2 = arith.constant 2 : index
    %c0_14 = arith.constant 0 : index
    %c0_15 = arith.constant 0 : index
    %32 = vector.load %arg6[%c2, %c0_14, %c0_15] : memref<3x1x32xf32, #tpu.memory_space<vmem>>, vector<1x1x32xf32>
    %33 = vector.shape_cast %32 : vector<1x1x32xf32> to vector<1x32xf32>
    %34 = vector.broadcast %33 : vector<1x32xf32> to vector<64x32xf32>
    %35 = arith.addf %31, %34 : vector<64x32xf32>
    %c0_16 = arith.constant 0 : index
    %c0_17 = arith.constant 0 : index
    %c0_18 = arith.constant 0 : index
    %36 = vector.load %arg3[%c0_16, %c0_17, %c0_18] : memref<2x448x64xbf16, #tpu.memory_space<vmem>>, vector<1x448x64xbf16>
    %37 = vector.shape_cast %36 : vector<1x448x64xbf16> to vector<448x64xbf16>
    %c1_19 = arith.constant 1 : index
    %c0_20 = arith.constant 0 : index
    %c0_21 = arith.constant 0 : index
    %38 = vector.load %arg3[%c1_19, %c0_20, %c0_21] : memref<2x448x64xbf16, #tpu.memory_space<vmem>>, vector<1x448x64xbf16>
    %39 = vector.shape_cast %38 : vector<1x448x64xbf16> to vector<448x64xbf16>
    %c0_22 = arith.constant 0 : index
    %c0_23 = arith.constant 0 : index
    %40 = vector.load %arg4[%c0_22, %c0_23] : memref<64x448xbf16, #tpu.memory_space<vmem>>, vector<64x448xbf16>
    %c0_24 = arith.constant 0 : index
    %c0_25 = arith.constant 0 : index
    %41 = vector.load %arg2[%c0_24, %c0_25] : memref<448x64xf32, #tpu.memory_space<vmem>>, vector<448x64xf32>
    %42 = arith.truncf %35 : vector<64x32xf32> to vector<64x32xbf16>
    %cst_26 = arith.constant dense<0.000000e+00> : vector<448x32xf32>
    %43 = tpu.matmul %37, %42, %cst_26 {dimension_numbers = #tpu.dot_dimension_numbers<[1], [0], [0], [1], [0, 0, 1, 1], [], []>} : vector<448x64xbf16>, vector<64x32xbf16>, vector<448x32xf32> -> vector<448x32xf32>
    %cst_27 = arith.constant dense<0.000000e+00> : vector<448x32xf32>
    %44 = tpu.matmul %39, %42, %cst_27 {dimension_numbers = #tpu.dot_dimension_numbers<[1], [0], [0], [1], [0, 0, 1, 1], [], []>} : vector<448x64xbf16>, vector<64x32xbf16>, vector<448x32xf32> -> vector<448x32xf32>
    %c0_28 = arith.constant 0 : index
    %c0_29 = arith.constant 0 : index
    %c0_30 = arith.constant 0 : index
    %c0_31 = arith.constant 0 : index
    %45 = vector.load %arg7[%c0_28, %c0_29, %c0_30, %c0_31] : memref<2x2x32x64xbf16, #tpu.memory_space<vmem>>, vector<1x1x32x64xbf16>
    %46 = vector.shape_cast %45 : vector<1x1x32x64xbf16> to vector<32x64xbf16>
    %47 = arith.truncf %44 : vector<448x32xf32> to vector<448x32xbf16>
    %cst_32 = arith.constant dense<0.000000e+00> : vector<448x64xf32>
    %48 = tpu.matmul %47, %46, %cst_32 {dimension_numbers = #tpu.dot_dimension_numbers<[1], [0], [0], [1], [0, 0, 1, 1], [], []>} : vector<448x32xbf16>, vector<32x64xbf16>, vector<448x64xf32> -> vector<448x64xf32>
    %c0_33 = arith.constant 0 : index
    %c1_34 = arith.constant 1 : index
    %c0_35 = arith.constant 0 : index
    %c0_36 = arith.constant 0 : index
    %49 = vector.load %arg7[%c0_33, %c1_34, %c0_35, %c0_36] : memref<2x2x32x64xbf16, #tpu.memory_space<vmem>>, vector<1x1x32x64xbf16>
    %50 = vector.shape_cast %49 : vector<1x1x32x64xbf16> to vector<32x64xbf16>
    %51 = arith.truncf %43 : vector<448x32xf32> to vector<448x32xbf16>
    %cst_37 = arith.constant dense<0.000000e+00> : vector<448x64xf32>
    %52 = tpu.matmul %51, %50, %cst_37 {dimension_numbers = #tpu.dot_dimension_numbers<[1], [0], [0], [1], [0, 0, 1, 1], [], []>} : vector<448x32xbf16>, vector<32x64xbf16>, vector<448x64xf32> -> vector<448x64xf32>
    %53 = arith.addf %48, %52 : vector<448x64xf32>
    %c0_38 = arith.constant 0 : index
    %c0_39 = arith.constant 0 : index
    %c0_40 = arith.constant 0 : index
    %c0_41 = arith.constant 0 : index
    %54 = vector.load %arg8[%c0_38, %c0_39, %c0_40, %c0_41] : memref<2x2x1x64xf32, #tpu.memory_space<vmem>>, vector<1x1x1x64xf32>
    %55 = vector.shape_cast %54 : vector<1x1x1x64xf32> to vector<1x64xf32>
    %56 = vector.broadcast %55 : vector<1x64xf32> to vector<448x64xf32>
    %57 = arith.addf %53, %56 : vector<448x64xf32>
    %cst_42 = arith.constant 0.000000e+00 : f32
    %58 = vector.broadcast %cst_42 : f32 to vector<448x64xf32>
    %59 = arith.maximumf %57, %58 : vector<448x64xf32>
    %c0_43 = arith.constant 0 : index
    %c0_44 = arith.constant 0 : index
    %c0_45 = arith.constant 0 : index
    %60 = vector.load %arg9[%c0_43, %c0_44, %c0_45] : memref<2x64x64xbf16, #tpu.memory_space<vmem>>, vector<1x64x64xbf16>
    %61 = vector.shape_cast %60 : vector<1x64x64xbf16> to vector<64x64xbf16>
    %62 = arith.truncf %59 : vector<448x64xf32> to vector<448x64xbf16>
    %cst_46 = arith.constant dense<0.000000e+00> : vector<448x64xf32>
    %63 = tpu.matmul %62, %61, %cst_46 {dimension_numbers = #tpu.dot_dimension_numbers<[1], [0], [0], [1], [0, 0, 1, 1], [], []>} : vector<448x64xbf16>, vector<64x64xbf16>, vector<448x64xf32> -> vector<448x64xf32>
    %c0_47 = arith.constant 0 : index
    %c1_48 = arith.constant 1 : index
    %c0_49 = arith.constant 0 : index
    %c0_50 = arith.constant 0 : index
    %64 = vector.load %arg8[%c0_47, %c1_48, %c0_49, %c0_50] : memref<2x2x1x64xf32, #tpu.memory_space<vmem>>, vector<1x1x1x64xf32>
    %65 = vector.shape_cast %64 : vector<1x1x1x64xf32> to vector<1x64xf32>
    %66 = vector.broadcast %65 : vector<1x64xf32> to vector<448x64xf32>
    %67 = arith.addf %63, %66 : vector<448x64xf32>
    %cst_51 = arith.constant 0.000000e+00 : f32
    %68 = vector.broadcast %cst_51 : f32 to vector<448x64xf32>
    %69 = arith.maximumf %67, %68 : vector<448x64xf32>
    %70 = arith.mulf %69, %41 : vector<448x64xf32>
    %71 = arith.truncf %70 : vector<448x64xf32> to vector<448x64xbf16>
    %cst_52 = arith.constant dense<0.000000e+00> : vector<64x64xf32>
    %72 = tpu.matmul %40, %71, %cst_52 {dimension_numbers = #tpu.dot_dimension_numbers<[1], [0], [0], [1], [0, 0, 1, 1], [], []>} : vector<64x448xbf16>, vector<448x64xbf16>, vector<64x64xf32> -> vector<64x64xf32>
    %c0_53 = arith.constant 0 : index
    %c0_54 = arith.constant 0 : index
    %c0_55 = arith.constant 0 : index
    %73 = vector.load %arg10[%c0_53, %c0_54, %c0_55] : memref<2x96x32xbf16, #tpu.memory_space<vmem>>, vector<1x96x32xbf16>
    %74 = vector.shape_cast %73 : vector<1x96x32xbf16> to vector<96x32xbf16>
    %75 = vector.extract_strided_slice %74 {offsets = [0, 0], sizes = [32, 32], strides = [1, 1]} : vector<96x32xbf16> to vector<32x32xbf16>
    %76 = arith.truncf %35 : vector<64x32xf32> to vector<64x32xbf16>
    %cst_56 = arith.constant dense<0.000000e+00> : vector<64x32xf32>
    %77 = tpu.matmul %76, %75, %cst_56 {dimension_numbers = #tpu.dot_dimension_numbers<[1], [0], [0], [1], [0, 0, 1, 1], [], []>} : vector<64x32xbf16>, vector<32x32xbf16>, vector<64x32xf32> -> vector<64x32xf32>
    %78 = vector.extract_strided_slice %74 {offsets = [32, 0], sizes = [64, 32], strides = [1, 1]} : vector<96x32xbf16> to vector<64x32xbf16>
    %79 = arith.truncf %72 : vector<64x64xf32> to vector<64x64xbf16>
    %cst_57 = arith.constant dense<0.000000e+00> : vector<64x32xf32>
    %80 = tpu.matmul %79, %78, %cst_57 {dimension_numbers = #tpu.dot_dimension_numbers<[1], [0], [0], [1], [0, 0, 1, 1], [], []>} : vector<64x64xbf16>, vector<64x32xbf16>, vector<64x32xf32> -> vector<64x32xf32>
    %81 = arith.addf %77, %80 : vector<64x32xf32>
    %c0_58 = arith.constant 0 : index
    %c0_59 = arith.constant 0 : index
    %c0_60 = arith.constant 0 : index
    %c0_61 = arith.constant 0 : index
    %82 = vector.load %arg11[%c0_58, %c0_59, %c0_60, %c0_61] : memref<2x2x1x32xf32, #tpu.memory_space<vmem>>, vector<1x1x1x32xf32>
    %83 = vector.shape_cast %82 : vector<1x1x1x32xf32> to vector<1x32xf32>
    %84 = vector.broadcast %83 : vector<1x32xf32> to vector<64x32xf32>
    %85 = arith.addf %81, %84 : vector<64x32xf32>
    %cst_62 = arith.constant 0.000000e+00 : f32
    %86 = vector.broadcast %cst_62 : f32 to vector<64x32xf32>
    %87 = arith.maximumf %85, %86 : vector<64x32xf32>
    %c0_63 = arith.constant 0 : index
    %c0_64 = arith.constant 0 : index
    %c0_65 = arith.constant 0 : index
    %88 = vector.load %arg12[%c0_63, %c0_64, %c0_65] : memref<2x32x32xbf16, #tpu.memory_space<vmem>>, vector<1x32x32xbf16>
    %89 = vector.shape_cast %88 : vector<1x32x32xbf16> to vector<32x32xbf16>
    %90 = arith.truncf %87 : vector<64x32xf32> to vector<64x32xbf16>
    %cst_66 = arith.constant dense<0.000000e+00> : vector<64x32xf32>
    %91 = tpu.matmul %90, %89, %cst_66 {dimension_numbers = #tpu.dot_dimension_numbers<[1], [0], [0], [1], [0, 0, 1, 1], [], []>} : vector<64x32xbf16>, vector<32x32xbf16>, vector<64x32xf32> -> vector<64x32xf32>
    %c0_67 = arith.constant 0 : index
    %c1_68 = arith.constant 1 : index
    %c0_69 = arith.constant 0 : index
    %c0_70 = arith.constant 0 : index
    %92 = vector.load %arg11[%c0_67, %c1_68, %c0_69, %c0_70] : memref<2x2x1x32xf32, #tpu.memory_space<vmem>>, vector<1x1x1x32xf32>
    %93 = vector.shape_cast %92 : vector<1x1x1x32xf32> to vector<1x32xf32>
    %94 = vector.broadcast %93 : vector<1x32xf32> to vector<64x32xf32>
    %95 = arith.addf %91, %94 : vector<64x32xf32>
    %cst_71 = arith.constant 0.000000e+00 : f32
    %96 = vector.broadcast %cst_71 : f32 to vector<64x32xf32>
    %97 = arith.maximumf %95, %96 : vector<64x32xf32>
    %98 = arith.addf %35, %97 : vector<64x32xf32>
    %99 = arith.truncf %98 : vector<64x32xf32> to vector<64x32xbf16>
    %cst_72 = arith.constant dense<0.000000e+00> : vector<448x32xf32>
    %100 = tpu.matmul %37, %99, %cst_72 {dimension_numbers = #tpu.dot_dimension_numbers<[1], [0], [0], [1], [0, 0, 1, 1], [], []>} : vector<448x64xbf16>, vector<64x32xbf16>, vector<448x32xf32> -> vector<448x32xf32>
    %cst_73 = arith.constant dense<0.000000e+00> : vector<448x32xf32>
    %101 = tpu.matmul %39, %99, %cst_73 {dimension_numbers = #tpu.dot_dimension_numbers<[1], [0], [0], [1], [0, 0, 1, 1], [], []>} : vector<448x64xbf16>, vector<64x32xbf16>, vector<448x32xf32> -> vector<448x32xf32>
    %c1_74 = arith.constant 1 : index
    %c0_75 = arith.constant 0 : index
    %c0_76 = arith.constant 0 : index
    %c0_77 = arith.constant 0 : index
    %102 = vector.load %arg7[%c1_74, %c0_75, %c0_76, %c0_77] : memref<2x2x32x64xbf16, #tpu.memory_space<vmem>>, vector<1x1x32x64xbf16>
    %103 = vector.shape_cast %102 : vector<1x1x32x64xbf16> to vector<32x64xbf16>
    %104 = arith.truncf %101 : vector<448x32xf32> to vector<448x32xbf16>
    %cst_78 = arith.constant dense<0.000000e+00> : vector<448x64xf32>
    %105 = tpu.matmul %104, %103, %cst_78 {dimension_numbers = #tpu.dot_dimension_numbers<[1], [0], [0], [1], [0, 0, 1, 1], [], []>} : vector<448x32xbf16>, vector<32x64xbf16>, vector<448x64xf32> -> vector<448x64xf32>
    %c1_79 = arith.constant 1 : index
    %c1_80 = arith.constant 1 : index
    %c0_81 = arith.constant 0 : index
    %c0_82 = arith.constant 0 : index
    %106 = vector.load %arg7[%c1_79, %c1_80, %c0_81, %c0_82] : memref<2x2x32x64xbf16, #tpu.memory_space<vmem>>, vector<1x1x32x64xbf16>
    %107 = vector.shape_cast %106 : vector<1x1x32x64xbf16> to vector<32x64xbf16>
    %108 = arith.truncf %100 : vector<448x32xf32> to vector<448x32xbf16>
    %cst_83 = arith.constant dense<0.000000e+00> : vector<448x64xf32>
    %109 = tpu.matmul %108, %107, %cst_83 {dimension_numbers = #tpu.dot_dimension_numbers<[1], [0], [0], [1], [0, 0, 1, 1], [], []>} : vector<448x32xbf16>, vector<32x64xbf16>, vector<448x64xf32> -> vector<448x64xf32>
    %110 = arith.addf %105, %109 : vector<448x64xf32>
    %c1_84 = arith.constant 1 : index
    %c0_85 = arith.constant 0 : index
    %c0_86 = arith.constant 0 : index
    %c0_87 = arith.constant 0 : index
    %111 = vector.load %arg8[%c1_84, %c0_85, %c0_86, %c0_87] : memref<2x2x1x64xf32, #tpu.memory_space<vmem>>, vector<1x1x1x64xf32>
    %112 = vector.shape_cast %111 : vector<1x1x1x64xf32> to vector<1x64xf32>
    %113 = vector.broadcast %112 : vector<1x64xf32> to vector<448x64xf32>
    %114 = arith.addf %110, %113 : vector<448x64xf32>
    %cst_88 = arith.constant 0.000000e+00 : f32
    %115 = vector.broadcast %cst_88 : f32 to vector<448x64xf32>
    %116 = arith.maximumf %114, %115 : vector<448x64xf32>
    %c1_89 = arith.constant 1 : index
    %c0_90 = arith.constant 0 : index
    %c0_91 = arith.constant 0 : index
    %117 = vector.load %arg9[%c1_89, %c0_90, %c0_91] : memref<2x64x64xbf16, #tpu.memory_space<vmem>>, vector<1x64x64xbf16>
    %118 = vector.shape_cast %117 : vector<1x64x64xbf16> to vector<64x64xbf16>
    %119 = arith.truncf %116 : vector<448x64xf32> to vector<448x64xbf16>
    %cst_92 = arith.constant dense<0.000000e+00> : vector<448x64xf32>
    %120 = tpu.matmul %119, %118, %cst_92 {dimension_numbers = #tpu.dot_dimension_numbers<[1], [0], [0], [1], [0, 0, 1, 1], [], []>} : vector<448x64xbf16>, vector<64x64xbf16>, vector<448x64xf32> -> vector<448x64xf32>
    %c1_93 = arith.constant 1 : index
    %c1_94 = arith.constant 1 : index
    %c0_95 = arith.constant 0 : index
    %c0_96 = arith.constant 0 : index
    %121 = vector.load %arg8[%c1_93, %c1_94, %c0_95, %c0_96] : memref<2x2x1x64xf32, #tpu.memory_space<vmem>>, vector<1x1x1x64xf32>
    %122 = vector.shape_cast %121 : vector<1x1x1x64xf32> to vector<1x64xf32>
    %123 = vector.broadcast %122 : vector<1x64xf32> to vector<448x64xf32>
    %124 = arith.addf %120, %123 : vector<448x64xf32>
    %cst_97 = arith.constant 0.000000e+00 : f32
    %125 = vector.broadcast %cst_97 : f32 to vector<448x64xf32>
    %126 = arith.maximumf %124, %125 : vector<448x64xf32>
    %127 = arith.mulf %126, %41 : vector<448x64xf32>
    %128 = arith.truncf %127 : vector<448x64xf32> to vector<448x64xbf16>
    %cst_98 = arith.constant dense<0.000000e+00> : vector<64x64xf32>
    %129 = tpu.matmul %40, %128, %cst_98 {dimension_numbers = #tpu.dot_dimension_numbers<[1], [0], [0], [1], [0, 0, 1, 1], [], []>} : vector<64x448xbf16>, vector<448x64xbf16>, vector<64x64xf32> -> vector<64x64xf32>
    %c1_99 = arith.constant 1 : index
    %c0_100 = arith.constant 0 : index
    %c0_101 = arith.constant 0 : index
    %130 = vector.load %arg10[%c1_99, %c0_100, %c0_101] : memref<2x96x32xbf16, #tpu.memory_space<vmem>>, vector<1x96x32xbf16>
    %131 = vector.shape_cast %130 : vector<1x96x32xbf16> to vector<96x32xbf16>
    %132 = vector.extract_strided_slice %131 {offsets = [0, 0], sizes = [32, 32], strides = [1, 1]} : vector<96x32xbf16> to vector<32x32xbf16>
    %133 = arith.truncf %98 : vector<64x32xf32> to vector<64x32xbf16>
    %cst_102 = arith.constant dense<0.000000e+00> : vector<64x32xf32>
    %134 = tpu.matmul %133, %132, %cst_102 {dimension_numbers = #tpu.dot_dimension_numbers<[1], [0], [0], [1], [0, 0, 1, 1], [], []>} : vector<64x32xbf16>, vector<32x32xbf16>, vector<64x32xf32> -> vector<64x32xf32>
    %135 = vector.extract_strided_slice %131 {offsets = [32, 0], sizes = [64, 32], strides = [1, 1]} : vector<96x32xbf16> to vector<64x32xbf16>
    %136 = arith.truncf %129 : vector<64x64xf32> to vector<64x64xbf16>
    %cst_103 = arith.constant dense<0.000000e+00> : vector<64x32xf32>
    %137 = tpu.matmul %136, %135, %cst_103 {dimension_numbers = #tpu.dot_dimension_numbers<[1], [0], [0], [1], [0, 0, 1, 1], [], []>} : vector<64x64xbf16>, vector<64x32xbf16>, vector<64x32xf32> -> vector<64x32xf32>
    %138 = arith.addf %134, %137 : vector<64x32xf32>
    %c1_104 = arith.constant 1 : index
    %c0_105 = arith.constant 0 : index
    %c0_106 = arith.constant 0 : index
    %c0_107 = arith.constant 0 : index
    %139 = vector.load %arg11[%c1_104, %c0_105, %c0_106, %c0_107] : memref<2x2x1x32xf32, #tpu.memory_space<vmem>>, vector<1x1x1x32xf32>
    %140 = vector.shape_cast %139 : vector<1x1x1x32xf32> to vector<1x32xf32>
    %141 = vector.broadcast %140 : vector<1x32xf32> to vector<64x32xf32>
    %142 = arith.addf %138, %141 : vector<64x32xf32>
    %cst_108 = arith.constant 0.000000e+00 : f32
    %143 = vector.broadcast %cst_108 : f32 to vector<64x32xf32>
    %144 = arith.maximumf %142, %143 : vector<64x32xf32>
    %c1_109 = arith.constant 1 : index
    %c0_110 = arith.constant 0 : index
    %c0_111 = arith.constant 0 : index
    %145 = vector.load %arg12[%c1_109, %c0_110, %c0_111] : memref<2x32x32xbf16, #tpu.memory_space<vmem>>, vector<1x32x32xbf16>
    %146 = vector.shape_cast %145 : vector<1x32x32xbf16> to vector<32x32xbf16>
    %147 = arith.truncf %144 : vector<64x32xf32> to vector<64x32xbf16>
    %cst_112 = arith.constant dense<0.000000e+00> : vector<64x32xf32>
    %148 = tpu.matmul %147, %146, %cst_112 {dimension_numbers = #tpu.dot_dimension_numbers<[1], [0], [0], [1], [0, 0, 1, 1], [], []>} : vector<64x32xbf16>, vector<32x32xbf16>, vector<64x32xf32> -> vector<64x32xf32>
    %c1_113 = arith.constant 1 : index
    %c1_114 = arith.constant 1 : index
    %c0_115 = arith.constant 0 : index
    %c0_116 = arith.constant 0 : index
    %149 = vector.load %arg11[%c1_113, %c1_114, %c0_115, %c0_116] : memref<2x2x1x32xf32, #tpu.memory_space<vmem>>, vector<1x1x1x32xf32>
    %150 = vector.shape_cast %149 : vector<1x1x1x32xf32> to vector<1x32xf32>
    %151 = vector.broadcast %150 : vector<1x32xf32> to vector<64x32xf32>
    %152 = arith.addf %148, %151 : vector<64x32xf32>
    %cst_117 = arith.constant 0.000000e+00 : f32
    %153 = vector.broadcast %cst_117 : f32 to vector<64x32xf32>
    %154 = arith.maximumf %152, %153 : vector<64x32xf32>
    %155 = arith.addf %98, %154 : vector<64x32xf32>
    %c0_118 = arith.constant 0 : index
    %c0_119 = arith.constant 0 : index
    %156 = vector.load %arg13[%c0_118, %c0_119] : memref<32x8xbf16, #tpu.memory_space<vmem>>, vector<32x8xbf16>
    %157 = arith.truncf %155 : vector<64x32xf32> to vector<64x32xbf16>
    %cst_120 = arith.constant dense<0.000000e+00> : vector<64x8xf32>
    %158 = tpu.matmul %157, %156, %cst_120 {dimension_numbers = #tpu.dot_dimension_numbers<[1], [0], [0], [1], [0, 0, 1, 1], [], []>} : vector<64x32xbf16>, vector<32x8xbf16>, vector<64x8xf32> -> vector<64x8xf32>
    %c0_121 = arith.constant 0 : index
    %c0_122 = arith.constant 0 : index
    %159 = vector.load %arg14[%c0_121, %c0_122] : memref<1x8xf32, #tpu.memory_space<vmem>>, vector<1x8xf32>
    %160 = vector.broadcast %159 : vector<1x8xf32> to vector<64x8xf32>
    %161 = arith.addf %158, %160 : vector<64x8xf32>
    %c0_123 = arith.constant 0 : index
    %c0_124 = arith.constant 0 : index
    %162 = vector.load %arg15[%c0_123, %c0_124] : memref<64x8xf32, #tpu.memory_space<vmem>>, vector<64x8xf32>
    tpu.vector_store %arg15[%c0_123, %c0_124], %161 {strides = array<i32>} : memref<64x8xf32, #tpu.memory_space<vmem>>, vector<64x8xf32>,
    return
  }
  func.func @transform_0(%arg0: i32) -> (i32, i32) {
    %c0_i32 = arith.constant 0 : i32
    %c0_i32_0 = arith.constant 0 : i32
    return %arg0, %c0_i32 : i32, i32
  }
  func.func @transform_1(%arg0: i32) -> (i32, i32) {
    %c0_i32 = arith.constant 0 : i32
    %c0_i32_0 = arith.constant 0 : i32
    return %arg0, %c0_i32 : i32, i32
  }
  func.func @transform_2(%arg0: i32) -> (i32, i32, i32) {
    %c0_i32 = arith.constant 0 : i32
    %c0_i32_0 = arith.constant 0 : i32
    %c0_i32_1 = arith.constant 0 : i32
    %c0_i32_2 = arith.constant 0 : i32
    return %c0_i32, %c0_i32_0, %c0_i32_1 : i32, i32, i32
  }
  func.func @transform_3(%arg0: i32) -> (i32, i32) {
    %c0_i32 = arith.constant 0 : i32
    %c0_i32_0 = arith.constant 0 : i32
    %c0_i32_1 = arith.constant 0 : i32
    return %c0_i32, %c0_i32_0 : i32, i32
  }
  func.func @transform_4(%arg0: i32) -> (i32, i32) {
    %c0_i32 = arith.constant 0 : i32
    %c0_i32_0 = arith.constant 0 : i32
    %c0_i32_1 = arith.constant 0 : i32
    return %c0_i32, %c0_i32_0 : i32, i32
  }
  func.func @transform_5(%arg0: i32) -> (i32, i32, i32) {
    %c0_i32 = arith.constant 0 : i32
    %c0_i32_0 = arith.constant 0 : i32
    %c0_i32_1 = arith.constant 0 : i32
    %c0_i32_2 = arith.constant 0 : i32
    return %c0_i32, %c0_i32_0, %c0_i32_1 : i32, i32, i32
  }
  func.func @transform_6(%arg0: i32) -> (i32, i32, i32, i32) {
    %c0_i32 = arith.constant 0 : i32
    %c0_i32_0 = arith.constant 0 : i32
    %c0_i32_1 = arith.constant 0 : i32
    %c0_i32_2 = arith.constant 0 : i32
    %c0_i32_3 = arith.constant 0 : i32
    return %c0_i32, %c0_i32_0, %c0_i32_1, %c0_i32_2 : i32, i32, i32, i32
  }
  func.func @transform_7(%arg0: i32) -> (i32, i32, i32, i32) {
    %c0_i32 = arith.constant 0 : i32
    %c0_i32_0 = arith.constant 0 : i32
    %c0_i32_1 = arith.constant 0 : i32
    %c0_i32_2 = arith.constant 0 : i32
    %c0_i32_3 = arith.constant 0 : i32
    return %c0_i32, %c0_i32_0, %c0_i32_1, %c0_i32_2 : i32, i32, i32, i32
  }
  func.func @transform_8(%arg0: i32) -> (i32, i32, i32) {
    %c0_i32 = arith.constant 0 : i32
    %c0_i32_0 = arith.constant 0 : i32
    %c0_i32_1 = arith.constant 0 : i32
    %c0_i32_2 = arith.constant 0 : i32
    return %c0_i32, %c0_i32_0, %c0_i32_1 : i32, i32, i32
  }
  func.func @transform_9(%arg0: i32) -> (i32, i32, i32) {
    %c0_i32 = arith.constant 0 : i32
    %c0_i32_0 = arith.constant 0 : i32
    %c0_i32_1 = arith.constant 0 : i32
    %c0_i32_2 = arith.constant 0 : i32
    return %c0_i32, %c0_i32_0, %c0_i32_1 : i32, i32, i32
  }
  func.func @transform_10(%arg0: i32) -> (i32, i32, i32, i32) {
    %c0_i32 = arith.constant 0 : i32
    %c0_i32_0 = arith.constant 0 : i32
    %c0_i32_1 = arith.constant 0 : i32
    %c0_i32_2 = arith.constant 0 : i32
    %c0_i32_3 = arith.constant 0 : i32
    return %c0_i32, %c0_i32_0, %c0_i32_1, %c0_i32_2 : i32, i32, i32, i32
  }
  func.func @transform_11(%arg0: i32) -> (i32, i32, i32) {
    %c0_i32 = arith.constant 0 : i32
    %c0_i32_0 = arith.constant 0 : i32
    %c0_i32_1 = arith.constant 0 : i32
    %c0_i32_2 = arith.constant 0 : i32
    return %c0_i32, %c0_i32_0, %c0_i32_1 : i32, i32, i32
  }
  func.func @transform_12(%arg0: i32) -> (i32, i32) {
    %c0_i32 = arith.constant 0 : i32
    %c0_i32_0 = arith.constant 0 : i32
    %c0_i32_1 = arith.constant 0 : i32
    return %c0_i32, %c0_i32_0 : i32, i32
  }
  func.func @transform_13(%arg0: i32) -> (i32, i32) {
    %c0_i32 = arith.constant 0 : i32
    %c0_i32_0 = arith.constant 0 : i32
    %c0_i32_1 = arith.constant 0 : i32
    return %c0_i32, %c0_i32_0 : i32, i32
  }
  func.func @transform_14(%arg0: i32) -> (i32, i32) {
    %c0_i32 = arith.constant 0 : i32
    %c0_i32_0 = arith.constant 0 : i32
    return %arg0, %c0_i32 : i32, i32
  }
}

</mosaic_0001>

<llo_original>
// kernel: tpu_custom_call.1
$region0: #{tpu_custom_call.1}
  #allocation0 [shape = 'u32[]', space=smem, size = 0x4, offset = 0x4, fixed_abs, tag = 'smem constant byte address 0x4 - core index']
  #allocation1 [shape = 'u32[144,128]{1,0:T(1,128)}', space=vmem, size = 0x12000, scoped, tag = 'internal scratch']
  %s0 = inlined_call_operand.vmem [shape: f32[128,4], index: 0, kind: input, shape index: {}]
  %s1 = inlined_call_operand.vmem [shape: f32[896,64], index: 1, kind: input, shape index: {}]
  %s2 = inlined_call_operand.vmem [shape: bf16[2,448,64], index: 2, kind: input, shape index: {}]
  %s3 = inlined_call_operand.vmem [shape: bf16[64,448], index: 3, kind: input, shape index: {}]
  %s4 = inlined_call_operand.vmem [shape: bf16[4,32], index: 4, kind: input, shape index: {}]
  %s5 = inlined_call_operand.vmem [shape: f32[3,1,32], index: 5, kind: input, shape index: {}]
  %s6 = inlined_call_operand.vmem [shape: bf16[2,2,32,64], index: 6, kind: input, shape index: {}]
  %s7 = inlined_call_operand.vmem [shape: f32[2,2,1,64], index: 7, kind: input, shape index: {}]
  %s8 = inlined_call_operand.vmem [shape: bf16[2,64,64], index: 8, kind: input, shape index: {}]
  %s9 = inlined_call_operand.vmem [shape: bf16[2,96,32], index: 9, kind: input, shape index: {}]
  %s10 = inlined_call_operand.vmem [shape: f32[2,2,1,32], index: 10, kind: input, shape index: {}]
  %s11 = inlined_call_operand.vmem [shape: bf16[2,32,32], index: 11, kind: input, shape index: {}]
  %s12 = inlined_call_operand.vmem [shape: bf16[32,8], index: 12, kind: input, shape index: {}]
  %s13 = inlined_call_operand.vmem [shape: f32[1,8], index: 13, kind: input, shape index: {}]
  %s14 = inlined_call_operand.vmem [shape: f32[128,8], index: 14, kind: output, shape index: {}]
  %s15 = sld [smem:[#allocation0]]
  $region89: #{tpu_custom_call.1} parent=0
    _
  %s17 = ssub.s32 1, %s15
  %s18 = scalar_select 0, %s17, %s15
  loop: start=0, step=1, limit=4
  $region2: #{tpu_custom_call.1} parent=0 // loop_pre_header
    _
  $region3: #{tpu_custom_call.1} parent=0 // loop_header
    %s20 = sphi 0, %s24
    %p21 = scmp.ge.s32.totalorder %s20, 4
    %s30 = sphi 0, %s32
    %s33 = sphi 0, %s30
    %s34 = sphi 0, %s33
    %s50 = sphi 0, %s34
    %s56 = sphi 0, %s58
    %s59 = sphi 0, %s56
    %s60 = sphi 0, %s59
    %s76 = sphi 0, %s60
    %s80 = sphi 0, %s80
    %s82 = sphi 0, %s80
    %s83 = sphi 0, %s82
    %s97 = sphi 0, %s83
    %s101 = sphi 0, %s101
    %s103 = sphi 0, %s101
    %s104 = sphi 0, %s103
    %s118 = sphi 0, %s104
    %s122 = sphi 0, %s122
    %s124 = sphi 0, %s122
    %s125 = sphi 0, %s124
    %s139 = sphi 0, %s125
    %s143 = sphi 0, %s143
    %s145 = sphi 0, %s143
    %s146 = sphi 0, %s145
    %s160 = sphi 0, %s146
    %s164 = sphi 0, %s164
    %s166 = sphi 0, %s164
    %s167 = sphi 0, %s166
    %s181 = sphi 0, %s167
    %s185 = sphi 0, %s185
    %s187 = sphi 0, %s185
    %s188 = sphi 0, %s187
    %s202 = sphi 0, %s188
    %s206 = sphi 0, %s206
    %s208 = sphi 0, %s206
    %s209 = sphi 0, %s208
    %s223 = sphi 0, %s209
    %s227 = sphi 0, %s227
    %s229 = sphi 0, %s227
    %s230 = sphi 0, %s229
    %s244 = sphi 0, %s230
    %s248 = sphi 0, %s248
    %s250 = sphi 0, %s248
    %s251 = sphi 0, %s250
    %s265 = sphi 0, %s251
    %s269 = sphi 0, %s269
    %s271 = sphi 0, %s269
    %s272 = sphi 0, %s271
    %s286 = sphi 0, %s272
    %s290 = sphi 0, %s290
    %s292 = sphi 0, %s290
    %s293 = sphi 0, %s292
    %s307 = sphi 0, %s293
    %s311 = sphi 0, %s311
    %s313 = sphi 0, %s311
    %s314 = sphi 0, %s313
    %s328 = sphi 0, %s314
    %s334 = sphi 0, %s336
    %s337 = sphi 0, %s334
    %s338 = sphi 0, %s337
    %s354 = sphi 0, %s338
  $region4: #{tpu_custom_call.1} parent=0 // loop_header_branch
    %23 = sbr.rel (%p21) target = $region8
  $region5: #{tpu_custom_call.1} parent=0 // loop_body
    %s25 = ssub.s32 %s20, 1
    %s26 = ssub.s32 %s20, 2
    %s27 = sadd.s32 %s20, 1
    %s28 = ssub.s32 %s20, %s27
    %p29 = scmp.eq.s32.totalorder %s28, 0
    %s31 = sadd.s32 %s30, 1
    %s32 = scalar_select %p29, %s30, %s31
    %p35 = pneg %p29
    %p36 = scmp.eq.s32.totalorder %s20, 1
    %p37 = por %p35, %p36
    %p38 = scmp.ne.s32.totalorder %s30, %s33
    %p39 = scmp.eq.s32.totalorder %s20, 0
    %p40 = por %p38, %p39
    %p41 = scmp.ne.s32.totalorder %s30, %s33
    %p42 = scmp.eq.s32.totalorder %s25, 1
    %p43 = por %p41, %p42
    %p44 = scmp.ne.s32.totalorder %s33, %s34
    %p45 = scmp.eq.s32.totalorder %s25, 0
    %p46 = por %p44, %p45
    %p47 = scmp.ne.s32.totalorder %s33, %s34
    %p48 = scmp.eq.s32.totalorder %s26, 1
    %p49 = por %p47, %p48
    %p51 = scmp.ne.s32.totalorder %s34, %s50
    %p52 = scmp.eq.s32.totalorder %s26, 0
    %p53 = por %p51, %p52
    %s54 = ssub.s32 %s20, %s27
    %p55 = scmp.eq.s32.totalorder %s54, 0
    %s57 = sadd.s32 %s56, 1
    %s58 = scalar_select %p55, %s56, %s57
    %p61 = pneg %p55
    %p62 = scmp.eq.s32.totalorder %s20, 1
    %p63 = por %p61, %p62
    %p64 = scmp.ne.s32.totalorder %s56, %s59
    %p65 = scmp.eq.s32.totalorder %s20, 0
    %p66 = por %p64, %p65
    %p67 = scmp.ne.s32.totalorder %s56, %s59
    %p68 = scmp.eq.s32.totalorder %s25, 1
    %p69 = por %p67, %p68
    %p70 = scmp.ne.s32.totalorder %s59, %s60
    %p71 = scmp.eq.s32.totalorder %s25, 0
    %p72 = por %p70, %p71
    %p73 = scmp.ne.s32.totalorder %s59, %s60
    %p74 = scmp.eq.s32.totalorder %s26, 1
    %p75 = por %p73, %p74
    %p77 = scmp.ne.s32.totalorder %s60, %s76
    %p78 = scmp.eq.s32.totalorder %s26, 0
    %p79 = por %p77, %p78
    %s81 = sadd.s32 %s80, 1
    %p84 = scmp.eq.s32.totalorder %s20, 1
    %p85 = scmp.ne.s32.totalorder %s80, %s82
    %p86 = scmp.eq.s32.totalorder %s20, 0
    %p87 = por %p85, %p86
    %p88 = scmp.ne.s32.totalorder %s80, %s82
    %p89 = scmp.eq.s32.totalorder %s25, 1
    %p90 = por %p88, %p89
    %p91 = scmp.ne.s32.totalorder %s82, %s83
    %p92 = scmp.eq.s32.totalorder %s25, 0
    %p93 = por %p91, %p92
    %p94 = scmp.ne.s32.totalorder %s82, %s83
    %p95 = scmp.eq.s32.totalorder %s26, 1
    %p96 = por %p94, %p95
    %p98 = scmp.ne.s32.totalorder %s83, %s97
    %p99 = scmp.eq.s32.totalorder %s26, 0
    %p100 = por %p98, %p99
    %s102 = sadd.s32 %s101, 1
    %p105 = scmp.eq.s32.totalorder %s20, 1
    %p106 = scmp.ne.s32.totalorder %s101, %s103
    %p107 = scmp.eq.s32.totalorder %s20, 0
    %p108 = por %p106, %p107
    %p109 = scmp.ne.s32.totalorder %s101, %s103
    %p110 = scmp.eq.s32.totalorder %s25, 1
    %p111 = por %p109, %p110
    %p112 = scmp.ne.s32.totalorder %s103, %s104
    %p113 = scmp.eq.s32.totalorder %s25, 0
    %p114 = por %p112, %p113
    %p115 = scmp.ne.s32.totalorder %s103, %s104
    %p116 = scmp.eq.s32.totalorder %s26, 1
    %p117 = por %p115, %p116
    %p119 = scmp.ne.s32.totalorder %s104, %s118
    %p120 = scmp.eq.s32.totalorder %s26, 0
    %p121 = por %p119, %p120
    %s123 = sadd.s32 %s122, 1
    %p126 = scmp.eq.s32.totalorder %s20, 1
    %p127 = scmp.ne.s32.totalorder %s122, %s124
    %p128 = scmp.eq.s32.totalorder %s20, 0
    %p129 = por %p127, %p128
    %p130 = scmp.ne.s32.totalorder %s122, %s124
    %p131 = scmp.eq.s32.totalorder %s25, 1
    %p132 = por %p130, %p131
    %p133 = scmp.ne.s32.totalorder %s124, %s125
    %p134 = scmp.eq.s32.totalorder %s25, 0
    %p135 = por %p133, %p134
    %p136 = scmp.ne.s32.totalorder %s124, %s125
    %p137 = scmp.eq.s32.totalorder %s26, 1
    %p138 = por %p136, %p137
    %p140 = scmp.ne.s32.totalorder %s125, %s139
    %p141 = scmp.eq.s32.totalorder %s26, 0
    %p142 = por %p140, %p141
    %s144 = sadd.s32 %s143, 1
    %p147 = scmp.eq.s32.totalorder %s20, 1
    %p148 = scmp.ne.s32.totalorder %s143, %s145
    %p149 = scmp.eq.s32.totalorder %s20, 0
    %p150 = por %p148, %p149
    %p151 = scmp.ne.s32.totalorder %s143, %s145
    %p152 = scmp.eq.s32.totalorder %s25, 1
    %p153 = por %p151, %p152
    %p154 = scmp.ne.s32.totalorder %s145, %s146
    %p155 = scmp.eq.s32.totalorder %s25, 0
    %p156 = por %p154, %p155
    %p157 = scmp.ne.s32.totalorder %s145, %s146
    %p158 = scmp.eq.s32.totalorder %s26, 1
    %p159 = por %p157, %p158
    %p161 = scmp.ne.s32.totalorder %s146, %s160
    %p162 = scmp.eq.s32.totalorder %s26, 0
    %p163 = por %p161, %p162
    %s165 = sadd.s32 %s164, 1
    %p168 = scmp.eq.s32.totalorder %s20, 1
    %p169 = scmp.ne.s32.totalorder %s164, %s166
    %p170 = scmp.eq.s32.totalorder %s20, 0
    %p171 = por %p169, %p170
    %p172 = scmp.ne.s32.totalorder %s164, %s166
    %p173 = scmp.eq.s32.totalorder %s25, 1
    %p174 = por %p172, %p173
    %p175 = scmp.ne.s32.totalorder %s166, %s167
    %p176 = scmp.eq.s32.totalorder %s25, 0
    %p177 = por %p175, %p176
    %p178 = scmp.ne.s32.totalorder %s166, %s167
    %p179 = scmp.eq.s32.totalorder %s26, 1
    %p180 = por %p178, %p179
    %p182 = scmp.ne.s32.totalorder %s167, %s181
    %p183 = scmp.eq.s32.totalorder %s26, 0
    %p184 = por %p182, %p183
    %s186 = sadd.s32 %s185, 1
    %p189 = scmp.eq.s32.totalorder %s20, 1
    %p190 = scmp.ne.s32.totalorder %s185, %s187
    %p191 = scmp.eq.s32.totalorder %s20, 0
    %p192 = por %p190, %p191
    %p193 = scmp.ne.s32.totalorder %s185, %s187
    %p194 = scmp.eq.s32.totalorder %s25, 1
    %p195 = por %p193, %p194
    %p196 = scmp.ne.s32.totalorder %s187, %s188
    %p197 = scmp.eq.s32.totalorder %s25, 0
    %p198 = por %p196, %p197
    %p199 = scmp.ne.s32.totalorder %s187, %s188
    %p200 = scmp.eq.s32.totalorder %s26, 1
    %p201 = por %p199, %p200
    %p203 = scmp.ne.s32.totalorder %s188, %s202
    %p204 = scmp.eq.s32.totalorder %s26, 0
    %p205 = por %p203, %p204
    %s207 = sadd.s32 %s206, 1
    %p210 = scmp.eq.s32.totalorder %s20, 1
    %p211 = scmp.ne.s32.totalorder %s206, %s208
    %p212 = scmp.eq.s32.totalorder %s20, 0
    %p213 = por %p211, %p212
    %p214 = scmp.ne.s32.totalorder %s206, %s208
    %p215 = scmp.eq.s32.totalorder %s25, 1
    %p216 = por %p214, %p215
    %p217 = scmp.ne.s32.totalorder %s208, %s209
    %p218 = scmp.eq.s32.totalorder %s25, 0
    %p219 = por %p217, %p218
    %p220 = scmp.ne.s32.totalorder %s208, %s209
    %p221 = scmp.eq.s32.totalorder %s26, 1
    %p222 = por %p220, %p221
    %p224 = scmp.ne.s32.totalorder %s209, %s223
    %p225 = scmp.eq.s32.totalorder %s26, 0
    %p226 = por %p224, %p225
    %s228 = sadd.s32 %s227, 1
    %p231 = scmp.eq.s32.totalorder %s20, 1
    %p232 = scmp.ne.s32.totalorder %s227, %s229
    %p233 = scmp.eq.s32.totalorder %s20, 0
    %p234 = por %p232, %p233
    %p235 = scmp.ne.s32.totalorder %s227, %s229
    %p236 = scmp.eq.s32.totalorder %s25, 1
    %p237 = por %p235, %p236
    %p238 = scmp.ne.s32.totalorder %s229, %s230
    %p239 = scmp.eq.s32.totalorder %s25, 0
    %p240 = por %p238, %p239
    %p241 = scmp.ne.s32.totalorder %s229, %s230
    %p242 = scmp.eq.s32.totalorder %s26, 1
    %p243 = por %p241, %p242
    %p245 = scmp.ne.s32.totalorder %s230, %s244
    %p246 = scmp.eq.s32.totalorder %s26, 0
    %p247 = por %p245, %p246
    %s249 = sadd.s32 %s248, 1
    %p252 = scmp.eq.s32.totalorder %s20, 1
    %p253 = scmp.ne.s32.totalorder %s248, %s250
    %p254 = scmp.eq.s32.totalorder %s20, 0
    %p255 = por %p253, %p254
    %p256 = scmp.ne.s32.totalorder %s248, %s250
    %p257 = scmp.eq.s32.totalorder %s25, 1
    %p258 = por %p256, %p257
    %p259 = scmp.ne.s32.totalorder %s250, %s251
    %p260 = scmp.eq.s32.totalorder %s25, 0
    %p261 = por %p259, %p260
    %p262 = scmp.ne.s32.totalorder %s250, %s251
    %p263 = scmp.eq.s32.totalorder %s26, 1
    %p264 = por %p262, %p263
    %p266 = scmp.ne.s32.totalorder %s251, %s265
    %p267 = scmp.eq.s32.totalorder %s26, 0
    %p268 = por %p266, %p267
    %s270 = sadd.s32 %s269, 1
    %p273 = scmp.eq.s32.totalorder %s20, 1
    %p274 = scmp.ne.s32.totalorder %s269, %s271
    %p275 = scmp.eq.s32.totalorder %s20, 0
    %p276 = por %p274, %p275
    %p277 = scmp.ne.s32.totalorder %s269, %s271
    %p278 = scmp.eq.s32.totalorder %s25, 1
    %p279 = por %p277, %p278
    %p280 = scmp.ne.s32.totalorder %s271, %s272
    %p281 = scmp.eq.s32.totalorder %s25, 0
    %p282 = por %p280, %p281
    %p283 = scmp.ne.s32.totalorder %s271, %s272
    %p284 = scmp.eq.s32.totalorder %s26, 1
    %p285 = por %p283, %p284
    %p287 = scmp.ne.s32.totalorder %s272, %s286
    %p288 = scmp.eq.s32.totalorder %s26, 0
    %p289 = por %p287, %p288
    %s291 = sadd.s32 %s290, 1
    %p294 = scmp.eq.s32.totalorder %s20, 1
    %p295 = scmp.ne.s32.totalorder %s290, %s292
    %p296 = scmp.eq.s32.totalorder %s20, 0
    %p297 = por %p295, %p296
    %p298 = scmp.ne.s32.totalorder %s290, %s292
    %p299 = scmp.eq.s32.totalorder %s25, 1
    %p300 = por %p298, %p299
    %p301 = scmp.ne.s32.totalorder %s292, %s293
    %p302 = scmp.eq.s32.totalorder %s25, 0
    %p303 = por %p301, %p302
    %p304 = scmp.ne.s32.totalorder %s292, %s293
    %p305 = scmp.eq.s32.totalorder %s26, 1
    %p306 = por %p304, %p305
    %p308 = scmp.ne.s32.totalorder %s293, %s307
    %p309 = scmp.eq.s32.totalorder %s26, 0
    %p310 = por %p308, %p309
    %s312 = sadd.s32 %s311, 1
    %p315 = scmp.eq.s32.totalorder %s20, 1
    %p316 = scmp.ne.s32.totalorder %s311, %s313
    %p317 = scmp.eq.s32.totalorder %s20, 0
    %p318 = por %p316, %p317
    %p319 = scmp.ne.s32.totalorder %s311, %s313
    %p320 = scmp.eq.s32.totalorder %s25, 1
    %p321 = por %p319, %p320
    %p322 = scmp.ne.s32.totalorder %s313, %s314
    %p323 = scmp.eq.s32.totalorder %s25, 0
    %p324 = por %p322, %p323
    %p325 = scmp.ne.s32.totalorder %s313, %s314
    %p326 = scmp.eq.s32.totalorder %s26, 1
    %p327 = por %p325, %p326
    %p329 = scmp.ne.s32.totalorder %s314, %s328
    %p330 = scmp.eq.s32.totalorder %s26, 0
    %p331 = por %p329, %p330
    %s332 = ssub.s32 %s20, %s27
    %p333 = scmp.eq.s32.totalorder %s332, 0
    %s335 = sadd.s32 %s334, 1
    %s336 = scalar_select %p333, %s334, %s335
    %p339 = pneg %p333
    %p340 = scmp.eq.s32.totalorder %s20, 1
    %p341 = por %p339, %p340
    %p342 = scmp.ne.s32.totalorder %s334, %s337
    %p343 = scmp.eq.s32.totalorder %s20, 0
    %p344 = por %p342, %p343
    %p345 = scmp.ne.s32.totalorder %s334, %s337
    %p346 = scmp.eq.s32.totalorder %s25, 1
    %p347 = por %p345, %p346
    %p348 = scmp.ne.s32.totalorder %s337, %s338
    %p349 = scmp.eq.s32.totalorder %s25, 0
    %p350 = por %p348, %p349
    %p351 = scmp.ne.s32.totalorder %s337, %s338
    %p352 = scmp.eq.s32.totalorder %s26, 1
    %p353 = por %p351, %p352
    %p355 = scmp.ne.s32.totalorder %s338, %s354
    %p356 = scmp.eq.s32.totalorder %s26, 0
    %p357 = por %p355, %p356
    %p358 = scmp.le.s32.totalorder 1, %s20
    %p359 = scmp.lt.s32.totalorder %s20, 3
    %p360 = pnand %p358, %p359
    %p361 = pneg %p360
    // Predicated region
    $region9: #{tpu_custom_call.1} parent=5 // pred_check
      _
    $region10: #{tpu_custom_call.1} parent=5 // pred_check_branch
      %363 = sbr.rel (%p360) target = $region12
    $region11: #{tpu_custom_call.1} parent=5 // pred_region
      %s364 = ssub.s32 %s20, 1
      // Predicated region
      $region13: #{tpu_custom_call.1} parent=11 // pred_check
        %p365 = pneg %p93
      $region14: #{tpu_custom_call.1} parent=11 // pred_check_branch
        %367 = sbr.rel (%p365) target = $region16
      $region15: #{tpu_custom_call.1} parent=11 // pred_region
        _
      $region16: #{tpu_custom_call.1} parent=11 // pred_fallthru
        _
      // Predicated region
      $region17: #{tpu_custom_call.1} parent=11 // pred_check
        %p368 = pneg %p114
      $region18: #{tpu_custom_call.1} parent=11 // pred_check_branch
        %370 = sbr.rel (%p368) target = $region20
      $region19: #{tpu_custom_call.1} parent=11 // pred_region
        _
      $region20: #{tpu_custom_call.1} parent=11 // pred_fallthru
        _
      // Predicated region
      $region21: #{tpu_custom_call.1} parent=11 // pred_check
        %p371 = pneg %p135
      $region22: #{tpu_custom_call.1} parent=11 // pred_check_branch
        %373 = sbr.rel (%p371) target = $region24
      $region23: #{tpu_custom_call.1} parent=11 // pred_region
        _
      $region24: #{tpu_custom_call.1} parent=11 // pred_fallthru
        _
      // Predicated region
      $region25: #{tpu_custom_call.1} parent=11 // pred_check
        %p374 = pneg %p156
      $region26: #{tpu_custom_call.1} parent=11 // pred_check_branch
        %376 = sbr.rel (%p374) target = $region28
      $region27: #{tpu_custom_call.1} parent=11 // pred_region
        _
      $region28: #{tpu_custom_call.1} parent=11 // pred_fallthru
        _
      // Predicated region
      $region29: #{tpu_custom_call.1} parent=11 // pred_check
        %p377 = pneg %p177
      $region30: #{tpu_custom_call.1} parent=11 // pred_check_branch
        %379 = sbr.rel (%p377) target = $region32
      $region31: #{tpu_custom_call.1} parent=11 // pred_region
        _
      $region32: #{tpu_custom_call.1} parent=11 // pred_fallthru
        _
      // Predicated region
      $region33: #{tpu_custom_call.1} parent=11 // pred_check
        %p380 = pneg %p198
      $region34: #{tpu_custom_call.1} parent=11 // pred_check_branch
        %382 = sbr.rel (%p380) target = $region36
      $region35: #{tpu_custom_call.1} parent=11 // pred_region
        _
      $region36: #{tpu_custom_call.1} parent=11 // pred_fallthru
        _
      // Predicated region
      $region37: #{tpu_custom_call.1} parent=11 // pred_check
        %p383 = pneg %p219
      $region38: #{tpu_custom_call.1} parent=11 // pred_check_branch
        %385 = sbr.rel (%p383) target = $region40
      $region39: #{tpu_custom_call.1} parent=11 // pred_region
        _
      $region40: #{tpu_custom_call.1} parent=11 // pred_fallthru
        _
      // Predicated region
      $region41: #{tpu_custom_call.1} parent=11 // pred_check
        %p386 = pneg %p240
      $region42: #{tpu_custom_call.1} parent=11 // pred_check_branch
        %388 = sbr.rel (%p386) target = $region44
      $region43: #{tpu_custom_call.1} parent=11 // pred_region
        _
      $region44: #{tpu_custom_call.1} parent=11 // pred_fallthru
        _
      // Predicated region
      $region45: #{tpu_custom_call.1} parent=11 // pred_check
        %p389 = pneg %p261
      $region46: #{tpu_custom_call.1} parent=11 // pred_check_branch
        %391 = sbr.rel (%p389) target = $region48
      $region47: #{tpu_custom_call.1} parent=11 // pred_region
        _
      $region48: #{tpu_custom_call.1} parent=11 // pred_fallthru
        _
      // Predicated region
      $region49: #{tpu_custom_call.1} parent=11 // pred_check
        %p392 = pneg %p282
      $region50: #{tpu_custom_call.1} parent=11 // pred_check_branch
        %394 = sbr.rel (%p392) target = $region52
      $region51: #{tpu_custom_call.1} parent=11 // pred_region
        _
      $region52: #{tpu_custom_call.1} parent=11 // pred_fallthru
        _
      // Predicated region
      $region53: #{tpu_custom_call.1} parent=11 // pred_check
        %p395 = pneg %p303
      $region54: #{tpu_custom_call.1} parent=11 // pred_check_branch
        %397 = sbr.rel (%p395) target = $region56
      $region55: #{tpu_custom_call.1} parent=11 // pred_region
        _
      $region56: #{tpu_custom_call.1} parent=11 // pred_fallthru
        _
      // Predicated region
      $region57: #{tpu_custom_call.1} parent=11 // pred_check
        %p398 = pneg %p324
      $region58: #{tpu_custom_call.1} parent=11 // pred_check_branch
        %400 = sbr.rel (%p398) target = $region60
      $region59: #{tpu_custom_call.1} parent=11 // pred_region
        _
      $region60: #{tpu_custom_call.1} parent=11 // pred_fallthru
        _
    $region12: #{tpu_custom_call.1} parent=5 // pred_fallthru
      _
    %p401 = scmp.lt.s32.totalorder %s20, 2
    // Predicated region
    $region61: #{tpu_custom_call.1} parent=5 // pred_check
      %p402 = pneg %p401
    $region62: #{tpu_custom_call.1} parent=5 // pred_check_branch
      %404 = sbr.rel (%p402) target = $region64
    $region63: #{tpu_custom_call.1} parent=5 // pred_region
      // Predicated region
      $region65: #{tpu_custom_call.1} parent=63 // pred_check
        %p405 = pneg %p40
      $region66: #{tpu_custom_call.1} parent=63 // pred_check_branch
        %407 = sbr.rel (%p405) target = $region68
      $region67: #{tpu_custom_call.1} parent=63 // pred_region
        %s408 = smul.u32 8, %s20
        %p409 = scmp.lt.s32.totalorder %s408, 15
        %s410 = scalar_select %p409, %s408, 15
        %s411 = smul.addr %s410, 8
        %s412 = scalar_lea.vmem %s0, %s411
        %s413 = smul.u32 8, %s20
      $region68: #{tpu_custom_call.1} parent=63 // pred_fallthru
        _
      // Predicated region
      $region69: #{tpu_custom_call.1} parent=63 // pred_check
        %p414 = pneg %p66
      $region70: #{tpu_custom_call.1} parent=63 // pred_check_branch
        %416 = sbr.rel (%p414) target = $region72
      $region71: #{tpu_custom_call.1} parent=63 // pred_region
        %s417 = smul.u32 56, %s20
        %p418 = scmp.lt.s32.totalorder %s417, 111
        %s419 = scalar_select %p418, %s417, 111
        %s420 = smul.addr %s419, 8
        %s421 = scalar_lea.vmem %s1, %s420
        %s422 = smul.u32 56, %s20
      $region72: #{tpu_custom_call.1} parent=63 // pred_fallthru
        _
    $region64: #{tpu_custom_call.1} parent=5 // pred_fallthru
      _
    %p423 = scmp.le.s32.totalorder 1, %s20
    %p424 = scmp.lt.s32.totalorder %s20, 3
    %p425 = pnand %p423, %p424
    %p426 = pneg %p425
    // Predicated region
    $region73: #{tpu_custom_call.1} parent=5 // pred_check
      _
    $region74: #{tpu_custom_call.1} parent=5 // pred_check_branch
      %428 = sbr.rel (%p425) target = $region76
    $region75: #{tpu_custom_call.1} parent=5 // pred_region
      %s429 = ssub.s32 %s20, 1
      %s430 = smul.u32 8, %s25
      %p431 = scmp.lt.s32.totalorder %s430, 15
      %s432 = scalar_select %p431, %s430, 15
      %s433 = smul.addr %s432, 8
      %s434 = scalar_lea.vmem %s0, %s433
      %p435 = pneg %p46
      %p436 = pneg %p43
      %s437 = smul.u32 56, %s25
      %p438 = scmp.lt.s32.totalorder %s437, 111
      %s439 = scalar_select %p438, %s437, 111
      %s440 = smul.addr %s439, 8
      %s441 = scalar_lea.vmem %s1, %s440
      %p442 = pneg %p72
      %p443 = pneg %p69
      %p444 = pneg %p93
      %p445 = pneg %p90
      %p446 = pneg %p114
      %p447 = pneg %p111
      %p448 = pneg %p135
      %p449 = pneg %p132
      %p450 = pneg %p156
      %p451 = pneg %p153
      %p452 = pneg %p177
      %p453 = pneg %p174
      %p454 = pneg %p198
      %p455 = pneg %p195
      %p456 = pneg %p219
      %p457 = pneg %p216
      %p458 = pneg %p240
      %p459 = pneg %p237
      %p460 = pneg %p261
      %p461 = pneg %p258
      %p462 = pneg %p282
      %p463 = pneg %p279
      %p464 = pneg %p303
      %p465 = pneg %p300
      %p466 = pneg %p324
      %p467 = pneg %p321
      %p468 = pneg %p350
      %p469 = pneg %p347
      %s470 = smul.u32 8, %s25
      %p471 = scmp.lt.s32.totalorder %s470, 15
      %s472 = scalar_select %p471, %s470, 15
      %s473 = smul.addr %s472, 8
      %s474 = scalar_lea.vmem %s14, %s473
      %s475 = smul.u32 8, %s25
      %p476 = scmp.lt.s32.totalorder %s475, 15
      %s477 = scalar_select %p476, %s475, 15
      %s478 = smul.addr %s477, 8
      %s479 = scalar_lea.vmem %s0, %s478
      %s480 = smul.u32 8, %s25
      %s481 = smul.u32 56, %s25
      %p482 = scmp.lt.s32.totalorder %s481, 111
      %s483 = scalar_select %p482, %s481, 111
      %s484 = smul.addr %s483, 8
      %s485 = scalar_lea.vmem %s1, %s484
      %s486 = smul.u32 56, %s25
      %s487 = smul.u32 8, %s25
      %p488 = scmp.lt.s32.totalorder %s487, 15
      %s489 = scalar_select %p488, %s487, 15
      %s490 = smul.addr %s489, 8
      %s491 = scalar_lea.vmem %s14, %s490
      %s492 = smul.u32 8, %s25
      %v494 = vld [vmem:[%s479] sm:$0xff]
      %v495 = vld [vmem:[%s479 + $0x8] sm:$0xff]
      %v496 = vld [vmem:[%s479 + $0x10] sm:$0xff]
      %v497 = vld [vmem:[%s479 + $0x18] sm:$0xff]
      %v498 = vld [vmem:[%s479 + $0x20] sm:$0xff]
      %v499 = vld [vmem:[%s479 + $0x28] sm:$0xff]
      %v500 = vld [vmem:[%s479 + $0x30] sm:$0xff]
      %v501 = vld [vmem:[%s479 + $0x38] sm:$0xff]
      %v502 = vld [vmem:[%s4] sm:$0x3]
      %v503 = vpack.c.bf16 %v495, %v494
      %v504 = vpack.c.bf16 %v497, %v496
      %v505 = vpack.c.bf16 %v499, %v498
      %v506 = vpack.c.bf16 %v501, %v500
      %v507 = vld [vmem:[%s5] sm:$0x1]
      %v509 = vlaneseq
      %v510 = vshrl.u32 %v509, 7
      %v511 = vsub.s32 0, %v510
      %v512 = vrot.slane %v507, %v511
      %vm514 = vcmask 31744
      %v516 = vsel %vm514, %v503, 0
      %v519 = vsel %vm514, %v504, 0
      %v522 = vsel %vm514, %v505, 0
      %v525 = vsel %vm514, %v506, 0
      %vm527 = vcmask 1041408
      %v529 = vsel %vm527, %v502, 0
      %531 = vmatprep.subr.bf16.mxu0 0
      %532 = vmatpush1.bf16.msra.mxu0 %v529
      %533 = vmatprep.subr.bf16.mxu0 0
      %534 = vmatpush1.bf16.msra.mxu0 0
      %535 = vmatprep.subr.bf16.mxu0 0
      %536 = vmatpush1.bf16.msra.mxu0 0
      %537 = vmatprep.subr.bf16.mxu0 0
      %538 = vmatpush1.bf16.msra.mxu0 0
      %539 = vmatprep.subr.bf16.mxu0 0
      %540 = vmatpush1.bf16.msra.mxu0 0
      %541 = vmatprep.subr.bf16.mxu0 0
      %542 = vmatpush1.bf16.msra.mxu0 0
      %543 = vmatprep.subr.bf16.mxu0 0
      %544 = vmatpush1.bf16.msra.mxu0 0
      %545 = vmatprep.subr.bf16.mxu0 0
      %546 = vmatpush1.bf16.msra.mxu0 0
      %547 = vmatprep.subr.bf16.mxu0 0
      %548 = vmatpush1.bf16.msra.mxu0 0
      %549 = vmatprep.subr.bf16.mxu0 0
      %550 = vmatpush1.bf16.msra.mxu0 0
      %551 = vmatprep.subr.bf16.mxu0 0
      %552 = vmatpush1.bf16.msra.mxu0 0
      %553 = vmatprep.subr.bf16.mxu0 0
      %554 = vmatpush1.bf16.msra.mxu0 0
      %555 = vmatprep.subr.bf16.mxu0 0
      %556 = vmatpush1.bf16.msra.mxu0 0
      %557 = vmatprep.subr.bf16.mxu0 0
      %558 = vmatpush1.bf16.msra.mxu0 0
      %559 = vmatprep.subr.bf16.mxu0 0
      %560 = vmatpush1.bf16.msra.mxu0 0
      %561 = vmatprep.subr.bf16.mxu0 0
      %562 = vmatpush1.bf16.msra.mxu0 0
      %563 = vmatprep.mubr.bf16.mxu0 0
      %564 = vmatmul.mubr.bf16.gmra.mrb[0].mxu0 %v516
      %v565 = vpop.f32.mrb[0].mxu0
      %v566 = vadd.f32 %v512, %v565
      %v567 = vpop.f32.mrb[0].mxu0
      %v568 = vpop.f32.mrb[0].mxu0
      %v569 = vadd.f32 %v512, %v568
      %v570 = vpop.f32.mrb[0].mxu0
      %571 = vmatprep.mubr.bf16.mxu0 0
      %572 = vmatmul.mubr.bf16.gmra.mrb[0].mxu0 %v519
      %v573 = vpop.f32.mrb[0].mxu0
      %v574 = vadd.f32 %v512, %v573
      %v575 = vpop.f32.mrb[0].mxu0
      %v576 = vpop.f32.mrb[0].mxu0
      %v577 = vadd.f32 %v512, %v576
      %v578 = vpop.f32.mrb[0].mxu0
      %579 = vmatprep.mubr.bf16.mxu0 0
      %580 = vmatmul.mubr.bf16.gmra.mrb[0].mxu0 %v522
      %v581 = vpop.f32.mrb[0].mxu0
      %v582 = vadd.f32 %v512, %v581
      %v583 = vpop.f32.mrb[0].mxu0
      %v584 = vpop.f32.mrb[0].mxu0
      %v585 = vadd.f32 %v512, %v584
      %v586 = vpop.f32.mrb[0].mxu0
      %587 = vmatprep.mubr.bf16.mxu0 0
      %588 = vmatmul.mubr.bf16.gmra.mrb[0].mxu0 %v525
      %v589 = vpop.f32.mrb[0].mxu0
      %v590 = vadd.f32 %v512, %v589
      %v591 = vpop.f32.mrb[0].mxu0
      %v592 = vpop.f32.mrb[0].mxu0
      %v593 = vadd.f32 %v512, %v592
      %v594 = vpop.f32.mrb[0].mxu0
      %595 = vdwg.mxu0
      %v596 = vmax.f32 %v566, 0.0
      %v597 = vmax.f32 %v569, 0.0
      %v598 = vmax.f32 %v574, 0.0
      %v599 = vmax.f32 %v577, 0.0
      %v600 = vmax.f32 %v582, 0.0
      %v601 = vmax.f32 %v585, 0.0
      %v602 = vmax.f32 %v590, 0.0
      %v603 = vmax.f32 %v593, 0.0
      %vm604 = vcmask 261120
      %v605 = vsel %vm604, %v596, 0.0
      %606 = vadd.xlane.f32.xlu0 %v605
      %v607 = vpop.xlane.xlu0 %606
      %v608 = vsel %vm604, %v597, 0.0
      %609 = vadd.xlane.f32.xlu0 %v608
      %v610 = vpop.xlane.xlu0 %609
      %v611 = vsel %vm604, %v598, 0.0
      %612 = vadd.xlane.f32.xlu0 %v611
      %v613 = vpop.xlane.xlu0 %612
      %v614 = vsel %vm604, %v599, 0.0
      %615 = vadd.xlane.f32.xlu0 %v614
      %v616 = vpop.xlane.xlu0 %615
      %v617 = vsel %vm604, %v600, 0.0
      %618 = vadd.xlane.f32.xlu0 %v617
      %v619 = vpop.xlane.xlu0 %618
      %v620 = vsel %vm604, %v601, 0.0
      %621 = vadd.xlane.f32.xlu0 %v620
      %v622 = vpop.xlane.xlu0 %621
      %v623 = vsel %vm604, %v602, 0.0
      %624 = vadd.xlane.f32.xlu0 %v623
      %v625 = vpop.xlane.xlu0 %624
      %v626 = vsel %vm604, %v603, 0.0
      %627 = vadd.xlane.f32.xlu0 %v626
      %v628 = vpop.xlane.xlu0 %627
      %v629 = vrcp.pop 32.0
      %v630 = vmul.f32 %v607, %v629
      %v631 = vmul.f32 %v610, %v629
      %v632 = vmul.f32 %v613, %v629
      %v633 = vmul.f32 %v616, %v629
      %v634 = vmul.f32 %v619, %v629
      %v635 = vmul.f32 %v622, %v629
      %v636 = vmul.f32 %v625, %v629
      %v637 = vmul.f32 %v628, %v629
      %v638 = vsub.f32 %v596, %v630
      %v639 = vsub.f32 %v597, %v631
      %v640 = vsub.f32 %v598, %v632
      %v641 = vsub.f32 %v599, %v633
      %v642 = vsub.f32 %v600, %v634
      %v643 = vsub.f32 %v601, %v635
      %v644 = vsub.f32 %v602, %v636
      %v645 = vsub.f32 %v603, %v637
      %v646 = vmul.f32 %v638, %v638
      %v647 = vmul.f32 %v639, %v639
      %v648 = vmul.f32 %v640, %v640
      %v649 = vmul.f32 %v641, %v641
      %v650 = vmul.f32 %v642, %v642
      %v651 = vmul.f32 %v643, %v643
      %v652 = vmul.f32 %v644, %v644
      %v653 = vmul.f32 %v645, %v645
      %v654 = vsel %vm604, %v646, 0.0
      %655 = vadd.xlane.f32.xlu0 %v654
      %v656 = vpop.xlane.xlu0 %655
      %v657 = vsel %vm604, %v647, 0.0
      %658 = vadd.xlane.f32.xlu0 %v657
      %v659 = vpop.xlane.xlu0 %658
      %v660 = vsel %vm604, %v648, 0.0
      %661 = vadd.xlane.f32.xlu0 %v660
      %v662 = vpop.xlane.xlu0 %661
      %v663 = vsel %vm604, %v649, 0.0
      %664 = vadd.xlane.f32.xlu0 %v663
      %v665 = vpop.xlane.xlu0 %664
      %v666 = vsel %vm604, %v650, 0.0
      %667 = vadd.xlane.f32.xlu0 %v666
      %v668 = vpop.xlane.xlu0 %667
      %v669 = vsel %vm604, %v651, 0.0
      %670 = vadd.xlane.f32.xlu0 %v669
      %v671 = vpop.xlane.xlu0 %670
      %v672 = vsel %vm604, %v652, 0.0
      %673 = vadd.xlane.f32.xlu0 %v672
      %v674 = vpop.xlane.xlu0 %673
      %v675 = vsel %vm604, %v653, 0.0
      %676 = vadd.xlane.f32.xlu0 %v675
      %v677 = vpop.xlane.xlu0 %676
      %v678 = vmul.f32 %v656, %v629
      %v679 = vmul.f32 %v659, %v629
      %v680 = vmul.f32 %v662, %v629
      %v681 = vmul.f32 %v665, %v629
      %v682 = vmul.f32 %v668, %v629
      %v683 = vmul.f32 %v671, %v629
      %v684 = vmul.f32 %v674, %v629
      %v685 = vmul.f32 %v677, %v629
      %v686 = vadd.f32 %v678, 1e-05
      %v687 = vadd.f32 %v679, 1e-05
      %v688 = vadd.f32 %v680, 1e-05
      %v689 = vadd.f32 %v681, 1e-05
      %v690 = vadd.f32 %v682, 1e-05
      %v691 = vadd.f32 %v683, 1e-05
      %v692 = vadd.f32 %v684, 1e-05
      %v693 = vadd.f32 %v685, 1e-05
      %v694 = vrsqrt.pop %v686
      %v695 = vrsqrt.pop %v687
      %v696 = vrsqrt.pop %v688
      %v697 = vrsqrt.pop %v689
      %v698 = vrsqrt.pop %v690
      %v699 = vrsqrt.pop %v691
      %v700 = vrsqrt.pop %v692
      %v701 = vrsqrt.pop %v693
      %v702 = vmul.f32 %v638, %v694
      %v703 = vmul.f32 %v639, %v695
      %v704 = vmul.f32 %v640, %v696
      %v705 = vmul.f32 %v641, %v697
      %v706 = vmul.f32 %v642, %v698
      %v707 = vmul.f32 %v643, %v699
      %v708 = vmul.f32 %v644, %v700
      %v709 = vmul.f32 %v645, %v701
      %s710 = scalar_lea.vmem %s5, 1
      %v711 = vld [vmem:[%s710] sm:$0x1]
      %v713 = vlaneseq
      %v714 = vshrl.u32 %v713, 7
      %v715 = vsub.s32 0, %v714
      %v716 = vrot.slane %v711, %v715
      %v718 = vmul.f32 %v702, %v716
      %v719 = vmul.f32 %v703, %v716
      %v720 = vmul.f32 %v704, %v716
      %v721 = vmul.f32 %v705, %v716
      %v722 = vmul.f32 %v706, %v716
      %v723 = vmul.f32 %v707, %v716
      %v724 = vmul.f32 %v708, %v716
      %v725 = vmul.f32 %v709, %v716
      %s726 = scalar_lea.vmem %s5, 2
      %v727 = vld [vmem:[%s726] sm:$0x1]
      %v729 = vlaneseq
      %v730 = vshrl.u32 %v729, 7
      %v731 = vsub.s32 0, %v730
      %v732 = vrot.slane %v727, %v731
      %v734 = vadd.f32 %v718, %v732
      %v735 = vadd.f32 %v719, %v732
      %v736 = vadd.f32 %v720, %v732
      %v737 = vadd.f32 %v721, %v732
      %v738 = vadd.f32 %v722, %v732
      %v739 = vadd.f32 %v723, %v732
      %v740 = vadd.f32 %v724, %v732
      %v741 = vadd.f32 %v725, %v732
      %v742 = vld [vmem:[%s2] sm:$0xf]
      %v743 = vld [vmem:[%s2 + $0x4] sm:$0xf]
      %v744 = vld [vmem:[%s2 + $0x8] sm:$0xf]
      %v745 = vld [vmem:[%s2 + $0xc] sm:$0xf]
      %v746 = vld [vmem:[%s2 + $0x10] sm:$0xf]
      %v747 = vld [vmem:[%s2 + $0x14] sm:$0xf]
      %v748 = vld [vmem:[%s2 + $0x18] sm:$0xf]
      %v749 = vld [vmem:[%s2 + $0x1c] sm:$0xf]
      %v750 = vld [vmem:[%s2 + $0x20] sm:$0xf]
      %v751 = vld [vmem:[%s2 + $0x24] sm:$0xf]
      %v752 = vld [vmem:[%s2 + $0x28] sm:$0xf]
      %v753 = vld [vmem:[%s2 + $0x2c] sm:$0xf]
      %v754 = vld [vmem:[%s2 + $0x30] sm:$0xf]
      %v755 = vld [vmem:[%s2 + $0x34] sm:$0xf]
      %v756 = vld [vmem:[%s2 + $0x38] sm:$0xf]
      %v757 = vld [vmem:[%s2 + $0x3c] sm:$0xf]
      %v758 = vld [vmem:[%s2 + $0x40] sm:$0xf]
      %v759 = vld [vmem:[%s2 + $0x44] sm:$0xf]
      %v760 = vld [vmem:[%s2 + $0x48] sm:$0xf]
      %v761 = vld [vmem:[%s2 + $0x4c] sm:$0xf]
      %v762 = vld [vmem:[%s2 + $0x50] sm:$0xf]
      %v763 = vld [vmem:[%s2 + $0x54] sm:$0xf]
      %v764 = vld [vmem:[%s2 + $0x58] sm:$0xf]
      %v765 = vld [vmem:[%s2 + $0x5c] sm:$0xf]
      %v766 = vld [vmem:[%s2 + $0x60] sm:$0xf]
      %v767 = vld [vmem:[%s2 + $0x64] sm:$0xf]
      %v768 = vld [vmem:[%s2 + $0x68] sm:$0xf]
      %v769 = vld [vmem:[%s2 + $0x6c] sm:$0xf]
      %v770 = vld [vmem:[%s2 + $0x70] sm:$0xf]
      %v771 = vld [vmem:[%s2 + $0x74] sm:$0xf]
      %v772 = vld [vmem:[%s2 + $0x78] sm:$0xf]
      %v773 = vld [vmem:[%s2 + $0x7c] sm:$0xf]
      %v774 = vld [vmem:[%s2 + $0x80] sm:$0xf]
      %v775 = vld [vmem:[%s2 + $0x84] sm:$0xf]
      %v776 = vld [vmem:[%s2 + $0x88] sm:$0xf]
      %v777 = vld [vmem:[%s2 + $0x8c] sm:$0xf]
      %v778 = vld [vmem:[%s2 + $0x90] sm:$0xf]
      %v779 = vld [vmem:[%s2 + $0x94] sm:$0xf]
      %v780 = vld [vmem:[%s2 + $0x98] sm:$0xf]
      %v781 = vld [vmem:[%s2 + $0x9c] sm:$0xf]
      %v782 = vld [vmem:[%s2 + $0xa0] sm:$0xf]
      %v783 = vld [vmem:[%s2 + $0xa4] sm:$0xf]
      %v784 = vld [vmem:[%s2 + $0xa8] sm:$0xf]
      %v785 = vld [vmem:[%s2 + $0xac] sm:$0xf]
      %v786 = vld [vmem:[%s2 + $0xb0] sm:$0xf]
      %v787 = vld [vmem:[%s2 + $0xb4] sm:$0xf]
      %v788 = vld [vmem:[%s2 + $0xb8] sm:$0xf]
      %v789 = vld [vmem:[%s2 + $0xbc] sm:$0xf]
      %v790 = vld [vmem:[%s2 + $0xc0] sm:$0xf]
      %v791 = vld [vmem:[%s2 + $0xc4] sm:$0xf]
      %v792 = vld [vmem:[%s2 + $0xc8] sm:$0xf]
      %v793 = vld [vmem:[%s2 + $0xcc] sm:$0xf]
      %v794 = vld [vmem:[%s2 + $0xd0] sm:$0xf]
      %v795 = vld [vmem:[%s2 + $0xd4] sm:$0xf]
      %v796 = vld [vmem:[%s2 + $0xd8] sm:$0xf]
      %v797 = vld [vmem:[%s2 + $0xdc] sm:$0xf]
      %s798 = scalar_lea.vmem %s2, 224
      %v799 = vld [vmem:[%s798] sm:$0xf]
      %v800 = vld [vmem:[%s798 + $0x4] sm:$0xf]
      %v801 = vld [vmem:[%s798 + $0x8] sm:$0xf]
      %v802 = vld [vmem:[%s798 + $0xc] sm:$0xf]
      %v803 = vld [vmem:[%s798 + $0x10] sm:$0xf]
      %v804 = vld [vmem:[%s798 + $0x14] sm:$0xf]
      %v805 = vld [vmem:[%s798 + $0x18] sm:$0xf]
      %v806 = vld [vmem:[%s798 + $0x1c] sm:$0xf]
      %v807 = vld [vmem:[%s798 + $0x20] sm:$0xf]
      %v808 = vld [vmem:[%s798 + $0x24] sm:$0xf]
      %v809 = vld [vmem:[%s798 + $0x28] sm:$0xf]
      %v810 = vld [vmem:[%s798 + $0x2c] sm:$0xf]
      %v811 = vld [vmem:[%s798 + $0x30] sm:$0xf]
      %v812 = vld [vmem:[%s798 + $0x34] sm:$0xf]
      %v813 = vld [vmem:[%s798 + $0x38] sm:$0xf]
      %v814 = vld [vmem:[%s798 + $0x3c] sm:$0xf]
      %v815 = vld [vmem:[%s798 + $0x40] sm:$0xf]
      %v816 = vld [vmem:[%s798 + $0x44] sm:$0xf]
      %v817 = vld [vmem:[%s798 + $0x48] sm:$0xf]
      %v818 = vld [vmem:[%s798 + $0x4c] sm:$0xf]
      %v819 = vld [vmem:[%s798 + $0x50] sm:$0xf]
      %v820 = vld [vmem:[%s798 + $0x54] sm:$0xf]
      %v821 = vld [vmem:[%s798 + $0x58] sm:$0xf]
      %v822 = vld [vmem:[%s798 + $0x5c] sm:$0xf]
      %v823 = vld [vmem:[%s798 + $0x60] sm:$0xf]
      %v824 = vld [vmem:[%s798 + $0x64] sm:$0xf]
      %v825 = vld [vmem:[%s798 + $0x68] sm:$0xf]
      %v826 = vld [vmem:[%s798 + $0x6c] sm:$0xf]
      %v827 = vld [vmem:[%s798 + $0x70] sm:$0xf]
      %v828 = vld [vmem:[%s798 + $0x74] sm:$0xf]
      %v829 = vld [vmem:[%s798 + $0x78] sm:$0xf]
      %v830 = vld [vmem:[%s798 + $0x7c] sm:$0xf]
      %v831 = vld [vmem:[%s798 + $0x80] sm:$0xf]
      %v832 = vld [vmem:[%s798 + $0x84] sm:$0xf]
      %v833 = vld [vmem:[%s798 + $0x88] sm:$0xf]
      %v834 = vld [vmem:[%s798 + $0x8c] sm:$0xf]
      %v835 = vld [vmem:[%s798 + $0x90] sm:$0xf]
      %v836 = vld [vmem:[%s798 + $0x94] sm:$0xf]
      %v837 = vld [vmem:[%s798 + $0x98] sm:$0xf]
      %v838 = vld [vmem:[%s798 + $0x9c] sm:$0xf]
      %v839 = vld [vmem:[%s798 + $0xa0] sm:$0xf]
      %v840 = vld [vmem:[%s798 + $0xa4] sm:$0xf]
      %v841 = vld [vmem:[%s798 + $0xa8] sm:$0xf]
      %v842 = vld [vmem:[%s798 + $0xac] sm:$0xf]
      %v843 = vld [vmem:[%s798 + $0xb0] sm:$0xf]
      %v844 = vld [vmem:[%s798 + $0xb4] sm:$0xf]
      %v845 = vld [vmem:[%s798 + $0xb8] sm:$0xf]
      %v846 = vld [vmem:[%s798 + $0xbc] sm:$0xf]
      %v847 = vld [vmem:[%s798 + $0xc0] sm:$0xf]
      %v848 = vld [vmem:[%s798 + $0xc4] sm:$0xf]
      %v849 = vld [vmem:[%s798 + $0xc8] sm:$0xf]
      %v850 = vld [vmem:[%s798 + $0xcc] sm:$0xf]
      %v851 = vld [vmem:[%s798 + $0xd0] sm:$0xf]
      %v852 = vld [vmem:[%s798 + $0xd4] sm:$0xf]
      %v853 = vld [vmem:[%s798 + $0xd8] sm:$0xf]
      %v854 = vld [vmem:[%s798 + $0xdc] sm:$0xf]
      %v855 = vld [vmem:[%s3] sm:$0xff]
      %v856 = vld [vmem:[%s3 + $0x8] sm:$0xff]
      %v857 = vld [vmem:[%s3 + $0x10] sm:$0xff]
      %v858 = vld [vmem:[%s3 + $0x18] sm:$0xff]
      %v859 = vld [vmem:[%s3 + $0x20] sm:$0xff]
      %v860 = vld [vmem:[%s3 + $0x28] sm:$0xff]
      %v861 = vld [vmem:[%s3 + $0x30] sm:$0xff]
      %v862 = vld [vmem:[%s3 + $0x38] sm:$0xff]
      %v863 = vld [vmem:[%s3 + $0x40] sm:$0xff]
      %v864 = vld [vmem:[%s3 + $0x48] sm:$0xff]
      %v865 = vld [vmem:[%s3 + $0x50] sm:$0xff]
      %v866 = vld [vmem:[%s3 + $0x58] sm:$0xff]
      %v867 = vld [vmem:[%s3 + $0x60] sm:$0xff]
      %v868 = vld [vmem:[%s3 + $0x68] sm:$0xff]
      %v869 = vld [vmem:[%s3 + $0x70] sm:$0xff]
      %v870 = vld [vmem:[%s3 + $0x78] sm:$0xff]
      %v871 = vld [vmem:[%s485] sm:$0xff]
      %v872 = vld [vmem:[%s485 + $0x8] sm:$0xff]
      %v873 = vld [vmem:[%s485 + $0x10] sm:$0xff]
      %v874 = vld [vmem:[%s485 + $0x18] sm:$0xff]
      %v875 = vld [vmem:[%s485 + $0x20] sm:$0xff]
      %v876 = vld [vmem:[%s485 + $0x28] sm:$0xff]
      %v877 = vld [vmem:[%s485 + $0x30] sm:$0xff]
      %v878 = vld [vmem:[%s485 + $0x38] sm:$0xff]
      %v879 = vld [vmem:[%s485 + $0x40] sm:$0xff]
      %v880 = vld [vmem:[%s485 + $0x48] sm:$0xff]
      %v881 = vld [vmem:[%s485 + $0x50] sm:$0xff]
      %v882 = vld [vmem:[%s485 + $0x58] sm:$0xff]
      %v883 = vld [vmem:[%s485 + $0x60] sm:$0xff]
      %v884 = vld [vmem:[%s485 + $0x68] sm:$0xff]
      %v885 = vld [vmem:[%s485 + $0x70] sm:$0xff]
      %v886 = vld [vmem:[%s485 + $0x78] sm:$0xff]
      %v887 = vld [vmem:[%s485 + $0x80] sm:$0xff]
      %v888 = vld [vmem:[%s485 + $0x88] sm:$0xff]
      %v889 = vld [vmem:[%s485 + $0x90] sm:$0xff]
      %v890 = vld [vmem:[%s485 + $0x98] sm:$0xff]
      %v891 = vld [vmem:[%s485 + $0xa0] sm:$0xff]
      %v892 = vld [vmem:[%s485 + $0xa8] sm:$0xff]
      %v893 = vld [vmem:[%s485 + $0xb0] sm:$0xff]
      %v894 = vld [vmem:[%s485 + $0xb8] sm:$0xff]
      %v895 = vld [vmem:[%s485 + $0xc0] sm:$0xff]
      %v896 = vld [vmem:[%s485 + $0xc8] sm:$0xff]
      %v897 = vld [vmem:[%s485 + $0xd0] sm:$0xff]
      %v898 = vld [vmem:[%s485 + $0xd8] sm:$0xff]
      %v899 = vld [vmem:[%s485 + $0xe0] sm:$0xff]
      %v900 = vld [vmem:[%s485 + $0xe8] sm:$0xff]
      %v901 = vld [vmem:[%s485 + $0xf0] sm:$0xff]
      %v902 = vld [vmem:[%s485 + $0xf8] sm:$0xff]
      %v903 = vld [vmem:[%s485 + $0x100] sm:$0xff]
      %v904 = vld [vmem:[%s485 + $0x108] sm:$0xff]
      %v905 = vld [vmem:[%s485 + $0x110] sm:$0xff]
      %v906 = vld [vmem:[%s485 + $0x118] sm:$0xff]
      %v907 = vld [vmem:[%s485 + $0x120] sm:$0xff]
      %v908 = vld [vmem:[%s485 + $0x128] sm:$0xff]
      %v909 = vld [vmem:[%s485 + $0x130] sm:$0xff]
      %v910 = vld [vmem:[%s485 + $0x138] sm:$0xff]
      %v911 = vld [vmem:[%s485 + $0x140] sm:$0xff]
      %v912 = vld [vmem:[%s485 + $0x148] sm:$0xff]
      %v913 = vld [vmem:[%s485 + $0x150] sm:$0xff]
      %v914 = vld [vmem:[%s485 + $0x158] sm:$0xff]
      %v915 = vld [vmem:[%s485 + $0x160] sm:$0xff]
      %v916 = vld [vmem:[%s485 + $0x168] sm:$0xff]
      %v917 = vld [vmem:[%s485 + $0x170] sm:$0xff]
      %v918 = vld [vmem:[%s485 + $0x178] sm:$0xff]
      %v919 = vld [vmem:[%s485 + $0x180] sm:$0xff]
      %v920 = vld [vmem:[%s485 + $0x188] sm:$0xff]
      %v921 = vld [vmem:[%s485 + $0x190] sm:$0xff]
      %v922 = vld [vmem:[%s485 + $0x198] sm:$0xff]
      %v923 = vld [vmem:[%s485 + $0x1a0] sm:$0xff]
      %v924 = vld [vmem:[%s485 + $0x1a8] sm:$0xff]
      %v925 = vld [vmem:[%s485 + $0x1b0] sm:$0xff]
      %v926 = vld [vmem:[%s485 + $0x1b8] sm:$0xff]
      %v927 = vpack.c.bf16 %v735, %v734
      %v928 = vpack.c.bf16 %v737, %v736
      %v929 = vpack.c.bf16 %v739, %v738
      %v930 = vpack.c.bf16 %v741, %v740
      %v987 = vunpack.c.l.b16 %v742
      %v988 = vunpack.c.l.b16 %v743
      %v989 = vunpack.c.l.b16 %v744
      %v990 = vunpack.c.l.b16 %v745
      %v991 = vunpack.c.l.b16 %v746
      %v992 = vunpack.c.l.b16 %v747
      %v993 = vunpack.c.l.b16 %v748
      %v994 = vunpack.c.l.b16 %v749
      %v995 = vunpack.c.l.b16 %v750
      %v996 = vunpack.c.l.b16 %v751
      %v997 = vunpack.c.l.b16 %v752
      %v998 = vunpack.c.l.b16 %v753
      %v999 = vunpack.c.l.b16 %v754
      %v1000 = vunpack.c.l.b16 %v755
      %v1001 = vunpack.c.l.b16 %v756
      %v1002 = vunpack.c.l.b16 %v757
      %v1003 = vunpack.c.l.b16 %v758
      %v1004 = vunpack.c.l.b16 %v759
      %v1005 = vunpack.c.l.b16 %v760
      %v1006 = vunpack.c.l.b16 %v761
      %v1007 = vunpack.c.l.b16 %v762
      %v1008 = vunpack.c.l.b16 %v763
      %v1009 = vunpack.c.l.b16 %v764
      %v1010 = vunpack.c.l.b16 %v765
      %v1011 = vunpack.c.l.b16 %v766
      %v1012 = vunpack.c.l.b16 %v767
      %v1013 = vunpack.c.l.b16 %v768
      %v1014 = vunpack.c.l.b16 %v769
      %v1015 = vunpack.c.l.b16 %v770
      %v1016 = vunpack.c.l.b16 %v771
      %v1017 = vunpack.c.l.b16 %v772
      %v1018 = vunpack.c.l.b16 %v773
      %v1019 = vunpack.c.l.b16 %v774
      %v1020 = vunpack.c.l.b16 %v775
      %v1021 = vunpack.c.l.b16 %v776
      %v1022 = vunpack.c.l.b16 %v777
      %v1023 = vunpack.c.l.b16 %v778
      %v1024 = vunpack.c.l.b16 %v779
      %v1025 = vunpack.c.l.b16 %v780
      %v1026 = vunpack.c.l.b16 %v781
      %v1027 = vunpack.c.l.b16 %v782
      %v1028 = vunpack.c.l.b16 %v783
      %v1029 = vunpack.c.l.b16 %v784
      %v1030 = vunpack.c.l.b16 %v785
      %v1031 = vunpack.c.l.b16 %v786
      %v1032 = vunpack.c.l.b16 %v787
      %v1033 = vunpack.c.l.b16 %v788
      %v1034 = vunpack.c.l.b16 %v789
      %v1035 = vunpack.c.l.b16 %v790
      %v1036 = vunpack.c.l.b16 %v791
      %v1037 = vunpack.c.l.b16 %v792
      %v1038 = vunpack.c.l.b16 %v793
      %v1039 = vunpack.c.l.b16 %v794
      %v1040 = vunpack.c.l.b16 %v795
      %v1041 = vunpack.c.l.b16 %v796
      %v1042 = vunpack.c.l.b16 %v797
      %v1043 = vpack.c.b16 %v988, %v987
      %v1044 = vpack.c.b16 %v990, %v989
      %v1045 = vpack.c.b16 %v992, %v991
      %v1046 = vpack.c.b16 %v994, %v993
      %v1047 = vpack.c.b16 %v996, %v995
      %v1048 = vpack.c.b16 %v998, %v997
      %v1049 = vpack.c.b16 %v1000, %v999
      %v1050 = vpack.c.b16 %v1002, %v1001
      %v1051 = vpack.c.b16 %v1004, %v1003
      %v1052 = vpack.c.b16 %v1006, %v1005
      %v1053 = vpack.c.b16 %v1008, %v1007
      %v1054 = vpack.c.b16 %v1010, %v1009
      %v1055 = vpack.c.b16 %v1012, %v1011
      %v1056 = vpack.c.b16 %v1014, %v1013
      %v1057 = vpack.c.b16 %v1016, %v1015
      %v1058 = vpack.c.b16 %v1018, %v1017
      %v1059 = vpack.c.b16 %v1020, %v1019
      %v1060 = vpack.c.b16 %v1022, %v1021
      %v1061 = vpack.c.b16 %v1024, %v1023
      %v1062 = vpack.c.b16 %v1026, %v1025
      %v1063 = vpack.c.b16 %v1028, %v1027
      %v1064 = vpack.c.b16 %v1030, %v1029
      %v1065 = vpack.c.b16 %v1032, %v1031
      %v1066 = vpack.c.b16 %v1034, %v1033
      %v1067 = vpack.c.b16 %v1036, %v1035
      %v1068 = vpack.c.b16 %v1038, %v1037
      %v1069 = vpack.c.b16 %v1040, %v1039
      %v1070 = vpack.c.b16 %v1042, %v1041
      %vm1071 = vcmask 523264
      %v1073 = vsel %vm1071, %v1043, 0
      %v1076 = vsel %vm1071, %v1044, 0
      %v1079 = vsel %vm1071, %v1045, 0
      %v1082 = vsel %vm1071, %v1046, 0
      %v1085 = vsel %vm1071, %v1047, 0
      %v1088 = vsel %vm1071, %v1048, 0
      %v1091 = vsel %vm1071, %v1049, 0
      %v1094 = vsel %vm1071, %v1050, 0
      %v1097 = vsel %vm1071, %v1051, 0
      %v1100 = vsel %vm1071, %v1052, 0
      %v1103 = vsel %vm1071, %v1053, 0
      %v1106 = vsel %vm1071, %v1054, 0
      %v1109 = vsel %vm1071, %v1055, 0
      %v1112 = vsel %vm1071, %v1056, 0
      %v1115 = vsel %vm1071, %v1057, 0
      %v1118 = vsel %vm1071, %v1058, 0
      %v1121 = vsel %vm1071, %v1059, 0
      %v1124 = vsel %vm1071, %v1060, 0
      %v1127 = vsel %vm1071, %v1061, 0
      %v1130 = vsel %vm1071, %v1062, 0
      %v1133 = vsel %vm1071, %v1063, 0
      %v1136 = vsel %vm1071, %v1064, 0
      %v1139 = vsel %vm1071, %v1065, 0
      %v1142 = vsel %vm1071, %v1066, 0
      %v1145 = vsel %vm1071, %v1067, 0
      %v1148 = vsel %vm1071, %v1068, 0
      %v1151 = vsel %vm1071, %v1069, 0
      %v1154 = vsel %vm1071, %v1070, 0
      %1156 = vmatprep.subr.bf16.mxu0 0
      %1157 = vmatpush1.bf16.msra.mxu0 %v927
      %1158 = vmatprep.subr.bf16.mxu0 0
      %1159 = vmatpush1.bf16.msra.mxu0 %v928
      %1160 = vmatprep.subr.bf16.mxu0 0
      %1161 = vmatpush1.bf16.msra.mxu0 %v929
      %1162 = vmatprep.subr.bf16.mxu0 0
      %1163 = vmatpush1.bf16.msra.mxu0 %v930
      %1164 = vmatprep.subr.bf16.mxu0 0
      %1165 = vmatpush1.bf16.msra.mxu0 0
      %1166 = vmatprep.subr.bf16.mxu0 0
      %1167 = vmatpush1.bf16.msra.mxu0 0
      %1168 = vmatprep.subr.bf16.mxu0 0
      %1169 = vmatpush1.bf16.msra.mxu0 0
      %1170 = vmatprep.subr.bf16.mxu0 0
      %1171 = vmatpush1.bf16.msra.mxu0 0
      %1172 = vmatprep.subr.bf16.mxu0 0
      %1173 = vmatpush1.bf16.msra.mxu0 0
      %1174 = vmatprep.subr.bf16.mxu0 0
      %1175 = vmatpush1.bf16.msra.mxu0 0
      %1176 = vmatprep.subr.bf16.mxu0 0
      %1177 = vmatpush1.bf16.msra.mxu0 0
      %1178 = vmatprep.subr.bf16.mxu0 0
      %1179 = vmatpush1.bf16.msra.mxu0 0
      %1180 = vmatprep.subr.bf16.mxu0 0
      %1181 = vmatpush1.bf16.msra.mxu0 0
      %1182 = vmatprep.subr.bf16.mxu0 0
      %1183 = vmatpush1.bf16.msra.mxu0 0
      %1184 = vmatprep.subr.bf16.mxu0 0
      %1185 = vmatpush1.bf16.msra.mxu0 0
      %1186 = vmatprep.subr.bf16.mxu0 0
      %1187 = vmatpush1.bf16.msra.mxu0 0
      %1188 = vmatprep.mubr.bf16.mxu0 0
      %1189 = vmatmul.mubr.bf16.gmra.mrb[0].mxu0 %v1073
      %v1190 = vpop.f32.mrb[0].mxu0
      %v1191 = vadd.f32 0.0, %v1190
      %v1192 = vpop.f32.mrb[0].mxu0
      %v1193 = vpop.f32.mrb[0].mxu0
      %v1194 = vadd.f32 0.0, %v1193
      %v1195 = vpop.f32.mrb[0].mxu0
      %1196 = vmatprep.mubr.bf16.mxu0 0
      %1197 = vmatmul.mubr.bf16.gmra.mrb[0].mxu0 %v1076
      %v1198 = vpop.f32.mrb[0].mxu0
      %v1199 = vadd.f32 0.0, %v1198
      %v1200 = vpop.f32.mrb[0].mxu0
      %v1201 = vpop.f32.mrb[0].mxu0
      %v1202 = vadd.f32 0.0, %v1201
      %v1203 = vpop.f32.mrb[0].mxu0
      %1204 = vmatprep.mubr.bf16.mxu0 0
      %1205 = vmatmul.mubr.bf16.gmra.mrb[0].mxu0 %v1079
      %v1206 = vpop.f32.mrb[0].mxu0
      %v1207 = vadd.f32 0.0, %v1206
      %v1208 = vpop.f32.mrb[0].mxu0
      %v1209 = vpop.f32.mrb[0].mxu0
      %v1210 = vadd.f32 0.0, %v1209
      %v1211 = vpop.f32.mrb[0].mxu0
      %1212 = vmatprep.mubr.bf16.mxu0 0
      %1213 = vmatmul.mubr.bf16.gmra.mrb[0].mxu0 %v1082
      %v1214 = vpop.f32.mrb[0].mxu0
      %v1215 = vadd.f32 0.0, %v1214
      %v1216 = vpop.f32.mrb[0].mxu0
      %v1217 = vpop.f32.mrb[0].mxu0
      %v1218 = vadd.f32 0.0, %v1217
      %v1219 = vpop.f32.mrb[0].mxu0
      %1220 = vmatprep.mubr.bf16.mxu0 0
      %1221 = vmatmul.mubr.bf16.gmra.mrb[0].mxu0 %v1085
      %v1222 = vpop.f32.mrb[0].mxu0
      %v1223 = vadd.f32 0.0, %v1222
      %v1224 = vpop.f32.mrb[0].mxu0
      %v1225 = vpop.f32.mrb[0].mxu0
      %v1226 = vadd.f32 0.0, %v1225
      %v1227 = vpop.f32.mrb[0].mxu0
      %1228 = vmatprep.mubr.bf16.mxu0 0
      %1229 = vmatmul.mubr.bf16.gmra.mrb[0].mxu0 %v1088
      %v1230 = vpop.f32.mrb[0].mxu0
      %v1231 = vadd.f32 0.0, %v1230
      %v1232 = vpop.f32.mrb[0].mxu0
      %v1233 = vpop.f32.mrb[0].mxu0
      %v1234 = vadd.f32 0.0, %v1233
      %v1235 = vpop.f32.mrb[0].mxu0
      %1236 = vmatprep.mubr.bf16.mxu0 0
      %1237 = vmatmul.mubr.bf16.gmra.mrb[0].mxu0 %v1091
      %v1238 = vpop.f32.mrb[0].mxu0
      %v1239 = vadd.f32 0.0, %v1238
      %v1240 = vpop.f32.mrb[0].mxu0
      %v1241 = vpop.f32.mrb[0].mxu0
      %v1242 = vadd.f32 0.0, %v1241
      %v1243 = vpop.f32.mrb[0].mxu0
      %1244 = vmatprep.mubr.bf16.mxu0 0
      %1245 = vmatmul.mubr.bf16.gmra.mrb[0].mxu0 %v1094
      %v1246 = vpop.f32.mrb[0].mxu0
      %v1247 = vadd.f32 0.0, %v1246
      %v1248 = vpop.f32.mrb[0].mxu0
      %v1249 = vpop.f32.mrb[0].mxu0
      %v1250 = vadd.f32 0.0, %v1249
      %v1251 = vpop.f32.mrb[0].mxu0
      %1252 = vmatprep.mubr.bf16.mxu0 0
      %1253 = vmatmul.mubr.bf16.gmra.mrb[0].mxu0 %v1097
      %v1254 = vpop.f32.mrb[0].mxu0
      %v1255 = vadd.f32 0.0, %v1254
      %v1256 = vpop.f32.mrb[0].mxu0
      %v1257 = vpop.f32.mrb[0].mxu0
      %v1258 = vadd.f32 0.0, %v1257
      %v1259 = vpop.f32.mrb[0].mxu0
      %1260 = vmatprep.mubr.bf16.mxu0 0
      %1261 = vmatmul.mubr.bf16.gmra.mrb[0].mxu0 %v1100
      %v1262 = vpop.f32.mrb[0].mxu0
      %v1263 = vadd.f32 0.0, %v1262
      %v1264 = vpop.f32.mrb[0].mxu0
      %v1265 = vpop.f32.mrb[0].mxu0
      %v1266 = vadd.f32 0.0, %v1265
      %v1267 = vpop.f32.mrb[0].mxu0
      %1268 = vmatprep.mubr.bf16.mxu0 0
      %1269 = vmatmul.mubr.bf16.gmra.mrb[0].mxu0 %v1103
      %v1270 = vpop.f32.mrb[0].mxu0
      %v1271 = vadd.f32 0.0, %v1270
      %v1272 = vpop.f32.mrb[0].mxu0
      %v1273 = vpop.f32.mrb[0].mxu0
      %v1274 = vadd.f32 0.0, %v1273
      %v1275 = vpop.f32.mrb[0].mxu0
      %1276 = vmatprep.mubr.bf16.mxu0 0
      %1277 = vmatmul.mubr.bf16.gmra.mrb[0].mxu0 %v1106
      %v1278 = vpop.f32.mrb[0].mxu0
      %v1279 = vadd.f32 0.0, %v1278
      %v1280 = vpop.f32.mrb[0].mxu0
      %v1281 = vpop.f32.mrb[0].mxu0
      %v1282 = vadd.f32 0.0, %v1281
      %v1283 = vpop.f32.mrb[0].mxu0
      %1284 = vmatprep.mubr.bf16.mxu0 0
      %1285 = vmatmul.mubr.bf16.gmra.mrb[0].mxu0 %v1109
      %v1286 = vpop.f32.mrb[0].mxu0
      %v1287 = vadd.f32 0.0, %v1286
      %v1288 = vpop.f32.mrb[0].mxu0
      %v1289 = vpop.f32.mrb[0].mxu0
      %v1290 = vadd.f32 0.0, %v1289
      %v1291 = vpop.f32.mrb[0].mxu0
      %1292 = vmatprep.mubr.bf16.mxu0 0
      %1293 = vmatmul.mubr.bf16.gmra.mrb[0].mxu0 %v1112
      %v1294 = vpop.f32.mrb[0].mxu0
      %v1295 = vadd.f32 0.0, %v1294
      %v1296 = vpop.f32.mrb[0].mxu0
      %v1297 = vpop.f32.mrb[0].mxu0
      %v1298 = vadd.f32 0.0, %v1297
      %v1299 = vpop.f32.mrb[0].mxu0
      %1300 = vmatprep.mubr.bf16.mxu0 0
      %1301 = vmatmul.mubr.bf16.gmra.mrb[0].mxu0 %v1115
      %v1302 = vpop.f32.mrb[0].mxu0
      %v1303 = vadd.f32 0.0, %v1302
      %v1304 = vpop.f32.mrb[0].mxu0
      %v1305 = vpop.f32.mrb[0].mxu0
      %v1306 = vadd.f32 0.0, %v1305
      %v1307 = vpop.f32.mrb[0].mxu0
      %1308 = vmatprep.mubr.bf16.mxu0 0
      %1309 = vmatmul.mubr.bf16.gmra.mrb[0].mxu0 %v1118
      %v1310 = vpop.f32.mrb[0].mxu0
      %v1311 = vadd.f32 0.0, %v1310
      %v1312 = vpop.f32.mrb[0].mxu0
      %v1313 = vpop.f32.mrb[0].mxu0
      %v1314 = vadd.f32 0.0, %v1313
      %v1315 = vpop.f32.mrb[0].mxu0
      %1316 = vmatprep.mubr.bf16.mxu0 0
      %1317 = vmatmul.mubr.bf16.gmra.mrb[0].mxu0 %v1121
      %v1318 = vpop.f32.mrb[0].mxu0
      %v1319 = vadd.f32 0.0, %v1318
      %v1320 = vpop.f32.mrb[0].mxu0
      %v1321 = vpop.f32.mrb[0].mxu0
      %v1322 = vadd.f32 0.0, %v1321
      %v1323 = vpop.f32.mrb[0].mxu0
      %1324 = vmatprep.mubr.bf16.mxu0 0
      %1325 = vmatmul.mubr.bf16.gmra.mrb[0].mxu0 %v1124
      %v1326 = vpop.f32.mrb[0].mxu0
      %v1327 = vadd.f32 0.0, %v1326
      %v1328 = vpop.f32.mrb[0].mxu0
      %v1329 = vpop.f32.mrb[0].mxu0
      %v1330 = vadd.f32 0.0, %v1329
      %v1331 = vpop.f32.mrb[0].mxu0
      %1332 = vmatprep.mubr.bf16.mxu0 0
      %1333 = vmatmul.mubr.bf16.gmra.mrb[0].mxu0 %v1127
      %v1334 = vpop.f32.mrb[0].mxu0
      %v1335 = vadd.f32 0.0, %v1334
      %v1336 = vpop.f32.mrb[0].mxu0
      %v1337 = vpop.f32.mrb[0].mxu0
      %v1338 = vadd.f32 0.0, %v1337
      %v1339 = vpop.f32.mrb[0].mxu0
      %1340 = vmatprep.mubr.bf16.mxu0 0
      %1341 = vmatmul.mubr.bf16.gmra.mrb[0].mxu0 %v1130
      %v1342 = vpop.f32.mrb[0].mxu0
      %v1343 = vadd.f32 0.0, %v1342
      %v1344 = vpop.f32.mrb[0].mxu0
      %v1345 = vpop.f32.mrb[0].mxu0
      %v1346 = vadd.f32 0.0, %v1345
      %v1347 = vpop.f32.mrb[0].mxu0
      %1348 = vmatprep.mubr.bf16.mxu0 0
      %1349 = vmatmul.mubr.bf16.gmra.mrb[0].mxu0 %v1133
      %v1350 = vpop.f32.mrb[0].mxu0
      %v1351 = vadd.f32 0.0, %v1350
      %v1352 = vpop.f32.mrb[0].mxu0
      %v1353 = vpop.f32.mrb[0].mxu0
      %v1354 = vadd.f32 0.0, %v1353
      %v1355 = vpop.f32.mrb[0].mxu0
      %1356 = vmatprep.mubr.bf16.mxu0 0
      %1357 = vmatmul.mubr.bf16.gmra.mrb[0].mxu0 %v1136
      %v1358 = vpop.f32.mrb[0].mxu0
      %v1359 = vadd.f32 0.0, %v1358
      %v1360 = vpop.f32.mrb[0].mxu0
      %v1361 = vpop.f32.mrb[0].mxu0
      %v1362 = vadd.f32 0.0, %v1361
      %v1363 = vpop.f32.mrb[0].mxu0
      %1364 = vmatprep.mubr.bf16.mxu0 0
      %1365 = vmatmul.mubr.bf16.gmra.mrb[0].mxu0 %v1139
      %v1366 = vpop.f32.mrb[0].mxu0
      %v1367 = vadd.f32 0.0, %v1366
      %v1368 = vpop.f32.mrb[0].mxu0
      %v1369 = vpop.f32.mrb[0].mxu0
      %v1370 = vadd.f32 0.0, %v1369
      %v1371 = vpop.f32.mrb[0].mxu0
      %1372 = vmatprep.mubr.bf16.mxu0 0
      %1373 = vmatmul.mubr.bf16.gmra.mrb[0].mxu0 %v1142
      %v1374 = vpop.f32.mrb[0].mxu0
      %v1375 = vadd.f32 0.0, %v1374
      %v1376 = vpop.f32.mrb[0].mxu0
      %v1377 = vpop.f32.mrb[0].mxu0
      %v1378 = vadd.f32 0.0, %v1377
      %v1379 = vpop.f32.mrb[0].mxu0
      %1380 = vmatprep.mubr.bf16.mxu0 0
      %1381 = vmatmul.mubr.bf16.gmra.mrb[0].mxu0 %v1145
      %v1382 = vpop.f32.mrb[0].mxu0
      %v1383 = vadd.f32 0.0, %v1382
      %v1384 = vpop.f32.mrb[0].mxu0
      %v1385 = vpop.f32.mrb[0].mxu0
      %v1386 = vadd.f32 0.0, %v1385
      %v1387 = vpop.f32.mrb[0].mxu0
      %1388 = vmatprep.mubr.bf16.mxu0 0
      %1389 = vmatmul.mubr.bf16.gmra.mrb[0].mxu0 %v1148
      %v1390 = vpop.f32.mrb[0].mxu0
      %v1391 = vadd.f32 0.0, %v1390
      %v1392 = vpop.f32.mrb[0].mxu0
      %v1393 = vpop.f32.mrb[0].mxu0
      %v1394 = vadd.f32 0.0, %v1393
      %v1395 = vpop.f32.mrb[0].mxu0
      %1396 = vmatprep.mubr.bf16.mxu0 0
      %1397 = vmatmul.mubr.bf16.gmra.mrb[0].mxu0 %v1151
      %v1398 = vpop.f32.mrb[0].mxu0
      %v1399 = vadd.f32 0.0, %v1398
      %v1400 = vpop.f32.mrb[0].mxu0
      %v1401 = vpop.f32.mrb[0].mxu0
      %v1402 = vadd.f32 0.0, %v1401
      %v1403 = vpop.f32.mrb[0].mxu0
      %1404 = vmatprep.mubr.bf16.mxu0 0
      %1405 = vmatmul.mubr.bf16.gmra.mrb[0].mxu0 %v1154
      %v1406 = vpop.f32.mrb[0].mxu0
      %v1407 = vadd.f32 0.0, %v1406
      %v1408 = vpop.f32.mrb[0].mxu0
      %v1409 = vpop.f32.mrb[0].mxu0
      %v1410 = vadd.f32 0.0, %v1409
      %v1411 = vpop.f32.mrb[0].mxu0
      %1412 = vdwg.mxu0
      %v1469 = vunpack.c.l.b16 %v799
      %v1470 = vunpack.c.l.b16 %v800
      %v1471 = vunpack.c.l.b16 %v801
      %v1472 = vunpack.c.l.b16 %v802
      %v1473 = vunpack.c.l.b16 %v803
      %v1474 = vunpack.c.l.b16 %v804
      %v1475 = vunpack.c.l.b16 %v805
      %v1476 = vunpack.c.l.b16 %v806
      %v1477 = vunpack.c.l.b16 %v807
      %v1478 = vunpack.c.l.b16 %v808
      %v1479 = vunpack.c.l.b16 %v809
      %v1480 = vunpack.c.l.b16 %v810
      %v1481 = vunpack.c.l.b16 %v811
      %v1482 = vunpack.c.l.b16 %v812
      %v1483 = vunpack.c.l.b16 %v813
      %v1484 = vunpack.c.l.b16 %v814
      %v1485 = vunpack.c.l.b16 %v815
      %v1486 = vunpack.c.l.b16 %v816
      %v1487 = vunpack.c.l.b16 %v817
      %v1488 = vunpack.c.l.b16 %v818
      %v1489 = vunpack.c.l.b16 %v819
      %v1490 = vunpack.c.l.b16 %v820
      %v1491 = vunpack.c.l.b16 %v821
      %v1492 = vunpack.c.l.b16 %v822
      %v1493 = vunpack.c.l.b16 %v823
      %v1494 = vunpack.c.l.b16 %v824
      %v1495 = vunpack.c.l.b16 %v825
      %v1496 = vunpack.c.l.b16 %v826
      %v1497 = vunpack.c.l.b16 %v827
      %v1498 = vunpack.c.l.b16 %v828
      %v1499 = vunpack.c.l.b16 %v829
      %v1500 = vunpack.c.l.b16 %v830
      %v1501 = vunpack.c.l.b16 %v831
      %v1502 = vunpack.c.l.b16 %v832
      %v1503 = vunpack.c.l.b16 %v833
      %v1504 = vunpack.c.l.b16 %v834
      %v1505 = vunpack.c.l.b16 %v835
      %v1506 = vunpack.c.l.b16 %v836
      %v1507 = vunpack.c.l.b16 %v837
      %v1508 = vunpack.c.l.b16 %v838
      %v1509 = vunpack.c.l.b16 %v839
      %v1510 = vunpack.c.l.b16 %v840
      %v1511 = vunpack.c.l.b16 %v841
      %v1512 = vunpack.c.l.b16 %v842
      %v1513 = vunpack.c.l.b16 %v843
      %v1514 = vunpack.c.l.b16 %v844
      %v1515 = vunpack.c.l.b16 %v845
      %v1516 = vunpack.c.l.b16 %v846
      %v1517 = vunpack.c.l.b16 %v847
      %v1518 = vunpack.c.l.b16 %v848
      %v1519 = vunpack.c.l.b16 %v849
      %v1520 = vunpack.c.l.b16 %v850
      %v1521 = vunpack.c.l.b16 %v851
      %v1522 = vunpack.c.l.b16 %v852
      %v1523 = vunpack.c.l.b16 %v853
      %v1524 = vunpack.c.l.b16 %v854
      %v1525 = vpack.c.b16 %v1470, %v1469
      %v1526 = vpack.c.b16 %v1472, %v1471
      %v1527 = vpack.c.b16 %v1474, %v1473
      %v1528 = vpack.c.b16 %v1476, %v1475
      %v1529 = vpack.c.b16 %v1478, %v1477
      %v1530 = vpack.c.b16 %v1480, %v1479
      %v1531 = vpack.c.b16 %v1482, %v1481
      %v1532 = vpack.c.b16 %v1484, %v1483
      %v1533 = vpack.c.b16 %v1486, %v1485
      %v1534 = vpack.c.b16 %v1488, %v1487
      %v1535 = vpack.c.b16 %v1490, %v1489
      %v1536 = vpack.c.b16 %v1492, %v1491
      %v1537 = vpack.c.b16 %v1494, %v1493
      %v1538 = vpack.c.b16 %v1496, %v1495
      %v1539 = vpack.c.b16 %v1498, %v1497
      %v1540 = vpack.c.b16 %v1500, %v1499
      %v1541 = vpack.c.b16 %v1502, %v1501
      %v1542 = vpack.c.b16 %v1504, %v1503
      %v1543 = vpack.c.b16 %v1506, %v1505
      %v1544 = vpack.c.b16 %v1508, %v1507
      %v1545 = vpack.c.b16 %v1510, %v1509
      %v1546 = vpack.c.b16 %v1512, %v1511
      %v1547 = vpack.c.b16 %v1514, %v1513
      %v1548 = vpack.c.b16 %v1516, %v1515
      %v1549 = vpack.c.b16 %v1518, %v1517
      %v1550 = vpack.c.b16 %v1520, %v1519
      %v1551 = vpack.c.b16 %v1522, %v1521
      %v1552 = vpack.c.b16 %v1524, %v1523
      %v1554 = vsel %vm1071, %v1525, 0
      %v1557 = vsel %vm1071, %v1526, 0
      %v1560 = vsel %vm1071, %v1527, 0
      %v1563 = vsel %vm1071, %v1528, 0
      %v1566 = vsel %vm1071, %v1529, 0
      %v1569 = vsel %vm1071, %v1530, 0
      %v1572 = vsel %vm1071, %v1531, 0
      %v1575 = vsel %vm1071, %v1532, 0
      %v1578 = vsel %vm1071, %v1533, 0
      %v1581 = vsel %vm1071, %v1534, 0
      %v1584 = vsel %vm1071, %v1535, 0
      %v1587 = vsel %vm1071, %v1536, 0
      %v1590 = vsel %vm1071, %v1537, 0
      %v1593 = vsel %vm1071, %v1538, 0
      %v1596 = vsel %vm1071, %v1539, 0
      %v1599 = vsel %vm1071, %v1540, 0
      %v1602 = vsel %vm1071, %v1541, 0
      %v1605 = vsel %vm1071, %v1542, 0
      %v1608 = vsel %vm1071, %v1543, 0
      %v1611 = vsel %vm1071, %v1544, 0
      %v1614 = vsel %vm1071, %v1545, 0
      %v1617 = vsel %vm1071, %v1546, 0
      %v1620 = vsel %vm1071, %v1547, 0
      %v1623 = vsel %vm1071, %v1548, 0
      %v1626 = vsel %vm1071, %v1549, 0
      %v1629 = vsel %vm1071, %v1550, 0
      %v1632 = vsel %vm1071, %v1551, 0
      %v1635 = vsel %vm1071, %v1552, 0
      %1637 = vmatprep.subr.bf16.mxu0 0
      %1638 = vmatpush1.bf16.msra.mxu0 %v927
      %1639 = vmatprep.subr.bf16.mxu0 0
      %1640 = vmatpush1.bf16.msra.mxu0 %v928
      %1641 = vmatprep.subr.bf16.mxu0 0
      %1642 = vmatpush1.bf16.msra.mxu0 %v929
      %1643 = vmatprep.subr.bf16.mxu0 0
      %1644 = vmatpush1.bf16.msra.mxu0 %v930
      %1645 = vmatprep.subr.bf16.mxu0 0
      %1646 = vmatpush1.bf16.msra.mxu0 0
      %1647 = vmatprep.subr.bf16.mxu0 0
      %1648 = vmatpush1.bf16.msra.mxu0 0
      %1649 = vmatprep.subr.bf16.mxu0 0
      %1650 = vmatpush1.bf16.msra.mxu0 0
      %1651 = vmatprep.subr.bf16.mxu0 0
      %1652 = vmatpush1.bf16.msra.mxu0 0
      %1653 = vmatprep.subr.bf16.mxu0 0
      %1654 = vmatpush1.bf16.msra.mxu0 0
      %1655 = vmatprep.subr.bf16.mxu0 0
      %1656 = vmatpush1.bf16.msra.mxu0 0
      %1657 = vmatprep.subr.bf16.mxu0 0
      %1658 = vmatpush1.bf16.msra.mxu0 0
      %1659 = vmatprep.subr.bf16.mxu0 0
      %1660 = vmatpush1.bf16.msra.mxu0 0
      %1661 = vmatprep.subr.bf16.mxu0 0
      %1662 = vmatpush1.bf16.msra.mxu0 0
      %1663 = vmatprep.subr.bf16.mxu0 0
      %1664 = vmatpush1.bf16.msra.mxu0 0
      %1665 = vmatprep.subr.bf16.mxu0 0
      %1666 = vmatpush1.bf16.msra.mxu0 0
      %1667 = vmatprep.subr.bf16.mxu0 0
      %1668 = vmatpush1.bf16.msra.mxu0 0
      %1669 = vmatprep.mubr.bf16.mxu0 0
      %1670 = vmatmul.mubr.bf16.gmra.mrb[0].mxu0 %v1554
      %v1671 = vpop.f32.mrb[0].mxu0
      %v1672 = vadd.f32 0.0, %v1671
      %v1673 = vpop.f32.mrb[0].mxu0
      %v1674 = vpop.f32.mrb[0].mxu0
      %v1675 = vadd.f32 0.0, %v1674
      %v1676 = vpop.f32.mrb[0].mxu0
      %1677 = vmatprep.mubr.bf16.mxu0 0
      %1678 = vmatmul.mubr.bf16.gmra.mrb[0].mxu0 %v1557
      %v1679 = vpop.f32.mrb[0].mxu0
      %v1680 = vadd.f32 0.0, %v1679
      %v1681 = vpop.f32.mrb[0].mxu0
      %v1682 = vpop.f32.mrb[0].mxu0
      %v1683 = vadd.f32 0.0, %v1682
      %v1684 = vpop.f32.mrb[0].mxu0
      %1685 = vmatprep.mubr.bf16.mxu0 0
      %1686 = vmatmul.mubr.bf16.gmra.mrb[0].mxu0 %v1560
      %v1687 = vpop.f32.mrb[0].mxu0
      %v1688 = vadd.f32 0.0, %v1687
      %v1689 = vpop.f32.mrb[0].mxu0
      %v1690 = vpop.f32.mrb[0].mxu0
      %v1691 = vadd.f32 0.0, %v1690
      %v1692 = vpop.f32.mrb[0].mxu0
      %1693 = vmatprep.mubr.bf16.mxu0 0
      %1694 = vmatmul.mubr.bf16.gmra.mrb[0].mxu0 %v1563
      %v1695 = vpop.f32.mrb[0].mxu0
      %v1696 = vadd.f32 0.0, %v1695
      %v1697 = vpop.f32.mrb[0].mxu0
      %v1698 = vpop.f32.mrb[0].mxu0
      %v1699 = vadd.f32 0.0, %v1698
      %v1700 = vpop.f32.mrb[0].mxu0
      %1701 = vmatprep.mubr.bf16.mxu0 0
      %1702 = vmatmul.mubr.bf16.gmra.mrb[0].mxu0 %v1566
      %v1703 = vpop.f32.mrb[0].mxu0
      %v1704 = vadd.f32 0.0, %v1703
      %v1705 = vpop.f32.mrb[0].mxu0
      %v1706 = vpop.f32.mrb[0].mxu0
      %v1707 = vadd.f32 0.0, %v1706
      %v1708 = vpop.f32.mrb[0].mxu0
      %1709 = vmatprep.mubr.bf16.mxu0 0
      %1710 = vmatmul.mubr.bf16.gmra.mrb[0].mxu0 %v1569
      %v1711 = vpop.f32.mrb[0].mxu0
      %v1712 = vadd.f32 0.0, %v1711
      %v1713 = vpop.f32.mrb[0].mxu0
      %v1714 = vpop.f32.mrb[0].mxu0
      %v1715 = vadd.f32 0.0, %v1714
      %v1716 = vpop.f32.mrb[0].mxu0
      %1717 = vmatprep.mubr.bf16.mxu0 0
      %1718 = vmatmul.mubr.bf16.gmra.mrb[0].mxu0 %v1572
      %v1719 = vpop.f32.mrb[0].mxu0
      %v1720 = vadd.f32 0.0, %v1719
      %v1721 = vpop.f32.mrb[0].mxu0
      %v1722 = vpop.f32.mrb[0].mxu0
      %v1723 = vadd.f32 0.0, %v1722
      %v1724 = vpop.f32.mrb[0].mxu0
      %1725 = vmatprep.mubr.bf16.mxu0 0
      %1726 = vmatmul.mubr.bf16.gmra.mrb[0].mxu0 %v1575
      %v1727 = vpop.f32.mrb[0].mxu0
      %v1728 = vadd.f32 0.0, %v1727
      %v1729 = vpop.f32.mrb[0].mxu0
      %v1730 = vpop.f32.mrb[0].mxu0
      %v1731 = vadd.f32 0.0, %v1730
      %v1732 = vpop.f32.mrb[0].mxu0
      %1733 = vmatprep.mubr.bf16.mxu0 0
      %1734 = vmatmul.mubr.bf16.gmra.mrb[0].mxu0 %v1578
      %v1735 = vpop.f32.mrb[0].mxu0
      %v1736 = vadd.f32 0.0, %v1735
      %v1737 = vpop.f32.mrb[0].mxu0
      %v1738 = vpop.f32.mrb[0].mxu0
      %v1739 = vadd.f32 0.0, %v1738
      %v1740 = vpop.f32.mrb[0].mxu0
      %1741 = vmatprep.mubr.bf16.mxu0 0
      %1742 = vmatmul.mubr.bf16.gmra.mrb[0].mxu0 %v1581
      %v1743 = vpop.f32.mrb[0].mxu0
      %v1744 = vadd.f32 0.0, %v1743
      %v1745 = vpop.f32.mrb[0].mxu0
      %v1746 = vpop.f32.mrb[0].mxu0
      %v1747 = vadd.f32 0.0, %v1746
      %v1748 = vpop.f32.mrb[0].mxu0
      %1749 = vmatprep.mubr.bf16.mxu0 0
      %1750 = vmatmul.mubr.bf16.gmra.mrb[0].mxu0 %v1584
      %v1751 = vpop.f32.mrb[0].mxu0
      %v1752 = vadd.f32 0.0, %v1751
      %v1753 = vpop.f32.mrb[0].mxu0
      %v1754 = vpop.f32.mrb[0].mxu0
      %v1755 = vadd.f32 0.0, %v1754
      %v1756 = vpop.f32.mrb[0].mxu0
      %1757 = vmatprep.mubr.bf16.mxu0 0
      %1758 = vmatmul.mubr.bf16.gmra.mrb[0].mxu0 %v1587
      %v1759 = vpop.f32.mrb[0].mxu0
      %v1760 = vadd.f32 0.0, %v1759
      %v1761 = vpop.f32.mrb[0].mxu0
      %v1762 = vpop.f32.mrb[0].mxu0
      %v1763 = vadd.f32 0.0, %v1762
      %v1764 = vpop.f32.mrb[0].mxu0
      %1765 = vmatprep.mubr.bf16.mxu0 0
      %1766 = vmatmul.mubr.bf16.gmra.mrb[0].mxu0 %v1590
      %v1767 = vpop.f32.mrb[0].mxu0
      %v1768 = vadd.f32 0.0, %v1767
      %v1769 = vpop.f32.mrb[0].mxu0
      %v1770 = vpop.f32.mrb[0].mxu0
      %v1771 = vadd.f32 0.0, %v1770
      %v1772 = vpop.f32.mrb[0].mxu0
      %1773 = vmatprep.mubr.bf16.mxu0 0
      %1774 = vmatmul.mubr.bf16.gmra.mrb[0].mxu0 %v1593
      %v1775 = vpop.f32.mrb[0].mxu0
      %v1776 = vadd.f32 0.0, %v1775
      %v1777 = vpop.f32.mrb[0].mxu0
      %v1778 = vpop.f32.mrb[0].mxu0
      %v1779 = vadd.f32 0.0, %v1778
      %v1780 = vpop.f32.mrb[0].mxu0
      %1781 = vmatprep.mubr.bf16.mxu0 0
      %1782 = vmatmul.mubr.bf16.gmra.mrb[0].mxu0 %v1596
      %v1783 = vpop.f32.mrb[0].mxu0
      %v1784 = vadd.f32 0.0, %v1783
      %v1785 = vpop.f32.mrb[0].mxu0
      %v1786 = vpop.f32.mrb[0].mxu0
      %v1787 = vadd.f32 0.0, %v1786
      %v1788 = vpop.f32.mrb[0].mxu0
      %1789 = vmatprep.mubr.bf16.mxu0 0
      %1790 = vmatmul.mubr.bf16.gmra.mrb[0].mxu0 %v1599
      %v1791 = vpop.f32.mrb[0].mxu0
      %v1792 = vadd.f32 0.0, %v1791
      %v1793 = vpop.f32.mrb[0].mxu0
      %v1794 = vpop.f32.mrb[0].mxu0
      %v1795 = vadd.f32 0.0, %v1794
      %v1796 = vpop.f32.mrb[0].mxu0
      %1797 = vmatprep.mubr.bf16.mxu0 0
      %1798 = vmatmul.mubr.bf16.gmra.mrb[0].mxu0 %v1602
      %v1799 = vpop.f32.mrb[0].mxu0
      %v1800 = vadd.f32 0.0, %v1799
      %v1801 = vpop.f32.mrb[0].mxu0
      %v1802 = vpop.f32.mrb[0].mxu0
      %v1803 = vadd.f32 0.0, %v1802
      %v1804 = vpop.f32.mrb[0].mxu0
      %1805 = vmatprep.mubr.bf16.mxu0 0
      %1806 = vmatmul.mubr.bf16.gmra.mrb[0].mxu0 %v1605
      %v1807 = vpop.f32.mrb[0].mxu0
      %v1808 = vadd.f32 0.0, %v1807
      %v1809 = vpop.f32.mrb[0].mxu0
      %v1810 = vpop.f32.mrb[0].mxu0
      %v1811 = vadd.f32 0.0, %v1810
      %v1812 = vpop.f32.mrb[0].mxu0
      %1813 = vmatprep.mubr.bf16.mxu0 0
      %1814 = vmatmul.mubr.bf16.gmra.mrb[0].mxu0 %v1608
      %v1815 = vpop.f32.mrb[0].mxu0
      %v1816 = vadd.f32 0.0, %v1815
      %v1817 = vpop.f32.mrb[0].mxu0
      %v1818 = vpop.f32.mrb[0].mxu0
      %v1819 = vadd.f32 0.0, %v1818
      %v1820 = vpop.f32.mrb[0].mxu0
      %1821 = vmatprep.mubr.bf16.mxu0 0
      %1822 = vmatmul.mubr.bf16.gmra.mrb[0].mxu0 %v1611
      %v1823 = vpop.f32.mrb[0].mxu0
      %v1824 = vadd.f32 0.0, %v1823
      %v1825 = vpop.f32.mrb[0].mxu0
      %v1826 = vpop.f32.mrb[0].mxu0
      %v1827 = vadd.f32 0.0, %v1826
      %v1828 = vpop.f32.mrb[0].mxu0
      %1829 = vmatprep.mubr.bf16.mxu0 0
      %1830 = vmatmul.mubr.bf16.gmra.mrb[0].mxu0 %v1614
      %v1831 = vpop.f32.mrb[0].mxu0
      %v1832 = vadd.f32 0.0, %v1831
      %v1833 = vpop.f32.mrb[0].mxu0
      %v1834 = vpop.f32.mrb[0].mxu0
      %v1835 = vadd.f32 0.0, %v1834
      %v1836 = vpop.f32.mrb[0].mxu0
      %1837 = vmatprep.mubr.bf16.mxu0 0
      %1838 = vmatmul.mubr.bf16.gmra.mrb[0].mxu0 %v1617
      %v1839 = vpop.f32.mrb[0].mxu0
      %v1840 = vadd.f32 0.0, %v1839
      %v1841 = vpop.f32.mrb[0].mxu0
      %v1842 = vpop.f32.mrb[0].mxu0
      %v1843 = vadd.f32 0.0, %v1842
      %v1844 = vpop.f32.mrb[0].mxu0
      %1845 = vmatprep.mubr.bf16.mxu0 0
      %1846 = vmatmul.mubr.bf16.gmra.mrb[0].mxu0 %v1620
      %v1847 = vpop.f32.mrb[0].mxu0
      %v1848 = vadd.f32 0.0, %v1847
      %v1849 = vpop.f32.mrb[0].mxu0
      %v1850 = vpop.f32.mrb[0].mxu0
      %v1851 = vadd.f32 0.0, %v1850
      %v1852 = vpop.f32.mrb[0].mxu0
      %1853 = vmatprep.mubr.bf16.mxu0 0
      %1854 = vmatmul.mubr.bf16.gmra.mrb[0].mxu0 %v1623
      %v1855 = vpop.f32.mrb[0].mxu0
      %v1856 = vadd.f32 0.0, %v1855
      %v1857 = vpop.f32.mrb[0].mxu0
      %v1858 = vpop.f32.mrb[0].mxu0
      %v1859 = vadd.f32 0.0, %v1858
      %v1860 = vpop.f32.mrb[0].mxu0
      %1861 = vmatprep.mubr.bf16.mxu0 0
      %1862 = vmatmul.mubr.bf16.gmra.mrb[0].mxu0 %v1626
      %v1863 = vpop.f32.mrb[0].mxu0
      %v1864 = vadd.f32 0.0, %v1863
      %v1865 = vpop.f32.mrb[0].mxu0
      %v1866 = vpop.f32.mrb[0].mxu0
      %v1867 = vadd.f32 0.0, %v1866
      %v1868 = vpop.f32.mrb[0].mxu0
      %1869 = vmatprep.mubr.bf16.mxu0 0
      %1870 = vmatmul.mubr.bf16.gmra.mrb[0].mxu0 %v1629
      %v1871 = vpop.f32.mrb[0].mxu0
      %v1872 = vadd.f32 0.0, %v1871
      %v1873 = vpop.f32.mrb[0].mxu0
      %v1874 = vpop.f32.mrb[0].mxu0
      %v1875 = vadd.f32 0.0, %v1874
      %v1876 = vpop.f32.mrb[0].mxu0
      %1877 = vmatprep.mubr.bf16.mxu0 0
      %1878 = vmatmul.mubr.bf16.gmra.mrb[0].mxu0 %v1632
      %v1879 = vpop.f32.mrb[0].mxu0
      %v1880 = vadd.f32 0.0, %v1879
      %v1881 = vpop.f32.mrb[0].mxu0
      %v1882 = vpop.f32.mrb[0].mxu0
      %v1883 = vadd.f32 0.0, %v1882
      %v1884 = vpop.f32.mrb[0].mxu0
      %1885 = vmatprep.mubr.bf16.mxu0 0
      %1886 = vmatmul.mubr.bf16.gmra.mrb[0].mxu0 %v1635
      %v1887 = vpop.f32.mrb[0].mxu0
      %v1888 = vadd.f32 0.0, %v1887
      %v1889 = vpop.f32.mrb[0].mxu0
      %v1890 = vpop.f32.mrb[0].mxu0
      %v1891 = vadd.f32 0.0, %v1890
      %v1892 = vpop.f32.mrb[0].mxu0
      %1893 = vdwg.mxu0
      %v1894 = vld [vmem:[%s6] sm:$0xf]
      %v1895 = vld [vmem:[%s6 + $0x4] sm:$0xf]
      %v1896 = vld [vmem:[%s6 + $0x8] sm:$0xf]
      %v1897 = vld [vmem:[%s6 + $0xc] sm:$0xf]
      %v1898 = vpack.c.bf16 %v1675, %v1672
      %v1899 = vpack.c.bf16 %v1683, %v1680
      %v1900 = vpack.c.bf16 %v1691, %v1688
      %v1901 = vpack.c.bf16 %v1699, %v1696
      %v1902 = vpack.c.bf16 %v1707, %v1704
      %v1903 = vpack.c.bf16 %v1715, %v1712
      %v1904 = vpack.c.bf16 %v1723, %v1720
      %v1905 = vpack.c.bf16 %v1731, %v1728
      %v1906 = vpack.c.bf16 %v1739, %v1736
      %v1907 = vpack.c.bf16 %v1747, %v1744
      %v1908 = vpack.c.bf16 %v1755, %v1752
      %v1909 = vpack.c.bf16 %v1763, %v1760
      %v1910 = vpack.c.bf16 %v1771, %v1768
      %v1911 = vpack.c.bf16 %v1779, %v1776
      %v1912 = vpack.c.bf16 %v1787, %v1784
      %v1913 = vpack.c.bf16 %v1795, %v1792
      %v1914 = vpack.c.bf16 %v1803, %v1800
      %v1915 = vpack.c.bf16 %v1811, %v1808
      %v1916 = vpack.c.bf16 %v1819, %v1816
      %v1917 = vpack.c.bf16 %v1827, %v1824
      %v1918 = vpack.c.bf16 %v1835, %v1832
      %v1919 = vpack.c.bf16 %v1843, %v1840
      %v1920 = vpack.c.bf16 %v1851, %v1848
      %v1921 = vpack.c.bf16 %v1859, %v1856
      %v1922 = vpack.c.bf16 %v1867, %v1864
      %v1923 = vpack.c.bf16 %v1875, %v1872
      %v1924 = vpack.c.bf16 %v1883, %v1880
      %v1925 = vpack.c.bf16 %v1891, %v1888
      %s1926 = scalar_lea.vmem %s6, 16
      %v1927 = vld [vmem:[%s1926] sm:$0xf]
      %v1928 = vld [vmem:[%s1926 + $0x4] sm:$0xf]
      %v1929 = vld [vmem:[%s1926 + $0x8] sm:$0xf]
      %v1930 = vld [vmem:[%s1926 + $0xc] sm:$0xf]
      %v1931 = vpack.c.bf16 %v1194, %v1191
      %v1932 = vpack.c.bf16 %v1202, %v1199
      %v1933 = vpack.c.bf16 %v1210, %v1207
      %v1934 = vpack.c.bf16 %v1218, %v1215
      %v1935 = vpack.c.bf16 %v1226, %v1223
      %v1936 = vpack.c.bf16 %v1234, %v1231
      %v1937 = vpack.c.bf16 %v1242, %v1239
      %v1938 = vpack.c.bf16 %v1250, %v1247
      %v1939 = vpack.c.bf16 %v1258, %v1255
      %v1940 = vpack.c.bf16 %v1266, %v1263
      %v1941 = vpack.c.bf16 %v1274, %v1271
      %v1942 = vpack.c.bf16 %v1282, %v1279
      %v1943 = vpack.c.bf16 %v1290, %v1287
      %v1944 = vpack.c.bf16 %v1298, %v1295
      %v1945 = vpack.c.bf16 %v1306, %v1303
      %v1946 = vpack.c.bf16 %v1314, %v1311
      %v1947 = vpack.c.bf16 %v1322, %v1319
      %v1948 = vpack.c.bf16 %v1330, %v1327
      %v1949 = vpack.c.bf16 %v1338, %v1335
      %v1950 = vpack.c.bf16 %v1346, %v1343
      %v1951 = vpack.c.bf16 %v1354, %v1351
      %v1952 = vpack.c.bf16 %v1362, %v1359
      %v1953 = vpack.c.bf16 %v1370, %v1367
      %v1954 = vpack.c.bf16 %v1378, %v1375
      %v1955 = vpack.c.bf16 %v1386, %v1383
      %v1956 = vpack.c.bf16 %v1394, %v1391
      %v1957 = vpack.c.bf16 %v1402, %v1399
      %v1958 = vpack.c.bf16 %v1410, %v1407
      %v1963 = vunpack.c.l.b16 %v1927
      %v1964 = vunpack.c.l.b16 %v1928
      %v1965 = vunpack.c.l.b16 %v1929
      %v1966 = vunpack.c.l.b16 %v1930
      %v1967 = vpack.c.b16 %v1964, %v1963
      %v1968 = vpack.c.b16 %v1966, %v1965
      %v1972 = vsel %vm604, %v1931, 0
      %v1975 = vsel %vm604, %v1932, 0
      %v1978 = vsel %vm604, %v1933, 0
      %v1981 = vsel %vm604, %v1934, 0
      %v1984 = vsel %vm604, %v1935, 0
      %v1987 = vsel %vm604, %v1936, 0
      %v1990 = vsel %vm604, %v1937, 0
      %v1993 = vsel %vm604, %v1938, 0
      %v1996 = vsel %vm604, %v1939, 0
      %v1999 = vsel %vm604, %v1940, 0
      %v2002 = vsel %vm604, %v1941, 0
      %v2005 = vsel %vm604, %v1942, 0
      %v2008 = vsel %vm604, %v1943, 0
      %v2011 = vsel %vm604, %v1944, 0
      %v2014 = vsel %vm604, %v1945, 0
      %v2017 = vsel %vm604, %v1946, 0
      %v2020 = vsel %vm604, %v1947, 0
      %v2023 = vsel %vm604, %v1948, 0
      %v2026 = vsel %vm604, %v1949, 0
      %v2029 = vsel %vm604, %v1950, 0
      %v2032 = vsel %vm604, %v1951, 0
      %v2035 = vsel %vm604, %v1952, 0
      %v2038 = vsel %vm604, %v1953, 0
      %v2041 = vsel %vm604, %v1954, 0
      %v2044 = vsel %vm604, %v1955, 0
      %v2047 = vsel %vm604, %v1956, 0
      %v2050 = vsel %vm604, %v1957, 0
      %v2053 = vsel %vm604, %v1958, 0
      %2055 = vmatprep.subr.bf16.mxu0 0
      %2056 = vmatpush1.bf16.msra.mxu0 %v1967
      %2057 = vmatprep.subr.bf16.mxu0 0
      %2058 = vmatpush1.bf16.msra.mxu0 %v1968
      %2059 = vmatprep.subr.bf16.mxu0 0
      %2060 = vmatpush1.bf16.msra.mxu0 0
      %2061 = vmatprep.subr.bf16.mxu0 0
      %2062 = vmatpush1.bf16.msra.mxu0 0
      %2063 = vmatprep.subr.bf16.mxu0 0
      %2064 = vmatpush1.bf16.msra.mxu0 0
      %2065 = vmatprep.subr.bf16.mxu0 0
      %2066 = vmatpush1.bf16.msra.mxu0 0
      %2067 = vmatprep.subr.bf16.mxu0 0
      %2068 = vmatpush1.bf16.msra.mxu0 0
      %2069 = vmatprep.subr.bf16.mxu0 0
      %2070 = vmatpush1.bf16.msra.mxu0 0
      %2071 = vmatprep.subr.bf16.mxu0 0
      %2072 = vmatpush1.bf16.msra.mxu0 0
      %2073 = vmatprep.subr.bf16.mxu0 0
      %2074 = vmatpush1.bf16.msra.mxu0 0
      %2075 = vmatprep.subr.bf16.mxu0 0
      %2076 = vmatpush1.bf16.msra.mxu0 0
      %2077 = vmatprep.subr.bf16.mxu0 0
      %2078 = vmatpush1.bf16.msra.mxu0 0
      %2079 = vmatprep.subr.bf16.mxu0 0
      %2080 = vmatpush1.bf16.msra.mxu0 0
      %2081 = vmatprep.subr.bf16.mxu0 0
      %2082 = vmatpush1.bf16.msra.mxu0 0
      %2083 = vmatprep.subr.bf16.mxu0 0
      %2084 = vmatpush1.bf16.msra.mxu0 0
      %2085 = vmatprep.subr.bf16.mxu0 0
      %2086 = vmatpush1.bf16.msra.mxu0 0
      %2087 = vmatprep.mubr.bf16.mxu0 0
      %2088 = vmatmul.mubr.bf16.gmra.mrb[0].mxu0 %v1972
      %v2089 = vpop.f32.mrb[0].mxu0
      %v2090 = vadd.f32 0.0, %v2089
      %v2091 = vpop.f32.mrb[0].mxu0
      %v2092 = vpop.f32.mrb[0].mxu0
      %v2093 = vadd.f32 0.0, %v2092
      %v2094 = vpop.f32.mrb[0].mxu0
      %2095 = vmatprep.mubr.bf16.mxu0 0
      %2096 = vmatmul.mubr.bf16.gmra.mrb[0].mxu0 %v1975
      %v2097 = vpop.f32.mrb[0].mxu0
      %v2098 = vadd.f32 0.0, %v2097
      %v2099 = vpop.f32.mrb[0].mxu0
      %v2100 = vpop.f32.mrb[0].mxu0
      %v2101 = vadd.f32 0.0, %v2100
      %v2102 = vpop.f32.mrb[0].mxu0
      %2103 = vmatprep.mubr.bf16.mxu0 0
      %2104 = vmatmul.mubr.bf16.gmra.mrb[0].mxu0 %v1978
      %v2105 = vpop.f32.mrb[0].mxu0
      %v2106 = vadd.f32 0.0, %v2105
      %v2107 = vpop.f32.mrb[0].mxu0
      %v2108 = vpop.f32.mrb[0].mxu0
      %v2109 = vadd.f32 0.0, %v2108
      %v2110 = vpop.f32.mrb[0].mxu0
      %2111 = vmatprep.mubr.bf16.mxu0 0
      %2112 = vmatmul.mubr.bf16.gmra.mrb[0].mxu0 %v1981
      %v2113 = vpop.f32.mrb[0].mxu0
      %v2114 = vadd.f32 0.0, %v2113
      %v2115 = vpop.f32.mrb[0].mxu0
      %v2116 = vpop.f32.mrb[0].mxu0
      %v2117 = vadd.f32 0.0, %v2116
      %v2118 = vpop.f32.mrb[0].mxu0
      %2119 = vmatprep.mubr.bf16.mxu0 0
      %2120 = vmatmul.mubr.bf16.gmra.mrb[0].mxu0 %v1984
      %v2121 = vpop.f32.mrb[0].mxu0
      %v2122 = vadd.f32 0.0, %v2121
      %v2123 = vpop.f32.mrb[0].mxu0
      %v2124 = vpop.f32.mrb[0].mxu0
      %v2125 = vadd.f32 0.0, %v2124
      %v2126 = vpop.f32.mrb[0].mxu0
      %2127 = vmatprep.mubr.bf16.mxu0 0
      %2128 = vmatmul.mubr.bf16.gmra.mrb[0].mxu0 %v1987
      %v2129 = vpop.f32.mrb[0].mxu0
      %v2130 = vadd.f32 0.0, %v2129
      %v2131 = vpop.f32.mrb[0].mxu0
      %v2132 = vpop.f32.mrb[0].mxu0
      %v2133 = vadd.f32 0.0, %v2132
      %v2134 = vpop.f32.mrb[0].mxu0
      %2135 = vmatprep.mubr.bf16.mxu0 0
      %2136 = vmatmul.mubr.bf16.gmra.mrb[0].mxu0 %v1990
      %v2137 = vpop.f32.mrb[0].mxu0
      %v2138 = vadd.f32 0.0, %v2137
      %v2139 = vpop.f32.mrb[0].mxu0
      %v2140 = vpop.f32.mrb[0].mxu0
      %v2141 = vadd.f32 0.0, %v2140
      %v2142 = vpop.f32.mrb[0].mxu0
      %2143 = vmatprep.mubr.bf16.mxu0 0
      %2144 = vmatmul.mubr.bf16.gmra.mrb[0].mxu0 %v1993
      %v2145 = vpop.f32.mrb[0].mxu0
      %v2146 = vadd.f32 0.0, %v2145
      %v2147 = vpop.f32.mrb[0].mxu0
      %v2148 = vpop.f32.mrb[0].mxu0
      %v2149 = vadd.f32 0.0, %v2148
      %v2150 = vpop.f32.mrb[0].mxu0
      %2151 = vmatprep.mubr.bf16.mxu0 0
      %2152 = vmatmul.mubr.bf16.gmra.mrb[0].mxu0 %v1996
      %v2153 = vpop.f32.mrb[0].mxu0
      %v2154 = vadd.f32 0.0, %v2153
      %v2155 = vpop.f32.mrb[0].mxu0
      %v2156 = vpop.f32.mrb[0].mxu0
      %v2157 = vadd.f32 0.0, %v2156
      %v2158 = vpop.f32.mrb[0].mxu0
      %2159 = vmatprep.mubr.bf16.mxu0 0
      %2160 = vmatmul.mubr.bf16.gmra.mrb[0].mxu0 %v1999
      %v2161 = vpop.f32.mrb[0].mxu0
      %v2162 = vadd.f32 0.0, %v2161
      %v2163 = vpop.f32.mrb[0].mxu0
      %v2164 = vpop.f32.mrb[0].mxu0
      %v2165 = vadd.f32 0.0, %v2164
      %v2166 = vpop.f32.mrb[0].mxu0
      %2167 = vmatprep.mubr.bf16.mxu0 0
      %2168 = vmatmul.mubr.bf16.gmra.mrb[0].mxu0 %v2002
      %v2169 = vpop.f32.mrb[0].mxu0
      %v2170 = vadd.f32 0.0, %v2169
      %v2171 = vpop.f32.mrb[0].mxu0
      %v2172 = vpop.f32.mrb[0].mxu0
      %v2173 = vadd.f32 0.0, %v2172
      %v2174 = vpop.f32.mrb[0].mxu0
      %2175 = vmatprep.mubr.bf16.mxu0 0
      %2176 = vmatmul.mubr.bf16.gmra.mrb[0].mxu0 %v2005
      %v2177 = vpop.f32.mrb[0].mxu0
      %v2178 = vadd.f32 0.0, %v2177
      %v2179 = vpop.f32.mrb[0].mxu0
      %v2180 = vpop.f32.mrb[0].mxu0
      %v2181 = vadd.f32 0.0, %v2180
      %v2182 = vpop.f32.mrb[0].mxu0
      %2183 = vmatprep.mubr.bf16.mxu0 0
      %2184 = vmatmul.mubr.bf16.gmra.mrb[0].mxu0 %v2008
      %v2185 = vpop.f32.mrb[0].mxu0
      %v2186 = vadd.f32 0.0, %v2185
      %v2187 = vpop.f32.mrb[0].mxu0
      %v2188 = vpop.f32.mrb[0].mxu0
      %v2189 = vadd.f32 0.0, %v2188
      %v2190 = vpop.f32.mrb[0].mxu0
      %2191 = vmatprep.mubr.bf16.mxu0 0
      %2192 = vmatmul.mubr.bf16.gmra.mrb[0].mxu0 %v2011
      %v2193 = vpop.f32.mrb[0].mxu0
      %v2194 = vadd.f32 0.0, %v2193
      %v2195 = vpop.f32.mrb[0].mxu0
      %v2196 = vpop.f32.mrb[0].mxu0
      %v2197 = vadd.f32 0.0, %v2196
      %v2198 = vpop.f32.mrb[0].mxu0
      %2199 = vmatprep.mubr.bf16.mxu0 0
      %2200 = vmatmul.mubr.bf16.gmra.mrb[0].mxu0 %v2014
      %v2201 = vpop.f32.mrb[0].mxu0
      %v2202 = vadd.f32 0.0, %v2201
      %v2203 = vpop.f32.mrb[0].mxu0
      %v2204 = vpop.f32.mrb[0].mxu0
      %v2205 = vadd.f32 0.0, %v2204
      %v2206 = vpop.f32.mrb[0].mxu0
      %2207 = vmatprep.mubr.bf16.mxu0 0
      %2208 = vmatmul.mubr.bf16.gmra.mrb[0].mxu0 %v2017
      %v2209 = vpop.f32.mrb[0].mxu0
      %v2210 = vadd.f32 0.0, %v2209
      %v2211 = vpop.f32.mrb[0].mxu0
      %v2212 = vpop.f32.mrb[0].mxu0
      %v2213 = vadd.f32 0.0, %v2212
      %v2214 = vpop.f32.mrb[0].mxu0
      %2215 = vmatprep.mubr.bf16.mxu0 0
      %2216 = vmatmul.mubr.bf16.gmra.mrb[0].mxu0 %v2020
      %v2217 = vpop.f32.mrb[0].mxu0
      %v2218 = vadd.f32 0.0, %v2217
      %v2219 = vpop.f32.mrb[0].mxu0
      %v2220 = vpop.f32.mrb[0].mxu0
      %v2221 = vadd.f32 0.0, %v2220
      %v2222 = vpop.f32.mrb[0].mxu0
      %2223 = vmatprep.mubr.bf16.mxu0 0
      %2224 = vmatmul.mubr.bf16.gmra.mrb[0].mxu0 %v2023
      %v2225 = vpop.f32.mrb[0].mxu0
      %v2226 = vadd.f32 0.0, %v2225
      %v2227 = vpop.f32.mrb[0].mxu0
      %v2228 = vpop.f32.mrb[0].mxu0
      %v2229 = vadd.f32 0.0, %v2228
      %v2230 = vpop.f32.mrb[0].mxu0
      %2231 = vmatprep.mubr.bf16.mxu0 0
      %2232 = vmatmul.mubr.bf16.gmra.mrb[0].mxu0 %v2026
      %v2233 = vpop.f32.mrb[0].mxu0
      %v2234 = vadd.f32 0.0, %v2233
      %v2235 = vpop.f32.mrb[0].mxu0
      %v2236 = vpop.f32.mrb[0].mxu0
      %v2237 = vadd.f32 0.0, %v2236
      %v2238 = vpop.f32.mrb[0].mxu0
      %2239 = vmatprep.mubr.bf16.mxu0 0
      %2240 = vmatmul.mubr.bf16.gmra.mrb[0].mxu0 %v2029
      %v2241 = vpop.f32.mrb[0].mxu0
      %v2242 = vadd.f32 0.0, %v2241
      %v2243 = vpop.f32.mrb[0].mxu0
      %v2244 = vpop.f32.mrb[0].mxu0
      %v2245 = vadd.f32 0.0, %v2244
      %v2246 = vpop.f32.mrb[0].mxu0
      %2247 = vmatprep.mubr.bf16.mxu0 0
      %2248 = vmatmul.mubr.bf16.gmra.mrb[0].mxu0 %v2032
      %v2249 = vpop.f32.mrb[0].mxu0
      %v2250 = vadd.f32 0.0, %v2249
      %v2251 = vpop.f32.mrb[0].mxu0
      %v2252 = vpop.f32.mrb[0].mxu0
      %v2253 = vadd.f32 0.0, %v2252
      %v2254 = vpop.f32.mrb[0].mxu0
      %2255 = vmatprep.mubr.bf16.mxu0 0
      %2256 = vmatmul.mubr.bf16.gmra.mrb[0].mxu0 %v2035
      %v2257 = vpop.f32.mrb[0].mxu0
      %v2258 = vadd.f32 0.0, %v2257
      %v2259 = vpop.f32.mrb[0].mxu0
      %v2260 = vpop.f32.mrb[0].mxu0
      %v2261 = vadd.f32 0.0, %v2260
      %v2262 = vpop.f32.mrb[0].mxu0
      %2263 = vmatprep.mubr.bf16.mxu0 0
      %2264 = vmatmul.mubr.bf16.gmra.mrb[0].mxu0 %v2038
      %v2265 = vpop.f32.mrb[0].mxu0
      %v2266 = vadd.f32 0.0, %v2265
      %v2267 = vpop.f32.mrb[0].mxu0
      %v2268 = vpop.f32.mrb[0].mxu0
      %v2269 = vadd.f32 0.0, %v2268
      %v2270 = vpop.f32.mrb[0].mxu0
      %2271 = vmatprep.mubr.bf16.mxu0 0
      %2272 = vmatmul.mubr.bf16.gmra.mrb[0].mxu0 %v2041
      %v2273 = vpop.f32.mrb[0].mxu0
      %v2274 = vadd.f32 0.0, %v2273
      %v2275 = vpop.f32.mrb[0].mxu0
      %v2276 = vpop.f32.mrb[0].mxu0
      %v2277 = vadd.f32 0.0, %v2276
      %v2278 = vpop.f32.mrb[0].mxu0
      %2279 = vmatprep.mubr.bf16.mxu0 0
      %2280 = vmatmul.mubr.bf16.gmra.mrb[0].mxu0 %v2044
      %v2281 = vpop.f32.mrb[0].mxu0
      %v2282 = vadd.f32 0.0, %v2281
      %v2283 = vpop.f32.mrb[0].mxu0
      %v2284 = vpop.f32.mrb[0].mxu0
      %v2285 = vadd.f32 0.0, %v2284
      %v2286 = vpop.f32.mrb[0].mxu0
      %2287 = vmatprep.mubr.bf16.mxu0 0
      %2288 = vmatmul.mubr.bf16.gmra.mrb[0].mxu0 %v2047
      %v2289 = vpop.f32.mrb[0].mxu0
      %v2290 = vadd.f32 0.0, %v2289
      %v2291 = vpop.f32.mrb[0].mxu0
      %v2292 = vpop.f32.mrb[0].mxu0
      %v2293 = vadd.f32 0.0, %v2292
      %v2294 = vpop.f32.mrb[0].mxu0
      %2295 = vmatprep.mubr.bf16.mxu0 0
      %2296 = vmatmul.mubr.bf16.gmra.mrb[0].mxu0 %v2050
      %v2297 = vpop.f32.mrb[0].mxu0
      %v2298 = vadd.f32 0.0, %v2297
      %v2299 = vpop.f32.mrb[0].mxu0
      %v2300 = vpop.f32.mrb[0].mxu0
      %v2301 = vadd.f32 0.0, %v2300
      %v2302 = vpop.f32.mrb[0].mxu0
      %2303 = vmatprep.mubr.bf16.mxu0 0
      %2304 = vmatmul.mubr.bf16.gmra.mrb[0].mxu0 %v2053
      %v2305 = vpop.f32.mrb[0].mxu0
      %v2306 = vadd.f32 0.0, %v2305
      %v2307 = vpop.f32.mrb[0].mxu0
      %v2308 = vpop.f32.mrb[0].mxu0
      %v2309 = vadd.f32 0.0, %v2308
      %v2310 = vpop.f32.mrb[0].mxu0
      %2311 = vdwg.mxu0
      %v2316 = vunpack.c.l.b16 %v1894
      %v2317 = vunpack.c.l.b16 %v1895
      %v2318 = vunpack.c.l.b16 %v1896
      %v2319 = vunpack.c.l.b16 %v1897
      %v2320 = vpack.c.b16 %v2317, %v2316
      %v2321 = vpack.c.b16 %v2319, %v2318
      %v2325 = vsel %vm604, %v1898, 0
      %v2328 = vsel %vm604, %v1899, 0
      %v2331 = vsel %vm604, %v1900, 0
      %v2334 = vsel %vm604, %v1901, 0
      %v2337 = vsel %vm604, %v1902, 0
      %v2340 = vsel %vm604, %v1903, 0
      %v2343 = vsel %vm604, %v1904, 0
      %v2346 = vsel %vm604, %v1905, 0
      %v2349 = vsel %vm604, %v1906, 0
      %v2352 = vsel %vm604, %v1907, 0
      %v2355 = vsel %vm604, %v1908, 0
      %v2358 = vsel %vm604, %v1909, 0
      %v2361 = vsel %vm604, %v1910, 0
      %v2364 = vsel %vm604, %v1911, 0
      %v2367 = vsel %vm604, %v1912, 0
      %v2370 = vsel %vm604, %v1913, 0
      %v2373 = vsel %vm604, %v1914, 0
      %v2376 = vsel %vm604, %v1915, 0
      %v2379 = vsel %vm604, %v1916, 0
      %v2382 = vsel %vm604, %v1917, 0
      %v2385 = vsel %vm604, %v1918, 0
      %v2388 = vsel %vm604, %v1919, 0
      %v2391 = vsel %vm604, %v1920, 0
      %v2394 = vsel %vm604, %v1921, 0
      %v2397 = vsel %vm604, %v1922, 0
      %v2400 = vsel %vm604, %v1923, 0
      %v2403 = vsel %vm604, %v1924, 0
      %v2406 = vsel %vm604, %v1925, 0
      %2408 = vmatprep.subr.bf16.mxu0 0
      %2409 = vmatpush1.bf16.msra.mxu0 %v2320
      %2410 = vmatprep.subr.bf16.mxu0 0
      %2411 = vmatpush1.bf16.msra.mxu0 %v2321
      %2412 = vmatprep.subr.bf16.mxu0 0
      %2413 = vmatpush1.bf16.msra.mxu0 0
      %2414 = vmatprep.subr.bf16.mxu0 0
      %2415 = vmatpush1.bf16.msra.mxu0 0
      %2416 = vmatprep.subr.bf16.mxu0 0
      %2417 = vmatpush1.bf16.msra.mxu0 0
      %2418 = vmatprep.subr.bf16.mxu0 0
      %2419 = vmatpush1.bf16.msra.mxu0 0
      %2420 = vmatprep.subr.bf16.mxu0 0
      %2421 = vmatpush1.bf16.msra.mxu0 0
      %2422 = vmatprep.subr.bf16.mxu0 0
      %2423 = vmatpush1.bf16.msra.mxu0 0
      %2424 = vmatprep.subr.bf16.mxu0 0
      %2425 = vmatpush1.bf16.msra.mxu0 0
      %2426 = vmatprep.subr.bf16.mxu0 0
      %2427 = vmatpush1.bf16.msra.mxu0 0
      %2428 = vmatprep.subr.bf16.mxu0 0
      %2429 = vmatpush1.bf16.msra.mxu0 0
      %2430 = vmatprep.subr.bf16.mxu0 0
      %2431 = vmatpush1.bf16.msra.mxu0 0
      %2432 = vmatprep.subr.bf16.mxu0 0
      %2433 = vmatpush1.bf16.msra.mxu0 0
      %2434 = vmatprep.subr.bf16.mxu0 0
      %2435 = vmatpush1.bf16.msra.mxu0 0
      %2436 = vmatprep.subr.bf16.mxu0 0
      %2437 = vmatpush1.bf16.msra.mxu0 0
      %2438 = vmatprep.subr.bf16.mxu0 0
      %2439 = vmatpush1.bf16.msra.mxu0 0
      %2440 = vmatprep.mubr.bf16.mxu0 0
      %2441 = vmatmul.mubr.bf16.gmra.mrb[0].mxu0 %v2325
      %v2442 = vpop.f32.mrb[0].mxu0
      %v2443 = vadd.f32 %v2090, %v2442
      %v2444 = vpop.f32.mrb[0].mxu0
      %v2445 = vpop.f32.mrb[0].mxu0
      %v2446 = vadd.f32 %v2093, %v2445
      %v2447 = vpop.f32.mrb[0].mxu0
      %2448 = vmatprep.mubr.bf16.mxu0 0
      %2449 = vmatmul.mubr.bf16.gmra.mrb[0].mxu0 %v2328
      %v2450 = vpop.f32.mrb[0].mxu0
      %v2451 = vadd.f32 %v2098, %v2450
      %v2452 = vpop.f32.mrb[0].mxu0
      %v2453 = vpop.f32.mrb[0].mxu0
      %v2454 = vadd.f32 %v2101, %v2453
      %v2455 = vpop.f32.mrb[0].mxu0
      %2456 = vmatprep.mubr.bf16.mxu0 0
      %2457 = vmatmul.mubr.bf16.gmra.mrb[0].mxu0 %v2331
      %v2458 = vpop.f32.mrb[0].mxu0
      %v2459 = vadd.f32 %v2106, %v2458
      %v2460 = vpop.f32.mrb[0].mxu0
      %v2461 = vpop.f32.mrb[0].mxu0
      %v2462 = vadd.f32 %v2109, %v2461
      %v2463 = vpop.f32.mrb[0].mxu0
      %2464 = vmatprep.mubr.bf16.mxu0 0
      %2465 = vmatmul.mubr.bf16.gmra.mrb[0].mxu0 %v2334
      %v2466 = vpop.f32.mrb[0].mxu0
      %v2467 = vadd.f32 %v2114, %v2466
      %v2468 = vpop.f32.mrb[0].mxu0
      %v2469 = vpop.f32.mrb[0].mxu0
      %v2470 = vadd.f32 %v2117, %v2469
      %v2471 = vpop.f32.mrb[0].mxu0
      %2472 = vmatprep.mubr.bf16.mxu0 0
      %2473 = vmatmul.mubr.bf16.gmra.mrb[0].mxu0 %v2337
      %v2474 = vpop.f32.mrb[0].mxu0
      %v2475 = vadd.f32 %v2122, %v2474
      %v2476 = vpop.f32.mrb[0].mxu0
      %v2477 = vpop.f32.mrb[0].mxu0
      %v2478 = vadd.f32 %v2125, %v2477
      %v2479 = vpop.f32.mrb[0].mxu0
      %2480 = vmatprep.mubr.bf16.mxu0 0
      %2481 = vmatmul.mubr.bf16.gmra.mrb[0].mxu0 %v2340
      %v2482 = vpop.f32.mrb[0].mxu0
      %v2483 = vadd.f32 %v2130, %v2482
      %v2484 = vpop.f32.mrb[0].mxu0
      %v2485 = vpop.f32.mrb[0].mxu0
      %v2486 = vadd.f32 %v2133, %v2485
      %v2487 = vpop.f32.mrb[0].mxu0
      %2488 = vmatprep.mubr.bf16.mxu0 0
      %2489 = vmatmul.mubr.bf16.gmra.mrb[0].mxu0 %v2343
      %v2490 = vpop.f32.mrb[0].mxu0
      %v2491 = vadd.f32 %v2138, %v2490
      %v2492 = vpop.f32.mrb[0].mxu0
      %v2493 = vpop.f32.mrb[0].mxu0
      %v2494 = vadd.f32 %v2141, %v2493
      %v2495 = vpop.f32.mrb[0].mxu0
      %2496 = vmatprep.mubr.bf16.mxu0 0
      %2497 = vmatmul.mubr.bf16.gmra.mrb[0].mxu0 %v2346
      %v2498 = vpop.f32.mrb[0].mxu0
      %v2499 = vadd.f32 %v2146, %v2498
      %v2500 = vpop.f32.mrb[0].mxu0
      %v2501 = vpop.f32.mrb[0].mxu0
      %v2502 = vadd.f32 %v2149, %v2501
      %v2503 = vpop.f32.mrb[0].mxu0
      %2504 = vmatprep.mubr.bf16.mxu0 0
      %2505 = vmatmul.mubr.bf16.gmra.mrb[0].mxu0 %v2349
      %v2506 = vpop.f32.mrb[0].mxu0
      %v2507 = vadd.f32 %v2154, %v2506
      %v2508 = vpop.f32.mrb[0].mxu0
      %v2509 = vpop.f32.mrb[0].mxu0
      %v2510 = vadd.f32 %v2157, %v2509
      %v2511 = vpop.f32.mrb[0].mxu0
      %2512 = vmatprep.mubr.bf16.mxu0 0
      %2513 = vmatmul.mubr.bf16.gmra.mrb[0].mxu0 %v2352
      %v2514 = vpop.f32.mrb[0].mxu0
      %v2515 = vadd.f32 %v2162, %v2514
      %v2516 = vpop.f32.mrb[0].mxu0
      %v2517 = vpop.f32.mrb[0].mxu0
      %v2518 = vadd.f32 %v2165, %v2517
      %v2519 = vpop.f32.mrb[0].mxu0
      %2520 = vmatprep.mubr.bf16.mxu0 0
      %2521 = vmatmul.mubr.bf16.gmra.mrb[0].mxu0 %v2355
      %v2522 = vpop.f32.mrb[0].mxu0
      %v2523 = vadd.f32 %v2170, %v2522
      %v2524 = vpop.f32.mrb[0].mxu0
      %v2525 = vpop.f32.mrb[0].mxu0
      %v2526 = vadd.f32 %v2173, %v2525
      %v2527 = vpop.f32.mrb[0].mxu0
      %2528 = vmatprep.mubr.bf16.mxu0 0
      %2529 = vmatmul.mubr.bf16.gmra.mrb[0].mxu0 %v2358
      %v2530 = vpop.f32.mrb[0].mxu0
      %v2531 = vadd.f32 %v2178, %v2530
      %v2532 = vpop.f32.mrb[0].mxu0
      %v2533 = vpop.f32.mrb[0].mxu0
      %v2534 = vadd.f32 %v2181, %v2533
      %v2535 = vpop.f32.mrb[0].mxu0
      %2536 = vmatprep.mubr.bf16.mxu0 0
      %2537 = vmatmul.mubr.bf16.gmra.mrb[0].mxu0 %v2361
      %v2538 = vpop.f32.mrb[0].mxu0
      %v2539 = vadd.f32 %v2186, %v2538
      %v2540 = vpop.f32.mrb[0].mxu0
      %v2541 = vpop.f32.mrb[0].mxu0
      %v2542 = vadd.f32 %v2189, %v2541
      %v2543 = vpop.f32.mrb[0].mxu0
      %2544 = vmatprep.mubr.bf16.mxu0 0
      %2545 = vmatmul.mubr.bf16.gmra.mrb[0].mxu0 %v2364
      %v2546 = vpop.f32.mrb[0].mxu0
      %v2547 = vadd.f32 %v2194, %v2546
      %v2548 = vpop.f32.mrb[0].mxu0
      %v2549 = vpop.f32.mrb[0].mxu0
      %v2550 = vadd.f32 %v2197, %v2549
      %v2551 = vpop.f32.mrb[0].mxu0
      %2552 = vmatprep.mubr.bf16.mxu0 0
      %2553 = vmatmul.mubr.bf16.gmra.mrb[0].mxu0 %v2367
      %v2554 = vpop.f32.mrb[0].mxu0
      %v2555 = vadd.f32 %v2202, %v2554
      %v2556 = vpop.f32.mrb[0].mxu0
      %v2557 = vpop.f32.mrb[0].mxu0
      %v2558 = vadd.f32 %v2205, %v2557
      %v2559 = vpop.f32.mrb[0].mxu0
      %2560 = vmatprep.mubr.bf16.mxu0 0
      %2561 = vmatmul.mubr.bf16.gmra.mrb[0].mxu0 %v2370
      %v2562 = vpop.f32.mrb[0].mxu0
      %v2563 = vadd.f32 %v2210, %v2562
      %v2564 = vpop.f32.mrb[0].mxu0
      %v2565 = vpop.f32.mrb[0].mxu0
      %v2566 = vadd.f32 %v2213, %v2565
      %v2567 = vpop.f32.mrb[0].mxu0
      %2568 = vmatprep.mubr.bf16.mxu0 0
      %2569 = vmatmul.mubr.bf16.gmra.mrb[0].mxu0 %v2373
      %v2570 = vpop.f32.mrb[0].mxu0
      %v2571 = vadd.f32 %v2218, %v2570
      %v2572 = vpop.f32.mrb[0].mxu0
      %v2573 = vpop.f32.mrb[0].mxu0
      %v2574 = vadd.f32 %v2221, %v2573
      %v2575 = vpop.f32.mrb[0].mxu0
      %2576 = vmatprep.mubr.bf16.mxu0 0
      %2577 = vmatmul.mubr.bf16.gmra.mrb[0].mxu0 %v2376
      %v2578 = vpop.f32.mrb[0].mxu0
      %v2579 = vadd.f32 %v2226, %v2578
      %v2580 = vpop.f32.mrb[0].mxu0
      %v2581 = vpop.f32.mrb[0].mxu0
      %v2582 = vadd.f32 %v2229, %v2581
      %v2583 = vpop.f32.mrb[0].mxu0
      %2584 = vmatprep.mubr.bf16.mxu0 0
      %2585 = vmatmul.mubr.bf16.gmra.mrb[0].mxu0 %v2379
      %v2586 = vpop.f32.mrb[0].mxu0
      %v2587 = vadd.f32 %v2234, %v2586
      %v2588 = vpop.f32.mrb[0].mxu0
      %v2589 = vpop.f32.mrb[0].mxu0
      %v2590 = vadd.f32 %v2237, %v2589
      %v2591 = vpop.f32.mrb[0].mxu0
      %2592 = vmatprep.mubr.bf16.mxu0 0
      %2593 = vmatmul.mubr.bf16.gmra.mrb[0].mxu0 %v2382
      %v2594 = vpop.f32.mrb[0].mxu0
      %v2595 = vadd.f32 %v2242, %v2594
      %v2596 = vpop.f32.mrb[0].mxu0
      %v2597 = vpop.f32.mrb[0].mxu0
      %v2598 = vadd.f32 %v2245, %v2597
      %v2599 = vpop.f32.mrb[0].mxu0
      %2600 = vmatprep.mubr.bf16.mxu0 0
      %2601 = vmatmul.mubr.bf16.gmra.mrb[0].mxu0 %v2385
      %v2602 = vpop.f32.mrb[0].mxu0
      %v2603 = vadd.f32 %v2250, %v2602
      %v2604 = vpop.f32.mrb[0].mxu0
      %v2605 = vpop.f32.mrb[0].mxu0
      %v2606 = vadd.f32 %v2253, %v2605
      %v2607 = vpop.f32.mrb[0].mxu0
      %2608 = vmatprep.mubr.bf16.mxu0 0
      %2609 = vmatmul.mubr.bf16.gmra.mrb[0].mxu0 %v2388
      %v2610 = vpop.f32.mrb[0].mxu0
      %v2611 = vadd.f32 %v2258, %v2610
      %v2612 = vpop.f32.mrb[0].mxu0
      %v2613 = vpop.f32.mrb[0].mxu0
      %v2614 = vadd.f32 %v2261, %v2613
      %v2615 = vpop.f32.mrb[0].mxu0
      %2616 = vmatprep.mubr.bf16.mxu0 0
      %2617 = vmatmul.mubr.bf16.gmra.mrb[0].mxu0 %v2391
      %v2618 = vpop.f32.mrb[0].mxu0
      %v2619 = vadd.f32 %v2266, %v2618
      %v2620 = vpop.f32.mrb[0].mxu0
      %v2621 = vpop.f32.mrb[0].mxu0
      %v2622 = vadd.f32 %v2269, %v2621
      %v2623 = vpop.f32.mrb[0].mxu0
      %2624 = vmatprep.mubr.bf16.mxu0 0
      %2625 = vmatmul.mubr.bf16.gmra.mrb[0].mxu0 %v2394
      %v2626 = vpop.f32.mrb[0].mxu0
      %v2627 = vadd.f32 %v2274, %v2626
      %v2628 = vpop.f32.mrb[0].mxu0
      %v2629 = vpop.f32.mrb[0].mxu0
      %v2630 = vadd.f32 %v2277, %v2629
      %v2631 = vpop.f32.mrb[0].mxu0
      %2632 = vmatprep.mubr.bf16.mxu0 0
      %2633 = vmatmul.mubr.bf16.gmra.mrb[0].mxu0 %v2397
      %v2634 = vpop.f32.mrb[0].mxu0
      %v2635 = vadd.f32 %v2282, %v2634
      %v2636 = vpop.f32.mrb[0].mxu0
      %v2637 = vpop.f32.mrb[0].mxu0
      %v2638 = vadd.f32 %v2285, %v2637
      %v2639 = vpop.f32.mrb[0].mxu0
      %2640 = vmatprep.mubr.bf16.mxu0 0
      %2641 = vmatmul.mubr.bf16.gmra.mrb[0].mxu0 %v2400
      %v2642 = vpop.f32.mrb[0].mxu0
      %v2643 = vadd.f32 %v2290, %v2642
      %v2644 = vpop.f32.mrb[0].mxu0
      %v2645 = vpop.f32.mrb[0].mxu0
      %v2646 = vadd.f32 %v2293, %v2645
      %v2647 = vpop.f32.mrb[0].mxu0
      %2648 = vmatprep.mubr.bf16.mxu0 0
      %2649 = vmatmul.mubr.bf16.gmra.mrb[0].mxu0 %v2403
      %v2650 = vpop.f32.mrb[0].mxu0
      %v2651 = vadd.f32 %v2298, %v2650
      %v2652 = vpop.f32.mrb[0].mxu0
      %v2653 = vpop.f32.mrb[0].mxu0
      %v2654 = vadd.f32 %v2301, %v2653
      %v2655 = vpop.f32.mrb[0].mxu0
      %2656 = vmatprep.mubr.bf16.mxu0 0
      %2657 = vmatmul.mubr.bf16.gmra.mrb[0].mxu0 %v2406
      %v2658 = vpop.f32.mrb[0].mxu0
      %v2659 = vadd.f32 %v2306, %v2658
      %v2660 = vpop.f32.mrb[0].mxu0
      %v2661 = vpop.f32.mrb[0].mxu0
      %v2662 = vadd.f32 %v2309, %v2661
      %v2663 = vpop.f32.mrb[0].mxu0
      %2664 = vdwg.mxu0
      %v2665 = vld [vmem:[%s7] sm:$0x1]
      %v2667 = vlaneseq
      %v2668 = vshrl.u32 %v2667, 7
      %v2669 = vsub.s32 0, %v2668
      %v2670 = vrot.slane %v2665, %v2669
      %v2672 = vadd.f32 %v2443, %v2670
      %v2673 = vadd.f32 %v2446, %v2670
      %v2674 = vadd.f32 %v2451, %v2670
      %v2675 = vadd.f32 %v2454, %v2670
      %v2676 = vadd.f32 %v2459, %v2670
      %v2677 = vadd.f32 %v2462, %v2670
      %v2678 = vadd.f32 %v2467, %v2670
      %v2679 = vadd.f32 %v2470, %v2670
      %v2680 = vadd.f32 %v2475, %v2670
      %v2681 = vadd.f32 %v2478, %v2670
      %v2682 = vadd.f32 %v2483, %v2670
      %v2683 = vadd.f32 %v2486, %v2670
      %v2684 = vadd.f32 %v2491, %v2670
      %v2685 = vadd.f32 %v2494, %v2670
      %v2686 = vadd.f32 %v2499, %v2670
      %v2687 = vadd.f32 %v2502, %v2670
      %v2688 = vadd.f32 %v2507, %v2670
      %v2689 = vadd.f32 %v2510, %v2670
      %v2690 = vadd.f32 %v2515, %v2670
      %v2691 = vadd.f32 %v2518, %v2670
      %v2692 = vadd.f32 %v2523, %v2670
      %v2693 = vadd.f32 %v2526, %v2670
      %v2694 = vadd.f32 %v2531, %v2670
      %v2695 = vadd.f32 %v2534, %v2670
      %v2696 = vadd.f32 %v2539, %v2670
      %v2697 = vadd.f32 %v2542, %v2670
      %v2698 = vadd.f32 %v2547, %v2670
      %v2699 = vadd.f32 %v2550, %v2670
      %v2700 = vadd.f32 %v2555, %v2670
      %v2701 = vadd.f32 %v2558, %v2670
      %v2702 = vadd.f32 %v2563, %v2670
      %v2703 = vadd.f32 %v2566, %v2670
      %v2704 = vadd.f32 %v2571, %v2670
      %v2705 = vadd.f32 %v2574, %v2670
      %v2706 = vadd.f32 %v2579, %v2670
      %v2707 = vadd.f32 %v2582, %v2670
      %v2708 = vadd.f32 %v2587, %v2670
      %v2709 = vadd.f32 %v2590, %v2670
      %v2710 = vadd.f32 %v2595, %v2670
      %v2711 = vadd.f32 %v2598, %v2670
      %v2712 = vadd.f32 %v2603, %v2670
      %v2713 = vadd.f32 %v2606, %v2670
      %v2714 = vadd.f32 %v2611, %v2670
      %v2715 = vadd.f32 %v2614, %v2670
      %v2716 = vadd.f32 %v2619, %v2670
      %v2717 = vadd.f32 %v2622, %v2670
      %v2718 = vadd.f32 %v2627, %v2670
      %v2719 = vadd.f32 %v2630, %v2670
      %v2720 = vadd.f32 %v2635, %v2670
      %v2721 = vadd.f32 %v2638, %v2670
      %v2722 = vadd.f32 %v2643, %v2670
      %v2723 = vadd.f32 %v2646, %v2670
      %v2724 = vadd.f32 %v2651, %v2670
      %v2725 = vadd.f32 %v2654, %v2670
      %v2726 = vadd.f32 %v2659, %v2670
      %v2727 = vadd.f32 %v2662, %v2670
      %v2728 = vmax.f32 %v2672, 0.0
      %v2729 = vmax.f32 %v2673, 0.0
      %v2730 = vmax.f32 %v2674, 0.0
      %v2731 = vmax.f32 %v2675, 0.0
      %v2732 = vmax.f32 %v2676, 0.0
      %v2733 = vmax.f32 %v2677, 0.0
      %v2734 = vmax.f32 %v2678, 0.0
      %v2735 = vmax.f32 %v2679, 0.0
      %v2736 = vmax.f32 %v2680, 0.0
      %v2737 = vmax.f32 %v2681, 0.0
      %v2738 = vmax.f32 %v2682, 0.0
      %v2739 = vmax.f32 %v2683, 0.0
      %v2740 = vmax.f32 %v2684, 0.0
      %v2741 = vmax.f32 %v2685, 0.0
      %v2742 = vmax.f32 %v2686, 0.0
      %v2743 = vmax.f32 %v2687, 0.0
      %v2744 = vmax.f32 %v2688, 0.0
      %v2745 = vmax.f32 %v2689, 0.0
      %v2746 = vmax.f32 %v2690, 0.0
      %v2747 = vmax.f32 %v2691, 0.0
      %v2748 = vmax.f32 %v2692, 0.0
      %v2749 = vmax.f32 %v2693, 0.0
      %v2750 = vmax.f32 %v2694, 0.0
      %v2751 = vmax.f32 %v2695, 0.0
      %v2752 = vmax.f32 %v2696, 0.0
      %v2753 = vmax.f32 %v2697, 0.0
      %v2754 = vmax.f32 %v2698, 0.0
      %v2755 = vmax.f32 %v2699, 0.0
      %v2756 = vmax.f32 %v2700, 0.0
      %v2757 = vmax.f32 %v2701, 0.0
      %v2758 = vmax.f32 %v2702, 0.0
      %v2759 = vmax.f32 %v2703, 0.0
      %v2760 = vmax.f32 %v2704, 0.0
      %v2761 = vmax.f32 %v2705, 0.0
      %v2762 = vmax.f32 %v2706, 0.0
      %v2763 = vmax.f32 %v2707, 0.0
      %v2764 = vmax.f32 %v2708, 0.0
      %v2765 = vmax.f32 %v2709, 0.0
      %v2766 = vmax.f32 %v2710, 0.0
      %v2767 = vmax.f32 %v2711, 0.0
      %v2768 = vmax.f32 %v2712, 0.0
      %v2769 = vmax.f32 %v2713, 0.0
      %v2770 = vmax.f32 %v2714, 0.0
      %v2771 = vmax.f32 %v2715, 0.0
      %v2772 = vmax.f32 %v2716, 0.0
      %v2773 = vmax.f32 %v2717, 0.0
      %v2774 = vmax.f32 %v2718, 0.0
      %v2775 = vmax.f32 %v2719, 0.0
      %v2776 = vmax.f32 %v2720, 0.0
      %v2777 = vmax.f32 %v2721, 0.0
      %v2778 = vmax.f32 %v2722, 0.0
      %v2779 = vmax.f32 %v2723, 0.0
      %v2780 = vmax.f32 %v2724, 0.0
      %v2781 = vmax.f32 %v2725, 0.0
      %v2782 = vmax.f32 %v2726, 0.0
      %v2783 = vmax.f32 %v2727, 0.0
      %v2784 = vld [vmem:[%s8] sm:$0xf]
      %v2785 = vld [vmem:[%s8 + $0x4] sm:$0xf]
      %v2786 = vld [vmem:[%s8 + $0x8] sm:$0xf]
      %v2787 = vld [vmem:[%s8 + $0xc] sm:$0xf]
      %v2788 = vld [vmem:[%s8 + $0x10] sm:$0xf]
      %v2789 = vld [vmem:[%s8 + $0x14] sm:$0xf]
      %v2790 = vld [vmem:[%s8 + $0x18] sm:$0xf]
      %v2791 = vld [vmem:[%s8 + $0x1c] sm:$0xf]
      %v2792 = vpack.c.bf16 %v2729, %v2728
      %v2793 = vpack.c.bf16 %v2731, %v2730
      %v2794 = vpack.c.bf16 %v2733, %v2732
      %v2795 = vpack.c.bf16 %v2735, %v2734
      %v2796 = vpack.c.bf16 %v2737, %v2736
      %v2797 = vpack.c.bf16 %v2739, %v2738
      %v2798 = vpack.c.bf16 %v2741, %v2740
      %v2799 = vpack.c.bf16 %v2743, %v2742
      %v2800 = vpack.c.bf16 %v2745, %v2744
      %v2801 = vpack.c.bf16 %v2747, %v2746
      %v2802 = vpack.c.bf16 %v2749, %v2748
      %v2803 = vpack.c.bf16 %v2751, %v2750
      %v2804 = vpack.c.bf16 %v2753, %v2752
      %v2805 = vpack.c.bf16 %v2755, %v2754
      %v2806 = vpack.c.bf16 %v2757, %v2756
      %v2807 = vpack.c.bf16 %v2759, %v2758
      %v2808 = vpack.c.bf16 %v2761, %v2760
      %v2809 = vpack.c.bf16 %v2763, %v2762
      %v2810 = vpack.c.bf16 %v2765, %v2764
      %v2811 = vpack.c.bf16 %v2767, %v2766
      %v2812 = vpack.c.bf16 %v2769, %v2768
      %v2813 = vpack.c.bf16 %v2771, %v2770
      %v2814 = vpack.c.bf16 %v2773, %v2772
      %v2815 = vpack.c.bf16 %v2775, %v2774
      %v2816 = vpack.c.bf16 %v2777, %v2776
      %v2817 = vpack.c.bf16 %v2779, %v2778
      %v2818 = vpack.c.bf16 %v2781, %v2780
      %v2819 = vpack.c.bf16 %v2783, %v2782
      %s2820 = scalar_lea.vmem %s7, 1
      %v2821 = vld [vmem:[%s2820] sm:$0x1]
      %v2823 = vlaneseq
      %v2824 = vshrl.u32 %v2823, 7
      %v2825 = vsub.s32 0, %v2824
      %v2826 = vrot.slane %v2821, %v2825
      %v2836 = vunpack.c.l.b16 %v2784
      %v2837 = vunpack.c.l.b16 %v2785
      %v2838 = vunpack.c.l.b16 %v2786
      %v2839 = vunpack.c.l.b16 %v2787
      %v2840 = vunpack.c.l.b16 %v2788
      %v2841 = vunpack.c.l.b16 %v2789
      %v2842 = vunpack.c.l.b16 %v2790
      %v2843 = vunpack.c.l.b16 %v2791
      %v2844 = vpack.c.b16 %v2837, %v2836
      %v2845 = vpack.c.b16 %v2839, %v2838
      %v2846 = vpack.c.b16 %v2841, %v2840
      %v2847 = vpack.c.b16 %v2843, %v2842
      %v2853 = vsel %vm1071, %v2792, 0
      %v2856 = vsel %vm1071, %v2793, 0
      %v2859 = vsel %vm1071, %v2794, 0
      %v2862 = vsel %vm1071, %v2795, 0
      %v2865 = vsel %vm1071, %v2796, 0
      %v2868 = vsel %vm1071, %v2797, 0
      %v2871 = vsel %vm1071, %v2798, 0
      %v2874 = vsel %vm1071, %v2799, 0
      %v2877 = vsel %vm1071, %v2800, 0
      %v2880 = vsel %vm1071, %v2801, 0
      %v2883 = vsel %vm1071, %v2802, 0
      %v2886 = vsel %vm1071, %v2803, 0
      %v2889 = vsel %vm1071, %v2804, 0
      %v2892 = vsel %vm1071, %v2805, 0
      %v2895 = vsel %vm1071, %v2806, 0
      %v2898 = vsel %vm1071, %v2807, 0
      %v2901 = vsel %vm1071, %v2808, 0
      %v2904 = vsel %vm1071, %v2809, 0
      %v2907 = vsel %vm1071, %v2810, 0
      %v2910 = vsel %vm1071, %v2811, 0
      %v2913 = vsel %vm1071, %v2812, 0
      %v2916 = vsel %vm1071, %v2813, 0
      %v2919 = vsel %vm1071, %v2814, 0
      %v2922 = vsel %vm1071, %v2815, 0
      %v2925 = vsel %vm1071, %v2816, 0
      %v2928 = vsel %vm1071, %v2817, 0
      %v2931 = vsel %vm1071, %v2818, 0
      %v2934 = vsel %vm1071, %v2819, 0
      %2936 = vmatprep.subr.bf16.mxu0 0
      %2937 = vmatpush1.bf16.msra.mxu0 %v2844
      %2938 = vmatprep.subr.bf16.mxu0 0
      %2939 = vmatpush1.bf16.msra.mxu0 %v2845
      %2940 = vmatprep.subr.bf16.mxu0 0
      %2941 = vmatpush1.bf16.msra.mxu0 %v2846
      %2942 = vmatprep.subr.bf16.mxu0 0
      %2943 = vmatpush1.bf16.msra.mxu0 %v2847
      %2944 = vmatprep.subr.bf16.mxu0 0
      %2945 = vmatpush1.bf16.msra.mxu0 0
      %2946 = vmatprep.subr.bf16.mxu0 0
      %2947 = vmatpush1.bf16.msra.mxu0 0
      %2948 = vmatprep.subr.bf16.mxu0 0
      %2949 = vmatpush1.bf16.msra.mxu0 0
      %2950 = vmatprep.subr.bf16.mxu0 0
      %2951 = vmatpush1.bf16.msra.mxu0 0
      %2952 = vmatprep.subr.bf16.mxu0 0
      %2953 = vmatpush1.bf16.msra.mxu0 0
      %2954 = vmatprep.subr.bf16.mxu0 0
      %2955 = vmatpush1.bf16.msra.mxu0 0
      %2956 = vmatprep.subr.bf16.mxu0 0
      %2957 = vmatpush1.bf16.msra.mxu0 0
      %2958 = vmatprep.subr.bf16.mxu0 0
      %2959 = vmatpush1.bf16.msra.mxu0 0
      %2960 = vmatprep.subr.bf16.mxu0 0
      %2961 = vmatpush1.bf16.msra.mxu0 0
      %2962 = vmatprep.subr.bf16.mxu0 0
      %2963 = vmatpush1.bf16.msra.mxu0 0
      %2964 = vmatprep.subr.bf16.mxu0 0
      %2965 = vmatpush1.bf16.msra.mxu0 0
      %2966 = vmatprep.subr.bf16.mxu0 0
      %2967 = vmatpush1.bf16.msra.mxu0 0
      %2968 = vmatprep.mubr.bf16.mxu0 0
      %2969 = vmatmul.mubr.bf16.gmra.mrb[0].mxu0 %v2853
      %v2970 = vpop.f32.mrb[0].mxu0
      %v2971 = vadd.f32 %v2826, %v2970
      %v2972 = vpop.f32.mrb[0].mxu0
      %v2973 = vpop.f32.mrb[0].mxu0
      %v2974 = vadd.f32 %v2826, %v2973
      %v2975 = vpop.f32.mrb[0].mxu0
      %2976 = vmatprep.mubr.bf16.mxu0 0
      %2977 = vmatmul.mubr.bf16.gmra.mrb[0].mxu0 %v2856
      %v2978 = vpop.f32.mrb[0].mxu0
      %v2979 = vadd.f32 %v2826, %v2978
      %v2980 = vpop.f32.mrb[0].mxu0
      %v2981 = vpop.f32.mrb[0].mxu0
      %v2982 = vadd.f32 %v2826, %v2981
      %v2983 = vpop.f32.mrb[0].mxu0
      %2984 = vmatprep.mubr.bf16.mxu0 0
      %2985 = vmatmul.mubr.bf16.gmra.mrb[0].mxu0 %v2859
      %v2986 = vpop.f32.mrb[0].mxu0
      %v2987 = vadd.f32 %v2826, %v2986
      %v2988 = vpop.f32.mrb[0].mxu0
      %v2989 = vpop.f32.mrb[0].mxu0
      %v2990 = vadd.f32 %v2826, %v2989
      %v2991 = vpop.f32.mrb[0].mxu0
      %2992 = vmatprep.mubr.bf16.mxu0 0
      %2993 = vmatmul.mubr.bf16.gmra.mrb[0].mxu0 %v2862
      %v2994 = vpop.f32.mrb[0].mxu0
      %v2995 = vadd.f32 %v2826, %v2994
      %v2996 = vpop.f32.mrb[0].mxu0
      %v2997 = vpop.f32.mrb[0].mxu0
      %v2998 = vadd.f32 %v2826, %v2997
      %v2999 = vpop.f32.mrb[0].mxu0
      %3000 = vmatprep.mubr.bf16.mxu0 0
      %3001 = vmatmul.mubr.bf16.gmra.mrb[0].mxu0 %v2865
      %v3002 = vpop.f32.mrb[0].mxu0
      %v3003 = vadd.f32 %v2826, %v3002
      %v3004 = vpop.f32.mrb[0].mxu0
      %v3005 = vpop.f32.mrb[0].mxu0
      %v3006 = vadd.f32 %v2826, %v3005
      %v3007 = vpop.f32.mrb[0].mxu0
      %3008 = vmatprep.mubr.bf16.mxu0 0
      %3009 = vmatmul.mubr.bf16.gmra.mrb[0].mxu0 %v2868
      %v3010 = vpop.f32.mrb[0].mxu0
      %v3011 = vadd.f32 %v2826, %v3010
      %v3012 = vpop.f32.mrb[0].mxu0
      %v3013 = vpop.f32.mrb[0].mxu0
      %v3014 = vadd.f32 %v2826, %v3013
      %v3015 = vpop.f32.mrb[0].mxu0
      %3016 = vmatprep.mubr.bf16.mxu0 0
      %3017 = vmatmul.mubr.bf16.gmra.mrb[0].mxu0 %v2871
      %v3018 = vpop.f32.mrb[0].mxu0
      %v3019 = vadd.f32 %v2826, %v3018
      %v3020 = vpop.f32.mrb[0].mxu0
      %v3021 = vpop.f32.mrb[0].mxu0
      %v3022 = vadd.f32 %v2826, %v3021
      %v3023 = vpop.f32.mrb[0].mxu0
      %3024 = vmatprep.mubr.bf16.mxu0 0
      %3025 = vmatmul.mubr.bf16.gmra.mrb[0].mxu0 %v2874
      %v3026 = vpop.f32.mrb[0].mxu0
      %v3027 = vadd.f32 %v2826, %v3026
      %v3028 = vpop.f32.mrb[0].mxu0
      %v3029 = vpop.f32.mrb[0].mxu0
      %v3030 = vadd.f32 %v2826, %v3029
      %v3031 = vpop.f32.mrb[0].mxu0
      %3032 = vmatprep.mubr.bf16.mxu0 0
      %3033 = vmatmul.mubr.bf16.gmra.mrb[0].mxu0 %v2877
      %v3034 = vpop.f32.mrb[0].mxu0
      %v3035 = vadd.f32 %v2826, %v3034
      %v3036 = vpop.f32.mrb[0].mxu0
      %v3037 = vpop.f32.mrb[0].mxu0
      %v3038 = vadd.f32 %v2826, %v3037
      %v3039 = vpop.f32.mrb[0].mxu0
      %3040 = vmatprep.mubr.bf16.mxu0 0
      %3041 = vmatmul.mubr.bf16.gmra.mrb[0].mxu0 %v2880
      %v3042 = vpop.f32.mrb[0].mxu0
      %v3043 = vadd.f32 %v2826, %v3042
      %v3044 = vpop.f32.mrb[0].mxu0
      %v3045 = vpop.f32.mrb[0].mxu0
      %v3046 = vadd.f32 %v2826, %v3045
      %v3047 = vpop.f32.mrb[0].mxu0
      %3048 = vmatprep.mubr.bf16.mxu0 0
      %3049 = vmatmul.mubr.bf16.gmra.mrb[0].mxu0 %v2883
      %v3050 = vpop.f32.mrb[0].mxu0
      %v3051 = vadd.f32 %v2826, %v3050
      %v3052 = vpop.f32.mrb[0].mxu0
      %v3053 = vpop.f32.mrb[0].mxu0
      %v3054 = vadd.f32 %v2826, %v3053
      %v3055 = vpop.f32.mrb[0].mxu0
      %3056 = vmatprep.mubr.bf16.mxu0 0
      %3057 = vmatmul.mubr.bf16.gmra.mrb[0].mxu0 %v2886
      %v3058 = vpop.f32.mrb[0].mxu0
      %v3059 = vadd.f32 %v2826, %v3058
      %v3060 = vpop.f32.mrb[0].mxu0
      %v3061 = vpop.f32.mrb[0].mxu0
      %v3062 = vadd.f32 %v2826, %v3061
      %v3063 = vpop.f32.mrb[0].mxu0
      %3064 = vmatprep.mubr.bf16.mxu0 0
      %3065 = vmatmul.mubr.bf16.gmra.mrb[0].mxu0 %v2889
      %v3066 = vpop.f32.mrb[0].mxu0
      %v3067 = vadd.f32 %v2826, %v3066
      %v3068 = vpop.f32.mrb[0].mxu0
      %v3069 = vpop.f32.mrb[0].mxu0
      %v3070 = vadd.f32 %v2826, %v3069
      %v3071 = vpop.f32.mrb[0].mxu0
      %3072 = vmatprep.mubr.bf16.mxu0 0
      %3073 = vmatmul.mubr.bf16.gmra.mrb[0].mxu0 %v2892
      %v3074 = vpop.f32.mrb[0].mxu0
      %v3075 = vadd.f32 %v2826, %v3074
      %v3076 = vpop.f32.mrb[0].mxu0
      %v3077 = vpop.f32.mrb[0].mxu0
      %v3078 = vadd.f32 %v2826, %v3077
      %v3079 = vpop.f32.mrb[0].mxu0
      %3080 = vmatprep.mubr.bf16.mxu0 0
      %3081 = vmatmul.mubr.bf16.gmra.mrb[0].mxu0 %v2895
      %v3082 = vpop.f32.mrb[0].mxu0
      %v3083 = vadd.f32 %v2826, %v3082
      %v3084 = vpop.f32.mrb[0].mxu0
      %v3085 = vpop.f32.mrb[0].mxu0
      %v3086 = vadd.f32 %v2826, %v3085
      %v3087 = vpop.f32.mrb[0].mxu0
      %3088 = vmatprep.mubr.bf16.mxu0 0
      %3089 = vmatmul.mubr.bf16.gmra.mrb[0].mxu0 %v2898
      %v3090 = vpop.f32.mrb[0].mxu0
      %v3091 = vadd.f32 %v2826, %v3090
      %v3092 = vpop.f32.mrb[0].mxu0
      %v3093 = vpop.f32.mrb[0].mxu0
      %v3094 = vadd.f32 %v2826, %v3093
      %v3095 = vpop.f32.mrb[0].mxu0
      %3096 = vmatprep.mubr.bf16.mxu0 0
      %3097 = vmatmul.mubr.bf16.gmra.mrb[0].mxu0 %v2901
      %v3098 = vpop.f32.mrb[0].mxu0
      %v3099 = vadd.f32 %v2826, %v3098
      %v3100 = vpop.f32.mrb[0].mxu0
      %v3101 = vpop.f32.mrb[0].mxu0
      %v3102 = vadd.f32 %v2826, %v3101
      %v3103 = vpop.f32.mrb[0].mxu0
      %3104 = vmatprep.mubr.bf16.mxu0 0
      %3105 = vmatmul.mubr.bf16.gmra.mrb[0].mxu0 %v2904
      %v3106 = vpop.f32.mrb[0].mxu0
      %v3107 = vadd.f32 %v2826, %v3106
      %v3108 = vpop.f32.mrb[0].mxu0
      %v3109 = vpop.f32.mrb[0].mxu0
      %v3110 = vadd.f32 %v2826, %v3109
      %v3111 = vpop.f32.mrb[0].mxu0
      %3112 = vmatprep.mubr.bf16.mxu0 0
      %3113 = vmatmul.mubr.bf16.gmra.mrb[0].mxu0 %v2907
      %v3114 = vpop.f32.mrb[0].mxu0
      %v3115 = vadd.f32 %v2826, %v3114
      %v3116 = vpop.f32.mrb[0].mxu0
      %v3117 = vpop.f32.mrb[0].mxu0
      %v3118 = vadd.f32 %v2826, %v3117
      %v3119 = vpop.f32.mrb[0].mxu0
      %3120 = vmatprep.mubr.bf16.mxu0 0
      %3121 = vmatmul.mubr.bf16.gmra.mrb[0].mxu0 %v2910
      %v3122 = vpop.f32.mrb[0].mxu0
      %v3123 = vadd.f32 %v2826, %v3122
      %v3124 = vpop.f32.mrb[0].mxu0
      %v3125 = vpop.f32.mrb[0].mxu0
      %v3126 = vadd.f32 %v2826, %v3125
      %v3127 = vpop.f32.mrb[0].mxu0
      %3128 = vmatprep.mubr.bf16.mxu0 0
      %3129 = vmatmul.mubr.bf16.gmra.mrb[0].mxu0 %v2913
      %v3130 = vpop.f32.mrb[0].mxu0
      %v3131 = vadd.f32 %v2826, %v3130
      %v3132 = vpop.f32.mrb[0].mxu0
      %v3133 = vpop.f32.mrb[0].mxu0
      %v3134 = vadd.f32 %v2826, %v3133
      %v3135 = vpop.f32.mrb[0].mxu0
      %3136 = vmatprep.mubr.bf16.mxu0 0
      %3137 = vmatmul.mubr.bf16.gmra.mrb[0].mxu0 %v2916
      %v3138 = vpop.f32.mrb[0].mxu0
      %v3139 = vadd.f32 %v2826, %v3138
      %v3140 = vpop.f32.mrb[0].mxu0
      %v3141 = vpop.f32.mrb[0].mxu0
      %v3142 = vadd.f32 %v2826, %v3141
      %v3143 = vpop.f32.mrb[0].mxu0
      %3144 = vmatprep.mubr.bf16.mxu0 0
      %3145 = vmatmul.mubr.bf16.gmra.mrb[0].mxu0 %v2919
      %v3146 = vpop.f32.mrb[0].mxu0
      %v3147 = vadd.f32 %v2826, %v3146
      %v3148 = vpop.f32.mrb[0].mxu0
      %v3149 = vpop.f32.mrb[0].mxu0
      %v3150 = vadd.f32 %v2826, %v3149
      %v3151 = vpop.f32.mrb[0].mxu0
      %3152 = vmatprep.mubr.bf16.mxu0 0
      %3153 = vmatmul.mubr.bf16.gmra.mrb[0].mxu0 %v2922
      %v3154 = vpop.f32.mrb[0].mxu0
      %v3155 = vadd.f32 %v2826, %v3154
      %v3156 = vpop.f32.mrb[0].mxu0
      %v3157 = vpop.f32.mrb[0].mxu0
      %v3158 = vadd.f32 %v2826, %v3157
      %v3159 = vpop.f32.mrb[0].mxu0
      %3160 = vmatprep.mubr.bf16.mxu0 0
      %3161 = vmatmul.mubr.bf16.gmra.mrb[0].mxu0 %v2925
      %v3162 = vpop.f32.mrb[0].mxu0
      %v3163 = vadd.f32 %v2826, %v3162
      %v3164 = vpop.f32.mrb[0].mxu0
      %v3165 = vpop.f32.mrb[0].mxu0
      %v3166 = vadd.f32 %v2826, %v3165
      %v3167 = vpop.f32.mrb[0].mxu0
      %3168 = vmatprep.mubr.bf16.mxu0 0
      %3169 = vmatmul.mubr.bf16.gmra.mrb[0].mxu0 %v2928
      %v3170 = vpop.f32.mrb[0].mxu0
      %v3171 = vadd.f32 %v2826, %v3170
      %v3172 = vpop.f32.mrb[0].mxu0
      %v3173 = vpop.f32.mrb[0].mxu0
      %v3174 = vadd.f32 %v2826, %v3173
      %v3175 = vpop.f32.mrb[0].mxu0
      %3176 = vmatprep.mubr.bf16.mxu0 0
      %3177 = vmatmul.mubr.bf16.gmra.mrb[0].mxu0 %v2931
      %v3178 = vpop.f32.mrb[0].mxu0
      %v3179 = vadd.f32 %v2826, %v3178
      %v3180 = vpop.f32.mrb[0].mxu0
      %v3181 = vpop.f32.mrb[0].mxu0
      %v3182 = vadd.f32 %v2826, %v3181
      %v3183 = vpop.f32.mrb[0].mxu0
      %3184 = vmatprep.mubr.bf16.mxu0 0
      %3185 = vmatmul.mubr.bf16.gmra.mrb[0].mxu0 %v2934
      %v3186 = vpop.f32.mrb[0].mxu0
      %v3187 = vadd.f32 %v2826, %v3186
      %v3188 = vpop.f32.mrb[0].mxu0
      %v3189 = vpop.f32.mrb[0].mxu0
      %v3190 = vadd.f32 %v2826, %v3189
      %v3191 = vpop.f32.mrb[0].mxu0
      %3192 = vdwg.mxu0
      %v3193 = vmax.f32 %v2971, 0.0
      %v3194 = vmax.f32 %v2974, 0.0
      %v3195 = vmax.f32 %v2979, 0.0
      %v3196 = vmax.f32 %v2982, 0.0
      %v3197 = vmax.f32 %v2987, 0.0
      %v3198 = vmax.f32 %v2990, 0.0
      %v3199 = vmax.f32 %v2995, 0.0
      %v3200 = vmax.f32 %v2998, 0.0
      %v3201 = vmax.f32 %v3003, 0.0
      %v3202 = vmax.f32 %v3006, 0.0
      %v3203 = vmax.f32 %v3011, 0.0
      %v3204 = vmax.f32 %v3014, 0.0
      %v3205 = vmax.f32 %v3019, 0.0
      %v3206 = vmax.f32 %v3022, 0.0
      %v3207 = vmax.f32 %v3027, 0.0
      %v3208 = vmax.f32 %v3030, 0.0
      %v3209 = vmax.f32 %v3035, 0.0
      %v3210 = vmax.f32 %v3038, 0.0
      %v3211 = vmax.f32 %v3043, 0.0
      %v3212 = vmax.f32 %v3046, 0.0
      %v3213 = vmax.f32 %v3051, 0.0
      %v3214 = vmax.f32 %v3054, 0.0
      %v3215 = vmax.f32 %v3059, 0.0
      %v3216 = vmax.f32 %v3062, 0.0
      %v3217 = vmax.f32 %v3067, 0.0
      %v3218 = vmax.f32 %v3070, 0.0
      %v3219 = vmax.f32 %v3075, 0.0
      %v3220 = vmax.f32 %v3078, 0.0
      %v3221 = vmax.f32 %v3083, 0.0
      %v3222 = vmax.f32 %v3086, 0.0
      %v3223 = vmax.f32 %v3091, 0.0
      %v3224 = vmax.f32 %v3094, 0.0
      %v3225 = vmax.f32 %v3099, 0.0
      %v3226 = vmax.f32 %v3102, 0.0
      %v3227 = vmax.f32 %v3107, 0.0
      %v3228 = vmax.f32 %v3110, 0.0
      %v3229 = vmax.f32 %v3115, 0.0
      %v3230 = vmax.f32 %v3118, 0.0
      %v3231 = vmax.f32 %v3123, 0.0
      %v3232 = vmax.f32 %v3126, 0.0
      %v3233 = vmax.f32 %v3131, 0.0
      %v3234 = vmax.f32 %v3134, 0.0
      %v3235 = vmax.f32 %v3139, 0.0
      %v3236 = vmax.f32 %v3142, 0.0
      %v3237 = vmax.f32 %v3147, 0.0
      %v3238 = vmax.f32 %v3150, 0.0
      %v3239 = vmax.f32 %v3155, 0.0
      %v3240 = vmax.f32 %v3158, 0.0
      %v3241 = vmax.f32 %v3163, 0.0
      %v3242 = vmax.f32 %v3166, 0.0
      %v3243 = vmax.f32 %v3171, 0.0
      %v3244 = vmax.f32 %v3174, 0.0
      %v3245 = vmax.f32 %v3179, 0.0
      %v3246 = vmax.f32 %v3182, 0.0
      %v3247 = vmax.f32 %v3187, 0.0
      %v3248 = vmax.f32 %v3190, 0.0
      %v3249 = vmul.f32 %v3193, %v871
      %v3250 = vmul.f32 %v3194, %v872
      %v3251 = vmul.f32 %v3195, %v873
      %v3252 = vmul.f32 %v3196, %v874
      %v3253 = vmul.f32 %v3197, %v875
      %v3254 = vmul.f32 %v3198, %v876
      %v3255 = vmul.f32 %v3199, %v877
      %v3256 = vmul.f32 %v3200, %v878
      %v3257 = vmul.f32 %v3201, %v879
      %v3258 = vmul.f32 %v3202, %v880
      %v3259 = vmul.f32 %v3203, %v881
      %v3260 = vmul.f32 %v3204, %v882
      %v3261 = vmul.f32 %v3205, %v883
      %v3262 = vmul.f32 %v3206, %v884
      %v3263 = vmul.f32 %v3207, %v885
      %v3264 = vmul.f32 %v3208, %v886
      %v3265 = vmul.f32 %v3209, %v887
      %v3266 = vmul.f32 %v3210, %v888
      %v3267 = vmul.f32 %v3211, %v889
      %v3268 = vmul.f32 %v3212, %v890
      %v3269 = vmul.f32 %v3213, %v891
      %v3270 = vmul.f32 %v3214, %v892
      %v3271 = vmul.f32 %v3215, %v893
      %v3272 = vmul.f32 %v3216, %v894
      %v3273 = vmul.f32 %v3217, %v895
      %v3274 = vmul.f32 %v3218, %v896
      %v3275 = vmul.f32 %v3219, %v897
      %v3276 = vmul.f32 %v3220, %v898
      %v3277 = vmul.f32 %v3221, %v899
      %v3278 = vmul.f32 %v3222, %v900
      %v3279 = vmul.f32 %v3223, %v901
      %v3280 = vmul.f32 %v3224, %v902
      %v3281 = vmul.f32 %v3225, %v903
      %v3282 = vmul.f32 %v3226, %v904
      %v3283 = vmul.f32 %v3227, %v905
      %v3284 = vmul.f32 %v3228, %v906
      %v3285 = vmul.f32 %v3229, %v907
      %v3286 = vmul.f32 %v3230, %v908
      %v3287 = vmul.f32 %v3231, %v909
      %v3288 = vmul.f32 %v3232, %v910
      %v3289 = vmul.f32 %v3233, %v911
      %v3290 = vmul.f32 %v3234, %v912
      %v3291 = vmul.f32 %v3235, %v913
      %v3292 = vmul.f32 %v3236, %v914
      %v3293 = vmul.f32 %v3237, %v915
      %v3294 = vmul.f32 %v3238, %v916
      %v3295 = vmul.f32 %v3239, %v917
      %v3296 = vmul.f32 %v3240, %v918
      %v3297 = vmul.f32 %v3241, %v919
      %v3298 = vmul.f32 %v3242, %v920
      %v3299 = vmul.f32 %v3243, %v921
      %v3300 = vmul.f32 %v3244, %v922
      %v3301 = vmul.f32 %v3245, %v923
      %v3302 = vmul.f32 %v3246, %v924
      %v3303 = vmul.f32 %v3247, %v925
      %v3304 = vmul.f32 %v3248, %v926
      %v3305 = vpack.c.bf16 %v3250, %v3249
      %v3306 = vpack.c.bf16 %v3252, %v3251
      %v3307 = vpack.c.bf16 %v3254, %v3253
      %v3308 = vpack.c.bf16 %v3256, %v3255
      %v3309 = vpack.c.bf16 %v3258, %v3257
      %v3310 = vpack.c.bf16 %v3260, %v3259
      %v3311 = vpack.c.bf16 %v3262, %v3261
      %v3312 = vpack.c.bf16 %v3264, %v3263
      %v3313 = vpack.c.bf16 %v3266, %v3265
      %v3314 = vpack.c.bf16 %v3268, %v3267
      %v3315 = vpack.c.bf16 %v3270, %v3269
      %v3316 = vpack.c.bf16 %v3272, %v3271
      %v3317 = vpack.c.bf16 %v3274, %v3273
      %v3318 = vpack.c.bf16 %v3276, %v3275
      %v3319 = vpack.c.bf16 %v3278, %v3277
      %v3320 = vpack.c.bf16 %v3280, %v3279
      %v3321 = vpack.c.bf16 %v3282, %v3281
      %v3322 = vpack.c.bf16 %v3284, %v3283
      %v3323 = vpack.c.bf16 %v3286, %v3285
      %v3324 = vpack.c.bf16 %v3288, %v3287
      %v3325 = vpack.c.bf16 %v3290, %v3289
      %v3326 = vpack.c.bf16 %v3292, %v3291
      %v3327 = vpack.c.bf16 %v3294, %v3293
      %v3328 = vpack.c.bf16 %v3296, %v3295
      %v3329 = vpack.c.bf16 %v3298, %v3297
      %v3330 = vpack.c.bf16 %v3300, %v3299
      %v3331 = vpack.c.bf16 %v3302, %v3301
      %v3332 = vpack.c.bf16 %v3304, %v3303
      %v3349 = vunpack.c.l.b16 %v855
      %v3350 = vunpack.c.h.b16 %v855
      %v3351 = vunpack.c.l.b16 %v856
      %v3352 = vunpack.c.h.b16 %v856
      %v3353 = vunpack.c.l.b16 %v857
      %v3354 = vunpack.c.h.b16 %v857
      %v3355 = vunpack.c.l.b16 %v858
      %v3356 = vunpack.c.h.b16 %v858
      %v3357 = vunpack.c.l.b16 %v859
      %v3358 = vunpack.c.h.b16 %v859
      %v3359 = vunpack.c.l.b16 %v860
      %v3360 = vunpack.c.h.b16 %v860
      %v3361 = vunpack.c.l.b16 %v861
      %v3362 = vunpack.c.h.b16 %v861
      %v3363 = vunpack.c.l.b16 %v862
      %v3364 = vunpack.c.h.b16 %v862
      %v3365 = vunpack.c.l.b16 %v863
      %v3366 = vunpack.c.h.b16 %v863
      %v3367 = vunpack.c.l.b16 %v864
      %v3368 = vunpack.c.h.b16 %v864
      %v3369 = vunpack.c.l.b16 %v865
      %v3370 = vunpack.c.h.b16 %v865
      %v3371 = vunpack.c.l.b16 %v866
      %v3372 = vunpack.c.h.b16 %v866
      %v3373 = vunpack.c.l.b16 %v867
      %v3374 = vunpack.c.h.b16 %v867
      %v3375 = vunpack.c.l.b16 %v868
      %v3376 = vunpack.c.h.b16 %v868
      %v3377 = vunpack.c.l.b16 %v869
      %v3378 = vunpack.c.h.b16 %v869
      %v3379 = vunpack.c.l.b16 %v870
      %v3380 = vunpack.c.h.b16 %v870
      %v3381 = vpack.c.b16 %v3353, %v3349
      %v3382 = vpack.c.b16 %v3354, %v3350
      %v3383 = vpack.c.b16 %v3355, %v3351
      %v3384 = vpack.c.b16 %v3356, %v3352
      %v3385 = vpack.c.b16 %v3361, %v3357
      %v3386 = vpack.c.b16 %v3362, %v3358
      %v3387 = vpack.c.b16 %v3363, %v3359
      %v3388 = vpack.c.b16 %v3364, %v3360
      %v3389 = vpack.c.b16 %v3369, %v3365
      %v3390 = vpack.c.b16 %v3370, %v3366
      %v3391 = vpack.c.b16 %v3371, %v3367
      %v3392 = vpack.c.b16 %v3372, %v3368
      %v3393 = vpack.c.b16 %v3377, %v3373
      %v3394 = vpack.c.b16 %v3378, %v3374
      %v3395 = vpack.c.b16 %v3379, %v3375
      %v3396 = vpack.c.b16 %v3380, %v3376
      %v3410 = vsel %vm1071, %v3384, 0
      %v3413 = vsel %vm1071, %v3388, 0
      %v3416 = vsel %vm1071, %v3392, 0
      %v3419 = vsel %vm1071, %v3396, 0
      %3421 = vmatprep.subr.bf16.mxu0 0
      %3422 = vmatpush1.bf16.msra.mxu0 %v3305
      %3423 = vmatprep.subr.bf16.mxu0 0
      %3424 = vmatpush1.bf16.msra.mxu0 %v3306
      %3425 = vmatprep.subr.bf16.mxu0 0
      %3426 = vmatpush1.bf16.msra.mxu0 %v3307
      %3427 = vmatprep.subr.bf16.mxu0 0
      %3428 = vmatpush1.bf16.msra.mxu0 %v3308
      %3429 = vmatprep.subr.bf16.mxu0 0
      %3430 = vmatpush1.bf16.msra.mxu0 %v3309
      %3431 = vmatprep.subr.bf16.mxu0 0
      %3432 = vmatpush1.bf16.msra.mxu0 %v3310
      %3433 = vmatprep.subr.bf16.mxu0 0
      %3434 = vmatpush1.bf16.msra.mxu0 %v3311
      %3435 = vmatprep.subr.bf16.mxu0 0
      %3436 = vmatpush1.bf16.msra.mxu0 %v3312
      %3437 = vmatprep.subr.bf16.mxu0 0
      %3438 = vmatpush1.bf16.msra.mxu0 %v3313
      %3439 = vmatprep.subr.bf16.mxu0 0
      %3440 = vmatpush1.bf16.msra.mxu0 %v3314
      %3441 = vmatprep.subr.bf16.mxu0 0
      %3442 = vmatpush1.bf16.msra.mxu0 %v3315
      %3443 = vmatprep.subr.bf16.mxu0 0
      %3444 = vmatpush1.bf16.msra.mxu0 %v3316
      %3445 = vmatprep.subr.bf16.mxu0 0
      %3446 = vmatpush1.bf16.msra.mxu0 %v3317
      %3447 = vmatprep.subr.bf16.mxu0 0
      %3448 = vmatpush1.bf16.msra.mxu0 %v3318
      %3449 = vmatprep.subr.bf16.mxu0 0
      %3450 = vmatpush1.bf16.msra.mxu0 %v3319
      %3451 = vmatprep.subr.bf16.mxu0 0
      %3452 = vmatpush1.bf16.msra.mxu0 %v3320
      %3453 = vmatprep.mubr.bf16.mxu0 %v3382
      %3454 = vmatmul.mubr.bf16.gmra.mrb[0].mxu0 %v3381
      %v3455 = vpop.f32.mrb[0].mxu0
      %v3456 = vadd.f32 0.0, %v3455
      %v3457 = vpop.f32.mrb[0].mxu0
      %v3458 = vpop.f32.mrb[0].mxu0
      %v3459 = vadd.f32 0.0, %v3458
      %v3460 = vpop.f32.mrb[0].mxu0
      %3461 = vmatprep.mubr.bf16.mxu0 %v3386
      %3462 = vmatmul.mubr.bf16.gmra.mrb[0].mxu0 %v3385
      %v3463 = vpop.f32.mrb[0].mxu0
      %v3464 = vadd.f32 0.0, %v3463
      %v3465 = vpop.f32.mrb[0].mxu0
      %v3466 = vpop.f32.mrb[0].mxu0
      %v3467 = vadd.f32 0.0, %v3466
      %v3468 = vpop.f32.mrb[0].mxu0
      %3469 = vmatprep.mubr.bf16.mxu0 %v3390
      %3470 = vmatmul.mubr.bf16.gmra.mrb[0].mxu0 %v3389
      %v3471 = vpop.f32.mrb[0].mxu0
      %v3472 = vadd.f32 0.0, %v3471
      %v3473 = vpop.f32.mrb[0].mxu0
      %v3474 = vpop.f32.mrb[0].mxu0
      %v3475 = vadd.f32 0.0, %v3474
      %v3476 = vpop.f32.mrb[0].mxu0
      %3477 = vmatprep.mubr.bf16.mxu0 %v3394
      %3478 = vmatmul.mubr.bf16.gmra.mrb[0].mxu0 %v3393
      %v3479 = vpop.f32.mrb[0].mxu0
      %v3480 = vadd.f32 0.0, %v3479
      %v3481 = vpop.f32.mrb[0].mxu0
      %v3482 = vpop.f32.mrb[0].mxu0
      %v3483 = vadd.f32 0.0, %v3482
      %v3484 = vpop.f32.mrb[0].mxu0
      %3485 = vdwg.mxu0
      %3486 = vmatprep.subr.bf16.mxu0 0
      %3487 = vmatpush1.bf16.msra.mxu0 %v3321
      %3488 = vmatprep.subr.bf16.mxu0 0
      %3489 = vmatpush1.bf16.msra.mxu0 %v3322
      %3490 = vmatprep.subr.bf16.mxu0 0
      %3491 = vmatpush1.bf16.msra.mxu0 %v3323
      %3492 = vmatprep.subr.bf16.mxu0 0
      %3493 = vmatpush1.bf16.msra.mxu0 %v3324
      %3494 = vmatprep.subr.bf16.mxu0 0
      %3495 = vmatpush1.bf16.msra.mxu0 %v3325
      %3496 = vmatprep.subr.bf16.mxu0 0
      %3497 = vmatpush1.bf16.msra.mxu0 %v3326
      %3498 = vmatprep.subr.bf16.mxu0 0
      %3499 = vmatpush1.bf16.msra.mxu0 %v3327
      %3500 = vmatprep.subr.bf16.mxu0 0
      %3501 = vmatpush1.bf16.msra.mxu0 %v3328
      %3502 = vmatprep.subr.bf16.mxu0 0
      %3503 = vmatpush1.bf16.msra.mxu0 %v3329
      %3504 = vmatprep.subr.bf16.mxu0 0
      %3505 = vmatpush1.bf16.msra.mxu0 %v3330
      %3506 = vmatprep.subr.bf16.mxu0 0
      %3507 = vmatpush1.bf16.msra.mxu0 %v3331
      %3508 = vmatprep.subr.bf16.mxu0 0
      %3509 = vmatpush1.bf16.msra.mxu0 %v3332
      %3510 = vmatprep.subr.bf16.mxu0 0
      %3511 = vmatpush1.bf16.msra.mxu0 0
      %3512 = vmatprep.subr.bf16.mxu0 0
      %3513 = vmatpush1.bf16.msra.mxu0 0
      %3514 = vmatprep.subr.bf16.mxu0 0
      %3515 = vmatpush1.bf16.msra.mxu0 0
      %3516 = vmatprep.subr.bf16.mxu0 0
      %3517 = vmatpush1.bf16.msra.mxu0 0
      %3518 = vmatprep.mubr.bf16.mxu0 %v3410
      %3519 = vmatmul.mubr.bf16.gmra.mrb[0].mxu0 %v3383
      %v3520 = vpop.f32.mrb[0].mxu0
      %v3521 = vadd.f32 %v3456, %v3520
      %v3522 = vpop.f32.mrb[0].mxu0
      %v3523 = vpop.f32.mrb[0].mxu0
      %v3524 = vadd.f32 %v3459, %v3523
      %v3525 = vpop.f32.mrb[0].mxu0
      %3526 = vmatprep.mubr.bf16.mxu0 %v3413
      %3527 = vmatmul.mubr.bf16.gmra.mrb[0].mxu0 %v3387
      %v3528 = vpop.f32.mrb[0].mxu0
      %v3529 = vadd.f32 %v3464, %v3528
      %v3530 = vpop.f32.mrb[0].mxu0
      %v3531 = vpop.f32.mrb[0].mxu0
      %v3532 = vadd.f32 %v3467, %v3531
      %v3533 = vpop.f32.mrb[0].mxu0
      %3534 = vmatprep.mubr.bf16.mxu0 %v3416
      %3535 = vmatmul.mubr.bf16.gmra.mrb[0].mxu0 %v3391
      %v3536 = vpop.f32.mrb[0].mxu0
      %v3537 = vadd.f32 %v3472, %v3536
      %v3538 = vpop.f32.mrb[0].mxu0
      %v3539 = vpop.f32.mrb[0].mxu0
      %v3540 = vadd.f32 %v3475, %v3539
      %v3541 = vpop.f32.mrb[0].mxu0
      %3542 = vmatprep.mubr.bf16.mxu0 %v3419
      %3543 = vmatmul.mubr.bf16.gmra.mrb[0].mxu0 %v3395
      %v3544 = vpop.f32.mrb[0].mxu0
      %v3545 = vadd.f32 %v3480, %v3544
      %v3546 = vpop.f32.mrb[0].mxu0
      %v3547 = vpop.f32.mrb[0].mxu0
      %v3548 = vadd.f32 %v3483, %v3547
      %v3549 = vpop.f32.mrb[0].mxu0
      %3550 = vdwg.mxu0
      %v3551 = vld [vmem:[%s9] sm:$0xf]
      %v3552 = vld [vmem:[%s9 + $0x4] sm:$0xf]
      %v3553 = vld [vmem:[%s9 + $0x8] sm:$0xf]
      %v3554 = vld [vmem:[%s9 + $0xc] sm:$0xf]
      %v3555 = vld [vmem:[%s9 + $0x10] sm:$0xf]
      %v3556 = vld [vmem:[%s9 + $0x14] sm:$0xf]
      %v3557 = vld [vmem:[%s9 + $0x18] sm:$0xf]
      %v3558 = vld [vmem:[%s9 + $0x1c] sm:$0xf]
      %v3559 = vld [vmem:[%s9 + $0x20] sm:$0xf]
      %v3560 = vld [vmem:[%s9 + $0x24] sm:$0xf]
      %v3561 = vld [vmem:[%s9 + $0x28] sm:$0xf]
      %v3562 = vld [vmem:[%s9 + $0x2c] sm:$0xf]
      %v3563 = vpack.c.bf16 %v3524, %v3521
      %v3564 = vpack.c.bf16 %v3532, %v3529
      %v3565 = vpack.c.bf16 %v3540, %v3537
      %v3566 = vpack.c.bf16 %v3548, %v3545
      %v3575 = vunpack.c.l.b16 %v3555
      %v3576 = vunpack.c.l.b16 %v3556
      %v3577 = vunpack.c.l.b16 %v3557
      %v3578 = vunpack.c.l.b16 %v3558
      %v3579 = vunpack.c.l.b16 %v3559
      %v3580 = vunpack.c.l.b16 %v3560
      %v3581 = vunpack.c.l.b16 %v3561
      %v3582 = vunpack.c.l.b16 %v3562
      %v3583 = vpack.c.b16 %v3576, %v3575
      %v3584 = vpack.c.b16 %v3578, %v3577
      %v3585 = vpack.c.b16 %v3580, %v3579
      %v3586 = vpack.c.b16 %v3582, %v3581
      %v3592 = vsel %vm1071, %v3563, 0
      %v3595 = vsel %vm1071, %v3564, 0
      %v3598 = vsel %vm1071, %v3565, 0
      %v3601 = vsel %vm1071, %v3566, 0
      %3603 = vmatprep.subr.bf16.mxu0 0
      %3604 = vmatpush1.bf16.msra.mxu0 %v3583
      %3605 = vmatprep.subr.bf16.mxu0 0
      %3606 = vmatpush1.bf16.msra.mxu0 %v3584
      %3607 = vmatprep.subr.bf16.mxu0 0
      %3608 = vmatpush1.bf16.msra.mxu0 %v3585
      %3609 = vmatprep.subr.bf16.mxu0 0
      %3610 = vmatpush1.bf16.msra.mxu0 %v3586
      %3611 = vmatprep.subr.bf16.mxu0 0
      %3612 = vmatpush1.bf16.msra.mxu0 0
      %3613 = vmatprep.subr.bf16.mxu0 0
      %3614 = vmatpush1.bf16.msra.mxu0 0
      %3615 = vmatprep.subr.bf16.mxu0 0
      %3616 = vmatpush1.bf16.msra.mxu0 0
      %3617 = vmatprep.subr.bf16.mxu0 0
      %3618 = vmatpush1.bf16.msra.mxu0 0
      %3619 = vmatprep.subr.bf16.mxu0 0
      %3620 = vmatpush1.bf16.msra.mxu0 0
      %3621 = vmatprep.subr.bf16.mxu0 0
      %3622 = vmatpush1.bf16.msra.mxu0 0
      %3623 = vmatprep.subr.bf16.mxu0 0
      %3624 = vmatpush1.bf16.msra.mxu0 0
      %3625 = vmatprep.subr.bf16.mxu0 0
      %3626 = vmatpush1.bf16.msra.mxu0 0
      %3627 = vmatprep.subr.bf16.mxu0 0
      %3628 = vmatpush1.bf16.msra.mxu0 0
      %3629 = vmatprep.subr.bf16.mxu0 0
      %3630 = vmatpush1.bf16.msra.mxu0 0
      %3631 = vmatprep.subr.bf16.mxu0 0
      %3632 = vmatpush1.bf16.msra.mxu0 0
      %3633 = vmatprep.subr.bf16.mxu0 0
      %3634 = vmatpush1.bf16.msra.mxu0 0
      %3635 = vmatprep.mubr.bf16.mxu0 0
      %3636 = vmatmul.mubr.bf16.gmra.mrb[0].mxu0 %v3592
      %v3637 = vpop.f32.mrb[0].mxu0
      %v3638 = vadd.f32 0.0, %v3637
      %v3639 = vpop.f32.mrb[0].mxu0
      %v3640 = vpop.f32.mrb[0].mxu0
      %v3641 = vadd.f32 0.0, %v3640
      %v3642 = vpop.f32.mrb[0].mxu0
      %3643 = vmatprep.mubr.bf16.mxu0 0
      %3644 = vmatmul.mubr.bf16.gmra.mrb[0].mxu0 %v3595
      %v3645 = vpop.f32.mrb[0].mxu0
      %v3646 = vadd.f32 0.0, %v3645
      %v3647 = vpop.f32.mrb[0].mxu0
      %v3648 = vpop.f32.mrb[0].mxu0
      %v3649 = vadd.f32 0.0, %v3648
      %v3650 = vpop.f32.mrb[0].mxu0
      %3651 = vmatprep.mubr.bf16.mxu0 0
      %3652 = vmatmul.mubr.bf16.gmra.mrb[0].mxu0 %v3598
      %v3653 = vpop.f32.mrb[0].mxu0
      %v3654 = vadd.f32 0.0, %v3653
      %v3655 = vpop.f32.mrb[0].mxu0
      %v3656 = vpop.f32.mrb[0].mxu0
      %v3657 = vadd.f32 0.0, %v3656
      %v3658 = vpop.f32.mrb[0].mxu0
      %3659 = vmatprep.mubr.bf16.mxu0 0
      %3660 = vmatmul.mubr.bf16.gmra.mrb[0].mxu0 %v3601
      %v3661 = vpop.f32.mrb[0].mxu0
      %v3662 = vadd.f32 0.0, %v3661
      %v3663 = vpop.f32.mrb[0].mxu0
      %v3664 = vpop.f32.mrb[0].mxu0
      %v3665 = vadd.f32 0.0, %v3664
      %v3666 = vpop.f32.mrb[0].mxu0
      %3667 = vdwg.mxu0
      %v3672 = vunpack.c.l.b16 %v3551
      %v3673 = vunpack.c.l.b16 %v3552
      %v3674 = vunpack.c.l.b16 %v3553
      %v3675 = vunpack.c.l.b16 %v3554
      %v3676 = vpack.c.b16 %v3673, %v3672
      %v3677 = vpack.c.b16 %v3675, %v3674
      %v3681 = vsel %vm604, %v927, 0
      %v3684 = vsel %vm604, %v928, 0
      %v3687 = vsel %vm604, %v929, 0
      %v3690 = vsel %vm604, %v930, 0
      %3692 = vmatprep.subr.bf16.mxu0 0
      %3693 = vmatpush1.bf16.msra.mxu0 %v3676
      %3694 = vmatprep.subr.bf16.mxu0 0
      %3695 = vmatpush1.bf16.msra.mxu0 %v3677
      %3696 = vmatprep.subr.bf16.mxu0 0
      %3697 = vmatpush1.bf16.msra.mxu0 0
      %3698 = vmatprep.subr.bf16.mxu0 0
      %3699 = vmatpush1.bf16.msra.mxu0 0
      %3700 = vmatprep.subr.bf16.mxu0 0
      %3701 = vmatpush1.bf16.msra.mxu0 0
      %3702 = vmatprep.subr.bf16.mxu0 0
      %3703 = vmatpush1.bf16.msra.mxu0 0
      %3704 = vmatprep.subr.bf16.mxu0 0
      %3705 = vmatpush1.bf16.msra.mxu0 0
      %3706 = vmatprep.subr.bf16.mxu0 0
      %3707 = vmatpush1.bf16.msra.mxu0 0
      %3708 = vmatprep.subr.bf16.mxu0 0
      %3709 = vmatpush1.bf16.msra.mxu0 0
      %3710 = vmatprep.subr.bf16.mxu0 0
      %3711 = vmatpush1.bf16.msra.mxu0 0
      %3712 = vmatprep.subr.bf16.mxu0 0
      %3713 = vmatpush1.bf16.msra.mxu0 0
      %3714 = vmatprep.subr.bf16.mxu0 0
      %3715 = vmatpush1.bf16.msra.mxu0 0
      %3716 = vmatprep.subr.bf16.mxu0 0
      %3717 = vmatpush1.bf16.msra.mxu0 0
      %3718 = vmatprep.subr.bf16.mxu0 0
      %3719 = vmatpush1.bf16.msra.mxu0 0
      %3720 = vmatprep.subr.bf16.mxu0 0
      %3721 = vmatpush1.bf16.msra.mxu0 0
      %3722 = vmatprep.subr.bf16.mxu0 0
      %3723 = vmatpush1.bf16.msra.mxu0 0
      %3724 = vmatprep.mubr.bf16.mxu0 0
      %3725 = vmatmul.mubr.bf16.gmra.mrb[0].mxu0 %v3681
      %v3726 = vpop.f32.mrb[0].mxu0
      %v3727 = vadd.f32 %v3638, %v3726
      %v3728 = vpop.f32.mrb[0].mxu0
      %v3729 = vpop.f32.mrb[0].mxu0
      %v3730 = vadd.f32 %v3641, %v3729
      %v3731 = vpop.f32.mrb[0].mxu0
      %3732 = vmatprep.mubr.bf16.mxu0 0
      %3733 = vmatmul.mubr.bf16.gmra.mrb[0].mxu0 %v3684
      %v3734 = vpop.f32.mrb[0].mxu0
      %v3735 = vadd.f32 %v3646, %v3734
      %v3736 = vpop.f32.mrb[0].mxu0
      %v3737 = vpop.f32.mrb[0].mxu0
      %v3738 = vadd.f32 %v3649, %v3737
      %v3739 = vpop.f32.mrb[0].mxu0
      %3740 = vmatprep.mubr.bf16.mxu0 0
      %3741 = vmatmul.mubr.bf16.gmra.mrb[0].mxu0 %v3687
      %v3742 = vpop.f32.mrb[0].mxu0
      %v3743 = vadd.f32 %v3654, %v3742
      %v3744 = vpop.f32.mrb[0].mxu0
      %v3745 = vpop.f32.mrb[0].mxu0
      %v3746 = vadd.f32 %v3657, %v3745
      %v3747 = vpop.f32.mrb[0].mxu0
      %3748 = vmatprep.mubr.bf16.mxu0 0
      %3749 = vmatmul.mubr.bf16.gmra.mrb[0].mxu0 %v3690
      %v3750 = vpop.f32.mrb[0].mxu0
      %v3751 = vadd.f32 %v3662, %v3750
      %v3752 = vpop.f32.mrb[0].mxu0
      %v3753 = vpop.f32.mrb[0].mxu0
      %v3754 = vadd.f32 %v3665, %v3753
      %v3755 = vpop.f32.mrb[0].mxu0
      %3756 = vdwg.mxu0
      %v3757 = vld [vmem:[%s10] sm:$0x1]
      %v3759 = vlaneseq
      %v3760 = vshrl.u32 %v3759, 7
      %v3761 = vsub.s32 0, %v3760
      %v3762 = vrot.slane %v3757, %v3761
      %v3764 = vadd.f32 %v3727, %v3762
      %v3765 = vadd.f32 %v3730, %v3762
      %v3766 = vadd.f32 %v3735, %v3762
      %v3767 = vadd.f32 %v3738, %v3762
      %v3768 = vadd.f32 %v3743, %v3762
      %v3769 = vadd.f32 %v3746, %v3762
      %v3770 = vadd.f32 %v3751, %v3762
      %v3771 = vadd.f32 %v3754, %v3762
      %v3772 = vmax.f32 %v3764, 0.0
      %v3773 = vmax.f32 %v3765, 0.0
      %v3774 = vmax.f32 %v3766, 0.0
      %v3775 = vmax.f32 %v3767, 0.0
      %v3776 = vmax.f32 %v3768, 0.0
      %v3777 = vmax.f32 %v3769, 0.0
      %v3778 = vmax.f32 %v3770, 0.0
      %v3779 = vmax.f32 %v3771, 0.0
      %v3780 = vld [vmem:[%s11] sm:$0xf]
      %v3781 = vld [vmem:[%s11 + $0x4] sm:$0xf]
      %v3782 = vld [vmem:[%s11 + $0x8] sm:$0xf]
      %v3783 = vld [vmem:[%s11 + $0xc] sm:$0xf]
      %v3784 = vpack.c.bf16 %v3773, %v3772
      %v3785 = vpack.c.bf16 %v3775, %v3774
      %v3786 = vpack.c.bf16 %v3777, %v3776
      %v3787 = vpack.c.bf16 %v3779, %v3778
      %s3788 = scalar_lea.vmem %s10, 1
      %v3789 = vld [vmem:[%s3788] sm:$0x1]
      %v3791 = vlaneseq
      %v3792 = vshrl.u32 %v3791, 7
      %v3793 = vsub.s32 0, %v3792
      %v3794 = vrot.slane %v3789, %v3793
      %v3800 = vunpack.c.l.b16 %v3780
      %v3801 = vunpack.c.l.b16 %v3781
      %v3802 = vunpack.c.l.b16 %v3782
      %v3803 = vunpack.c.l.b16 %v3783
      %v3804 = vpack.c.b16 %v3801, %v3800
      %v3805 = vpack.c.b16 %v3803, %v3802
      %v3809 = vsel %vm604, %v3784, 0
      %v3812 = vsel %vm604, %v3785, 0
      %v3815 = vsel %vm604, %v3786, 0
      %v3818 = vsel %vm604, %v3787, 0
      %3820 = vmatprep.subr.bf16.mxu0 0
      %3821 = vmatpush1.bf16.msra.mxu0 %v3804
      %3822 = vmatprep.subr.bf16.mxu0 0
      %3823 = vmatpush1.bf16.msra.mxu0 %v3805
      %3824 = vmatprep.subr.bf16.mxu0 0
      %3825 = vmatpush1.bf16.msra.mxu0 0
      %3826 = vmatprep.subr.bf16.mxu0 0
      %3827 = vmatpush1.bf16.msra.mxu0 0
      %3828 = vmatprep.subr.bf16.mxu0 0
      %3829 = vmatpush1.bf16.msra.mxu0 0
      %3830 = vmatprep.subr.bf16.mxu0 0
      %3831 = vmatpush1.bf16.msra.mxu0 0
      %3832 = vmatprep.subr.bf16.mxu0 0
      %3833 = vmatpush1.bf16.msra.mxu0 0
      %3834 = vmatprep.subr.bf16.mxu0 0
      %3835 = vmatpush1.bf16.msra.mxu0 0
      %3836 = vmatprep.subr.bf16.mxu0 0
      %3837 = vmatpush1.bf16.msra.mxu0 0
      %3838 = vmatprep.subr.bf16.mxu0 0
      %3839 = vmatpush1.bf16.msra.mxu0 0
      %3840 = vmatprep.subr.bf16.mxu0 0
      %3841 = vmatpush1.bf16.msra.mxu0 0
      %3842 = vmatprep.subr.bf16.mxu0 0
      %3843 = vmatpush1.bf16.msra.mxu0 0
      %3844 = vmatprep.subr.bf16.mxu0 0
      %3845 = vmatpush1.bf16.msra.mxu0 0
      %3846 = vmatprep.subr.bf16.mxu0 0
      %3847 = vmatpush1.bf16.msra.mxu0 0
      %3848 = vmatprep.subr.bf16.mxu0 0
      %3849 = vmatpush1.bf16.msra.mxu0 0
      %3850 = vmatprep.subr.bf16.mxu0 0
      %3851 = vmatpush1.bf16.msra.mxu0 0
      %3852 = vmatprep.mubr.bf16.mxu0 0
      %3853 = vmatmul.mubr.bf16.gmra.mrb[0].mxu0 %v3809
      %v3854 = vpop.f32.mrb[0].mxu0
      %v3855 = vadd.f32 %v3794, %v3854
      %v3856 = vpop.f32.mrb[0].mxu0
      %v3857 = vpop.f32.mrb[0].mxu0
      %v3858 = vadd.f32 %v3794, %v3857
      %v3859 = vpop.f32.mrb[0].mxu0
      %3860 = vmatprep.mubr.bf16.mxu0 0
      %3861 = vmatmul.mubr.bf16.gmra.mrb[0].mxu0 %v3812
      %v3862 = vpop.f32.mrb[0].mxu0
      %v3863 = vadd.f32 %v3794, %v3862
      %v3864 = vpop.f32.mrb[0].mxu0
      %v3865 = vpop.f32.mrb[0].mxu0
      %v3866 = vadd.f32 %v3794, %v3865
      %v3867 = vpop.f32.mrb[0].mxu0
      %3868 = vmatprep.mubr.bf16.mxu0 0
      %3869 = vmatmul.mubr.bf16.gmra.mrb[0].mxu0 %v3815
      %v3870 = vpop.f32.mrb[0].mxu0
      %v3871 = vadd.f32 %v3794, %v3870
      %v3872 = vpop.f32.mrb[0].mxu0
      %v3873 = vpop.f32.mrb[0].mxu0
      %v3874 = vadd.f32 %v3794, %v3873
      %v3875 = vpop.f32.mrb[0].mxu0
      %3876 = vmatprep.mubr.bf16.mxu0 0
      %3877 = vmatmul.mubr.bf16.gmra.mrb[0].mxu0 %v3818
      %v3878 = vpop.f32.mrb[0].mxu0
      %v3879 = vadd.f32 %v3794, %v3878
      %v3880 = vpop.f32.mrb[0].mxu0
      %v3881 = vpop.f32.mrb[0].mxu0
      %v3882 = vadd.f32 %v3794, %v3881
      %v3883 = vpop.f32.mrb[0].mxu0
      %3884 = vdwg.mxu0
      %v3885 = vmax.f32 %v3855, 0.0
      %v3886 = vmax.f32 %v3858, 0.0
      %v3887 = vmax.f32 %v3863, 0.0
      %v3888 = vmax.f32 %v3866, 0.0
      %v3889 = vmax.f32 %v3871, 0.0
      %v3890 = vmax.f32 %v3874, 0.0
      %v3891 = vmax.f32 %v3879, 0.0
      %v3892 = vmax.f32 %v3882, 0.0
      %v3893 = vadd.f32 %v734, %v3885
      %v3894 = vadd.f32 %v735, %v3886
      %v3895 = vadd.f32 %v736, %v3887
      %v3896 = vadd.f32 %v737, %v3888
      %v3897 = vadd.f32 %v738, %v3889
      %v3898 = vadd.f32 %v739, %v3890
      %v3899 = vadd.f32 %v740, %v3891
      %v3900 = vadd.f32 %v741, %v3892
      %v3901 = vpack.c.bf16 %v3894, %v3893
      %v3902 = vpack.c.bf16 %v3896, %v3895
      %v3903 = vpack.c.bf16 %v3898, %v3897
      %v3904 = vpack.c.bf16 %v3900, %v3899
      %3905 = vmatprep.subr.bf16.mxu0 0
      %3906 = vmatpush1.bf16.msra.mxu0 %v3901
      %3907 = vmatprep.subr.bf16.mxu0 0
      %3908 = vmatpush1.bf16.msra.mxu0 %v3902
      %3909 = vmatprep.subr.bf16.mxu0 0
      %3910 = vmatpush1.bf16.msra.mxu0 %v3903
      %3911 = vmatprep.subr.bf16.mxu0 0
      %3912 = vmatpush1.bf16.msra.mxu0 %v3904
      %3913 = vmatprep.subr.bf16.mxu0 0
      %3914 = vmatpush1.bf16.msra.mxu0 0
      %3915 = vmatprep.subr.bf16.mxu0 0
      %3916 = vmatpush1.bf16.msra.mxu0 0
      %3917 = vmatprep.subr.bf16.mxu0 0
      %3918 = vmatpush1.bf16.msra.mxu0 0
      %3919 = vmatprep.subr.bf16.mxu0 0
      %3920 = vmatpush1.bf16.msra.mxu0 0
      %3921 = vmatprep.subr.bf16.mxu0 0
      %3922 = vmatpush1.bf16.msra.mxu0 0
      %3923 = vmatprep.subr.bf16.mxu0 0
      %3924 = vmatpush1.bf16.msra.mxu0 0
      %3925 = vmatprep.subr.bf16.mxu0 0
      %3926 = vmatpush1.bf16.msra.mxu0 0
      %3927 = vmatprep.subr.bf16.mxu0 0
      %3928 = vmatpush1.bf16.msra.mxu0 0
      %3929 = vmatprep.subr.bf16.mxu0 0
      %3930 = vmatpush1.bf16.msra.mxu0 0
      %3931 = vmatprep.subr.bf16.mxu0 0
      %3932 = vmatpush1.bf16.msra.mxu0 0
      %3933 = vmatprep.subr.bf16.mxu0 0
      %3934 = vmatpush1.bf16.msra.mxu0 0
      %3935 = vmatprep.subr.bf16.mxu0 0
      %3936 = vmatpush1.bf16.msra.mxu0 0
      %3937 = vmatprep.mubr.bf16.mxu0 0
      %3938 = vmatmul.mubr.bf16.gmra.mrb[0].mxu0 %v1073
      %v3939 = vpop.f32.mrb[0].mxu0
      %v3940 = vadd.f32 0.0, %v3939
      %v3941 = vpop.f32.mrb[0].mxu0
      %v3942 = vpop.f32.mrb[0].mxu0
      %v3943 = vadd.f32 0.0, %v3942
      %v3944 = vpop.f32.mrb[0].mxu0
      %3945 = vmatprep.mubr.bf16.mxu0 0
      %3946 = vmatmul.mubr.bf16.gmra.mrb[0].mxu0 %v1076
      %v3947 = vpop.f32.mrb[0].mxu0
      %v3948 = vadd.f32 0.0, %v3947
      %v3949 = vpop.f32.mrb[0].mxu0
      %v3950 = vpop.f32.mrb[0].mxu0
      %v3951 = vadd.f32 0.0, %v3950
      %v3952 = vpop.f32.mrb[0].mxu0
      %3953 = vmatprep.mubr.bf16.mxu0 0
      %3954 = vmatmul.mubr.bf16.gmra.mrb[0].mxu0 %v1079
      %v3955 = vpop.f32.mrb[0].mxu0
      %v3956 = vadd.f32 0.0, %v3955
      %v3957 = vpop.f32.mrb[0].mxu0
      %v3958 = vpop.f32.mrb[0].mxu0
      %v3959 = vadd.f32 0.0, %v3958
      %v3960 = vpop.f32.mrb[0].mxu0
      %3961 = vmatprep.mubr.bf16.mxu0 0
      %3962 = vmatmul.mubr.bf16.gmra.mrb[0].mxu0 %v1082
      %v3963 = vpop.f32.mrb[0].mxu0
      %v3964 = vadd.f32 0.0, %v3963
      %v3965 = vpop.f32.mrb[0].mxu0
      %v3966 = vpop.f32.mrb[0].mxu0
      %v3967 = vadd.f32 0.0, %v3966
      %v3968 = vpop.f32.mrb[0].mxu0
      %3969 = vmatprep.mubr.bf16.mxu0 0
      %3970 = vmatmul.mubr.bf16.gmra.mrb[0].mxu0 %v1085
      %v3971 = vpop.f32.mrb[0].mxu0
      %v3972 = vadd.f32 0.0, %v3971
      %v3973 = vpop.f32.mrb[0].mxu0
      %v3974 = vpop.f32.mrb[0].mxu0
      %v3975 = vadd.f32 0.0, %v3974
      %v3976 = vpop.f32.mrb[0].mxu0
      %3977 = vmatprep.mubr.bf16.mxu0 0
      %3978 = vmatmul.mubr.bf16.gmra.mrb[0].mxu0 %v1088
      %v3979 = vpop.f32.mrb[0].mxu0
      %v3980 = vadd.f32 0.0, %v3979
      %v3981 = vpop.f32.mrb[0].mxu0
      %v3982 = vpop.f32.mrb[0].mxu0
      %v3983 = vadd.f32 0.0, %v3982
      %v3984 = vpop.f32.mrb[0].mxu0
      %3985 = vmatprep.mubr.bf16.mxu0 0
      %3986 = vmatmul.mubr.bf16.gmra.mrb[0].mxu0 %v1091
      %v3987 = vpop.f32.mrb[0].mxu0
      %v3988 = vadd.f32 0.0, %v3987
      %v3989 = vpop.f32.mrb[0].mxu0
      %v3990 = vpop.f32.mrb[0].mxu0
      %v3991 = vadd.f32 0.0, %v3990
      %v3992 = vpop.f32.mrb[0].mxu0
      %3993 = vmatprep.mubr.bf16.mxu0 0
      %3994 = vmatmul.mubr.bf16.gmra.mrb[0].mxu0 %v1094
      %v3995 = vpop.f32.mrb[0].mxu0
      %v3996 = vadd.f32 0.0, %v3995
      %v3997 = vpop.f32.mrb[0].mxu0
      %v3998 = vpop.f32.mrb[0].mxu0
      %v3999 = vadd.f32 0.0, %v3998
      %v4000 = vpop.f32.mrb[0].mxu0
      %4001 = vmatprep.mubr.bf16.mxu0 0
      %4002 = vmatmul.mubr.bf16.gmra.mrb[0].mxu0 %v1097
      %v4003 = vpop.f32.mrb[0].mxu0
      %v4004 = vadd.f32 0.0, %v4003
      %v4005 = vpop.f32.mrb[0].mxu0
      %v4006 = vpop.f32.mrb[0].mxu0
      %v4007 = vadd.f32 0.0, %v4006
      %v4008 = vpop.f32.mrb[0].mxu0
      %4009 = vmatprep.mubr.bf16.mxu0 0
      %4010 = vmatmul.mubr.bf16.gmra.mrb[0].mxu0 %v1100
      %v4011 = vpop.f32.mrb[0].mxu0
      %v4012 = vadd.f32 0.0, %v4011
      %v4013 = vpop.f32.mrb[0].mxu0
      %v4014 = vpop.f32.mrb[0].mxu0
      %v4015 = vadd.f32 0.0, %v4014
      %v4016 = vpop.f32.mrb[0].mxu0
      %4017 = vmatprep.mubr.bf16.mxu0 0
      %4018 = vmatmul.mubr.bf16.gmra.mrb[0].mxu0 %v1103
      %v4019 = vpop.f32.mrb[0].mxu0
      %v4020 = vadd.f32 0.0, %v4019
      %v4021 = vpop.f32.mrb[0].mxu0
      %v4022 = vpop.f32.mrb[0].mxu0
      %v4023 = vadd.f32 0.0, %v4022
      %v4024 = vpop.f32.mrb[0].mxu0
      %4025 = vmatprep.mubr.bf16.mxu0 0
      %4026 = vmatmul.mubr.bf16.gmra.mrb[0].mxu0 %v1106
      %v4027 = vpop.f32.mrb[0].mxu0
      %v4028 = vadd.f32 0.0, %v4027
      %v4029 = vpop.f32.mrb[0].mxu0
      %v4030 = vpop.f32.mrb[0].mxu0
      %v4031 = vadd.f32 0.0, %v4030
      %v4032 = vpop.f32.mrb[0].mxu0
      %4033 = vmatprep.mubr.bf16.mxu0 0
      %4034 = vmatmul.mubr.bf16.gmra.mrb[0].mxu0 %v1109
      %v4035 = vpop.f32.mrb[0].mxu0
      %v4036 = vadd.f32 0.0, %v4035
      %v4037 = vpop.f32.mrb[0].mxu0
      %v4038 = vpop.f32.mrb[0].mxu0
      %v4039 = vadd.f32 0.0, %v4038
      %v4040 = vpop.f32.mrb[0].mxu0
      %4041 = vmatprep.mubr.bf16.mxu0 0
      %4042 = vmatmul.mubr.bf16.gmra.mrb[0].mxu0 %v1112
      %v4043 = vpop.f32.mrb[0].mxu0
      %v4044 = vadd.f32 0.0, %v4043
      %v4045 = vpop.f32.mrb[0].mxu0
      %v4046 = vpop.f32.mrb[0].mxu0
      %v4047 = vadd.f32 0.0, %v4046
      %v4048 = vpop.f32.mrb[0].mxu0
      %4049 = vmatprep.mubr.bf16.mxu0 0
      %4050 = vmatmul.mubr.bf16.gmra.mrb[0].mxu0 %v1115
      %v4051 = vpop.f32.mrb[0].mxu0
      %v4052 = vadd.f32 0.0, %v4051
      %v4053 = vpop.f32.mrb[0].mxu0
      %v4054 = vpop.f32.mrb[0].mxu0
      %v4055 = vadd.f32 0.0, %v4054
      %v4056 = vpop.f32.mrb[0].mxu0
      %4057 = vmatprep.mubr.bf16.mxu0 0
      %4058 = vmatmul.mubr.bf16.gmra.mrb[0].mxu0 %v1118
      %v4059 = vpop.f32.mrb[0].mxu0
      %v4060 = vadd.f32 0.0, %v4059
      %v4061 = vpop.f32.mrb[0].mxu0
      %v4062 = vpop.f32.mrb[0].mxu0
      %v4063 = vadd.f32 0.0, %v4062
      %v4064 = vpop.f32.mrb[0].mxu0
      %4065 = vmatprep.mubr.bf16.mxu0 0
      %4066 = vmatmul.mubr.bf16.gmra.mrb[0].mxu0 %v1121
      %v4067 = vpop.f32.mrb[0].mxu0
      %v4068 = vadd.f32 0.0, %v4067
      %v4069 = vpop.f32.mrb[0].mxu0
      %v4070 = vpop.f32.mrb[0].mxu0
      %v4071 = vadd.f32 0.0, %v4070
      %v4072 = vpop.f32.mrb[0].mxu0
      %4073 = vmatprep.mubr.bf16.mxu0 0
      %4074 = vmatmul.mubr.bf16.gmra.mrb[0].mxu0 %v1124
      %v4075 = vpop.f32.mrb[0].mxu0
      %v4076 = vadd.f32 0.0, %v4075
      %v4077 = vpop.f32.mrb[0].mxu0
      %v4078 = vpop.f32.mrb[0].mxu0
      %v4079 = vadd.f32 0.0, %v4078
      %v4080 = vpop.f32.mrb[0].mxu0
      %4081 = vmatprep.mubr.bf16.mxu0 0
      %4082 = vmatmul.mubr.bf16.gmra.mrb[0].mxu0 %v1127
      %v4083 = vpop.f32.mrb[0].mxu0
      %v4084 = vadd.f32 0.0, %v4083
      %v4085 = vpop.f32.mrb[0].mxu0
      %v4086 = vpop.f32.mrb[0].mxu0
      %v4087 = vadd.f32 0.0, %v4086
      %v4088 = vpop.f32.mrb[0].mxu0
      %4089 = vmatprep.mubr.bf16.mxu0 0
      %4090 = vmatmul.mubr.bf16.gmra.mrb[0].mxu0 %v1130
      %v4091 = vpop.f32.mrb[0].mxu0
      %v4092 = vadd.f32 0.0, %v4091
      %v4093 = vpop.f32.mrb[0].mxu0
      %v4094 = vpop.f32.mrb[0].mxu0
      %v4095 = vadd.f32 0.0, %v4094
      %v4096 = vpop.f32.mrb[0].mxu0
      %4097 = vmatprep.mubr.bf16.mxu0 0
      %4098 = vmatmul.mubr.bf16.gmra.mrb[0].mxu0 %v1133
      %v4099 = vpop.f32.mrb[0].mxu0
      %v4100 = vadd.f32 0.0, %v4099
      %v4101 = vpop.f32.mrb[0].mxu0
      %v4102 = vpop.f32.mrb[0].mxu0
      %v4103 = vadd.f32 0.0, %v4102
      %v4104 = vpop.f32.mrb[0].mxu0
      %4105 = vmatprep.mubr.bf16.mxu0 0
      %4106 = vmatmul.mubr.bf16.gmra.mrb[0].mxu0 %v1136
      %v4107 = vpop.f32.mrb[0].mxu0
      %v4108 = vadd.f32 0.0, %v4107
      %v4109 = vpop.f32.mrb[0].mxu0
      %v4110 = vpop.f32.mrb[0].mxu0
      %v4111 = vadd.f32 0.0, %v4110
      %v4112 = vpop.f32.mrb[0].mxu0
      %4113 = vmatprep.mubr.bf16.mxu0 0
      %4114 = vmatmul.mubr.bf16.gmra.mrb[0].mxu0 %v1139
      %v4115 = vpop.f32.mrb[0].mxu0
      %v4116 = vadd.f32 0.0, %v4115
      %v4117 = vpop.f32.mrb[0].mxu0
      %v4118 = vpop.f32.mrb[0].mxu0
      %v4119 = vadd.f32 0.0, %v4118
      %v4120 = vpop.f32.mrb[0].mxu0
      %4121 = vmatprep.mubr.bf16.mxu0 0
      %4122 = vmatmul.mubr.bf16.gmra.mrb[0].mxu0 %v1142
      %v4123 = vpop.f32.mrb[0].mxu0
      %v4124 = vadd.f32 0.0, %v4123
      %v4125 = vpop.f32.mrb[0].mxu0
      %v4126 = vpop.f32.mrb[0].mxu0
      %v4127 = vadd.f32 0.0, %v4126
      %v4128 = vpop.f32.mrb[0].mxu0
      %4129 = vmatprep.mubr.bf16.mxu0 0
      %4130 = vmatmul.mubr.bf16.gmra.mrb[0].mxu0 %v1145
      %v4131 = vpop.f32.mrb[0].mxu0
      %v4132 = vadd.f32 0.0, %v4131
      %v4133 = vpop.f32.mrb[0].mxu0
      %v4134 = vpop.f32.mrb[0].mxu0
      %v4135 = vadd.f32 0.0, %v4134
      %v4136 = vpop.f32.mrb[0].mxu0
      %4137 = vmatprep.mubr.bf16.mxu0 0
      %4138 = vmatmul.mubr.bf16.gmra.mrb[0].mxu0 %v1148
      %v4139 = vpop.f32.mrb[0].mxu0
      %v4140 = vadd.f32 0.0, %v4139
      %v4141 = vpop.f32.mrb[0].mxu0
      %v4142 = vpop.f32.mrb[0].mxu0
      %v4143 = vadd.f32 0.0, %v4142
      %v4144 = vpop.f32.mrb[0].mxu0
      %4145 = vmatprep.mubr.bf16.mxu0 0
      %4146 = vmatmul.mubr.bf16.gmra.mrb[0].mxu0 %v1151
      %v4147 = vpop.f32.mrb[0].mxu0
      %v4148 = vadd.f32 0.0, %v4147
      %v4149 = vpop.f32.mrb[0].mxu0
      %v4150 = vpop.f32.mrb[0].mxu0
      %v4151 = vadd.f32 0.0, %v4150
      %v4152 = vpop.f32.mrb[0].mxu0
      %4153 = vmatprep.mubr.bf16.mxu0 0
      %4154 = vmatmul.mubr.bf16.gmra.mrb[0].mxu0 %v1154
      %v4155 = vpop.f32.mrb[0].mxu0
      %v4156 = vadd.f32 0.0, %v4155
      %v4157 = vpop.f32.mrb[0].mxu0
      %v4158 = vpop.f32.mrb[0].mxu0
      %v4159 = vadd.f32 0.0, %v4158
      %v4160 = vpop.f32.mrb[0].mxu0
      %4161 = vdwg.mxu0
      %4162 = vmatprep.subr.bf16.mxu0 0
      %4163 = vmatpush1.bf16.msra.mxu0 %v3901
      %4164 = vmatprep.subr.bf16.mxu0 0
      %4165 = vmatpush1.bf16.msra.mxu0 %v3902
      %4166 = vmatprep.subr.bf16.mxu0 0
      %4167 = vmatpush1.bf16.msra.mxu0 %v3903
      %4168 = vmatprep.subr.bf16.mxu0 0
      %4169 = vmatpush1.bf16.msra.mxu0 %v3904
      %4170 = vmatprep.subr.bf16.mxu0 0
      %4171 = vmatpush1.bf16.msra.mxu0 0
      %4172 = vmatprep.subr.bf16.mxu0 0
      %4173 = vmatpush1.bf16.msra.mxu0 0
      %4174 = vmatprep.subr.bf16.mxu0 0
      %4175 = vmatpush1.bf16.msra.mxu0 0
      %4176 = vmatprep.subr.bf16.mxu0 0
      %4177 = vmatpush1.bf16.msra.mxu0 0
      %4178 = vmatprep.subr.bf16.mxu0 0
      %4179 = vmatpush1.bf16.msra.mxu0 0
      %4180 = vmatprep.subr.bf16.mxu0 0
      %4181 = vmatpush1.bf16.msra.mxu0 0
      %4182 = vmatprep.subr.bf16.mxu0 0
      %4183 = vmatpush1.bf16.msra.mxu0 0
      %4184 = vmatprep.subr.bf16.mxu0 0
      %4185 = vmatpush1.bf16.msra.mxu0 0
      %4186 = vmatprep.subr.bf16.mxu0 0
      %4187 = vmatpush1.bf16.msra.mxu0 0
      %4188 = vmatprep.subr.bf16.mxu0 0
      %4189 = vmatpush1.bf16.msra.mxu0 0
      %4190 = vmatprep.subr.bf16.mxu0 0
      %4191 = vmatpush1.bf16.msra.mxu0 0
      %4192 = vmatprep.subr.bf16.mxu0 0
      %4193 = vmatpush1.bf16.msra.mxu0 0
      %4194 = vmatprep.mubr.bf16.mxu0 0
      %4195 = vmatmul.mubr.bf16.gmra.mrb[0].mxu0 %v1554
      %v4196 = vpop.f32.mrb[0].mxu0
      %v4197 = vadd.f32 0.0, %v4196
      %v4198 = vpop.f32.mrb[0].mxu0
      %v4199 = vpop.f32.mrb[0].mxu0
      %v4200 = vadd.f32 0.0, %v4199
      %v4201 = vpop.f32.mrb[0].mxu0
      %4202 = vmatprep.mubr.bf16.mxu0 0
      %4203 = vmatmul.mubr.bf16.gmra.mrb[0].mxu0 %v1557
      %v4204 = vpop.f32.mrb[0].mxu0
      %v4205 = vadd.f32 0.0, %v4204
      %v4206 = vpop.f32.mrb[0].mxu0
      %v4207 = vpop.f32.mrb[0].mxu0
      %v4208 = vadd.f32 0.0, %v4207
      %v4209 = vpop.f32.mrb[0].mxu0
      %4210 = vmatprep.mubr.bf16.mxu0 0
      %4211 = vmatmul.mubr.bf16.gmra.mrb[0].mxu0 %v1560
      %v4212 = vpop.f32.mrb[0].mxu0
      %v4213 = vadd.f32 0.0, %v4212
      %v4214 = vpop.f32.mrb[0].mxu0
      %v4215 = vpop.f32.mrb[0].mxu0
      %v4216 = vadd.f32 0.0, %v4215
      %v4217 = vpop.f32.mrb[0].mxu0
      %4218 = vmatprep.mubr.bf16.mxu0 0
      %4219 = vmatmul.mubr.bf16.gmra.mrb[0].mxu0 %v1563
      %v4220 = vpop.f32.mrb[0].mxu0
      %v4221 = vadd.f32 0.0, %v4220
      %v4222 = vpop.f32.mrb[0].mxu0
      %v4223 = vpop.f32.mrb[0].mxu0
      %v4224 = vadd.f32 0.0, %v4223
      %v4225 = vpop.f32.mrb[0].mxu0
      %4226 = vmatprep.mubr.bf16.mxu0 0
      %4227 = vmatmul.mubr.bf16.gmra.mrb[0].mxu0 %v1566
      %v4228 = vpop.f32.mrb[0].mxu0
      %v4229 = vadd.f32 0.0, %v4228
      %v4230 = vpop.f32.mrb[0].mxu0
      %v4231 = vpop.f32.mrb[0].mxu0
      %v4232 = vadd.f32 0.0, %v4231
      %v4233 = vpop.f32.mrb[0].mxu0
      %4234 = vmatprep.mubr.bf16.mxu0 0
      %4235 = vmatmul.mubr.bf16.gmra.mrb[0].mxu0 %v1569
      %v4236 = vpop.f32.mrb[0].mxu0
      %v4237 = vadd.f32 0.0, %v4236
      %v4238 = vpop.f32.mrb[0].mxu0
      %v4239 = vpop.f32.mrb[0].mxu0
      %v4240 = vadd.f32 0.0, %v4239
      %v4241 = vpop.f32.mrb[0].mxu0
      %4242 = vmatprep.mubr.bf16.mxu0 0
      %4243 = vmatmul.mubr.bf16.gmra.mrb[0].mxu0 %v1572
      %v4244 = vpop.f32.mrb[0].mxu0
      %v4245 = vadd.f32 0.0, %v4244
      %v4246 = vpop.f32.mrb[0].mxu0
      %v4247 = vpop.f32.mrb[0].mxu0
      %v4248 = vadd.f32 0.0, %v4247
      %v4249 = vpop.f32.mrb[0].mxu0
      %4250 = vmatprep.mubr.bf16.mxu0 0
      %4251 = vmatmul.mubr.bf16.gmra.mrb[0].mxu0 %v1575
      %v4252 = vpop.f32.mrb[0].mxu0
      %v4253 = vadd.f32 0.0, %v4252
      %v4254 = vpop.f32.mrb[0].mxu0
      %v4255 = vpop.f32.mrb[0].mxu0
      %v4256 = vadd.f32 0.0, %v4255
      %v4257 = vpop.f32.mrb[0].mxu0
      %4258 = vmatprep.mubr.bf16.mxu0 0
      %4259 = vmatmul.mubr.bf16.gmra.mrb[0].mxu0 %v1578
      %v4260 = vpop.f32.mrb[0].mxu0
      %v4261 = vadd.f32 0.0, %v4260
      %v4262 = vpop.f32.mrb[0].mxu0
      %v4263 = vpop.f32.mrb[0].mxu0
      %v4264 = vadd.f32 0.0, %v4263
      %v4265 = vpop.f32.mrb[0].mxu0
      %4266 = vmatprep.mubr.bf16.mxu0 0
      %4267 = vmatmul.mubr.bf16.gmra.mrb[0].mxu0 %v1581
      %v4268 = vpop.f32.mrb[0].mxu0
      %v4269 = vadd.f32 0.0, %v4268
      %v4270 = vpop.f32.mrb[0].mxu0
      %v4271 = vpop.f32.mrb[0].mxu0
      %v4272 = vadd.f32 0.0, %v4271
      %v4273 = vpop.f32.mrb[0].mxu0
      %4274 = vmatprep.mubr.bf16.mxu0 0
      %4275 = vmatmul.mubr.bf16.gmra.mrb[0].mxu0 %v1584
      %v4276 = vpop.f32.mrb[0].mxu0
      %v4277 = vadd.f32 0.0, %v4276
      %v4278 = vpop.f32.mrb[0].mxu0
      %v4279 = vpop.f32.mrb[0].mxu0
      %v4280 = vadd.f32 0.0, %v4279
      %v4281 = vpop.f32.mrb[0].mxu0
      %4282 = vmatprep.mubr.bf16.mxu0 0
      %4283 = vmatmul.mubr.bf16.gmra.mrb[0].mxu0 %v1587
      %v4284 = vpop.f32.mrb[0].mxu0
      %v4285 = vadd.f32 0.0, %v4284
      %v4286 = vpop.f32.mrb[0].mxu0
      %v4287 = vpop.f32.mrb[0].mxu0
      %v4288 = vadd.f32 0.0, %v4287
      %v4289 = vpop.f32.mrb[0].mxu0
      %4290 = vmatprep.mubr.bf16.mxu0 0
      %4291 = vmatmul.mubr.bf16.gmra.mrb[0].mxu0 %v1590
      %v4292 = vpop.f32.mrb[0].mxu0
      %v4293 = vadd.f32 0.0, %v4292
      %v4294 = vpop.f32.mrb[0].mxu0
      %v4295 = vpop.f32.mrb[0].mxu0
      %v4296 = vadd.f32 0.0, %v4295
      %v4297 = vpop.f32.mrb[0].mxu0
      %4298 = vmatprep.mubr.bf16.mxu0 0
      %4299 = vmatmul.mubr.bf16.gmra.mrb[0].mxu0 %v1593
      %v4300 = vpop.f32.mrb[0].mxu0
      %v4301 = vadd.f32 0.0, %v4300
      %v4302 = vpop.f32.mrb[0].mxu0
      %v4303 = vpop.f32.mrb[0].mxu0
      %v4304 = vadd.f32 0.0, %v4303
      %v4305 = vpop.f32.mrb[0].mxu0
      %4306 = vmatprep.mubr.bf16.mxu0 0
      %4307 = vmatmul.mubr.bf16.gmra.mrb[0].mxu0 %v1596
      %v4308 = vpop.f32.mrb[0].mxu0
      %v4309 = vadd.f32 0.0, %v4308
      %v4310 = vpop.f32.mrb[0].mxu0
      %v4311 = vpop.f32.mrb[0].mxu0
      %v4312 = vadd.f32 0.0, %v4311
      %v4313 = vpop.f32.mrb[0].mxu0
      %4314 = vmatprep.mubr.bf16.mxu0 0
      %4315 = vmatmul.mubr.bf16.gmra.mrb[0].mxu0 %v1599
      %v4316 = vpop.f32.mrb[0].mxu0
      %v4317 = vadd.f32 0.0, %v4316
      %v4318 = vpop.f32.mrb[0].mxu0
      %v4319 = vpop.f32.mrb[0].mxu0
      %v4320 = vadd.f32 0.0, %v4319
      %v4321 = vpop.f32.mrb[0].mxu0
      %4322 = vmatprep.mubr.bf16.mxu0 0
      %4323 = vmatmul.mubr.bf16.gmra.mrb[0].mxu0 %v1602
      %v4324 = vpop.f32.mrb[0].mxu0
      %v4325 = vadd.f32 0.0, %v4324
      %v4326 = vpop.f32.mrb[0].mxu0
      %v4327 = vpop.f32.mrb[0].mxu0
      %v4328 = vadd.f32 0.0, %v4327
      %v4329 = vpop.f32.mrb[0].mxu0
      %4330 = vmatprep.mubr.bf16.mxu0 0
      %4331 = vmatmul.mubr.bf16.gmra.mrb[0].mxu0 %v1605
      %v4332 = vpop.f32.mrb[0].mxu0
      %v4333 = vadd.f32 0.0, %v4332
      %v4334 = vpop.f32.mrb[0].mxu0
      %v4335 = vpop.f32.mrb[0].mxu0
      %v4336 = vadd.f32 0.0, %v4335
      %v4337 = vpop.f32.mrb[0].mxu0
      %4338 = vmatprep.mubr.bf16.mxu0 0
      %4339 = vmatmul.mubr.bf16.gmra.mrb[0].mxu0 %v1608
      %v4340 = vpop.f32.mrb[0].mxu0
      %v4341 = vadd.f32 0.0, %v4340
      %v4342 = vpop.f32.mrb[0].mxu0
      %v4343 = vpop.f32.mrb[0].mxu0
      %v4344 = vadd.f32 0.0, %v4343
      %v4345 = vpop.f32.mrb[0].mxu0
      %4346 = vmatprep.mubr.bf16.mxu0 0
      %4347 = vmatmul.mubr.bf16.gmra.mrb[0].mxu0 %v1611
      %v4348 = vpop.f32.mrb[0].mxu0
      %v4349 = vadd.f32 0.0, %v4348
      %v4350 = vpop.f32.mrb[0].mxu0
      %v4351 = vpop.f32.mrb[0].mxu0
      %v4352 = vadd.f32 0.0, %v4351
      %v4353 = vpop.f32.mrb[0].mxu0
      %4354 = vmatprep.mubr.bf16.mxu0 0
      %4355 = vmatmul.mubr.bf16.gmra.mrb[0].mxu0 %v1614
      %v4356 = vpop.f32.mrb[0].mxu0
      %v4357 = vadd.f32 0.0, %v4356
      %v4358 = vpop.f32.mrb[0].mxu0
      %v4359 = vpop.f32.mrb[0].mxu0
      %v4360 = vadd.f32 0.0, %v4359
      %v4361 = vpop.f32.mrb[0].mxu0
      %4362 = vmatprep.mubr.bf16.mxu0 0
      %4363 = vmatmul.mubr.bf16.gmra.mrb[0].mxu0 %v1617
      %v4364 = vpop.f32.mrb[0].mxu0
      %v4365 = vadd.f32 0.0, %v4364
      %v4366 = vpop.f32.mrb[0].mxu0
      %v4367 = vpop.f32.mrb[0].mxu0
      %v4368 = vadd.f32 0.0, %v4367
      %v4369 = vpop.f32.mrb[0].mxu0
      %4370 = vmatprep.mubr.bf16.mxu0 0
      %4371 = vmatmul.mubr.bf16.gmra.mrb[0].mxu0 %v1620
      %v4372 = vpop.f32.mrb[0].mxu0
      %v4373 = vadd.f32 0.0, %v4372
      %v4374 = vpop.f32.mrb[0].mxu0
      %v4375 = vpop.f32.mrb[0].mxu0
      %v4376 = vadd.f32 0.0, %v4375
      %v4377 = vpop.f32.mrb[0].mxu0
      %4378 = vmatprep.mubr.bf16.mxu0 0
      %4379 = vmatmul.mubr.bf16.gmra.mrb[0].mxu0 %v1623
      %v4380 = vpop.f32.mrb[0].mxu0
      %v4381 = vadd.f32 0.0, %v4380
      %v4382 = vpop.f32.mrb[0].mxu0
      %v4383 = vpop.f32.mrb[0].mxu0
      %v4384 = vadd.f32 0.0, %v4383
      %v4385 = vpop.f32.mrb[0].mxu0
      %4386 = vmatprep.mubr.bf16.mxu0 0
      %4387 = vmatmul.mubr.bf16.gmra.mrb[0].mxu0 %v1626
      %v4388 = vpop.f32.mrb[0].mxu0
      %v4389 = vadd.f32 0.0, %v4388
      %v4390 = vpop.f32.mrb[0].mxu0
      %v4391 = vpop.f32.mrb[0].mxu0
      %v4392 = vadd.f32 0.0, %v4391
      %v4393 = vpop.f32.mrb[0].mxu0
      %4394 = vmatprep.mubr.bf16.mxu0 0
      %4395 = vmatmul.mubr.bf16.gmra.mrb[0].mxu0 %v1629
      %v4396 = vpop.f32.mrb[0].mxu0
      %v4397 = vadd.f32 0.0, %v4396
      %v4398 = vpop.f32.mrb[0].mxu0
      %v4399 = vpop.f32.mrb[0].mxu0
      %v4400 = vadd.f32 0.0, %v4399
      %v4401 = vpop.f32.mrb[0].mxu0
      %4402 = vmatprep.mubr.bf16.mxu0 0
      %4403 = vmatmul.mubr.bf16.gmra.mrb[0].mxu0 %v1632
      %v4404 = vpop.f32.mrb[0].mxu0
      %v4405 = vadd.f32 0.0, %v4404
      %v4406 = vpop.f32.mrb[0].mxu0
      %v4407 = vpop.f32.mrb[0].mxu0
      %v4408 = vadd.f32 0.0, %v4407
      %v4409 = vpop.f32.mrb[0].mxu0
      %4410 = vmatprep.mubr.bf16.mxu0 0
      %4411 = vmatmul.mubr.bf16.gmra.mrb[0].mxu0 %v1635
      %v4412 = vpop.f32.mrb[0].mxu0
      %v4413 = vadd.f32 0.0, %v4412
      %v4414 = vpop.f32.mrb[0].mxu0
      %v4415 = vpop.f32.mrb[0].mxu0
      %v4416 = vadd.f32 0.0, %v4415
      %v4417 = vpop.f32.mrb[0].mxu0
      %4418 = vdwg.mxu0
      %s4419 = scalar_lea.vmem %s6, 32
      %v4420 = vld [vmem:[%s4419] sm:$0xf]
      %v4421 = vld [vmem:[%s4419 + $0x4] sm:$0xf]
      %v4422 = vld [vmem:[%s4419 + $0x8] sm:$0xf]
      %v4423 = vld [vmem:[%s4419 + $0xc] sm:$0xf]
      %v4424 = vpack.c.bf16 %v4200, %v4197
      %v4425 = vpack.c.bf16 %v4208, %v4205
      %v4426 = vpack.c.bf16 %v4216, %v4213
      %v4427 = vpack.c.bf16 %v4224, %v4221
      %v4428 = vpack.c.bf16 %v4232, %v4229
      %v4429 = vpack.c.bf16 %v4240, %v4237
      %v4430 = vpack.c.bf16 %v4248, %v4245
      %v4431 = vpack.c.bf16 %v4256, %v4253
      %v4432 = vpack.c.bf16 %v4264, %v4261
      %v4433 = vpack.c.bf16 %v4272, %v4269
      %v4434 = vpack.c.bf16 %v4280, %v4277
      %v4435 = vpack.c.bf16 %v4288, %v4285
      %v4436 = vpack.c.bf16 %v4296, %v4293
      %v4437 = vpack.c.bf16 %v4304, %v4301
      %v4438 = vpack.c.bf16 %v4312, %v4309
      %v4439 = vpack.c.bf16 %v4320, %v4317
      %v4440 = vpack.c.bf16 %v4328, %v4325
      %v4441 = vpack.c.bf16 %v4336, %v4333
      %v4442 = vpack.c.bf16 %v4344, %v4341
      %v4443 = vpack.c.bf16 %v4352, %v4349
      %v4444 = vpack.c.bf16 %v4360, %v4357
      %v4445 = vpack.c.bf16 %v4368, %v4365
      %v4446 = vpack.c.bf16 %v4376, %v4373
      %v4447 = vpack.c.bf16 %v4384, %v4381
      %v4448 = vpack.c.bf16 %v4392, %v4389
      %v4449 = vpack.c.bf16 %v4400, %v4397
      %v4450 = vpack.c.bf16 %v4408, %v4405
      %v4451 = vpack.c.bf16 %v4416, %v4413
      %s4452 = scalar_lea.vmem %s6, 48
      %v4453 = vld [vmem:[%s4452] sm:$0xf]
      %v4454 = vld [vmem:[%s4452 + $0x4] sm:$0xf]
      %v4455 = vld [vmem:[%s4452 + $0x8] sm:$0xf]
      %v4456 = vld [vmem:[%s4452 + $0xc] sm:$0xf]
      %v4457 = vpack.c.bf16 %v3943, %v3940
      %v4458 = vpack.c.bf16 %v3951, %v3948
      %v4459 = vpack.c.bf16 %v3959, %v3956
      %v4460 = vpack.c.bf16 %v3967, %v3964
      %v4461 = vpack.c.bf16 %v3975, %v3972
      %v4462 = vpack.c.bf16 %v3983, %v3980
      %v4463 = vpack.c.bf16 %v3991, %v3988
      %v4464 = vpack.c.bf16 %v3999, %v3996
      %v4465 = vpack.c.bf16 %v4007, %v4004
      %v4466 = vpack.c.bf16 %v4015, %v4012
      %v4467 = vpack.c.bf16 %v4023, %v4020
      %v4468 = vpack.c.bf16 %v4031, %v4028
      %v4469 = vpack.c.bf16 %v4039, %v4036
      %v4470 = vpack.c.bf16 %v4047, %v4044
      %v4471 = vpack.c.bf16 %v4055, %v4052
      %v4472 = vpack.c.bf16 %v4063, %v4060
      %v4473 = vpack.c.bf16 %v4071, %v4068
      %v4474 = vpack.c.bf16 %v4079, %v4076
      %v4475 = vpack.c.bf16 %v4087, %v4084
      %v4476 = vpack.c.bf16 %v4095, %v4092
      %v4477 = vpack.c.bf16 %v4103, %v4100
      %v4478 = vpack.c.bf16 %v4111, %v4108
      %v4479 = vpack.c.bf16 %v4119, %v4116
      %v4480 = vpack.c.bf16 %v4127, %v4124
      %v4481 = vpack.c.bf16 %v4135, %v4132
      %v4482 = vpack.c.bf16 %v4143, %v4140
      %v4483 = vpack.c.bf16 %v4151, %v4148
      %v4484 = vpack.c.bf16 %v4159, %v4156
      %v4489 = vunpack.c.l.b16 %v4453
      %v4490 = vunpack.c.l.b16 %v4454
      %v4491 = vunpack.c.l.b16 %v4455
      %v4492 = vunpack.c.l.b16 %v4456
      %v4493 = vpack.c.b16 %v4490, %v4489
      %v4494 = vpack.c.b16 %v4492, %v4491
      %v4498 = vsel %vm604, %v4457, 0
      %v4501 = vsel %vm604, %v4458, 0
      %v4504 = vsel %vm604, %v4459, 0
      %v4507 = vsel %vm604, %v4460, 0
      %v4510 = vsel %vm604, %v4461, 0
      %v4513 = vsel %vm604, %v4462, 0
      %v4516 = vsel %vm604, %v4463, 0
      %v4519 = vsel %vm604, %v4464, 0
      %v4522 = vsel %vm604, %v4465, 0
      %v4525 = vsel %vm604, %v4466, 0
      %v4528 = vsel %vm604, %v4467, 0
      %v4531 = vsel %vm604, %v4468, 0
      %v4534 = vsel %vm604, %v4469, 0
      %v4537 = vsel %vm604, %v4470, 0
      %v4540 = vsel %vm604, %v4471, 0
      %v4543 = vsel %vm604, %v4472, 0
      %v4546 = vsel %vm604, %v4473, 0
      %v4549 = vsel %vm604, %v4474, 0
      %v4552 = vsel %vm604, %v4475, 0
      %v4555 = vsel %vm604, %v4476, 0
      %v4558 = vsel %vm604, %v4477, 0
      %v4561 = vsel %vm604, %v4478, 0
      %v4564 = vsel %vm604, %v4479, 0
      %v4567 = vsel %vm604, %v4480, 0
      %v4570 = vsel %vm604, %v4481, 0
      %v4573 = vsel %vm604, %v4482, 0
      %v4576 = vsel %vm604, %v4483, 0
      %v4579 = vsel %vm604, %v4484, 0
      %4581 = vmatprep.subr.bf16.mxu0 0
      %4582 = vmatpush1.bf16.msra.mxu0 %v4493
      %4583 = vmatprep.subr.bf16.mxu0 0
      %4584 = vmatpush1.bf16.msra.mxu0 %v4494
      %4585 = vmatprep.subr.bf16.mxu0 0
      %4586 = vmatpush1.bf16.msra.mxu0 0
      %4587 = vmatprep.subr.bf16.mxu0 0
      %4588 = vmatpush1.bf16.msra.mxu0 0
      %4589 = vmatprep.subr.bf16.mxu0 0
      %4590 = vmatpush1.bf16.msra.mxu0 0
      %4591 = vmatprep.subr.bf16.mxu0 0
      %4592 = vmatpush1.bf16.msra.mxu0 0
      %4593 = vmatprep.subr.bf16.mxu0 0
      %4594 = vmatpush1.bf16.msra.mxu0 0
      %4595 = vmatprep.subr.bf16.mxu0 0
      %4596 = vmatpush1.bf16.msra.mxu0 0
      %4597 = vmatprep.subr.bf16.mxu0 0
      %4598 = vmatpush1.bf16.msra.mxu0 0
      %4599 = vmatprep.subr.bf16.mxu0 0
      %4600 = vmatpush1.bf16.msra.mxu0 0
      %4601 = vmatprep.subr.bf16.mxu0 0
      %4602 = vmatpush1.bf16.msra.mxu0 0
      %4603 = vmatprep.subr.bf16.mxu0 0
      %4604 = vmatpush1.bf16.msra.mxu0 0
      %4605 = vmatprep.subr.bf16.mxu0 0
      %4606 = vmatpush1.bf16.msra.mxu0 0
      %4607 = vmatprep.subr.bf16.mxu0 0
      %4608 = vmatpush1.bf16.msra.mxu0 0
      %4609 = vmatprep.subr.bf16.mxu0 0
      %4610 = vmatpush1.bf16.msra.mxu0 0
      %4611 = vmatprep.subr.bf16.mxu0 0
      %4612 = vmatpush1.bf16.msra.mxu0 0
      %4613 = vmatprep.mubr.bf16.mxu0 0
      %4614 = vmatmul.mubr.bf16.gmra.mrb[0].mxu0 %v4498
      %v4615 = vpop.f32.mrb[0].mxu0
      %v4616 = vadd.f32 0.0, %v4615
      %v4617 = vpop.f32.mrb[0].mxu0
      %v4618 = vpop.f32.mrb[0].mxu0
      %v4619 = vadd.f32 0.0, %v4618
      %v4620 = vpop.f32.mrb[0].mxu0
      %4621 = vmatprep.mubr.bf16.mxu0 0
      %4622 = vmatmul.mubr.bf16.gmra.mrb[0].mxu0 %v4501
      %v4623 = vpop.f32.mrb[0].mxu0
      %v4624 = vadd.f32 0.0, %v4623
      %v4625 = vpop.f32.mrb[0].mxu0
      %v4626 = vpop.f32.mrb[0].mxu0
      %v4627 = vadd.f32 0.0, %v4626
      %v4628 = vpop.f32.mrb[0].mxu0
      %4629 = vmatprep.mubr.bf16.mxu0 0
      %4630 = vmatmul.mubr.bf16.gmra.mrb[0].mxu0 %v4504
      %v4631 = vpop.f32.mrb[0].mxu0
      %v4632 = vadd.f32 0.0, %v4631
      %v4633 = vpop.f32.mrb[0].mxu0
      %v4634 = vpop.f32.mrb[0].mxu0
      %v4635 = vadd.f32 0.0, %v4634
      %v4636 = vpop.f32.mrb[0].mxu0
      %4637 = vmatprep.mubr.bf16.mxu0 0
      %4638 = vmatmul.mubr.bf16.gmra.mrb[0].mxu0 %v4507
      %v4639 = vpop.f32.mrb[0].mxu0
      %v4640 = vadd.f32 0.0, %v4639
      %v4641 = vpop.f32.mrb[0].mxu0
      %v4642 = vpop.f32.mrb[0].mxu0
      %v4643 = vadd.f32 0.0, %v4642
      %v4644 = vpop.f32.mrb[0].mxu0
      %4645 = vmatprep.mubr.bf16.mxu0 0
      %4646 = vmatmul.mubr.bf16.gmra.mrb[0].mxu0 %v4510
      %v4647 = vpop.f32.mrb[0].mxu0
      %v4648 = vadd.f32 0.0, %v4647
      %v4649 = vpop.f32.mrb[0].mxu0
      %v4650 = vpop.f32.mrb[0].mxu0
      %v4651 = vadd.f32 0.0, %v4650
      %v4652 = vpop.f32.mrb[0].mxu0
      %4653 = vmatprep.mubr.bf16.mxu0 0
      %4654 = vmatmul.mubr.bf16.gmra.mrb[0].mxu0 %v4513
      %v4655 = vpop.f32.mrb[0].mxu0
      %v4656 = vadd.f32 0.0, %v4655
      %v4657 = vpop.f32.mrb[0].mxu0
      %v4658 = vpop.f32.mrb[0].mxu0
      %v4659 = vadd.f32 0.0, %v4658
      %v4660 = vpop.f32.mrb[0].mxu0
      %4661 = vmatprep.mubr.bf16.mxu0 0
      %4662 = vmatmul.mubr.bf16.gmra.mrb[0].mxu0 %v4516
      %v4663 = vpop.f32.mrb[0].mxu0
      %v4664 = vadd.f32 0.0, %v4663
      %v4665 = vpop.f32.mrb[0].mxu0
      %v4666 = vpop.f32.mrb[0].mxu0
      %v4667 = vadd.f32 0.0, %v4666
      %v4668 = vpop.f32.mrb[0].mxu0
      %4669 = vmatprep.mubr.bf16.mxu0 0
      %4670 = vmatmul.mubr.bf16.gmra.mrb[0].mxu0 %v4519
      %v4671 = vpop.f32.mrb[0].mxu0
      %v4672 = vadd.f32 0.0, %v4671
      %v4673 = vpop.f32.mrb[0].mxu0
      %v4674 = vpop.f32.mrb[0].mxu0
      %v4675 = vadd.f32 0.0, %v4674
      %v4676 = vpop.f32.mrb[0].mxu0
      %4677 = vmatprep.mubr.bf16.mxu0 0
      %4678 = vmatmul.mubr.bf16.gmra.mrb[0].mxu0 %v4522
      %v4679 = vpop.f32.mrb[0].mxu0
      %v4680 = vadd.f32 0.0, %v4679
      %v4681 = vpop.f32.mrb[0].mxu0
      %v4682 = vpop.f32.mrb[0].mxu0
      %v4683 = vadd.f32 0.0, %v4682
      %v4684 = vpop.f32.mrb[0].mxu0
      %4685 = vmatprep.mubr.bf16.mxu0 0
      %4686 = vmatmul.mubr.bf16.gmra.mrb[0].mxu0 %v4525
      %v4687 = vpop.f32.mrb[0].mxu0
      %v4688 = vadd.f32 0.0, %v4687
      %v4689 = vpop.f32.mrb[0].mxu0
      %v4690 = vpop.f32.mrb[0].mxu0
      %v4691 = vadd.f32 0.0, %v4690
      %v4692 = vpop.f32.mrb[0].mxu0
      %4693 = vmatprep.mubr.bf16.mxu0 0
      %4694 = vmatmul.mubr.bf16.gmra.mrb[0].mxu0 %v4528
      %v4695 = vpop.f32.mrb[0].mxu0
      %v4696 = vadd.f32 0.0, %v4695
      %v4697 = vpop.f32.mrb[0].mxu0
      %v4698 = vpop.f32.mrb[0].mxu0
      %v4699 = vadd.f32 0.0, %v4698
      %v4700 = vpop.f32.mrb[0].mxu0
      %4701 = vmatprep.mubr.bf16.mxu0 0
      %4702 = vmatmul.mubr.bf16.gmra.mrb[0].mxu0 %v4531
      %v4703 = vpop.f32.mrb[0].mxu0
      %v4704 = vadd.f32 0.0, %v4703
      %v4705 = vpop.f32.mrb[0].mxu0
      %v4706 = vpop.f32.mrb[0].mxu0
      %v4707 = vadd.f32 0.0, %v4706
      %v4708 = vpop.f32.mrb[0].mxu0
      %4709 = vmatprep.mubr.bf16.mxu0 0
      %4710 = vmatmul.mubr.bf16.gmra.mrb[0].mxu0 %v4534
      %v4711 = vpop.f32.mrb[0].mxu0
      %v4712 = vadd.f32 0.0, %v4711
      %v4713 = vpop.f32.mrb[0].mxu0
      %v4714 = vpop.f32.mrb[0].mxu0
      %v4715 = vadd.f32 0.0, %v4714
      %v4716 = vpop.f32.mrb[0].mxu0
      %4717 = vmatprep.mubr.bf16.mxu0 0
      %4718 = vmatmul.mubr.bf16.gmra.mrb[0].mxu0 %v4537
      %v4719 = vpop.f32.mrb[0].mxu0
      %v4720 = vadd.f32 0.0, %v4719
      %v4721 = vpop.f32.mrb[0].mxu0
      %v4722 = vpop.f32.mrb[0].mxu0
      %v4723 = vadd.f32 0.0, %v4722
      %v4724 = vpop.f32.mrb[0].mxu0
      %4725 = vmatprep.mubr.bf16.mxu0 0
      %4726 = vmatmul.mubr.bf16.gmra.mrb[0].mxu0 %v4540
      %v4727 = vpop.f32.mrb[0].mxu0
      %v4728 = vadd.f32 0.0, %v4727
      %v4729 = vpop.f32.mrb[0].mxu0
      %v4730 = vpop.f32.mrb[0].mxu0
      %v4731 = vadd.f32 0.0, %v4730
      %v4732 = vpop.f32.mrb[0].mxu0
      %4733 = vmatprep.mubr.bf16.mxu0 0
      %4734 = vmatmul.mubr.bf16.gmra.mrb[0].mxu0 %v4543
      %v4735 = vpop.f32.mrb[0].mxu0
      %v4736 = vadd.f32 0.0, %v4735
      %v4737 = vpop.f32.mrb[0].mxu0
      %v4738 = vpop.f32.mrb[0].mxu0
      %v4739 = vadd.f32 0.0, %v4738
      %v4740 = vpop.f32.mrb[0].mxu0
      %4741 = vmatprep.mubr.bf16.mxu0 0
      %4742 = vmatmul.mubr.bf16.gmra.mrb[0].mxu0 %v4546
      %v4743 = vpop.f32.mrb[0].mxu0
      %v4744 = vadd.f32 0.0, %v4743
      %v4745 = vpop.f32.mrb[0].mxu0
      %v4746 = vpop.f32.mrb[0].mxu0
      %v4747 = vadd.f32 0.0, %v4746
      %v4748 = vpop.f32.mrb[0].mxu0
      %4749 = vmatprep.mubr.bf16.mxu0 0
      %4750 = vmatmul.mubr.bf16.gmra.mrb[0].mxu0 %v4549
      %v4751 = vpop.f32.mrb[0].mxu0
      %v4752 = vadd.f32 0.0, %v4751
      %v4753 = vpop.f32.mrb[0].mxu0
      %v4754 = vpop.f32.mrb[0].mxu0
      %v4755 = vadd.f32 0.0, %v4754
      %v4756 = vpop.f32.mrb[0].mxu0
      %4757 = vmatprep.mubr.bf16.mxu0 0
      %4758 = vmatmul.mubr.bf16.gmra.mrb[0].mxu0 %v4552
      %v4759 = vpop.f32.mrb[0].mxu0
      %v4760 = vadd.f32 0.0, %v4759
      %v4761 = vpop.f32.mrb[0].mxu0
      %v4762 = vpop.f32.mrb[0].mxu0
      %v4763 = vadd.f32 0.0, %v4762
      %v4764 = vpop.f32.mrb[0].mxu0
      %4765 = vmatprep.mubr.bf16.mxu0 0
      %4766 = vmatmul.mubr.bf16.gmra.mrb[0].mxu0 %v4555
      %v4767 = vpop.f32.mrb[0].mxu0
      %v4768 = vadd.f32 0.0, %v4767
      %v4769 = vpop.f32.mrb[0].mxu0
      %v4770 = vpop.f32.mrb[0].mxu0
      %v4771 = vadd.f32 0.0, %v4770
      %v4772 = vpop.f32.mrb[0].mxu0
      %4773 = vmatprep.mubr.bf16.mxu0 0
      %4774 = vmatmul.mubr.bf16.gmra.mrb[0].mxu0 %v4558
      %v4775 = vpop.f32.mrb[0].mxu0
      %v4776 = vadd.f32 0.0, %v4775
      %v4777 = vpop.f32.mrb[0].mxu0
      %v4778 = vpop.f32.mrb[0].mxu0
      %v4779 = vadd.f32 0.0, %v4778
      %v4780 = vpop.f32.mrb[0].mxu0
      %4781 = vmatprep.mubr.bf16.mxu0 0
      %4782 = vmatmul.mubr.bf16.gmra.mrb[0].mxu0 %v4561
      %v4783 = vpop.f32.mrb[0].mxu0
      %v4784 = vadd.f32 0.0, %v4783
      %v4785 = vpop.f32.mrb[0].mxu0
      %v4786 = vpop.f32.mrb[0].mxu0
      %v4787 = vadd.f32 0.0, %v4786
      %v4788 = vpop.f32.mrb[0].mxu0
      %4789 = vmatprep.mubr.bf16.mxu0 0
      %4790 = vmatmul.mubr.bf16.gmra.mrb[0].mxu0 %v4564
      %v4791 = vpop.f32.mrb[0].mxu0
      %v4792 = vadd.f32 0.0, %v4791
      %v4793 = vpop.f32.mrb[0].mxu0
      %v4794 = vpop.f32.mrb[0].mxu0
      %v4795 = vadd.f32 0.0, %v4794
      %v4796 = vpop.f32.mrb[0].mxu0
      %4797 = vmatprep.mubr.bf16.mxu0 0
      %4798 = vmatmul.mubr.bf16.gmra.mrb[0].mxu0 %v4567
      %v4799 = vpop.f32.mrb[0].mxu0
      %v4800 = vadd.f32 0.0, %v4799
      %v4801 = vpop.f32.mrb[0].mxu0
      %v4802 = vpop.f32.mrb[0].mxu0
      %v4803 = vadd.f32 0.0, %v4802
      %v4804 = vpop.f32.mrb[0].mxu0
      %4805 = vmatprep.mubr.bf16.mxu0 0
      %4806 = vmatmul.mubr.bf16.gmra.mrb[0].mxu0 %v4570
      %v4807 = vpop.f32.mrb[0].mxu0
      %v4808 = vadd.f32 0.0, %v4807
      %v4809 = vpop.f32.mrb[0].mxu0
      %v4810 = vpop.f32.mrb[0].mxu0
      %v4811 = vadd.f32 0.0, %v4810
      %v4812 = vpop.f32.mrb[0].mxu0
      %4813 = vmatprep.mubr.bf16.mxu0 0
      %4814 = vmatmul.mubr.bf16.gmra.mrb[0].mxu0 %v4573
      %v4815 = vpop.f32.mrb[0].mxu0
      %v4816 = vadd.f32 0.0, %v4815
      %v4817 = vpop.f32.mrb[0].mxu0
      %v4818 = vpop.f32.mrb[0].mxu0
      %v4819 = vadd.f32 0.0, %v4818
      %v4820 = vpop.f32.mrb[0].mxu0
      %4821 = vmatprep.mubr.bf16.mxu0 0
      %4822 = vmatmul.mubr.bf16.gmra.mrb[0].mxu0 %v4576
      %v4823 = vpop.f32.mrb[0].mxu0
      %v4824 = vadd.f32 0.0, %v4823
      %v4825 = vpop.f32.mrb[0].mxu0
      %v4826 = vpop.f32.mrb[0].mxu0
      %v4827 = vadd.f32 0.0, %v4826
      %v4828 = vpop.f32.mrb[0].mxu0
      %4829 = vmatprep.mubr.bf16.mxu0 0
      %4830 = vmatmul.mubr.bf16.gmra.mrb[0].mxu0 %v4579
      %v4831 = vpop.f32.mrb[0].mxu0
      %v4832 = vadd.f32 0.0, %v4831
      %v4833 = vpop.f32.mrb[0].mxu0
      %v4834 = vpop.f32.mrb[0].mxu0
      %v4835 = vadd.f32 0.0, %v4834
      %v4836 = vpop.f32.mrb[0].mxu0
      %4837 = vdwg.mxu0
      %v4842 = vunpack.c.l.b16 %v4420
      %v4843 = vunpack.c.l.b16 %v4421
      %v4844 = vunpack.c.l.b16 %v4422
      %v4845 = vunpack.c.l.b16 %v4423
      %v4846 = vpack.c.b16 %v4843, %v4842
      %v4847 = vpack.c.b16 %v4845, %v4844
      %v4851 = vsel %vm604, %v4424, 0
      %v4854 = vsel %vm604, %v4425, 0
      %v4857 = vsel %vm604, %v4426, 0
      %v4860 = vsel %vm604, %v4427, 0
      %v4863 = vsel %vm604, %v4428, 0
      %v4866 = vsel %vm604, %v4429, 0
      %v4869 = vsel %vm604, %v4430, 0
      %v4872 = vsel %vm604, %v4431, 0
      %v4875 = vsel %vm604, %v4432, 0
      %v4878 = vsel %vm604, %v4433, 0
      %v4881 = vsel %vm604, %v4434, 0
      %v4884 = vsel %vm604, %v4435, 0
      %v4887 = vsel %vm604, %v4436, 0
      %v4890 = vsel %vm604, %v4437, 0
      %v4893 = vsel %vm604, %v4438, 0
      %v4896 = vsel %vm604, %v4439, 0
      %v4899 = vsel %vm604, %v4440, 0
      %v4902 = vsel %vm604, %v4441, 0
      %v4905 = vsel %vm604, %v4442, 0
      %v4908 = vsel %vm604, %v4443, 0
      %v4911 = vsel %vm604, %v4444, 0
      %v4914 = vsel %vm604, %v4445, 0
      %v4917 = vsel %vm604, %v4446, 0
      %v4920 = vsel %vm604, %v4447, 0
      %v4923 = vsel %vm604, %v4448, 0
      %v4926 = vsel %vm604, %v4449, 0
      %v4929 = vsel %vm604, %v4450, 0
      %v4932 = vsel %vm604, %v4451, 0
      %4934 = vmatprep.subr.bf16.mxu0 0
      %4935 = vmatpush1.bf16.msra.mxu0 %v4846
      %4936 = vmatprep.subr.bf16.mxu0 0
      %4937 = vmatpush1.bf16.msra.mxu0 %v4847
      %4938 = vmatprep.subr.bf16.mxu0 0
      %4939 = vmatpush1.bf16.msra.mxu0 0
      %4940 = vmatprep.subr.bf16.mxu0 0
      %4941 = vmatpush1.bf16.msra.mxu0 0
      %4942 = vmatprep.subr.bf16.mxu0 0
      %4943 = vmatpush1.bf16.msra.mxu0 0
      %4944 = vmatprep.subr.bf16.mxu0 0
      %4945 = vmatpush1.bf16.msra.mxu0 0
      %4946 = vmatprep.subr.bf16.mxu0 0
      %4947 = vmatpush1.bf16.msra.mxu0 0
      %4948 = vmatprep.subr.bf16.mxu0 0
      %4949 = vmatpush1.bf16.msra.mxu0 0
      %4950 = vmatprep.subr.bf16.mxu0 0
      %4951 = vmatpush1.bf16.msra.mxu0 0
      %4952 = vmatprep.subr.bf16.mxu0 0
      %4953 = vmatpush1.bf16.msra.mxu0 0
      %4954 = vmatprep.subr.bf16.mxu0 0
      %4955 = vmatpush1.bf16.msra.mxu0 0
      %4956 = vmatprep.subr.bf16.mxu0 0
      %4957 = vmatpush1.bf16.msra.mxu0 0
      %4958 = vmatprep.subr.bf16.mxu0 0
      %4959 = vmatpush1.bf16.msra.mxu0 0
      %4960 = vmatprep.subr.bf16.mxu0 0
      %4961 = vmatpush1.bf16.msra.mxu0 0
      %4962 = vmatprep.subr.bf16.mxu0 0
      %4963 = vmatpush1.bf16.msra.mxu0 0
      %4964 = vmatprep.subr.bf16.mxu0 0
      %4965 = vmatpush1.bf16.msra.mxu0 0
      %4966 = vmatprep.mubr.bf16.mxu0 0
      %4967 = vmatmul.mubr.bf16.gmra.mrb[0].mxu0 %v4851
      %v4968 = vpop.f32.mrb[0].mxu0
      %v4969 = vadd.f32 %v4616, %v4968
      %v4970 = vpop.f32.mrb[0].mxu0
      %v4971 = vpop.f32.mrb[0].mxu0
      %v4972 = vadd.f32 %v4619, %v4971
      %v4973 = vpop.f32.mrb[0].mxu0
      %4974 = vmatprep.mubr.bf16.mxu0 0
      %4975 = vmatmul.mubr.bf16.gmra.mrb[0].mxu0 %v4854
      %v4976 = vpop.f32.mrb[0].mxu0
      %v4977 = vadd.f32 %v4624, %v4976
      %v4978 = vpop.f32.mrb[0].mxu0
      %v4979 = vpop.f32.mrb[0].mxu0
      %v4980 = vadd.f32 %v4627, %v4979
      %v4981 = vpop.f32.mrb[0].mxu0
      %4982 = vmatprep.mubr.bf16.mxu0 0
      %4983 = vmatmul.mubr.bf16.gmra.mrb[0].mxu0 %v4857
      %v4984 = vpop.f32.mrb[0].mxu0
      %v4985 = vadd.f32 %v4632, %v4984
      %v4986 = vpop.f32.mrb[0].mxu0
      %v4987 = vpop.f32.mrb[0].mxu0
      %v4988 = vadd.f32 %v4635, %v4987
      %v4989 = vpop.f32.mrb[0].mxu0
      %4990 = vmatprep.mubr.bf16.mxu0 0
      %4991 = vmatmul.mubr.bf16.gmra.mrb[0].mxu0 %v4860
      %v4992 = vpop.f32.mrb[0].mxu0
      %v4993 = vadd.f32 %v4640, %v4992
      %v4994 = vpop.f32.mrb[0].mxu0
      %v4995 = vpop.f32.mrb[0].mxu0
      %v4996 = vadd.f32 %v4643, %v4995
      %v4997 = vpop.f32.mrb[0].mxu0
      %4998 = vmatprep.mubr.bf16.mxu0 0
      %4999 = vmatmul.mubr.bf16.gmra.mrb[0].mxu0 %v4863
      %v5000 = vpop.f32.mrb[0].mxu0
      %v5001 = vadd.f32 %v4648, %v5000
      %v5002 = vpop.f32.mrb[0].mxu0
      %v5003 = vpop.f32.mrb[0].mxu0
      %v5004 = vadd.f32 %v4651, %v5003
      %v5005 = vpop.f32.mrb[0].mxu0
      %5006 = vmatprep.mubr.bf16.mxu0 0
      %5007 = vmatmul.mubr.bf16.gmra.mrb[0].mxu0 %v4866
      %v5008 = vpop.f32.mrb[0].mxu0
      %v5009 = vadd.f32 %v4656, %v5008
      %v5010 = vpop.f32.mrb[0].mxu0
      %v5011 = vpop.f32.mrb[0].mxu0
      %v5012 = vadd.f32 %v4659, %v5011
      %v5013 = vpop.f32.mrb[0].mxu0
      %5014 = vmatprep.mubr.bf16.mxu0 0
      %5015 = vmatmul.mubr.bf16.gmra.mrb[0].mxu0 %v4869
      %v5016 = vpop.f32.mrb[0].mxu0
      %v5017 = vadd.f32 %v4664, %v5016
      %v5018 = vpop.f32.mrb[0].mxu0
      %v5019 = vpop.f32.mrb[0].mxu0
      %v5020 = vadd.f32 %v4667, %v5019
      %v5021 = vpop.f32.mrb[0].mxu0
      %5022 = vmatprep.mubr.bf16.mxu0 0
      %5023 = vmatmul.mubr.bf16.gmra.mrb[0].mxu0 %v4872
      %v5024 = vpop.f32.mrb[0].mxu0
      %v5025 = vadd.f32 %v4672, %v5024
      %v5026 = vpop.f32.mrb[0].mxu0
      %v5027 = vpop.f32.mrb[0].mxu0
      %v5028 = vadd.f32 %v4675, %v5027
      %v5029 = vpop.f32.mrb[0].mxu0
      %5030 = vmatprep.mubr.bf16.mxu0 0
      %5031 = vmatmul.mubr.bf16.gmra.mrb[0].mxu0 %v4875
      %v5032 = vpop.f32.mrb[0].mxu0
      %v5033 = vadd.f32 %v4680, %v5032
      %v5034 = vpop.f32.mrb[0].mxu0
      %v5035 = vpop.f32.mrb[0].mxu0
      %v5036 = vadd.f32 %v4683, %v5035
      %v5037 = vpop.f32.mrb[0].mxu0
      %5038 = vmatprep.mubr.bf16.mxu0 0
      %5039 = vmatmul.mubr.bf16.gmra.mrb[0].mxu0 %v4878
      %v5040 = vpop.f32.mrb[0].mxu0
      %v5041 = vadd.f32 %v4688, %v5040
      %v5042 = vpop.f32.mrb[0].mxu0
      %v5043 = vpop.f32.mrb[0].mxu0
      %v5044 = vadd.f32 %v4691, %v5043
      %v5045 = vpop.f32.mrb[0].mxu0
      %5046 = vmatprep.mubr.bf16.mxu0 0
      %5047 = vmatmul.mubr.bf16.gmra.mrb[0].mxu0 %v4881
      %v5048 = vpop.f32.mrb[0].mxu0
      %v5049 = vadd.f32 %v4696, %v5048
      %v5050 = vpop.f32.mrb[0].mxu0
      %v5051 = vpop.f32.mrb[0].mxu0
      %v5052 = vadd.f32 %v4699, %v5051
      %v5053 = vpop.f32.mrb[0].mxu0
      %5054 = vmatprep.mubr.bf16.mxu0 0
      %5055 = vmatmul.mubr.bf16.gmra.mrb[0].mxu0 %v4884
      %v5056 = vpop.f32.mrb[0].mxu0
      %v5057 = vadd.f32 %v4704, %v5056
      %v5058 = vpop.f32.mrb[0].mxu0
      %v5059 = vpop.f32.mrb[0].mxu0
      %v5060 = vadd.f32 %v4707, %v5059
      %v5061 = vpop.f32.mrb[0].mxu0
      %5062 = vmatprep.mubr.bf16.mxu0 0
      %5063 = vmatmul.mubr.bf16.gmra.mrb[0].mxu0 %v4887
      %v5064 = vpop.f32.mrb[0].mxu0
      %v5065 = vadd.f32 %v4712, %v5064
      %v5066 = vpop.f32.mrb[0].mxu0
      %v5067 = vpop.f32.mrb[0].mxu0
      %v5068 = vadd.f32 %v4715, %v5067
      %v5069 = vpop.f32.mrb[0].mxu0
      %5070 = vmatprep.mubr.bf16.mxu0 0
      %5071 = vmatmul.mubr.bf16.gmra.mrb[0].mxu0 %v4890
      %v5072 = vpop.f32.mrb[0].mxu0
      %v5073 = vadd.f32 %v4720, %v5072
      %v5074 = vpop.f32.mrb[0].mxu0
      %v5075 = vpop.f32.mrb[0].mxu0
      %v5076 = vadd.f32 %v4723, %v5075
      %v5077 = vpop.f32.mrb[0].mxu0
      %5078 = vmatprep.mubr.bf16.mxu0 0
      %5079 = vmatmul.mubr.bf16.gmra.mrb[0].mxu0 %v4893
      %v5080 = vpop.f32.mrb[0].mxu0
      %v5081 = vadd.f32 %v4728, %v5080
      %v5082 = vpop.f32.mrb[0].mxu0
      %v5083 = vpop.f32.mrb[0].mxu0
      %v5084 = vadd.f32 %v4731, %v5083
      %v5085 = vpop.f32.mrb[0].mxu0
      %5086 = vmatprep.mubr.bf16.mxu0 0
      %5087 = vmatmul.mubr.bf16.gmra.mrb[0].mxu0 %v4896
      %v5088 = vpop.f32.mrb[0].mxu0
      %v5089 = vadd.f32 %v4736, %v5088
      %v5090 = vpop.f32.mrb[0].mxu0
      %v5091 = vpop.f32.mrb[0].mxu0
      %v5092 = vadd.f32 %v4739, %v5091
      %v5093 = vpop.f32.mrb[0].mxu0
      %5094 = vmatprep.mubr.bf16.mxu0 0
      %5095 = vmatmul.mubr.bf16.gmra.mrb[0].mxu0 %v4899
      %v5096 = vpop.f32.mrb[0].mxu0
      %v5097 = vadd.f32 %v4744, %v5096
      %v5098 = vpop.f32.mrb[0].mxu0
      %v5099 = vpop.f32.mrb[0].mxu0
      %v5100 = vadd.f32 %v4747, %v5099
      %v5101 = vpop.f32.mrb[0].mxu0
      %5102 = vmatprep.mubr.bf16.mxu0 0
      %5103 = vmatmul.mubr.bf16.gmra.mrb[0].mxu0 %v4902
      %v5104 = vpop.f32.mrb[0].mxu0
      %v5105 = vadd.f32 %v4752, %v5104
      %v5106 = vpop.f32.mrb[0].mxu0
      %v5107 = vpop.f32.mrb[0].mxu0
      %v5108 = vadd.f32 %v4755, %v5107
      %v5109 = vpop.f32.mrb[0].mxu0
      %5110 = vmatprep.mubr.bf16.mxu0 0
      %5111 = vmatmul.mubr.bf16.gmra.mrb[0].mxu0 %v4905
      %v5112 = vpop.f32.mrb[0].mxu0
      %v5113 = vadd.f32 %v4760, %v5112
      %v5114 = vpop.f32.mrb[0].mxu0
      %v5115 = vpop.f32.mrb[0].mxu0
      %v5116 = vadd.f32 %v4763, %v5115
      %v5117 = vpop.f32.mrb[0].mxu0
      %5118 = vmatprep.mubr.bf16.mxu0 0
      %5119 = vmatmul.mubr.bf16.gmra.mrb[0].mxu0 %v4908
      %v5120 = vpop.f32.mrb[0].mxu0
      %v5121 = vadd.f32 %v4768, %v5120
      %v5122 = vpop.f32.mrb[0].mxu0
      %v5123 = vpop.f32.mrb[0].mxu0
      %v5124 = vadd.f32 %v4771, %v5123
      %v5125 = vpop.f32.mrb[0].mxu0
      %5126 = vmatprep.mubr.bf16.mxu0 0
      %5127 = vmatmul.mubr.bf16.gmra.mrb[0].mxu0 %v4911
      %v5128 = vpop.f32.mrb[0].mxu0
      %v5129 = vadd.f32 %v4776, %v5128
      %v5130 = vpop.f32.mrb[0].mxu0
      %v5131 = vpop.f32.mrb[0].mxu0
      %v5132 = vadd.f32 %v4779, %v5131
      %v5133 = vpop.f32.mrb[0].mxu0
      %5134 = vmatprep.mubr.bf16.mxu0 0
      %5135 = vmatmul.mubr.bf16.gmra.mrb[0].mxu0 %v4914
      %v5136 = vpop.f32.mrb[0].mxu0
      %v5137 = vadd.f32 %v4784, %v5136
      %v5138 = vpop.f32.mrb[0].mxu0
      %v5139 = vpop.f32.mrb[0].mxu0
      %v5140 = vadd.f32 %v4787, %v5139
      %v5141 = vpop.f32.mrb[0].mxu0
      %5142 = vmatprep.mubr.bf16.mxu0 0
      %5143 = vmatmul.mubr.bf16.gmra.mrb[0].mxu0 %v4917
      %v5144 = vpop.f32.mrb[0].mxu0
      %v5145 = vadd.f32 %v4792, %v5144
      %v5146 = vpop.f32.mrb[0].mxu0
      %v5147 = vpop.f32.mrb[0].mxu0
      %v5148 = vadd.f32 %v4795, %v5147
      %v5149 = vpop.f32.mrb[0].mxu0
      %5150 = vmatprep.mubr.bf16.mxu0 0
      %5151 = vmatmul.mubr.bf16.gmra.mrb[0].mxu0 %v4920
      %v5152 = vpop.f32.mrb[0].mxu0
      %v5153 = vadd.f32 %v4800, %v5152
      %v5154 = vpop.f32.mrb[0].mxu0
      %v5155 = vpop.f32.mrb[0].mxu0
      %v5156 = vadd.f32 %v4803, %v5155
      %v5157 = vpop.f32.mrb[0].mxu0
      %5158 = vmatprep.mubr.bf16.mxu0 0
      %5159 = vmatmul.mubr.bf16.gmra.mrb[0].mxu0 %v4923
      %v5160 = vpop.f32.mrb[0].mxu0
      %v5161 = vadd.f32 %v4808, %v5160
      %v5162 = vpop.f32.mrb[0].mxu0
      %v5163 = vpop.f32.mrb[0].mxu0
      %v5164 = vadd.f32 %v4811, %v5163
      %v5165 = vpop.f32.mrb[0].mxu0
      %5166 = vmatprep.mubr.bf16.mxu0 0
      %5167 = vmatmul.mubr.bf16.gmra.mrb[0].mxu0 %v4926
      %v5168 = vpop.f32.mrb[0].mxu0
      %v5169 = vadd.f32 %v4816, %v5168
      %v5170 = vpop.f32.mrb[0].mxu0
      %v5171 = vpop.f32.mrb[0].mxu0
      %v5172 = vadd.f32 %v4819, %v5171
      %v5173 = vpop.f32.mrb[0].mxu0
      %5174 = vmatprep.mubr.bf16.mxu0 0
      %5175 = vmatmul.mubr.bf16.gmra.mrb[0].mxu0 %v4929
      %v5176 = vpop.f32.mrb[0].mxu0
      %v5177 = vadd.f32 %v4824, %v5176
      %v5178 = vpop.f32.mrb[0].mxu0
      %v5179 = vpop.f32.mrb[0].mxu0
      %v5180 = vadd.f32 %v4827, %v5179
      %v5181 = vpop.f32.mrb[0].mxu0
      %5182 = vmatprep.mubr.bf16.mxu0 0
      %5183 = vmatmul.mubr.bf16.gmra.mrb[0].mxu0 %v4932
      %v5184 = vpop.f32.mrb[0].mxu0
      %v5185 = vadd.f32 %v4832, %v5184
      %v5186 = vpop.f32.mrb[0].mxu0
      %v5187 = vpop.f32.mrb[0].mxu0
      %v5188 = vadd.f32 %v4835, %v5187
      %v5189 = vpop.f32.mrb[0].mxu0
      %5190 = vdwg.mxu0
      %s5191 = scalar_lea.vmem %s7, 2
      %v5192 = vld [vmem:[%s5191] sm:$0x1]
      %v5194 = vlaneseq
      %v5195 = vshrl.u32 %v5194, 7
      %v5196 = vsub.s32 0, %v5195
      %v5197 = vrot.slane %v5192, %v5196
      %v5199 = vadd.f32 %v4969, %v5197
      %v5200 = vadd.f32 %v4972, %v5197
      %v5201 = vadd.f32 %v4977, %v5197
      %v5202 = vadd.f32 %v4980, %v5197
      %v5203 = vadd.f32 %v4985, %v5197
      %v5204 = vadd.f32 %v4988, %v5197
      %v5205 = vadd.f32 %v4993, %v5197
      %v5206 = vadd.f32 %v4996, %v5197
      %v5207 = vadd.f32 %v5001, %v5197
      %v5208 = vadd.f32 %v5004, %v5197
      %v5209 = vadd.f32 %v5009, %v5197
      %v5210 = vadd.f32 %v5012, %v5197
      %v5211 = vadd.f32 %v5017, %v5197
      %v5212 = vadd.f32 %v5020, %v5197
      %v5213 = vadd.f32 %v5025, %v5197
      %v5214 = vadd.f32 %v5028, %v5197
      %v5215 = vadd.f32 %v5033, %v5197
      %v5216 = vadd.f32 %v5036, %v5197
      %v5217 = vadd.f32 %v5041, %v5197
      %v5218 = vadd.f32 %v5044, %v5197
      %v5219 = vadd.f32 %v5049, %v5197
      %v5220 = vadd.f32 %v5052, %v5197
      %v5221 = vadd.f32 %v5057, %v5197
      %v5222 = vadd.f32 %v5060, %v5197
      %v5223 = vadd.f32 %v5065, %v5197
      %v5224 = vadd.f32 %v5068, %v5197
      %v5225 = vadd.f32 %v5073, %v5197
      %v5226 = vadd.f32 %v5076, %v5197
      %v5227 = vadd.f32 %v5081, %v5197
      %v5228 = vadd.f32 %v5084, %v5197
      %v5229 = vadd.f32 %v5089, %v5197
      %v5230 = vadd.f32 %v5092, %v5197
      %v5231 = vadd.f32 %v5097, %v5197
      %v5232 = vadd.f32 %v5100, %v5197
      %v5233 = vadd.f32 %v5105, %v5197
      %v5234 = vadd.f32 %v5108, %v5197
      %v5235 = vadd.f32 %v5113, %v5197
      %v5236 = vadd.f32 %v5116, %v5197
      %v5237 = vadd.f32 %v5121, %v5197
      %v5238 = vadd.f32 %v5124, %v5197
      %v5239 = vadd.f32 %v5129, %v5197
      %v5240 = vadd.f32 %v5132, %v5197
      %v5241 = vadd.f32 %v5137, %v5197
      %v5242 = vadd.f32 %v5140, %v5197
      %v5243 = vadd.f32 %v5145, %v5197
      %v5244 = vadd.f32 %v5148, %v5197
      %v5245 = vadd.f32 %v5153, %v5197
      %v5246 = vadd.f32 %v5156, %v5197
      %v5247 = vadd.f32 %v5161, %v5197
      %v5248 = vadd.f32 %v5164, %v5197
      %v5249 = vadd.f32 %v5169, %v5197
      %v5250 = vadd.f32 %v5172, %v5197
      %v5251 = vadd.f32 %v5177, %v5197
      %v5252 = vadd.f32 %v5180, %v5197
      %v5253 = vadd.f32 %v5185, %v5197
      %v5254 = vadd.f32 %v5188, %v5197
      %v5255 = vmax.f32 %v5199, 0.0
      %v5256 = vmax.f32 %v5200, 0.0
      %v5257 = vmax.f32 %v5201, 0.0
      %v5258 = vmax.f32 %v5202, 0.0
      %v5259 = vmax.f32 %v5203, 0.0
      %v5260 = vmax.f32 %v5204, 0.0
      %v5261 = vmax.f32 %v5205, 0.0
      %v5262 = vmax.f32 %v5206, 0.0
      %v5263 = vmax.f32 %v5207, 0.0
      %v5264 = vmax.f32 %v5208, 0.0
      %v5265 = vmax.f32 %v5209, 0.0
      %v5266 = vmax.f32 %v5210, 0.0
      %v5267 = vmax.f32 %v5211, 0.0
      %v5268 = vmax.f32 %v5212, 0.0
      %v5269 = vmax.f32 %v5213, 0.0
      %v5270 = vmax.f32 %v5214, 0.0
      %v5271 = vmax.f32 %v5215, 0.0
      %v5272 = vmax.f32 %v5216, 0.0
      %v5273 = vmax.f32 %v5217, 0.0
      %v5274 = vmax.f32 %v5218, 0.0
      %v5275 = vmax.f32 %v5219, 0.0
      %v5276 = vmax.f32 %v5220, 0.0
      %v5277 = vmax.f32 %v5221, 0.0
      %v5278 = vmax.f32 %v5222, 0.0
      %v5279 = vmax.f32 %v5223, 0.0
      %v5280 = vmax.f32 %v5224, 0.0
      %v5281 = vmax.f32 %v5225, 0.0
      %v5282 = vmax.f32 %v5226, 0.0
      %v5283 = vmax.f32 %v5227, 0.0
      %v5284 = vmax.f32 %v5228, 0.0
      %v5285 = vmax.f32 %v5229, 0.0
      %v5286 = vmax.f32 %v5230, 0.0
      %v5287 = vmax.f32 %v5231, 0.0
      %v5288 = vmax.f32 %v5232, 0.0
      %v5289 = vmax.f32 %v5233, 0.0
      %v5290 = vmax.f32 %v5234, 0.0
      %v5291 = vmax.f32 %v5235, 0.0
      %v5292 = vmax.f32 %v5236, 0.0
      %v5293 = vmax.f32 %v5237, 0.0
      %v5294 = vmax.f32 %v5238, 0.0
      %v5295 = vmax.f32 %v5239, 0.0
      %v5296 = vmax.f32 %v5240, 0.0
      %v5297 = vmax.f32 %v5241, 0.0
      %v5298 = vmax.f32 %v5242, 0.0
      %v5299 = vmax.f32 %v5243, 0.0
      %v5300 = vmax.f32 %v5244, 0.0
      %v5301 = vmax.f32 %v5245, 0.0
      %v5302 = vmax.f32 %v5246, 0.0
      %v5303 = vmax.f32 %v5247, 0.0
      %v5304 = vmax.f32 %v5248, 0.0
      %v5305 = vmax.f32 %v5249, 0.0
      %v5306 = vmax.f32 %v5250, 0.0
      %v5307 = vmax.f32 %v5251, 0.0
      %v5308 = vmax.f32 %v5252, 0.0
      %v5309 = vmax.f32 %v5253, 0.0
      %v5310 = vmax.f32 %v5254, 0.0
      %s5311 = scalar_lea.vmem %s8, 32
      %v5312 = vld [vmem:[%s5311] sm:$0xf]
      %v5313 = vld [vmem:[%s5311 + $0x4] sm:$0xf]
      %v5314 = vld [vmem:[%s5311 + $0x8] sm:$0xf]
      %v5315 = vld [vmem:[%s5311 + $0xc] sm:$0xf]
      %v5316 = vld [vmem:[%s5311 + $0x10] sm:$0xf]
      %v5317 = vld [vmem:[%s5311 + $0x14] sm:$0xf]
      %v5318 = vld [vmem:[%s5311 + $0x18] sm:$0xf]
      %v5319 = vld [vmem:[%s5311 + $0x1c] sm:$0xf]
      %v5320 = vpack.c.bf16 %v5256, %v5255
      %v5321 = vpack.c.bf16 %v5258, %v5257
      %v5322 = vpack.c.bf16 %v5260, %v5259
      %v5323 = vpack.c.bf16 %v5262, %v5261
      %v5324 = vpack.c.bf16 %v5264, %v5263
      %v5325 = vpack.c.bf16 %v5266, %v5265
      %v5326 = vpack.c.bf16 %v5268, %v5267
      %v5327 = vpack.c.bf16 %v5270, %v5269
      %v5328 = vpack.c.bf16 %v5272, %v5271
      %v5329 = vpack.c.bf16 %v5274, %v5273
      %v5330 = vpack.c.bf16 %v5276, %v5275
      %v5331 = vpack.c.bf16 %v5278, %v5277
      %v5332 = vpack.c.bf16 %v5280, %v5279
      %v5333 = vpack.c.bf16 %v5282, %v5281
      %v5334 = vpack.c.bf16 %v5284, %v5283
      %v5335 = vpack.c.bf16 %v5286, %v5285
      %v5336 = vpack.c.bf16 %v5288, %v5287
      %v5337 = vpack.c.bf16 %v5290, %v5289
      %v5338 = vpack.c.bf16 %v5292, %v5291
      %v5339 = vpack.c.bf16 %v5294, %v5293
      %v5340 = vpack.c.bf16 %v5296, %v5295
      %v5341 = vpack.c.bf16 %v5298, %v5297
      %v5342 = vpack.c.bf16 %v5300, %v5299
      %v5343 = vpack.c.bf16 %v5302, %v5301
      %v5344 = vpack.c.bf16 %v5304, %v5303
      %v5345 = vpack.c.bf16 %v5306, %v5305
      %v5346 = vpack.c.bf16 %v5308, %v5307
      %v5347 = vpack.c.bf16 %v5310, %v5309
      %s5348 = scalar_lea.vmem %s7, 3
      %v5349 = vld [vmem:[%s5348] sm:$0x1]
      %v5351 = vlaneseq
      %v5352 = vshrl.u32 %v5351, 7
      %v5353 = vsub.s32 0, %v5352
      %v5354 = vrot.slane %v5349, %v5353
      %v5364 = vunpack.c.l.b16 %v5312
      %v5365 = vunpack.c.l.b16 %v5313
      %v5366 = vunpack.c.l.b16 %v5314
      %v5367 = vunpack.c.l.b16 %v5315
      %v5368 = vunpack.c.l.b16 %v5316
      %v5369 = vunpack.c.l.b16 %v5317
      %v5370 = vunpack.c.l.b16 %v5318
      %v5371 = vunpack.c.l.b16 %v5319
      %v5372 = vpack.c.b16 %v5365, %v5364
      %v5373 = vpack.c.b16 %v5367, %v5366
      %v5374 = vpack.c.b16 %v5369, %v5368
      %v5375 = vpack.c.b16 %v5371, %v5370
      %v5381 = vsel %vm1071, %v5320, 0
      %v5384 = vsel %vm1071, %v5321, 0
      %v5387 = vsel %vm1071, %v5322, 0
      %v5390 = vsel %vm1071, %v5323, 0
      %v5393 = vsel %vm1071, %v5324, 0
      %v5396 = vsel %vm1071, %v5325, 0
      %v5399 = vsel %vm1071, %v5326, 0
      %v5402 = vsel %vm1071, %v5327, 0
      %v5405 = vsel %vm1071, %v5328, 0
      %v5408 = vsel %vm1071, %v5329, 0
      %v5411 = vsel %vm1071, %v5330, 0
      %v5414 = vsel %vm1071, %v5331, 0
      %v5417 = vsel %vm1071, %v5332, 0
      %v5420 = vsel %vm1071, %v5333, 0
      %v5423 = vsel %vm1071, %v5334, 0
      %v5426 = vsel %vm1071, %v5335, 0
      %v5429 = vsel %vm1071, %v5336, 0
      %v5432 = vsel %vm1071, %v5337, 0
      %v5435 = vsel %vm1071, %v5338, 0
      %v5438 = vsel %vm1071, %v5339, 0
      %v5441 = vsel %vm1071, %v5340, 0
      %v5444 = vsel %vm1071, %v5341, 0
      %v5447 = vsel %vm1071, %v5342, 0
      %v5450 = vsel %vm1071, %v5343, 0
      %v5453 = vsel %vm1071, %v5344, 0
      %v5456 = vsel %vm1071, %v5345, 0
      %v5459 = vsel %vm1071, %v5346, 0
      %v5462 = vsel %vm1071, %v5347, 0
      %5464 = vmatprep.subr.bf16.mxu0 0
      %5465 = vmatpush1.bf16.msra.mxu0 %v5372
      %5466 = vmatprep.subr.bf16.mxu0 0
      %5467 = vmatpush1.bf16.msra.mxu0 %v5373
      %5468 = vmatprep.subr.bf16.mxu0 0
      %5469 = vmatpush1.bf16.msra.mxu0 %v5374
      %5470 = vmatprep.subr.bf16.mxu0 0
      %5471 = vmatpush1.bf16.msra.mxu0 %v5375
      %5472 = vmatprep.subr.bf16.mxu0 0
      %5473 = vmatpush1.bf16.msra.mxu0 0
      %5474 = vmatprep.subr.bf16.mxu0 0
      %5475 = vmatpush1.bf16.msra.mxu0 0
      %5476 = vmatprep.subr.bf16.mxu0 0
      %5477 = vmatpush1.bf16.msra.mxu0 0
      %5478 = vmatprep.subr.bf16.mxu0 0
      %5479 = vmatpush1.bf16.msra.mxu0 0
      %5480 = vmatprep.subr.bf16.mxu0 0
      %5481 = vmatpush1.bf16.msra.mxu0 0
      %5482 = vmatprep.subr.bf16.mxu0 0
      %5483 = vmatpush1.bf16.msra.mxu0 0
      %5484 = vmatprep.subr.bf16.mxu0 0
      %5485 = vmatpush1.bf16.msra.mxu0 0
      %5486 = vmatprep.subr.bf16.mxu0 0
      %5487 = vmatpush1.bf16.msra.mxu0 0
      %5488 = vmatprep.subr.bf16.mxu0 0
      %5489 = vmatpush1.bf16.msra.mxu0 0
      %5490 = vmatprep.subr.bf16.mxu0 0
      %5491 = vmatpush1.bf16.msra.mxu0 0
      %5492 = vmatprep.subr.bf16.mxu0 0
      %5493 = vmatpush1.bf16.msra.mxu0 0
      %5494 = vmatprep.subr.bf16.mxu0 0
      %5495 = vmatpush1.bf16.msra.mxu0 0
      %5496 = vmatprep.mubr.bf16.mxu0 0
      %5497 = vmatmul.mubr.bf16.gmra.mrb[0].mxu0 %v5381
      %v5498 = vpop.f32.mrb[0].mxu0
      %v5499 = vadd.f32 %v5354, %v5498
      %v5500 = vpop.f32.mrb[0].mxu0
      %v5501 = vpop.f32.mrb[0].mxu0
      %v5502 = vadd.f32 %v5354, %v5501
      %v5503 = vpop.f32.mrb[0].mxu0
      %5504 = vmatprep.mubr.bf16.mxu0 0
      %5505 = vmatmul.mubr.bf16.gmra.mrb[0].mxu0 %v5384
      %v5506 = vpop.f32.mrb[0].mxu0
      %v5507 = vadd.f32 %v5354, %v5506
      %v5508 = vpop.f32.mrb[0].mxu0
      %v5509 = vpop.f32.mrb[0].mxu0
      %v5510 = vadd.f32 %v5354, %v5509
      %v5511 = vpop.f32.mrb[0].mxu0
      %5512 = vmatprep.mubr.bf16.mxu0 0
      %5513 = vmatmul.mubr.bf16.gmra.mrb[0].mxu0 %v5387
      %v5514 = vpop.f32.mrb[0].mxu0
      %v5515 = vadd.f32 %v5354, %v5514
      %v5516 = vpop.f32.mrb[0].mxu0
      %v5517 = vpop.f32.mrb[0].mxu0
      %v5518 = vadd.f32 %v5354, %v5517
      %v5519 = vpop.f32.mrb[0].mxu0
      %5520 = vmatprep.mubr.bf16.mxu0 0
      %5521 = vmatmul.mubr.bf16.gmra.mrb[0].mxu0 %v5390
      %v5522 = vpop.f32.mrb[0].mxu0
      %v5523 = vadd.f32 %v5354, %v5522
      %v5524 = vpop.f32.mrb[0].mxu0
      %v5525 = vpop.f32.mrb[0].mxu0
      %v5526 = vadd.f32 %v5354, %v5525
      %v5527 = vpop.f32.mrb[0].mxu0
      %5528 = vmatprep.mubr.bf16.mxu0 0
      %5529 = vmatmul.mubr.bf16.gmra.mrb[0].mxu0 %v5393
      %v5530 = vpop.f32.mrb[0].mxu0
      %v5531 = vadd.f32 %v5354, %v5530
      %v5532 = vpop.f32.mrb[0].mxu0
      %v5533 = vpop.f32.mrb[0].mxu0
      %v5534 = vadd.f32 %v5354, %v5533
      %v5535 = vpop.f32.mrb[0].mxu0
      %5536 = vmatprep.mubr.bf16.mxu0 0
      %5537 = vmatmul.mubr.bf16.gmra.mrb[0].mxu0 %v5396
      %v5538 = vpop.f32.mrb[0].mxu0
      %v5539 = vadd.f32 %v5354, %v5538
      %v5540 = vpop.f32.mrb[0].mxu0
      %v5541 = vpop.f32.mrb[0].mxu0
      %v5542 = vadd.f32 %v5354, %v5541
      %v5543 = vpop.f32.mrb[0].mxu0
      %5544 = vmatprep.mubr.bf16.mxu0 0
      %5545 = vmatmul.mubr.bf16.gmra.mrb[0].mxu0 %v5399
      %v5546 = vpop.f32.mrb[0].mxu0
      %v5547 = vadd.f32 %v5354, %v5546
      %v5548 = vpop.f32.mrb[0].mxu0
      %v5549 = vpop.f32.mrb[0].mxu0
      %v5550 = vadd.f32 %v5354, %v5549
      %v5551 = vpop.f32.mrb[0].mxu0
      %5552 = vmatprep.mubr.bf16.mxu0 0
      %5553 = vmatmul.mubr.bf16.gmra.mrb[0].mxu0 %v5402
      %v5554 = vpop.f32.mrb[0].mxu0
      %v5555 = vadd.f32 %v5354, %v5554
      %v5556 = vpop.f32.mrb[0].mxu0
      %v5557 = vpop.f32.mrb[0].mxu0
      %v5558 = vadd.f32 %v5354, %v5557
      %v5559 = vpop.f32.mrb[0].mxu0
      %5560 = vmatprep.mubr.bf16.mxu0 0
      %5561 = vmatmul.mubr.bf16.gmra.mrb[0].mxu0 %v5405
      %v5562 = vpop.f32.mrb[0].mxu0
      %v5563 = vadd.f32 %v5354, %v5562
      %v5564 = vpop.f32.mrb[0].mxu0
      %v5565 = vpop.f32.mrb[0].mxu0
      %v5566 = vadd.f32 %v5354, %v5565
      %v5567 = vpop.f32.mrb[0].mxu0
      %5568 = vmatprep.mubr.bf16.mxu0 0
      %5569 = vmatmul.mubr.bf16.gmra.mrb[0].mxu0 %v5408
      %v5570 = vpop.f32.mrb[0].mxu0
      %v5571 = vadd.f32 %v5354, %v5570
      %v5572 = vpop.f32.mrb[0].mxu0
      %v5573 = vpop.f32.mrb[0].mxu0
      %v5574 = vadd.f32 %v5354, %v5573
      %v5575 = vpop.f32.mrb[0].mxu0
      %5576 = vmatprep.mubr.bf16.mxu0 0
      %5577 = vmatmul.mubr.bf16.gmra.mrb[0].mxu0 %v5411
      %v5578 = vpop.f32.mrb[0].mxu0
      %v5579 = vadd.f32 %v5354, %v5578
      %v5580 = vpop.f32.mrb[0].mxu0
      %v5581 = vpop.f32.mrb[0].mxu0
      %v5582 = vadd.f32 %v5354, %v5581
      %v5583 = vpop.f32.mrb[0].mxu0
      %5584 = vmatprep.mubr.bf16.mxu0 0
      %5585 = vmatmul.mubr.bf16.gmra.mrb[0].mxu0 %v5414
      %v5586 = vpop.f32.mrb[0].mxu0
      %v5587 = vadd.f32 %v5354, %v5586
      %v5588 = vpop.f32.mrb[0].mxu0
      %v5589 = vpop.f32.mrb[0].mxu0
      %v5590 = vadd.f32 %v5354, %v5589
      %v5591 = vpop.f32.mrb[0].mxu0
      %5592 = vmatprep.mubr.bf16.mxu0 0
      %5593 = vmatmul.mubr.bf16.gmra.mrb[0].mxu0 %v5417
      %v5594 = vpop.f32.mrb[0].mxu0
      %v5595 = vadd.f32 %v5354, %v5594
      %v5596 = vpop.f32.mrb[0].mxu0
      %v5597 = vpop.f32.mrb[0].mxu0
      %v5598 = vadd.f32 %v5354, %v5597
      %v5599 = vpop.f32.mrb[0].mxu0
      %5600 = vmatprep.mubr.bf16.mxu0 0
      %5601 = vmatmul.mubr.bf16.gmra.mrb[0].mxu0 %v5420
      %v5602 = vpop.f32.mrb[0].mxu0
      %v5603 = vadd.f32 %v5354, %v5602
      %v5604 = vpop.f32.mrb[0].mxu0
      %v5605 = vpop.f32.mrb[0].mxu0
      %v5606 = vadd.f32 %v5354, %v5605
      %v5607 = vpop.f32.mrb[0].mxu0
      %5608 = vmatprep.mubr.bf16.mxu0 0
      %5609 = vmatmul.mubr.bf16.gmra.mrb[0].mxu0 %v5423
      %v5610 = vpop.f32.mrb[0].mxu0
      %v5611 = vadd.f32 %v5354, %v5610
      %v5612 = vpop.f32.mrb[0].mxu0
      %v5613 = vpop.f32.mrb[0].mxu0
      %v5614 = vadd.f32 %v5354, %v5613
      %v5615 = vpop.f32.mrb[0].mxu0
      %5616 = vmatprep.mubr.bf16.mxu0 0
      %5617 = vmatmul.mubr.bf16.gmra.mrb[0].mxu0 %v5426
      %v5618 = vpop.f32.mrb[0].mxu0
      %v5619 = vadd.f32 %v5354, %v5618
      %v5620 = vpop.f32.mrb[0].mxu0
      %v5621 = vpop.f32.mrb[0].mxu0
      %v5622 = vadd.f32 %v5354, %v5621
      %v5623 = vpop.f32.mrb[0].mxu0
      %5624 = vmatprep.mubr.bf16.mxu0 0
      %5625 = vmatmul.mubr.bf16.gmra.mrb[0].mxu0 %v5429
      %v5626 = vpop.f32.mrb[0].mxu0
      %v5627 = vadd.f32 %v5354, %v5626
      %v5628 = vpop.f32.mrb[0].mxu0
      %v5629 = vpop.f32.mrb[0].mxu0
      %v5630 = vadd.f32 %v5354, %v5629
      %v5631 = vpop.f32.mrb[0].mxu0
      %5632 = vmatprep.mubr.bf16.mxu0 0
      %5633 = vmatmul.mubr.bf16.gmra.mrb[0].mxu0 %v5432
      %v5634 = vpop.f32.mrb[0].mxu0
      %v5635 = vadd.f32 %v5354, %v5634
      %v5636 = vpop.f32.mrb[0].mxu0
      %v5637 = vpop.f32.mrb[0].mxu0
      %v5638 = vadd.f32 %v5354, %v5637
      %v5639 = vpop.f32.mrb[0].mxu0
      %5640 = vmatprep.mubr.bf16.mxu0 0
      %5641 = vmatmul.mubr.bf16.gmra.mrb[0].mxu0 %v5435
      %v5642 = vpop.f32.mrb[0].mxu0
      %v5643 = vadd.f32 %v5354, %v5642
      %v5644 = vpop.f32.mrb[0].mxu0
      %v5645 = vpop.f32.mrb[0].mxu0
      %v5646 = vadd.f32 %v5354, %v5645
      %v5647 = vpop.f32.mrb[0].mxu0
      %5648 = vmatprep.mubr.bf16.mxu0 0
      %5649 = vmatmul.mubr.bf16.gmra.mrb[0].mxu0 %v5438
      %v5650 = vpop.f32.mrb[0].mxu0
      %v5651 = vadd.f32 %v5354, %v5650
      %v5652 = vpop.f32.mrb[0].mxu0
      %v5653 = vpop.f32.mrb[0].mxu0
      %v5654 = vadd.f32 %v5354, %v5653
      %v5655 = vpop.f32.mrb[0].mxu0
      %5656 = vmatprep.mubr.bf16.mxu0 0
      %5657 = vmatmul.mubr.bf16.gmra.mrb[0].mxu0 %v5441
      %v5658 = vpop.f32.mrb[0].mxu0
      %v5659 = vadd.f32 %v5354, %v5658
      %v5660 = vpop.f32.mrb[0].mxu0
      %v5661 = vpop.f32.mrb[0].mxu0
      %v5662 = vadd.f32 %v5354, %v5661
      %v5663 = vpop.f32.mrb[0].mxu0
      %5664 = vmatprep.mubr.bf16.mxu0 0
      %5665 = vmatmul.mubr.bf16.gmra.mrb[0].mxu0 %v5444
      %v5666 = vpop.f32.mrb[0].mxu0
      %v5667 = vadd.f32 %v5354, %v5666
      %v5668 = vpop.f32.mrb[0].mxu0
      %v5669 = vpop.f32.mrb[0].mxu0
      %v5670 = vadd.f32 %v5354, %v5669
      %v5671 = vpop.f32.mrb[0].mxu0
      %5672 = vmatprep.mubr.bf16.mxu0 0
      %5673 = vmatmul.mubr.bf16.gmra.mrb[0].mxu0 %v5447
      %v5674 = vpop.f32.mrb[0].mxu0
      %v5675 = vadd.f32 %v5354, %v5674
      %v5676 = vpop.f32.mrb[0].mxu0
      %v5677 = vpop.f32.mrb[0].mxu0
      %v5678 = vadd.f32 %v5354, %v5677
      %v5679 = vpop.f32.mrb[0].mxu0
      %5680 = vmatprep.mubr.bf16.mxu0 0
      %5681 = vmatmul.mubr.bf16.gmra.mrb[0].mxu0 %v5450
      %v5682 = vpop.f32.mrb[0].mxu0
      %v5683 = vadd.f32 %v5354, %v5682
      %v5684 = vpop.f32.mrb[0].mxu0
      %v5685 = vpop.f32.mrb[0].mxu0
      %v5686 = vadd.f32 %v5354, %v5685
      %v5687 = vpop.f32.mrb[0].mxu0
      %5688 = vmatprep.mubr.bf16.mxu0 0
      %5689 = vmatmul.mubr.bf16.gmra.mrb[0].mxu0 %v5453
      %v5690 = vpop.f32.mrb[0].mxu0
      %v5691 = vadd.f32 %v5354, %v5690
      %v5692 = vpop.f32.mrb[0].mxu0
      %v5693 = vpop.f32.mrb[0].mxu0
      %v5694 = vadd.f32 %v5354, %v5693
      %v5695 = vpop.f32.mrb[0].mxu0
      %5696 = vmatprep.mubr.bf16.mxu0 0
      %5697 = vmatmul.mubr.bf16.gmra.mrb[0].mxu0 %v5456
      %v5698 = vpop.f32.mrb[0].mxu0
      %v5699 = vadd.f32 %v5354, %v5698
      %v5700 = vpop.f32.mrb[0].mxu0
      %v5701 = vpop.f32.mrb[0].mxu0
      %v5702 = vadd.f32 %v5354, %v5701
      %v5703 = vpop.f32.mrb[0].mxu0
      %5704 = vmatprep.mubr.bf16.mxu0 0
      %5705 = vmatmul.mubr.bf16.gmra.mrb[0].mxu0 %v5459
      %v5706 = vpop.f32.mrb[0].mxu0
      %v5707 = vadd.f32 %v5354, %v5706
      %v5708 = vpop.f32.mrb[0].mxu0
      %v5709 = vpop.f32.mrb[0].mxu0
      %v5710 = vadd.f32 %v5354, %v5709
      %v5711 = vpop.f32.mrb[0].mxu0
      %5712 = vmatprep.mubr.bf16.mxu0 0
      %5713 = vmatmul.mubr.bf16.gmra.mrb[0].mxu0 %v5462
      %v5714 = vpop.f32.mrb[0].mxu0
      %v5715 = vadd.f32 %v5354, %v5714
      %v5716 = vpop.f32.mrb[0].mxu0
      %v5717 = vpop.f32.mrb[0].mxu0
      %v5718 = vadd.f32 %v5354, %v5717
      %v5719 = vpop.f32.mrb[0].mxu0
      %5720 = vdwg.mxu0
      %v5721 = vmax.f32 %v5499, 0.0
      %v5722 = vmax.f32 %v5502, 0.0
      %v5723 = vmax.f32 %v5507, 0.0
      %v5724 = vmax.f32 %v5510, 0.0
      %v5725 = vmax.f32 %v5515, 0.0
      %v5726 = vmax.f32 %v5518, 0.0
      %v5727 = vmax.f32 %v5523, 0.0
      %v5728 = vmax.f32 %v5526, 0.0
      %v5729 = vmax.f32 %v5531, 0.0
      %v5730 = vmax.f32 %v5534, 0.0
      %v5731 = vmax.f32 %v5539, 0.0
      %v5732 = vmax.f32 %v5542, 0.0
      %v5733 = vmax.f32 %v5547, 0.0
      %v5734 = vmax.f32 %v5550, 0.0
      %v5735 = vmax.f32 %v5555, 0.0
      %v5736 = vmax.f32 %v5558, 0.0
      %v5737 = vmax.f32 %v5563, 0.0
      %v5738 = vmax.f32 %v5566, 0.0
      %v5739 = vmax.f32 %v5571, 0.0
      %v5740 = vmax.f32 %v5574, 0.0
      %v5741 = vmax.f32 %v5579, 0.0
      %v5742 = vmax.f32 %v5582, 0.0
      %v5743 = vmax.f32 %v5587, 0.0
      %v5744 = vmax.f32 %v5590, 0.0
      %v5745 = vmax.f32 %v5595, 0.0
      %v5746 = vmax.f32 %v5598, 0.0
      %v5747 = vmax.f32 %v5603, 0.0
      %v5748 = vmax.f32 %v5606, 0.0
      %v5749 = vmax.f32 %v5611, 0.0
      %v5750 = vmax.f32 %v5614, 0.0
      %v5751 = vmax.f32 %v5619, 0.0
      %v5752 = vmax.f32 %v5622, 0.0
      %v5753 = vmax.f32 %v5627, 0.0
      %v5754 = vmax.f32 %v5630, 0.0
      %v5755 = vmax.f32 %v5635, 0.0
      %v5756 = vmax.f32 %v5638, 0.0
      %v5757 = vmax.f32 %v5643, 0.0
      %v5758 = vmax.f32 %v5646, 0.0
      %v5759 = vmax.f32 %v5651, 0.0
      %v5760 = vmax.f32 %v5654, 0.0
      %v5761 = vmax.f32 %v5659, 0.0
      %v5762 = vmax.f32 %v5662, 0.0
      %v5763 = vmax.f32 %v5667, 0.0
      %v5764 = vmax.f32 %v5670, 0.0
      %v5765 = vmax.f32 %v5675, 0.0
      %v5766 = vmax.f32 %v5678, 0.0
      %v5767 = vmax.f32 %v5683, 0.0
      %v5768 = vmax.f32 %v5686, 0.0
      %v5769 = vmax.f32 %v5691, 0.0
      %v5770 = vmax.f32 %v5694, 0.0
      %v5771 = vmax.f32 %v5699, 0.0
      %v5772 = vmax.f32 %v5702, 0.0
      %v5773 = vmax.f32 %v5707, 0.0
      %v5774 = vmax.f32 %v5710, 0.0
      %v5775 = vmax.f32 %v5715, 0.0
      %v5776 = vmax.f32 %v5718, 0.0
      %v5777 = vmul.f32 %v5721, %v871
      %v5778 = vmul.f32 %v5722, %v872
      %v5779 = vmul.f32 %v5723, %v873
      %v5780 = vmul.f32 %v5724, %v874
      %v5781 = vmul.f32 %v5725, %v875
      %v5782 = vmul.f32 %v5726, %v876
      %v5783 = vmul.f32 %v5727, %v877
      %v5784 = vmul.f32 %v5728, %v878
      %v5785 = vmul.f32 %v5729, %v879
      %v5786 = vmul.f32 %v5730, %v880
      %v5787 = vmul.f32 %v5731, %v881
      %v5788 = vmul.f32 %v5732, %v882
      %v5789 = vmul.f32 %v5733, %v883
      %v5790 = vmul.f32 %v5734, %v884
      %v5791 = vmul.f32 %v5735, %v885
      %v5792 = vmul.f32 %v5736, %v886
      %v5793 = vmul.f32 %v5737, %v887
      %v5794 = vmul.f32 %v5738, %v888
      %v5795 = vmul.f32 %v5739, %v889
      %v5796 = vmul.f32 %v5740, %v890
      %v5797 = vmul.f32 %v5741, %v891
      %v5798 = vmul.f32 %v5742, %v892
      %v5799 = vmul.f32 %v5743, %v893
      %v5800 = vmul.f32 %v5744, %v894
      %v5801 = vmul.f32 %v5745, %v895
      %v5802 = vmul.f32 %v5746, %v896
      %v5803 = vmul.f32 %v5747, %v897
      %v5804 = vmul.f32 %v5748, %v898
      %v5805 = vmul.f32 %v5749, %v899
      %v5806 = vmul.f32 %v5750, %v900
      %v5807 = vmul.f32 %v5751, %v901
      %v5808 = vmul.f32 %v5752, %v902
      %v5809 = vmul.f32 %v5753, %v903
      %v5810 = vmul.f32 %v5754, %v904
      %v5811 = vmul.f32 %v5755, %v905
      %v5812 = vmul.f32 %v5756, %v906
      %v5813 = vmul.f32 %v5757, %v907
      %v5814 = vmul.f32 %v5758, %v908
      %v5815 = vmul.f32 %v5759, %v909
      %v5816 = vmul.f32 %v5760, %v910
      %v5817 = vmul.f32 %v5761, %v911
      %v5818 = vmul.f32 %v5762, %v912
      %v5819 = vmul.f32 %v5763, %v913
      %v5820 = vmul.f32 %v5764, %v914
      %v5821 = vmul.f32 %v5765, %v915
      %v5822 = vmul.f32 %v5766, %v916
      %v5823 = vmul.f32 %v5767, %v917
      %v5824 = vmul.f32 %v5768, %v918
      %v5825 = vmul.f32 %v5769, %v919
      %v5826 = vmul.f32 %v5770, %v920
      %v5827 = vmul.f32 %v5771, %v921
      %v5828 = vmul.f32 %v5772, %v922
      %v5829 = vmul.f32 %v5773, %v923
      %v5830 = vmul.f32 %v5774, %v924
      %v5831 = vmul.f32 %v5775, %v925
      %v5832 = vmul.f32 %v5776, %v926
      %v5833 = vpack.c.bf16 %v5778, %v5777
      %v5834 = vpack.c.bf16 %v5780, %v5779
      %v5835 = vpack.c.bf16 %v5782, %v5781
      %v5836 = vpack.c.bf16 %v5784, %v5783
      %v5837 = vpack.c.bf16 %v5786, %v5785
      %v5838 = vpack.c.bf16 %v5788, %v5787
      %v5839 = vpack.c.bf16 %v5790, %v5789
      %v5840 = vpack.c.bf16 %v5792, %v5791
      %v5841 = vpack.c.bf16 %v5794, %v5793
      %v5842 = vpack.c.bf16 %v5796, %v5795
      %v5843 = vpack.c.bf16 %v5798, %v5797
      %v5844 = vpack.c.bf16 %v5800, %v5799
      %v5845 = vpack.c.bf16 %v5802, %v5801
      %v5846 = vpack.c.bf16 %v5804, %v5803
      %v5847 = vpack.c.bf16 %v5806, %v5805
      %v5848 = vpack.c.bf16 %v5808, %v5807
      %v5849 = vpack.c.bf16 %v5810, %v5809
      %v5850 = vpack.c.bf16 %v5812, %v5811
      %v5851 = vpack.c.bf16 %v5814, %v5813
      %v5852 = vpack.c.bf16 %v5816, %v5815
      %v5853 = vpack.c.bf16 %v5818, %v5817
      %v5854 = vpack.c.bf16 %v5820, %v5819
      %v5855 = vpack.c.bf16 %v5822, %v5821
      %v5856 = vpack.c.bf16 %v5824, %v5823
      %v5857 = vpack.c.bf16 %v5826, %v5825
      %v5858 = vpack.c.bf16 %v5828, %v5827
      %v5859 = vpack.c.bf16 %v5830, %v5829
      %v5860 = vpack.c.bf16 %v5832, %v5831
      %5861 = vmatprep.subr.bf16.mxu0 0
      %5862 = vmatpush1.bf16.msra.mxu0 %v5833
      %5863 = vmatprep.subr.bf16.mxu0 0
      %5864 = vmatpush1.bf16.msra.mxu0 %v5834
      %5865 = vmatprep.subr.bf16.mxu0 0
      %5866 = vmatpush1.bf16.msra.mxu0 %v5835
      %5867 = vmatprep.subr.bf16.mxu0 0
      %5868 = vmatpush1.bf16.msra.mxu0 %v5836
      %5869 = vmatprep.subr.bf16.mxu0 0
      %5870 = vmatpush1.bf16.msra.mxu0 %v5837
      %5871 = vmatprep.subr.bf16.mxu0 0
      %5872 = vmatpush1.bf16.msra.mxu0 %v5838
      %5873 = vmatprep.subr.bf16.mxu0 0
      %5874 = vmatpush1.bf16.msra.mxu0 %v5839
      %5875 = vmatprep.subr.bf16.mxu0 0
      %5876 = vmatpush1.bf16.msra.mxu0 %v5840
      %5877 = vmatprep.subr.bf16.mxu0 0
      %5878 = vmatpush1.bf16.msra.mxu0 %v5841
      %5879 = vmatprep.subr.bf16.mxu0 0
      %5880 = vmatpush1.bf16.msra.mxu0 %v5842
      %5881 = vmatprep.subr.bf16.mxu0 0
      %5882 = vmatpush1.bf16.msra.mxu0 %v5843
      %5883 = vmatprep.subr.bf16.mxu0 0
      %5884 = vmatpush1.bf16.msra.mxu0 %v5844
      %5885 = vmatprep.subr.bf16.mxu0 0
      %5886 = vmatpush1.bf16.msra.mxu0 %v5845
      %5887 = vmatprep.subr.bf16.mxu0 0
      %5888 = vmatpush1.bf16.msra.mxu0 %v5846
      %5889 = vmatprep.subr.bf16.mxu0 0
      %5890 = vmatpush1.bf16.msra.mxu0 %v5847
      %5891 = vmatprep.subr.bf16.mxu0 0
      %5892 = vmatpush1.bf16.msra.mxu0 %v5848
      %5893 = vmatprep.mubr.bf16.mxu0 %v3382
      %5894 = vmatmul.mubr.bf16.gmra.mrb[0].mxu0 %v3381
      %v5895 = vpop.f32.mrb[0].mxu0
      %v5896 = vadd.f32 0.0, %v5895
      %v5897 = vpop.f32.mrb[0].mxu0
      %v5898 = vpop.f32.mrb[0].mxu0
      %v5899 = vadd.f32 0.0, %v5898
      %v5900 = vpop.f32.mrb[0].mxu0
      %5901 = vmatprep.mubr.bf16.mxu0 %v3386
      %5902 = vmatmul.mubr.bf16.gmra.mrb[0].mxu0 %v3385
      %v5903 = vpop.f32.mrb[0].mxu0
      %v5904 = vadd.f32 0.0, %v5903
      %v5905 = vpop.f32.mrb[0].mxu0
      %v5906 = vpop.f32.mrb[0].mxu0
      %v5907 = vadd.f32 0.0, %v5906
      %v5908 = vpop.f32.mrb[0].mxu0
      %5909 = vmatprep.mubr.bf16.mxu0 %v3390
      %5910 = vmatmul.mubr.bf16.gmra.mrb[0].mxu0 %v3389
      %v5911 = vpop.f32.mrb[0].mxu0
      %v5912 = vadd.f32 0.0, %v5911
      %v5913 = vpop.f32.mrb[0].mxu0
      %v5914 = vpop.f32.mrb[0].mxu0
      %v5915 = vadd.f32 0.0, %v5914
      %v5916 = vpop.f32.mrb[0].mxu0
      %5917 = vmatprep.mubr.bf16.mxu0 %v3394
      %5918 = vmatmul.mubr.bf16.gmra.mrb[0].mxu0 %v3393
      %v5919 = vpop.f32.mrb[0].mxu0
      %v5920 = vadd.f32 0.0, %v5919
      %v5921 = vpop.f32.mrb[0].mxu0
      %v5922 = vpop.f32.mrb[0].mxu0
      %v5923 = vadd.f32 0.0, %v5922
      %v5924 = vpop.f32.mrb[0].mxu0
      %5925 = vdwg.mxu0
      %5926 = vmatprep.subr.bf16.mxu0 0
      %5927 = vmatpush1.bf16.msra.mxu0 %v5849
      %5928 = vmatprep.subr.bf16.mxu0 0
      %5929 = vmatpush1.bf16.msra.mxu0 %v5850
      %5930 = vmatprep.subr.bf16.mxu0 0
      %5931 = vmatpush1.bf16.msra.mxu0 %v5851
      %5932 = vmatprep.subr.bf16.mxu0 0
      %5933 = vmatpush1.bf16.msra.mxu0 %v5852
      %5934 = vmatprep.subr.bf16.mxu0 0
      %5935 = vmatpush1.bf16.msra.mxu0 %v5853
      %5936 = vmatprep.subr.bf16.mxu0 0
      %5937 = vmatpush1.bf16.msra.mxu0 %v5854
      %5938 = vmatprep.subr.bf16.mxu0 0
      %5939 = vmatpush1.bf16.msra.mxu0 %v5855
      %5940 = vmatprep.subr.bf16.mxu0 0
      %5941 = vmatpush1.bf16.msra.mxu0 %v5856
      %5942 = vmatprep.subr.bf16.mxu0 0
      %5943 = vmatpush1.bf16.msra.mxu0 %v5857
      %5944 = vmatprep.subr.bf16.mxu0 0
      %5945 = vmatpush1.bf16.msra.mxu0 %v5858
      %5946 = vmatprep.subr.bf16.mxu0 0
      %5947 = vmatpush1.bf16.msra.mxu0 %v5859
      %5948 = vmatprep.subr.bf16.mxu0 0
      %5949 = vmatpush1.bf16.msra.mxu0 %v5860
      %5950 = vmatprep.subr.bf16.mxu0 0
      %5951 = vmatpush1.bf16.msra.mxu0 0
      %5952 = vmatprep.subr.bf16.mxu0 0
      %5953 = vmatpush1.bf16.msra.mxu0 0
      %5954 = vmatprep.subr.bf16.mxu0 0
      %5955 = vmatpush1.bf16.msra.mxu0 0
      %5956 = vmatprep.subr.bf16.mxu0 0
      %5957 = vmatpush1.bf16.msra.mxu0 0
      %5958 = vmatprep.mubr.bf16.mxu0 %v3410
      %5959 = vmatmul.mubr.bf16.gmra.mrb[0].mxu0 %v3383
      %v5960 = vpop.f32.mrb[0].mxu0
      %v5961 = vadd.f32 %v5896, %v5960
      %v5962 = vpop.f32.mrb[0].mxu0
      %v5963 = vpop.f32.mrb[0].mxu0
      %v5964 = vadd.f32 %v5899, %v5963
      %v5965 = vpop.f32.mrb[0].mxu0
      %5966 = vmatprep.mubr.bf16.mxu0 %v3413
      %5967 = vmatmul.mubr.bf16.gmra.mrb[0].mxu0 %v3387
      %v5968 = vpop.f32.mrb[0].mxu0
      %v5969 = vadd.f32 %v5904, %v5968
      %v5970 = vpop.f32.mrb[0].mxu0
      %v5971 = vpop.f32.mrb[0].mxu0
      %v5972 = vadd.f32 %v5907, %v5971
      %v5973 = vpop.f32.mrb[0].mxu0
      %5974 = vmatprep.mubr.bf16.mxu0 %v3416
      %5975 = vmatmul.mubr.bf16.gmra.mrb[0].mxu0 %v3391
      %v5976 = vpop.f32.mrb[0].mxu0
      %v5977 = vadd.f32 %v5912, %v5976
      %v5978 = vpop.f32.mrb[0].mxu0
      %v5979 = vpop.f32.mrb[0].mxu0
      %v5980 = vadd.f32 %v5915, %v5979
      %v5981 = vpop.f32.mrb[0].mxu0
      %5982 = vmatprep.mubr.bf16.mxu0 %v3419
      %5983 = vmatmul.mubr.bf16.gmra.mrb[0].mxu0 %v3395
      %v5984 = vpop.f32.mrb[0].mxu0
      %v5985 = vadd.f32 %v5920, %v5984
      %v5986 = vpop.f32.mrb[0].mxu0
      %v5987 = vpop.f32.mrb[0].mxu0
      %v5988 = vadd.f32 %v5923, %v5987
      %v5989 = vpop.f32.mrb[0].mxu0
      %5990 = vdwg.mxu0
      %s5991 = scalar_lea.vmem %s9, 48
      %v5992 = vld [vmem:[%s5991] sm:$0xf]
      %v5993 = vld [vmem:[%s5991 + $0x4] sm:$0xf]
      %v5994 = vld [vmem:[%s5991 + $0x8] sm:$0xf]
      %v5995 = vld [vmem:[%s5991 + $0xc] sm:$0xf]
      %v5996 = vld [vmem:[%s5991 + $0x10] sm:$0xf]
      %v5997 = vld [vmem:[%s5991 + $0x14] sm:$0xf]
      %v5998 = vld [vmem:[%s5991 + $0x18] sm:$0xf]
      %v5999 = vld [vmem:[%s5991 + $0x1c] sm:$0xf]
      %v6000 = vld [vmem:[%s5991 + $0x20] sm:$0xf]
      %v6001 = vld [vmem:[%s5991 + $0x24] sm:$0xf]
      %v6002 = vld [vmem:[%s5991 + $0x28] sm:$0xf]
      %v6003 = vld [vmem:[%s5991 + $0x2c] sm:$0xf]
      %v6004 = vpack.c.bf16 %v5964, %v5961
      %v6005 = vpack.c.bf16 %v5972, %v5969
      %v6006 = vpack.c.bf16 %v5980, %v5977
      %v6007 = vpack.c.bf16 %v5988, %v5985
      %v6016 = vunpack.c.l.b16 %v5996
      %v6017 = vunpack.c.l.b16 %v5997
      %v6018 = vunpack.c.l.b16 %v5998
      %v6019 = vunpack.c.l.b16 %v5999
      %v6020 = vunpack.c.l.b16 %v6000
      %v6021 = vunpack.c.l.b16 %v6001
      %v6022 = vunpack.c.l.b16 %v6002
      %v6023 = vunpack.c.l.b16 %v6003
      %v6024 = vpack.c.b16 %v6017, %v6016
      %v6025 = vpack.c.b16 %v6019, %v6018
      %v6026 = vpack.c.b16 %v6021, %v6020
      %v6027 = vpack.c.b16 %v6023, %v6022
      %v6033 = vsel %vm1071, %v6004, 0
      %v6036 = vsel %vm1071, %v6005, 0
      %v6039 = vsel %vm1071, %v6006, 0
      %v6042 = vsel %vm1071, %v6007, 0
      %6044 = vmatprep.subr.bf16.mxu0 0
      %6045 = vmatpush1.bf16.msra.mxu0 %v6024
      %6046 = vmatprep.subr.bf16.mxu0 0
      %6047 = vmatpush1.bf16.msra.mxu0 %v6025
      %6048 = vmatprep.subr.bf16.mxu0 0
      %6049 = vmatpush1.bf16.msra.mxu0 %v6026
      %6050 = vmatprep.subr.bf16.mxu0 0
      %6051 = vmatpush1.bf16.msra.mxu0 %v6027
      %6052 = vmatprep.subr.bf16.mxu0 0
      %6053 = vmatpush1.bf16.msra.mxu0 0
      %6054 = vmatprep.subr.bf16.mxu0 0
      %6055 = vmatpush1.bf16.msra.mxu0 0
      %6056 = vmatprep.subr.bf16.mxu0 0
      %6057 = vmatpush1.bf16.msra.mxu0 0
      %6058 = vmatprep.subr.bf16.mxu0 0
      %6059 = vmatpush1.bf16.msra.mxu0 0
      %6060 = vmatprep.subr.bf16.mxu0 0
      %6061 = vmatpush1.bf16.msra.mxu0 0
      %6062 = vmatprep.subr.bf16.mxu0 0
      %6063 = vmatpush1.bf16.msra.mxu0 0
      %6064 = vmatprep.subr.bf16.mxu0 0
      %6065 = vmatpush1.bf16.msra.mxu0 0
      %6066 = vmatprep.subr.bf16.mxu0 0
      %6067 = vmatpush1.bf16.msra.mxu0 0
      %6068 = vmatprep.subr.bf16.mxu0 0
      %6069 = vmatpush1.bf16.msra.mxu0 0
      %6070 = vmatprep.subr.bf16.mxu0 0
      %6071 = vmatpush1.bf16.msra.mxu0 0
      %6072 = vmatprep.subr.bf16.mxu0 0
      %6073 = vmatpush1.bf16.msra.mxu0 0
      %6074 = vmatprep.subr.bf16.mxu0 0
      %6075 = vmatpush1.bf16.msra.mxu0 0
      %6076 = vmatprep.mubr.bf16.mxu0 0
      %6077 = vmatmul.mubr.bf16.gmra.mrb[0].mxu0 %v6033
      %v6078 = vpop.f32.mrb[0].mxu0
      %v6079 = vadd.f32 0.0, %v6078
      %v6080 = vpop.f32.mrb[0].mxu0
      %v6081 = vpop.f32.mrb[0].mxu0
      %v6082 = vadd.f32 0.0, %v6081
      %v6083 = vpop.f32.mrb[0].mxu0
      %6084 = vmatprep.mubr.bf16.mxu0 0
      %6085 = vmatmul.mubr.bf16.gmra.mrb[0].mxu0 %v6036
      %v6086 = vpop.f32.mrb[0].mxu0
      %v6087 = vadd.f32 0.0, %v6086
      %v6088 = vpop.f32.mrb[0].mxu0
      %v6089 = vpop.f32.mrb[0].mxu0
      %v6090 = vadd.f32 0.0, %v6089
      %v6091 = vpop.f32.mrb[0].mxu0
      %6092 = vmatprep.mubr.bf16.mxu0 0
      %6093 = vmatmul.mubr.bf16.gmra.mrb[0].mxu0 %v6039
      %v6094 = vpop.f32.mrb[0].mxu0
      %v6095 = vadd.f32 0.0, %v6094
      %v6096 = vpop.f32.mrb[0].mxu0
      %v6097 = vpop.f32.mrb[0].mxu0
      %v6098 = vadd.f32 0.0, %v6097
      %v6099 = vpop.f32.mrb[0].mxu0
      %6100 = vmatprep.mubr.bf16.mxu0 0
      %6101 = vmatmul.mubr.bf16.gmra.mrb[0].mxu0 %v6042
      %v6102 = vpop.f32.mrb[0].mxu0
      %v6103 = vadd.f32 0.0, %v6102
      %v6104 = vpop.f32.mrb[0].mxu0
      %v6105 = vpop.f32.mrb[0].mxu0
      %v6106 = vadd.f32 0.0, %v6105
      %v6107 = vpop.f32.mrb[0].mxu0
      %6108 = vdwg.mxu0
      %v6113 = vunpack.c.l.b16 %v5992
      %v6114 = vunpack.c.l.b16 %v5993
      %v6115 = vunpack.c.l.b16 %v5994
      %v6116 = vunpack.c.l.b16 %v5995
      %v6117 = vpack.c.b16 %v6114, %v6113
      %v6118 = vpack.c.b16 %v6116, %v6115
      %v6122 = vsel %vm604, %v3901, 0
      %v6125 = vsel %vm604, %v3902, 0
      %v6128 = vsel %vm604, %v3903, 0
      %v6131 = vsel %vm604, %v3904, 0
      %6133 = vmatprep.subr.bf16.mxu0 0
      %6134 = vmatpush1.bf16.msra.mxu0 %v6117
      %6135 = vmatprep.subr.bf16.mxu0 0
      %6136 = vmatpush1.bf16.msra.mxu0 %v6118
      %6137 = vmatprep.subr.bf16.mxu0 0
      %6138 = vmatpush1.bf16.msra.mxu0 0
      %6139 = vmatprep.subr.bf16.mxu0 0
      %6140 = vmatpush1.bf16.msra.mxu0 0
      %6141 = vmatprep.subr.bf16.mxu0 0
      %6142 = vmatpush1.bf16.msra.mxu0 0
      %6143 = vmatprep.subr.bf16.mxu0 0
      %6144 = vmatpush1.bf16.msra.mxu0 0
      %6145 = vmatprep.subr.bf16.mxu0 0
      %6146 = vmatpush1.bf16.msra.mxu0 0
      %6147 = vmatprep.subr.bf16.mxu0 0
      %6148 = vmatpush1.bf16.msra.mxu0 0
      %6149 = vmatprep.subr.bf16.mxu0 0
      %6150 = vmatpush1.bf16.msra.mxu0 0
      %6151 = vmatprep.subr.bf16.mxu0 0
      %6152 = vmatpush1.bf16.msra.mxu0 0
      %6153 = vmatprep.subr.bf16.mxu0 0
      %6154 = vmatpush1.bf16.msra.mxu0 0
      %6155 = vmatprep.subr.bf16.mxu0 0
      %6156 = vmatpush1.bf16.msra.mxu0 0
      %6157 = vmatprep.subr.bf16.mxu0 0
      %6158 = vmatpush1.bf16.msra.mxu0 0
      %6159 = vmatprep.subr.bf16.mxu0 0
      %6160 = vmatpush1.bf16.msra.mxu0 0
      %6161 = vmatprep.subr.bf16.mxu0 0
      %6162 = vmatpush1.bf16.msra.mxu0 0
      %6163 = vmatprep.subr.bf16.mxu0 0
      %6164 = vmatpush1.bf16.msra.mxu0 0
      %6165 = vmatprep.mubr.bf16.mxu0 0
      %6166 = vmatmul.mubr.bf16.gmra.mrb[0].mxu0 %v6122
      %v6167 = vpop.f32.mrb[0].mxu0
      %v6168 = vadd.f32 %v6079, %v6167
      %v6169 = vpop.f32.mrb[0].mxu0
      %v6170 = vpop.f32.mrb[0].mxu0
      %v6171 = vadd.f32 %v6082, %v6170
      %v6172 = vpop.f32.mrb[0].mxu0
      %6173 = vmatprep.mubr.bf16.mxu0 0
      %6174 = vmatmul.mubr.bf16.gmra.mrb[0].mxu0 %v6125
      %v6175 = vpop.f32.mrb[0].mxu0
      %v6176 = vadd.f32 %v6087, %v6175
      %v6177 = vpop.f32.mrb[0].mxu0
      %v6178 = vpop.f32.mrb[0].mxu0
      %v6179 = vadd.f32 %v6090, %v6178
      %v6180 = vpop.f32.mrb[0].mxu0
      %6181 = vmatprep.mubr.bf16.mxu0 0
      %6182 = vmatmul.mubr.bf16.gmra.mrb[0].mxu0 %v6128
      %v6183 = vpop.f32.mrb[0].mxu0
      %v6184 = vadd.f32 %v6095, %v6183
      %v6185 = vpop.f32.mrb[0].mxu0
      %v6186 = vpop.f32.mrb[0].mxu0
      %v6187 = vadd.f32 %v6098, %v6186
      %v6188 = vpop.f32.mrb[0].mxu0
      %6189 = vmatprep.mubr.bf16.mxu0 0
      %6190 = vmatmul.mubr.bf16.gmra.mrb[0].mxu0 %v6131
      %v6191 = vpop.f32.mrb[0].mxu0
      %v6192 = vadd.f32 %v6103, %v6191
      %v6193 = vpop.f32.mrb[0].mxu0
      %v6194 = vpop.f32.mrb[0].mxu0
      %v6195 = vadd.f32 %v6106, %v6194
      %v6196 = vpop.f32.mrb[0].mxu0
      %6197 = vdwg.mxu0
      %s6198 = scalar_lea.vmem %s10, 2
      %v6199 = vld [vmem:[%s6198] sm:$0x1]
      %v6201 = vlaneseq
      %v6202 = vshrl.u32 %v6201, 7
      %v6203 = vsub.s32 0, %v6202
      %v6204 = vrot.slane %v6199, %v6203
      %v6206 = vadd.f32 %v6168, %v6204
      %v6207 = vadd.f32 %v6171, %v6204
      %v6208 = vadd.f32 %v6176, %v6204
      %v6209 = vadd.f32 %v6179, %v6204
      %v6210 = vadd.f32 %v6184, %v6204
      %v6211 = vadd.f32 %v6187, %v6204
      %v6212 = vadd.f32 %v6192, %v6204
      %v6213 = vadd.f32 %v6195, %v6204
      %v6214 = vmax.f32 %v6206, 0.0
      %v6215 = vmax.f32 %v6207, 0.0
      %v6216 = vmax.f32 %v6208, 0.0
      %v6217 = vmax.f32 %v6209, 0.0
      %v6218 = vmax.f32 %v6210, 0.0
      %v6219 = vmax.f32 %v6211, 0.0
      %v6220 = vmax.f32 %v6212, 0.0
      %v6221 = vmax.f32 %v6213, 0.0
      %s6222 = scalar_lea.vmem %s11, 16
      %v6223 = vld [vmem:[%s6222] sm:$0xf]
      %v6224 = vld [vmem:[%s6222 + $0x4] sm:$0xf]
      %v6225 = vld [vmem:[%s6222 + $0x8] sm:$0xf]
      %v6226 = vld [vmem:[%s6222 + $0xc] sm:$0xf]
      %v6227 = vpack.c.bf16 %v6215, %v6214
      %v6228 = vpack.c.bf16 %v6217, %v6216
      %v6229 = vpack.c.bf16 %v6219, %v6218
      %v6230 = vpack.c.bf16 %v6221, %v6220
      %s6231 = scalar_lea.vmem %s10, 3
      %v6232 = vld [vmem:[%s6231] sm:$0x1]
      %v6234 = vlaneseq
      %v6235 = vshrl.u32 %v6234, 7
      %v6236 = vsub.s32 0, %v6235
      %v6237 = vrot.slane %v6232, %v6236
      %v6243 = vunpack.c.l.b16 %v6223
      %v6244 = vunpack.c.l.b16 %v6224
      %v6245 = vunpack.c.l.b16 %v6225
      %v6246 = vunpack.c.l.b16 %v6226
      %v6247 = vpack.c.b16 %v6244, %v6243
      %v6248 = vpack.c.b16 %v6246, %v6245
      %v6252 = vsel %vm604, %v6227, 0
      %v6255 = vsel %vm604, %v6228, 0
      %v6258 = vsel %vm604, %v6229, 0
      %v6261 = vsel %vm604, %v6230, 0
      %6263 = vmatprep.subr.bf16.mxu0 0
      %6264 = vmatpush1.bf16.msra.mxu0 %v6247
      %6265 = vmatprep.subr.bf16.mxu0 0
      %6266 = vmatpush1.bf16.msra.mxu0 %v6248
      %6267 = vmatprep.subr.bf16.mxu0 0
      %6268 = vmatpush1.bf16.msra.mxu0 0
      %6269 = vmatprep.subr.bf16.mxu0 0
      %6270 = vmatpush1.bf16.msra.mxu0 0
      %6271 = vmatprep.subr.bf16.mxu0 0
      %6272 = vmatpush1.bf16.msra.mxu0 0
      %6273 = vmatprep.subr.bf16.mxu0 0
      %6274 = vmatpush1.bf16.msra.mxu0 0
      %6275 = vmatprep.subr.bf16.mxu0 0
      %6276 = vmatpush1.bf16.msra.mxu0 0
      %6277 = vmatprep.subr.bf16.mxu0 0
      %6278 = vmatpush1.bf16.msra.mxu0 0
      %6279 = vmatprep.subr.bf16.mxu0 0
      %6280 = vmatpush1.bf16.msra.mxu0 0
      %6281 = vmatprep.subr.bf16.mxu0 0
      %6282 = vmatpush1.bf16.msra.mxu0 0
      %6283 = vmatprep.subr.bf16.mxu0 0
      %6284 = vmatpush1.bf16.msra.mxu0 0
      %6285 = vmatprep.subr.bf16.mxu0 0
      %6286 = vmatpush1.bf16.msra.mxu0 0
      %6287 = vmatprep.subr.bf16.mxu0 0
      %6288 = vmatpush1.bf16.msra.mxu0 0
      %6289 = vmatprep.subr.bf16.mxu0 0
      %6290 = vmatpush1.bf16.msra.mxu0 0
      %6291 = vmatprep.subr.bf16.mxu0 0
      %6292 = vmatpush1.bf16.msra.mxu0 0
      %6293 = vmatprep.subr.bf16.mxu0 0
      %6294 = vmatpush1.bf16.msra.mxu0 0
      %6295 = vmatprep.mubr.bf16.mxu0 0
      %6296 = vmatmul.mubr.bf16.gmra.mrb[0].mxu0 %v6252
      %v6297 = vpop.f32.mrb[0].mxu0
      %v6298 = vadd.f32 %v6237, %v6297
      %v6299 = vpop.f32.mrb[0].mxu0
      %v6300 = vpop.f32.mrb[0].mxu0
      %v6301 = vadd.f32 %v6237, %v6300
      %v6302 = vpop.f32.mrb[0].mxu0
      %6303 = vmatprep.mubr.bf16.mxu0 0
      %6304 = vmatmul.mubr.bf16.gmra.mrb[0].mxu0 %v6255
      %v6305 = vpop.f32.mrb[0].mxu0
      %v6306 = vadd.f32 %v6237, %v6305
      %v6307 = vpop.f32.mrb[0].mxu0
      %v6308 = vpop.f32.mrb[0].mxu0
      %v6309 = vadd.f32 %v6237, %v6308
      %v6310 = vpop.f32.mrb[0].mxu0
      %6311 = vmatprep.mubr.bf16.mxu0 0
      %6312 = vmatmul.mubr.bf16.gmra.mrb[0].mxu0 %v6258
      %v6313 = vpop.f32.mrb[0].mxu0
      %v6314 = vadd.f32 %v6237, %v6313
      %v6315 = vpop.f32.mrb[0].mxu0
      %v6316 = vpop.f32.mrb[0].mxu0
      %v6317 = vadd.f32 %v6237, %v6316
      %v6318 = vpop.f32.mrb[0].mxu0
      %6319 = vmatprep.mubr.bf16.mxu0 0
      %6320 = vmatmul.mubr.bf16.gmra.mrb[0].mxu0 %v6261
      %v6321 = vpop.f32.mrb[0].mxu0
      %v6322 = vadd.f32 %v6237, %v6321
      %v6323 = vpop.f32.mrb[0].mxu0
      %v6324 = vpop.f32.mrb[0].mxu0
      %v6325 = vadd.f32 %v6237, %v6324
      %v6326 = vpop.f32.mrb[0].mxu0
      %6327 = vdwg.mxu0
      %v6328 = vmax.f32 %v6298, 0.0
      %v6329 = vmax.f32 %v6301, 0.0
      %v6330 = vmax.f32 %v6306, 0.0
      %v6331 = vmax.f32 %v6309, 0.0
      %v6332 = vmax.f32 %v6314, 0.0
      %v6333 = vmax.f32 %v6317, 0.0
      %v6334 = vmax.f32 %v6322, 0.0
      %v6335 = vmax.f32 %v6325, 0.0
      %v6336 = vadd.f32 %v3893, %v6328
      %v6337 = vadd.f32 %v3894, %v6329
      %v6338 = vadd.f32 %v3895, %v6330
      %v6339 = vadd.f32 %v3896, %v6331
      %v6340 = vadd.f32 %v3897, %v6332
      %v6341 = vadd.f32 %v3898, %v6333
      %v6342 = vadd.f32 %v3899, %v6334
      %v6343 = vadd.f32 %v3900, %v6335
      %v6344 = vld [vmem:[%s12] sm:$0xf]
      %v6345 = vld [vmem:[%s12 + $0x4] sm:$0xf]
      %v6346 = vld [vmem:[%s12 + $0x8] sm:$0xf]
      %v6347 = vld [vmem:[%s12 + $0xc] sm:$0xf]
      %v6348 = vpack.c.bf16 %v6337, %v6336
      %v6349 = vpack.c.bf16 %v6339, %v6338
      %v6350 = vpack.c.bf16 %v6341, %v6340
      %v6351 = vpack.c.bf16 %v6343, %v6342
      %v6352 = vld [vmem:[%s13] sm:$0x1]
      %v6354 = vlaneseq
      %v6355 = vshrl.u32 %v6354, 7
      %v6356 = vsub.s32 0, %v6355
      %v6357 = vrot.slane %v6352, %v6356
      %v6363 = vunpack.c.l.b16 %v6344
      %v6364 = vunpack.c.l.b16 %v6345
      %v6365 = vunpack.c.l.b16 %v6346
      %v6366 = vunpack.c.l.b16 %v6347
      %v6367 = vpack.c.b16 %v6364, %v6363
      %v6368 = vpack.c.b16 %v6366, %v6365
      %v6372 = vsel %vm604, %v6348, 0
      %v6375 = vsel %vm604, %v6349, 0
      %v6378 = vsel %vm604, %v6350, 0
      %v6381 = vsel %vm604, %v6351, 0
      %6383 = vmatprep.subr.bf16.mxu0 0
      %6384 = vmatpush1.bf16.msra.mxu0 %v6367
      %6385 = vmatprep.subr.bf16.mxu0 0
      %6386 = vmatpush1.bf16.msra.mxu0 %v6368
      %6387 = vmatprep.subr.bf16.mxu0 0
      %6388 = vmatpush1.bf16.msra.mxu0 0
      %6389 = vmatprep.subr.bf16.mxu0 0
      %6390 = vmatpush1.bf16.msra.mxu0 0
      %6391 = vmatprep.subr.bf16.mxu0 0
      %6392 = vmatpush1.bf16.msra.mxu0 0
      %6393 = vmatprep.subr.bf16.mxu0 0
      %6394 = vmatpush1.bf16.msra.mxu0 0
      %6395 = vmatprep.subr.bf16.mxu0 0
      %6396 = vmatpush1.bf16.msra.mxu0 0
      %6397 = vmatprep.subr.bf16.mxu0 0
      %6398 = vmatpush1.bf16.msra.mxu0 0
      %6399 = vmatprep.subr.bf16.mxu0 0
      %6400 = vmatpush1.bf16.msra.mxu0 0
      %6401 = vmatprep.subr.bf16.mxu0 0
      %6402 = vmatpush1.bf16.msra.mxu0 0
      %6403 = vmatprep.subr.bf16.mxu0 0
      %6404 = vmatpush1.bf16.msra.mxu0 0
      %6405 = vmatprep.subr.bf16.mxu0 0
      %6406 = vmatpush1.bf16.msra.mxu0 0
      %6407 = vmatprep.subr.bf16.mxu0 0
      %6408 = vmatpush1.bf16.msra.mxu0 0
      %6409 = vmatprep.subr.bf16.mxu0 0
      %6410 = vmatpush1.bf16.msra.mxu0 0
      %6411 = vmatprep.subr.bf16.mxu0 0
      %6412 = vmatpush1.bf16.msra.mxu0 0
      %6413 = vmatprep.subr.bf16.mxu0 0
      %6414 = vmatpush1.bf16.msra.mxu0 0
      %6415 = vmatprep.mubr.bf16.mxu0 0
      %6416 = vmatmul.mubr.bf16.gmra.mrb[0].mxu0 %v6372
      %v6417 = vpop.f32.mrb[0].mxu0
      %v6418 = vadd.f32 %v6357, %v6417
      %v6419 = vpop.f32.mrb[0].mxu0
      %v6420 = vpop.f32.mrb[0].mxu0
      %v6421 = vadd.f32 %v6357, %v6420
      %v6422 = vpop.f32.mrb[0].mxu0
      %6423 = vmatprep.mubr.bf16.mxu0 0
      %6424 = vmatmul.mubr.bf16.gmra.mrb[0].mxu0 %v6375
      %v6425 = vpop.f32.mrb[0].mxu0
      %v6426 = vadd.f32 %v6357, %v6425
      %v6427 = vpop.f32.mrb[0].mxu0
      %v6428 = vpop.f32.mrb[0].mxu0
      %v6429 = vadd.f32 %v6357, %v6428
      %v6430 = vpop.f32.mrb[0].mxu0
      %6431 = vmatprep.mubr.bf16.mxu0 0
      %6432 = vmatmul.mubr.bf16.gmra.mrb[0].mxu0 %v6378
      %v6433 = vpop.f32.mrb[0].mxu0
      %v6434 = vadd.f32 %v6357, %v6433
      %v6435 = vpop.f32.mrb[0].mxu0
      %v6436 = vpop.f32.mrb[0].mxu0
      %v6437 = vadd.f32 %v6357, %v6436
      %v6438 = vpop.f32.mrb[0].mxu0
      %6439 = vmatprep.mubr.bf16.mxu0 0
      %6440 = vmatmul.mubr.bf16.gmra.mrb[0].mxu0 %v6381
      %v6441 = vpop.f32.mrb[0].mxu0
      %v6442 = vadd.f32 %v6357, %v6441
      %v6443 = vpop.f32.mrb[0].mxu0
      %v6444 = vpop.f32.mrb[0].mxu0
      %v6445 = vadd.f32 %v6357, %v6444
      %v6446 = vpop.f32.mrb[0].mxu0
      %6447 = vdwg.mxu0
      %vm6448 = vcmask 64512
      %6449 = vst.msk [vmem:[%s491] sm:$0xff] %vm6448, %v6418
      %6450 = vst.msk [vmem:[%s491 + $0x8] sm:$0xff] %vm6448, %v6421
      %6451 = vst.msk [vmem:[%s491 + $0x10] sm:$0xff] %vm6448, %v6426
      %6452 = vst.msk [vmem:[%s491 + $0x18] sm:$0xff] %vm6448, %v6429
      %6453 = vst.msk [vmem:[%s491 + $0x20] sm:$0xff] %vm6448, %v6434
      %6454 = vst.msk [vmem:[%s491 + $0x28] sm:$0xff] %vm6448, %v6437
      %6455 = vst.msk [vmem:[%s491 + $0x30] sm:$0xff] %vm6448, %v6442
      %6456 = vst.msk [vmem:[%s491 + $0x38] sm:$0xff] %vm6448, %v6445
      %s6457 = smul.u32 8, %s25
      %p6458 = scmp.lt.s32.totalorder %s6457, 15
      %s6459 = scalar_select %p6458, %s6457, 15
      %s6460 = smul.addr %s6459, 8
      %s6461 = scalar_lea.vmem %s14, %s6460
      // Predicated region
      $region77: #{tpu_custom_call.1} parent=75 // pred_check
        %p6462 = pneg %p347
      $region78: #{tpu_custom_call.1} parent=75 // pred_check_branch
        %6464 = sbr.rel (%p6462) target = $region80
      $region79: #{tpu_custom_call.1} parent=75 // pred_region
        %s6465 = smul.u32 8, %s25
      $region80: #{tpu_custom_call.1} parent=75 // pred_fallthru
        _
    $region76: #{tpu_custom_call.1} parent=5 // pred_fallthru
      _
    %p6466 = scmp.le.s32.totalorder 2, %s20
    // Predicated region
    $region81: #{tpu_custom_call.1} parent=5 // pred_check
      %p6467 = pneg %p6466
    $region82: #{tpu_custom_call.1} parent=5 // pred_check_branch
      %6469 = sbr.rel (%p6467) target = $region84
    $region83: #{tpu_custom_call.1} parent=5 // pred_region
      %s6470 = ssub.s32 %s20, 2
      // Predicated region
      $region85: #{tpu_custom_call.1} parent=83 // pred_check
        %p6471 = pneg %p353
      $region86: #{tpu_custom_call.1} parent=83 // pred_check_branch
        %6473 = sbr.rel (%p6471) target = $region88
      $region87: #{tpu_custom_call.1} parent=83 // pred_region
        %s6474 = smul.u32 8, %s26
        %p6475 = scmp.lt.s32.totalorder %s6474, 15
        %s6476 = scalar_select %p6475, %s6474, 15
        %s6477 = smul.addr %s6476, 8
        %s6478 = scalar_lea.vmem %s14, %s6477
      $region88: #{tpu_custom_call.1} parent=83 // pred_fallthru
        _
    $region84: #{tpu_custom_call.1} parent=5 // pred_fallthru
      _
  $region6: #{tpu_custom_call.1} parent=0 // loop_footer
    %s24 = sadd.s32 1, %s20
  $region7: #{tpu_custom_call.1} parent=0 // loop_footer_branch
    %19 = sbr.rel target = $region3
  $region8: #{tpu_custom_call.1} parent=0 // loop_exit
    _

</llo_original>
